<compile_context>
chip_gen: v5e
topology: v5e:2x2
jax: 0.10.0
libtpu: 0.0.40
codegen_flags: <defaults>
</compile_context>

<pallas_src>
import functools

import jax
import jax.numpy as jnp
from jax import lax
from jax.experimental import pallas as pl
from jax.experimental.pallas import tpu as pltpu


# ----------------------------------------------------------------------------
# Kernels
# ----------------------------------------------------------------------------
def _conv_stats_kernel(x_ref, w_ref, scale_ref, shift_ref, y_ref, stats_ref,
                       pad_ref, col_ref, *, H, W, Cin_p, Cout_p, pre_bn_relu):
    """One image: [optional BN-affine+ReLU] -> 3x3 conv (im2col) -> partial BN stats.

    x_ref:     (1, H*W, Cin_p)   activation rows, channels on lanes
    w_ref:     (9*Cin_p, Cout_p) tap-major HWIO weight slab
    scale/shift: (1, Cin_p)      previous BN affine (read only if pre_bn_relu)
    y_ref:     (1, H*W, Cout_p)  raw conv output (pre-BN)
    stats_ref: (1, 8, Cout_p)    row 0 = sum, row 1 = sum of squares
    pad_ref:   (H+2, W+2, Cin_p) zero-halo staging scratch
    col_ref:   (H, W, 9*Cin_p)   im2col slab scratch
    """
    x = x_ref[0]                                        # (H*W, Cin_p)
    if pre_bn_relu:
        # Previous layer's BatchNorm + ReLU, folded into one FMA per element.
        x = jnp.maximum(x * scale_ref[...] + shift_ref[...], 0.0)

    # Stage into the zero-halo padded scratch (true padding=1; no tap masks).
    # Zero only the halo; the interior is fully overwritten below.
    zrow = jnp.zeros((1, W + 2, Cin_p), jnp.float32)
    zcol = jnp.zeros((H + 2, 1, Cin_p), jnp.float32)
    pad_ref[0:1, :, :] = zrow
    pad_ref[H + 1:H + 2, :, :] = zrow
    pad_ref[:, 0:1, :] = zcol
    pad_ref[:, W + 1:W + 2, :] = zcol
    pad_ref[1:H + 1, 1:W + 1, :] = x.reshape(H, W, Cin_p)

    # im2col: 9 shifted static slices -> one (H, W, 9*Cin_p) slab.
    for t in range(9):
        dy, dx = divmod(t, 3)
        col_ref[:, :, t * Cin_p:(t + 1) * Cin_p] = pad_ref[dy:dy + H, dx:dx + W, :]

    # Single fused MXU matmul over K = 9*Cin_p (conv bias omitted: BN cancels it).
    y = jnp.dot(col_ref[...].reshape(H * W, 9 * Cin_p), w_ref[...],
                preferred_element_type=jnp.float32)     # (H*W, Cout_p)
    y_ref[0] = y

    # Per-image BatchNorm partial statistics.
    stats_ref[...] = jnp.zeros((1, 8, Cout_p), jnp.float32)
    stats_ref[0:1, 0:1, :] = jnp.sum(y, axis=0, keepdims=True).reshape(1, 1, Cout_p)
    stats_ref[0:1, 1:2, :] = jnp.sum(y * y, axis=0, keepdims=True).reshape(1, 1, Cout_p)


def _affine_relu_kernel(x_ref, scale_ref, shift_ref, o_ref):
    """Final BatchNorm affine + ReLU: y = max(x*scale + shift, 0)."""
    o_ref[...] = jnp.maximum(x_ref[...] * scale_ref[...] + shift_ref[...], 0.0)


# ----------------------------------------------------------------------------
# pallas_call wrappers
# ----------------------------------------------------------------------------
def _conv_bn_stats(x, w_slab, scale, shift, *, H, W, Cin_p, Cout_p, pre_bn_relu):
    N, HW, _ = x.shape
    kern = functools.partial(_conv_stats_kernel, H=H, W=W, Cin_p=Cin_p,
                             Cout_p=Cout_p, pre_bn_relu=pre_bn_relu)
    return pl.pallas_call(
        kern,
        grid=(N,),
        in_specs=[
            pl.BlockSpec((1, HW, Cin_p), lambda n: (n, 0, 0)),
            pl.BlockSpec((9 * Cin_p, Cout_p), lambda n: (0, 0)),
            pl.BlockSpec((1, Cin_p), lambda n: (0, 0)),
            pl.BlockSpec((1, Cin_p), lambda n: (0, 0)),
        ],
        out_specs=(
            pl.BlockSpec((1, HW, Cout_p), lambda n: (n, 0, 0)),
            pl.BlockSpec((1, 8, Cout_p), lambda n: (n, 0, 0)),
        ),
        out_shape=(
            jax.ShapeDtypeStruct((N, HW, Cout_p), jnp.float32),
            jax.ShapeDtypeStruct((N, 8, Cout_p), jnp.float32),
        ),
        scratch_shapes=[
            pltpu.VMEM((H + 2, W + 2, Cin_p), jnp.float32),   # zero-halo staging
            pltpu.VMEM((H, W, 9 * Cin_p), jnp.float32),       # im2col slab
        ],
        compiler_params=pltpu.CompilerParams(dimension_semantics=("parallel",)),
    )(x, w_slab, scale, shift)


def _bn_relu(x, scale, shift):
    N, HW, Cp = x.shape
    return pl.pallas_call(
        _affine_relu_kernel,
        grid=(N,),
        in_specs=[
            pl.BlockSpec((1, HW, Cp), lambda n: (n, 0, 0)),
            pl.BlockSpec((1, Cp), lambda n: (0, 0)),
            pl.BlockSpec((1, Cp), lambda n: (0, 0)),
        ],
        out_specs=pl.BlockSpec((1, HW, Cp), lambda n: (n, 0, 0)),
        out_shape=jax.ShapeDtypeStruct((N, HW, Cp), jnp.float32),
        compiler_params=pltpu.CompilerParams(dimension_semantics=("parallel",)),
    )(x, scale, shift)


# ----------------------------------------------------------------------------
# DoubleConv forward
# ----------------------------------------------------------------------------
def _round_up(x, m):
    return (x + m - 1) // m * m


def _scale_shift(stats, gamma_p, beta_p, count, eps):
    """Per-channel BN scale/shift from per-image (sum, sumsq) partials."""
    s = jnp.sum(stats[:, 0, :], axis=0)
    ss = jnp.sum(stats[:, 1, :], axis=0)
    mean = s / count
    var = jnp.maximum(ss / count - mean * mean, 0.0)   # biased, like PyTorch BN
    scale = gamma_p * lax.rsqrt(var + eps)
    shift = beta_p - mean * scale
    cp = scale.shape[0]
    return scale.reshape(1, cp), shift.reshape(1, cp)


def double_conv(x_nchw, params, *, eps=1e-5):
    """Pallas DoubleConv forward.  x_nchw: (N, C_in, H, W) f32 -> (N, C_out, H, W)."""
    w1, cb1, g1, b1, w2, cb2, g2, b2 = params
    del cb1, cb2  # per-channel conv bias cancels exactly under training-mode BN
    N, C_in, H, W = x_nchw.shape
    C_out = w1.shape[0]                   # (C_out, C_in, 3, 3)
    HW = H * W
    Cin_p = _round_up(C_in, 128)
    Cout_p = _round_up(C_out, 128)

    # TODO(synk): accept NHWC activations directly to avoid these HBM-round-trip
    #             transposes around the kernels.
    x_rows = jnp.transpose(x_nchw, (0, 2, 3, 1)).reshape(N, HW, C_in)
    x_rows = jnp.pad(x_rows, ((0, 0), (0, 0), (0, Cin_p - C_in)))

    def weight_slab(w, cin, cin_p, cout, cout_p):
        wt = jnp.transpose(w, (2, 3, 1, 0))                      # (3, 3, cin, cout)
        wt = jnp.pad(wt, ((0, 0), (0, 0), (0, cin_p - cin), (0, cout_p - cout)))
        return wt.reshape(9 * cin_p, cout_p)                     # tap-major rows

    def pad_vec(v, cp):
        return jnp.pad(v, (0, cp - v.shape[0]))

    w1s = weight_slab(w1, C_in, Cin_p, C_out, Cout_p)
    w2s = weight_slab(w2, C_out, Cout_p, C_out, Cout_p)
    g1p, b1p = pad_vec(g1, Cout_p), pad_vec(b1, Cout_p)
    g2p, b2p = pad_vec(g2, Cout_p), pad_vec(b2, Cout_p)

    count = float(N * HW)
    one_in = jnp.ones((1, Cin_p), jnp.float32)
    zero_in = jnp.zeros((1, Cin_p), jnp.float32)

    # conv1 (+ BN1 partial stats); no pre-affine on the raw input.
    y1_raw, st1 = _conv_bn_stats(x_rows, w1s, one_in, zero_in,
                                 H=H, W=W, Cin_p=Cin_p, Cout_p=Cout_p,
                                 pre_bn_relu=False)
    scale1, shift1 = _scale_shift(st1, g1p, b1p, count, eps)

    # BN1+ReLU fused into conv2's staging pass (+ BN2 partial stats).
    y2_raw, st2 = _conv_bn_stats(y1_raw, w2s, scale1, shift1,
                                 H=H, W=W, Cin_p=Cout_p, Cout_p=Cout_p,
                                 pre_bn_relu=True)
    scale2, shift2 = _scale_shift(st2, g2p, b2p, count, eps)

    # Final BN2 + ReLU.
    out = _bn_relu(y2_raw, scale2, shift2)

    out = out[:, :, :C_out].reshape(N, H, W, C_out)
    return jnp.transpose(out, (0, 3, 1, 2))               # back to NCHW


# ----------------------------------------------------------------------------
# Pure-JAX reference (matches PyTorch DoubleConv.forward, training-mode BN)
# ----------------------------------------------------------------------------
def reference(x_nchw, params, eps=1e-5):
    w1, cb1, g1, b1, w2, cb2, g2, b2 = params

    def block(x, w, cb, g, b):
        y = lax.conv_general_dilated(x, w, (1, 1), 'SAME',
                                     dimension_numbers=('NCHW', 'OIHW', 'NCHW'))
        y = y + cb[None, :, None, None]
        mean = jnp.mean(y, axis=(0, 2, 3), keepdims=True)
        var = jnp.var(y, axis=(0, 2, 3), keepdims=True)   # biased, like PyTorch BN
        y = (y - mean) / jnp.sqrt(var + eps)
        y = y * g[None, :, None, None] + b[None, :, None, None]
        return jnp.maximum(y, 0.0)

    y = block(x_nchw, w1, cb1, g1, b1)
    return block(y, w2, cb2, g2, b2)


if __name__ == "__main__":
    key = jax.random.PRNGKey(0)
    N, C_in, C_out, H, W = 2, 4, 8, 16, 16
    ks = jax.random.split(key, 9)

    x = jax.random.normal(ks[0], (N, C_in, H, W), jnp.float32)
    # Deterministic synthetic parameters (shapes per nn.Conv2d / nn.BatchNorm2d).
    w1 = 0.1 * jax.random.normal(ks[1], (C_out, C_in, 3, 3), jnp.float32)
    cb1 = 0.1 * jax.random.normal(ks[2], (C_out,), jnp.float32)
    g1 = 1.0 + 0.1 * jax.random.normal(ks[3], (C_out,), jnp.float32)
    b1 = 0.1 * jax.random.normal(ks[4], (C_out,), jnp.float32)
    w2 = 0.1 * jax.random.normal(ks[5], (C_out, C_out, 3, 3), jnp.float32)
    cb2 = 0.1 * jax.random.normal(ks[6], (C_out,), jnp.float32)
    g2 = 1.0 + 0.1 * jax.random.normal(ks[7], (C_out,), jnp.float32)
    b2 = 0.1 * jax.random.normal(ks[8], (C_out,), jnp.float32)
    params = (w1, cb1, g1, b1, w2, cb2, g2, b2)

    out = jax.block_until_ready(jax.jit(double_conv)(x, params))
    ref = jax.block_until_ready(reference(x, params))

    assert out.shape == (N, C_out, H, W), out.shape
    if not bool(jnp.allclose(out, ref, atol=2e-3, rtol=2e-3)):
        raise AssertionError(
            f"mismatch: max abs err = {float(jnp.max(jnp.abs(out - ref)))}")
    print("KERNEL_OK")
</pallas_src>

<mosaic_0001>
module attributes {stable_mosaic.version = 11 : i64} {
  func.func @_conv_stats_kernel(%arg0: i32, %arg1: memref<1x256x128xf32, #tpu.memory_space<vmem>>, %arg2: memref<1152x128xf32, #tpu.memory_space<vmem>>, %arg3: memref<1x128xf32, #tpu.memory_space<vmem>>, %arg4: memref<1x128xf32, #tpu.memory_space<vmem>>, %arg5: memref<1x256x128xf32, #tpu.memory_space<vmem>>, %arg6: memref<1x8x128xf32, #tpu.memory_space<vmem>>, %arg7: memref<18x18x128xf32, #tpu.memory_space<vmem>>, %arg8: memref<16x16x1152xf32, #tpu.memory_space<vmem>>) attributes {dimension_semantics = [#tpu.dimension_semantics<parallel>], iteration_bounds = array<i64: 2>, scalar_prefetch = 0 : i64, scratch_operands = 2 : i64, tpu.core_type = #tpu.core_type<tc>, window_params = [{transform_indices = @transform_0, window_bounds = array<i64: 1, 256, 128>}, {pipeline_mode = #tpu.pipeline_mode<synchronous>, transform_indices = @transform_1, window_bounds = array<i64: 1152, 128>}, {pipeline_mode = #tpu.pipeline_mode<synchronous>, transform_indices = @transform_2, window_bounds = array<i64: 1, 128>}, {pipeline_mode = #tpu.pipeline_mode<synchronous>, transform_indices = @transform_3, window_bounds = array<i64: 1, 128>}, {transform_indices = @transform_4, window_bounds = array<i64: 1, 256, 128>}, {transform_indices = @transform_5, window_bounds = array<i64: 1, 8, 128>}]} {
    %c0 = arith.constant 0 : index
    %c0_0 = arith.constant 0 : index
    %c0_1 = arith.constant 0 : index
    %0 = vector.load %arg1[%c0, %c0_0, %c0_1] : memref<1x256x128xf32, #tpu.memory_space<vmem>>, vector<1x256x128xf32>
    %1 = vector.shape_cast %0 : vector<1x256x128xf32> to vector<256x128xf32>
    %cst = arith.constant 0.000000e+00 : f32
    %2 = vector.broadcast %cst : f32 to vector<1x18x128xf32>
    %cst_2 = arith.constant 0.000000e+00 : f32
    %3 = vector.broadcast %cst_2 : f32 to vector<18x1x128xf32>
    %c0_3 = arith.constant 0 : index
    %c0_4 = arith.constant 0 : index
    %c0_5 = arith.constant 0 : index
    %4 = vector.load %arg7[%c0_3, %c0_4, %c0_5] : memref<18x18x128xf32, #tpu.memory_space<vmem>>, vector<1x18x128xf32>
    tpu.vector_store %arg7[%c0_3, %c0_4, %c0_5], %2 {strides = array<i32>} : memref<18x18x128xf32, #tpu.memory_space<vmem>>, vector<1x18x128xf32>,
    %c17 = arith.constant 17 : index
    %c0_6 = arith.constant 0 : index
    %c0_7 = arith.constant 0 : index
    %5 = vector.load %arg7[%c17, %c0_6, %c0_7] : memref<18x18x128xf32, #tpu.memory_space<vmem>>, vector<1x18x128xf32>
    tpu.vector_store %arg7[%c17, %c0_6, %c0_7], %2 {strides = array<i32>} : memref<18x18x128xf32, #tpu.memory_space<vmem>>, vector<1x18x128xf32>,
    %c0_8 = arith.constant 0 : index
    %c0_9 = arith.constant 0 : index
    %c0_10 = arith.constant 0 : index
    %6 = vector.load %arg7[%c0_8, %c0_9, %c0_10] : memref<18x18x128xf32, #tpu.memory_space<vmem>>, vector<18x1x128xf32>
    tpu.vector_store %arg7[%c0_8, %c0_9, %c0_10], %3 {strides = array<i32>} : memref<18x18x128xf32, #tpu.memory_space<vmem>>, vector<18x1x128xf32>,
    %c0_11 = arith.constant 0 : index
    %c17_12 = arith.constant 17 : index
    %c0_13 = arith.constant 0 : index
    %7 = vector.load %arg7[%c0_11, %c17_12, %c0_13] : memref<18x18x128xf32, #tpu.memory_space<vmem>>, vector<18x1x128xf32>
    tpu.vector_store %arg7[%c0_11, %c17_12, %c0_13], %3 {strides = array<i32>} : memref<18x18x128xf32, #tpu.memory_space<vmem>>, vector<18x1x128xf32>,
    %8 = vector.shape_cast %1 : vector<256x128xf32> to vector<16x16x128xf32>
    %c1 = arith.constant 1 : index
    %c1_14 = arith.constant 1 : index
    %c0_15 = arith.constant 0 : index
    %9 = vector.load %arg7[%c1, %c1_14, %c0_15] : memref<18x18x128xf32, #tpu.memory_space<vmem>>, vector<16x16x128xf32>
    tpu.vector_store %arg7[%c1, %c1_14, %c0_15], %8 {strides = array<i32>} : memref<18x18x128xf32, #tpu.memory_space<vmem>>, vector<16x16x128xf32>,
    %c0_16 = arith.constant 0 : index
    %c0_17 = arith.constant 0 : index
    %c0_18 = arith.constant 0 : index
    %10 = vector.load %arg7[%c0_16, %c0_17, %c0_18] : memref<18x18x128xf32, #tpu.memory_space<vmem>>, vector<16x16x128xf32>
    %c0_19 = arith.constant 0 : index
    %c0_20 = arith.constant 0 : index
    %c0_21 = arith.constant 0 : index
    %11 = vector.load %arg8[%c0_19, %c0_20, %c0_21] : memref<16x16x1152xf32, #tpu.memory_space<vmem>>, vector<16x16x128xf32>
    tpu.vector_store %arg8[%c0_19, %c0_20, %c0_21], %10 {strides = array<i32>} : memref<16x16x1152xf32, #tpu.memory_space<vmem>>, vector<16x16x128xf32>,
    %c0_22 = arith.constant 0 : index
    %c1_23 = arith.constant 1 : index
    %c0_24 = arith.constant 0 : index
    %12 = vector.load %arg7[%c0_22, %c1_23, %c0_24] : memref<18x18x128xf32, #tpu.memory_space<vmem>>, vector<16x16x128xf32>
    %c0_25 = arith.constant 0 : index
    %c0_26 = arith.constant 0 : index
    %c128 = arith.constant 128 : index
    %13 = vector.load %arg8[%c0_25, %c0_26, %c128] : memref<16x16x1152xf32, #tpu.memory_space<vmem>>, vector<16x16x128xf32>
    tpu.vector_store %arg8[%c0_25, %c0_26, %c128], %12 {strides = array<i32>} : memref<16x16x1152xf32, #tpu.memory_space<vmem>>, vector<16x16x128xf32>,
    %c0_27 = arith.constant 0 : index
    %c2 = arith.constant 2 : index
    %c0_28 = arith.constant 0 : index
    %14 = vector.load %arg7[%c0_27, %c2, %c0_28] : memref<18x18x128xf32, #tpu.memory_space<vmem>>, vector<16x16x128xf32>
    %c0_29 = arith.constant 0 : index
    %c0_30 = arith.constant 0 : index
    %c256 = arith.constant 256 : index
    %15 = vector.load %arg8[%c0_29, %c0_30, %c256] : memref<16x16x1152xf32, #tpu.memory_space<vmem>>, vector<16x16x128xf32>
    tpu.vector_store %arg8[%c0_29, %c0_30, %c256], %14 {strides = array<i32>} : memref<16x16x1152xf32, #tpu.memory_space<vmem>>, vector<16x16x128xf32>,
    %c1_31 = arith.constant 1 : index
    %c0_32 = arith.constant 0 : index
    %c0_33 = arith.constant 0 : index
    %16 = vector.load %arg7[%c1_31, %c0_32, %c0_33] : memref<18x18x128xf32, #tpu.memory_space<vmem>>, vector<16x16x128xf32>
    %c0_34 = arith.constant 0 : index
    %c0_35 = arith.constant 0 : index
    %c384 = arith.constant 384 : index
    %17 = vector.load %arg8[%c0_34, %c0_35, %c384] : memref<16x16x1152xf32, #tpu.memory_space<vmem>>, vector<16x16x128xf32>
    tpu.vector_store %arg8[%c0_34, %c0_35, %c384], %16 {strides = array<i32>} : memref<16x16x1152xf32, #tpu.memory_space<vmem>>, vector<16x16x128xf32>,
    %c1_36 = arith.constant 1 : index
    %c1_37 = arith.constant 1 : index
    %c0_38 = arith.constant 0 : index
    %18 = vector.load %arg7[%c1_36, %c1_37, %c0_38] : memref<18x18x128xf32, #tpu.memory_space<vmem>>, vector<16x16x128xf32>
    %c0_39 = arith.constant 0 : index
    %c0_40 = arith.constant 0 : index
    %c512 = arith.constant 512 : index
    %19 = vector.load %arg8[%c0_39, %c0_40, %c512] : memref<16x16x1152xf32, #tpu.memory_space<vmem>>, vector<16x16x128xf32>
    tpu.vector_store %arg8[%c0_39, %c0_40, %c512], %18 {strides = array<i32>} : memref<16x16x1152xf32, #tpu.memory_space<vmem>>, vector<16x16x128xf32>,
    %c1_41 = arith.constant 1 : index
    %c2_42 = arith.constant 2 : index
    %c0_43 = arith.constant 0 : index
    %20 = vector.load %arg7[%c1_41, %c2_42, %c0_43] : memref<18x18x128xf32, #tpu.memory_space<vmem>>, vector<16x16x128xf32>
    %c0_44 = arith.constant 0 : index
    %c0_45 = arith.constant 0 : index
    %c640 = arith.constant 640 : index
    %21 = vector.load %arg8[%c0_44, %c0_45, %c640] : memref<16x16x1152xf32, #tpu.memory_space<vmem>>, vector<16x16x128xf32>
    tpu.vector_store %arg8[%c0_44, %c0_45, %c640], %20 {strides = array<i32>} : memref<16x16x1152xf32, #tpu.memory_space<vmem>>, vector<16x16x128xf32>,
    %c2_46 = arith.constant 2 : index
    %c0_47 = arith.constant 0 : index
    %c0_48 = arith.constant 0 : index
    %22 = vector.load %arg7[%c2_46, %c0_47, %c0_48] : memref<18x18x128xf32, #tpu.memory_space<vmem>>, vector<16x16x128xf32>
    %c0_49 = arith.constant 0 : index
    %c0_50 = arith.constant 0 : index
    %c768 = arith.constant 768 : index
    %23 = vector.load %arg8[%c0_49, %c0_50, %c768] : memref<16x16x1152xf32, #tpu.memory_space<vmem>>, vector<16x16x128xf32>
    tpu.vector_store %arg8[%c0_49, %c0_50, %c768], %22 {strides = array<i32>} : memref<16x16x1152xf32, #tpu.memory_space<vmem>>, vector<16x16x128xf32>,
    %c2_51 = arith.constant 2 : index
    %c1_52 = arith.constant 1 : index
    %c0_53 = arith.constant 0 : index
    %24 = vector.load %arg7[%c2_51, %c1_52, %c0_53] : memref<18x18x128xf32, #tpu.memory_space<vmem>>, vector<16x16x128xf32>
    %c0_54 = arith.constant 0 : index
    %c0_55 = arith.constant 0 : index
    %c896 = arith.constant 896 : index
    %25 = vector.load %arg8[%c0_54, %c0_55, %c896] : memref<16x16x1152xf32, #tpu.memory_space<vmem>>, vector<16x16x128xf32>
    tpu.vector_store %arg8[%c0_54, %c0_55, %c896], %24 {strides = array<i32>} : memref<16x16x1152xf32, #tpu.memory_space<vmem>>, vector<16x16x128xf32>,
    %c2_56 = arith.constant 2 : index
    %c2_57 = arith.constant 2 : index
    %c0_58 = arith.constant 0 : index
    %26 = vector.load %arg7[%c2_56, %c2_57, %c0_58] : memref<18x18x128xf32, #tpu.memory_space<vmem>>, vector<16x16x128xf32>
    %c0_59 = arith.constant 0 : index
    %c0_60 = arith.constant 0 : index
    %c1024 = arith.constant 1024 : index
    %27 = vector.load %arg8[%c0_59, %c0_60, %c1024] : memref<16x16x1152xf32, #tpu.memory_space<vmem>>, vector<16x16x128xf32>
    tpu.vector_store %arg8[%c0_59, %c0_60, %c1024], %26 {strides = array<i32>} : memref<16x16x1152xf32, #tpu.memory_space<vmem>>, vector<16x16x128xf32>,
    %c0_61 = arith.constant 0 : index
    %c0_62 = arith.constant 0 : index
    %c0_63 = arith.constant 0 : index
    %28 = vector.load %arg8[%c0_61, %c0_62, %c0_63] : memref<16x16x1152xf32, #tpu.memory_space<vmem>>, vector<16x16x1152xf32>
    %29 = vector.shape_cast %28 : vector<16x16x1152xf32> to vector<256x1152xf32>
    %c0_64 = arith.constant 0 : index
    %c0_65 = arith.constant 0 : index
    %30 = vector.load %arg2[%c0_64, %c0_65] : memref<1152x128xf32, #tpu.memory_space<vmem>>, vector<1152x128xf32>
    %cst_66 = arith.constant dense<0.000000e+00> : vector<256x128xf32>
    %31 = tpu.matmul %29, %30, %cst_66 {dimension_numbers = #tpu.dot_dimension_numbers<[1], [0], [0], [1], [0, 0, 1, 1], [], []>} : vector<256x1152xf32>, vector<1152x128xf32>, vector<256x128xf32> -> vector<256x128xf32>
    %c0_67 = arith.constant 0 : index
    %c0_68 = arith.constant 0 : index
    %c0_69 = arith.constant 0 : index
    %32 = vector.load %arg5[%c0_67, %c0_68, %c0_69] : memref<1x256x128xf32, #tpu.memory_space<vmem>>, vector<1x256x128xf32>
    %33 = vector.shape_cast %32 : vector<1x256x128xf32> to vector<256x128xf32>
    %34 = vector.shape_cast %31 : vector<256x128xf32> to vector<1x256x128xf32>
    tpu.vector_store %arg5[%c0_67, %c0_68, %c0_69], %34 {strides = array<i32>} : memref<1x256x128xf32, #tpu.memory_space<vmem>>, vector<1x256x128xf32>,
    %cst_70 = arith.constant 0.000000e+00 : f32
    %35 = vector.broadcast %cst_70 : f32 to vector<1x8x128xf32>
    %c0_71 = arith.constant 0 : index
    %c0_72 = arith.constant 0 : index
    %c0_73 = arith.constant 0 : index
    %36 = vector.load %arg6[%c0_71, %c0_72, %c0_73] : memref<1x8x128xf32, #tpu.memory_space<vmem>>, vector<1x8x128xf32>
    tpu.vector_store %arg6[%c0_71, %c0_72, %c0_73], %35 {strides = array<i32>} : memref<1x8x128xf32, #tpu.memory_space<vmem>>, vector<1x8x128xf32>,
    %cst_74 = arith.constant dense<0.000000e+00> : vector<128xf32>
    %37 = vector.multi_reduction <add>, %31, %cst_74 [0] : vector<256x128xf32> to vector<128xf32>
    %38 = vector.shape_cast %37 : vector<128xf32> to vector<1x128xf32>
    %39 = vector.shape_cast %38 : vector<1x128xf32> to vector<1x1x128xf32>
    %c0_75 = arith.constant 0 : index
    %c0_76 = arith.constant 0 : index
    %c0_77 = arith.constant 0 : index
    %40 = vector.load %arg6[%c0_75, %c0_76, %c0_77] : memref<1x8x128xf32, #tpu.memory_space<vmem>>, vector<1x1x128xf32>
    tpu.vector_store %arg6[%c0_75, %c0_76, %c0_77], %39 {strides = array<i32>} : memref<1x8x128xf32, #tpu.memory_space<vmem>>, vector<1x1x128xf32>,
    %41 = arith.mulf %31, %31 : vector<256x128xf32>
    %cst_78 = arith.constant dense<0.000000e+00> : vector<128xf32>
    %42 = vector.multi_reduction <add>, %41, %cst_78 [0] : vector<256x128xf32> to vector<128xf32>
    %43 = vector.shape_cast %42 : vector<128xf32> to vector<1x128xf32>
    %44 = vector.shape_cast %43 : vector<1x128xf32> to vector<1x1x128xf32>
    %c0_79 = arith.constant 0 : index
    %c1_80 = arith.constant 1 : index
    %c0_81 = arith.constant 0 : index
    %45 = vector.load %arg6[%c0_79, %c1_80, %c0_81] : memref<1x8x128xf32, #tpu.memory_space<vmem>>, vector<1x1x128xf32>
    tpu.vector_store %arg6[%c0_79, %c1_80, %c0_81], %44 {strides = array<i32>} : memref<1x8x128xf32, #tpu.memory_space<vmem>>, vector<1x1x128xf32>,
    return
  }
  func.func @transform_0(%arg0: i32) -> (i32, i32, i32) {
    %c0_i32 = arith.constant 0 : i32
    %c0_i32_0 = arith.constant 0 : i32
    %c0_i32_1 = arith.constant 0 : i32
    return %arg0, %c0_i32, %c0_i32_0 : i32, i32, i32
  }
  func.func @transform_1(%arg0: i32) -> (i32, i32) {
    %c0_i32 = arith.constant 0 : i32
    %c0_i32_0 = arith.constant 0 : i32
    %c0_i32_1 = arith.constant 0 : i32
    return %c0_i32, %c0_i32_0 : i32, i32
  }
  func.func @transform_2(%arg0: i32) -> (i32, i32) {
    %c0_i32 = arith.constant 0 : i32
    %c0_i32_0 = arith.constant 0 : i32
    %c0_i32_1 = arith.constant 0 : i32
    return %c0_i32, %c0_i32_0 : i32, i32
  }
  func.func @transform_3(%arg0: i32) -> (i32, i32) {
    %c0_i32 = arith.constant 0 : i32
    %c0_i32_0 = arith.constant 0 : i32
    %c0_i32_1 = arith.constant 0 : i32
    return %c0_i32, %c0_i32_0 : i32, i32
  }
  func.func @transform_4(%arg0: i32) -> (i32, i32, i32) {
    %c0_i32 = arith.constant 0 : i32
    %c0_i32_0 = arith.constant 0 : i32
    %c0_i32_1 = arith.constant 0 : i32
    return %arg0, %c0_i32, %c0_i32_0 : i32, i32, i32
  }
  func.func @transform_5(%arg0: i32) -> (i32, i32, i32) {
    %c0_i32 = arith.constant 0 : i32
    %c0_i32_0 = arith.constant 0 : i32
    %c0_i32_1 = arith.constant 0 : i32
    return %arg0, %c0_i32, %c0_i32_0 : i32, i32, i32
  }
}

module attributes {stable_mosaic.version = 11 : i64} {
  func.func @_affine_relu_kernel(%arg0: i32, %arg1: memref<1x256x128xf32, #tpu.memory_space<vmem>>, %arg2: memref<1x128xf32, #tpu.memory_space<vmem>>, %arg3: memref<1x128xf32, #tpu.memory_space<vmem>>, %arg4: memref<1x256x128xf32, #tpu.memory_space<vmem>>) attributes {dimension_semantics = [#tpu.dimension_semantics<parallel>], iteration_bounds = array<i64: 2>, scalar_prefetch = 0 : i64, scratch_operands = 0 : i64, tpu.core_type = #tpu.core_type<tc>, window_params = [{transform_indices = @transform_0, window_bounds = array<i64: 1, 256, 128>}, {pipeline_mode = #tpu.pipeline_mode<synchronous>, transform_indices = @transform_1, window_bounds = array<i64: 1, 128>}, {pipeline_mode = #tpu.pipeline_mode<synchronous>, transform_indices = @transform_2, window_bounds = array<i64: 1, 128>}, {transform_indices = @transform_3, window_bounds = array<i64: 1, 256, 128>}]} {
    %c0 = arith.constant 0 : index
    %c0_0 = arith.constant 0 : index
    %c0_1 = arith.constant 0 : index
    %0 = vector.load %arg1[%c0, %c0_0, %c0_1] : memref<1x256x128xf32, #tpu.memory_space<vmem>>, vector<1x256x128xf32>
    %c0_2 = arith.constant 0 : index
    %c0_3 = arith.constant 0 : index
    %1 = vector.load %arg2[%c0_2, %c0_3] : memref<1x128xf32, #tpu.memory_space<vmem>>, vector<1x128xf32>
    %2 = vector.shape_cast %1 : vector<1x128xf32> to vector<1x1x128xf32>
    %3 = vector.broadcast %2 : vector<1x1x128xf32> to vector<1x256x128xf32>
    %4 = arith.mulf %0, %3 : vector<1x256x128xf32>
    %c0_4 = arith.constant 0 : index
    %c0_5 = arith.constant 0 : index
    %5 = vector.load %arg3[%c0_4, %c0_5] : memref<1x128xf32, #tpu.memory_space<vmem>>, vector<1x128xf32>
    %6 = vector.shape_cast %5 : vector<1x128xf32> to vector<1x1x128xf32>
    %7 = vector.broadcast %6 : vector<1x1x128xf32> to vector<1x256x128xf32>
    %8 = arith.addf %4, %7 : vector<1x256x128xf32>
    %cst = arith.constant 0.000000e+00 : f32
    %9 = vector.broadcast %cst : f32 to vector<1x256x128xf32>
    %10 = arith.maximumf %8, %9 : vector<1x256x128xf32>
    %c0_6 = arith.constant 0 : index
    %c0_7 = arith.constant 0 : index
    %c0_8 = arith.constant 0 : index
    %11 = vector.load %arg4[%c0_6, %c0_7, %c0_8] : memref<1x256x128xf32, #tpu.memory_space<vmem>>, vector<1x256x128xf32>
    tpu.vector_store %arg4[%c0_6, %c0_7, %c0_8], %10 {strides = array<i32>} : memref<1x256x128xf32, #tpu.memory_space<vmem>>, vector<1x256x128xf32>,
    return
  }
  func.func @transform_0(%arg0: i32) -> (i32, i32, i32) {
    %c0_i32 = arith.constant 0 : i32
    %c0_i32_0 = arith.constant 0 : i32
    %c0_i32_1 = arith.constant 0 : i32
    return %arg0, %c0_i32, %c0_i32_0 : i32, i32, i32
  }
  func.func @transform_1(%arg0: i32) -> (i32, i32) {
    %c0_i32 = arith.constant 0 : i32
    %c0_i32_0 = arith.constant 0 : i32
    %c0_i32_1 = arith.constant 0 : i32
    return %c0_i32, %c0_i32_0 : i32, i32
  }
  func.func @transform_2(%arg0: i32) -> (i32, i32) {
    %c0_i32 = arith.constant 0 : i32
    %c0_i32_0 = arith.constant 0 : i32
    %c0_i32_1 = arith.constant 0 : i32
    return %c0_i32, %c0_i32_0 : i32, i32
  }
  func.func @transform_3(%arg0: i32) -> (i32, i32, i32) {
    %c0_i32 = arith.constant 0 : i32
    %c0_i32_0 = arith.constant 0 : i32
    %c0_i32_1 = arith.constant 0 : i32
    return %arg0, %c0_i32, %c0_i32_0 : i32, i32, i32
  }
}

module attributes {stable_mosaic.version = 11 : i64} {
  func.func @_conv_stats_kernel(%arg0: i32, %arg1: memref<1x256x128xf32, #tpu.memory_space<vmem>>, %arg2: memref<1152x128xf32, #tpu.memory_space<vmem>>, %arg3: memref<1x128xf32, #tpu.memory_space<vmem>>, %arg4: memref<1x128xf32, #tpu.memory_space<vmem>>, %arg5: memref<1x256x128xf32, #tpu.memory_space<vmem>>, %arg6: memref<1x8x128xf32, #tpu.memory_space<vmem>>, %arg7: memref<18x18x128xf32, #tpu.memory_space<vmem>>, %arg8: memref<16x16x1152xf32, #tpu.memory_space<vmem>>) attributes {dimension_semantics = [#tpu.dimension_semantics<parallel>], iteration_bounds = array<i64: 2>, scalar_prefetch = 0 : i64, scratch_operands = 2 : i64, tpu.core_type = #tpu.core_type<tc>, window_params = [{transform_indices = @transform_0, window_bounds = array<i64: 1, 256, 128>}, {pipeline_mode = #tpu.pipeline_mode<synchronous>, transform_indices = @transform_1, window_bounds = array<i64: 1152, 128>}, {pipeline_mode = #tpu.pipeline_mode<synchronous>, transform_indices = @transform_2, window_bounds = array<i64: 1, 128>}, {pipeline_mode = #tpu.pipeline_mode<synchronous>, transform_indices = @transform_3, window_bounds = array<i64: 1, 128>}, {transform_indices = @transform_4, window_bounds = array<i64: 1, 256, 128>}, {transform_indices = @transform_5, window_bounds = array<i64: 1, 8, 128>}]} {
    %c0 = arith.constant 0 : index
    %c0_0 = arith.constant 0 : index
    %c0_1 = arith.constant 0 : index
    %0 = vector.load %arg1[%c0, %c0_0, %c0_1] : memref<1x256x128xf32, #tpu.memory_space<vmem>>, vector<1x256x128xf32>
    %1 = vector.shape_cast %0 : vector<1x256x128xf32> to vector<256x128xf32>
    %c0_2 = arith.constant 0 : index
    %c0_3 = arith.constant 0 : index
    %2 = vector.load %arg3[%c0_2, %c0_3] : memref<1x128xf32, #tpu.memory_space<vmem>>, vector<1x128xf32>
    %3 = vector.broadcast %2 : vector<1x128xf32> to vector<256x128xf32>
    %4 = arith.mulf %1, %3 : vector<256x128xf32>
    %c0_4 = arith.constant 0 : index
    %c0_5 = arith.constant 0 : index
    %5 = vector.load %arg4[%c0_4, %c0_5] : memref<1x128xf32, #tpu.memory_space<vmem>>, vector<1x128xf32>
    %6 = vector.broadcast %5 : vector<1x128xf32> to vector<256x128xf32>
    %7 = arith.addf %4, %6 : vector<256x128xf32>
    %cst = arith.constant 0.000000e+00 : f32
    %8 = vector.broadcast %cst : f32 to vector<256x128xf32>
    %9 = arith.maximumf %7, %8 : vector<256x128xf32>
    %cst_6 = arith.constant 0.000000e+00 : f32
    %10 = vector.broadcast %cst_6 : f32 to vector<1x18x128xf32>
    %cst_7 = arith.constant 0.000000e+00 : f32
    %11 = vector.broadcast %cst_7 : f32 to vector<18x1x128xf32>
    %c0_8 = arith.constant 0 : index
    %c0_9 = arith.constant 0 : index
    %c0_10 = arith.constant 0 : index
    %12 = vector.load %arg7[%c0_8, %c0_9, %c0_10] : memref<18x18x128xf32, #tpu.memory_space<vmem>>, vector<1x18x128xf32>
    tpu.vector_store %arg7[%c0_8, %c0_9, %c0_10], %10 {strides = array<i32>} : memref<18x18x128xf32, #tpu.memory_space<vmem>>, vector<1x18x128xf32>,
    %c17 = arith.constant 17 : index
    %c0_11 = arith.constant 0 : index
    %c0_12 = arith.constant 0 : index
    %13 = vector.load %arg7[%c17, %c0_11, %c0_12] : memref<18x18x128xf32, #tpu.memory_space<vmem>>, vector<1x18x128xf32>
    tpu.vector_store %arg7[%c17, %c0_11, %c0_12], %10 {strides = array<i32>} : memref<18x18x128xf32, #tpu.memory_space<vmem>>, vector<1x18x128xf32>,
    %c0_13 = arith.constant 0 : index
    %c0_14 = arith.constant 0 : index
    %c0_15 = arith.constant 0 : index
    %14 = vector.load %arg7[%c0_13, %c0_14, %c0_15] : memref<18x18x128xf32, #tpu.memory_space<vmem>>, vector<18x1x128xf32>
    tpu.vector_store %arg7[%c0_13, %c0_14, %c0_15], %11 {strides = array<i32>} : memref<18x18x128xf32, #tpu.memory_space<vmem>>, vector<18x1x128xf32>,
    %c0_16 = arith.constant 0 : index
    %c17_17 = arith.constant 17 : index
    %c0_18 = arith.constant 0 : index
    %15 = vector.load %arg7[%c0_16, %c17_17, %c0_18] : memref<18x18x128xf32, #tpu.memory_space<vmem>>, vector<18x1x128xf32>
    tpu.vector_store %arg7[%c0_16, %c17_17, %c0_18], %11 {strides = array<i32>} : memref<18x18x128xf32, #tpu.memory_space<vmem>>, vector<18x1x128xf32>,
    %16 = vector.shape_cast %9 : vector<256x128xf32> to vector<16x16x128xf32>
    %c1 = arith.constant 1 : index
    %c1_19 = arith.constant 1 : index
    %c0_20 = arith.constant 0 : index
    %17 = vector.load %arg7[%c1, %c1_19, %c0_20] : memref<18x18x128xf32, #tpu.memory_space<vmem>>, vector<16x16x128xf32>
    tpu.vector_store %arg7[%c1, %c1_19, %c0_20], %16 {strides = array<i32>} : memref<18x18x128xf32, #tpu.memory_space<vmem>>, vector<16x16x128xf32>,
    %c0_21 = arith.constant 0 : index
    %c0_22 = arith.constant 0 : index
    %c0_23 = arith.constant 0 : index
    %18 = vector.load %arg7[%c0_21, %c0_22, %c0_23] : memref<18x18x128xf32, #tpu.memory_space<vmem>>, vector<16x16x128xf32>
    %c0_24 = arith.constant 0 : index
    %c0_25 = arith.constant 0 : index
    %c0_26 = arith.constant 0 : index
    %19 = vector.load %arg8[%c0_24, %c0_25, %c0_26] : memref<16x16x1152xf32, #tpu.memory_space<vmem>>, vector<16x16x128xf32>
    tpu.vector_store %arg8[%c0_24, %c0_25, %c0_26], %18 {strides = array<i32>} : memref<16x16x1152xf32, #tpu.memory_space<vmem>>, vector<16x16x128xf32>,
    %c0_27 = arith.constant 0 : index
    %c1_28 = arith.constant 1 : index
    %c0_29 = arith.constant 0 : index
    %20 = vector.load %arg7[%c0_27, %c1_28, %c0_29] : memref<18x18x128xf32, #tpu.memory_space<vmem>>, vector<16x16x128xf32>
    %c0_30 = arith.constant 0 : index
    %c0_31 = arith.constant 0 : index
    %c128 = arith.constant 128 : index
    %21 = vector.load %arg8[%c0_30, %c0_31, %c128] : memref<16x16x1152xf32, #tpu.memory_space<vmem>>, vector<16x16x128xf32>
    tpu.vector_store %arg8[%c0_30, %c0_31, %c128], %20 {strides = array<i32>} : memref<16x16x1152xf32, #tpu.memory_space<vmem>>, vector<16x16x128xf32>,
    %c0_32 = arith.constant 0 : index
    %c2 = arith.constant 2 : index
    %c0_33 = arith.constant 0 : index
    %22 = vector.load %arg7[%c0_32, %c2, %c0_33] : memref<18x18x128xf32, #tpu.memory_space<vmem>>, vector<16x16x128xf32>
    %c0_34 = arith.constant 0 : index
    %c0_35 = arith.constant 0 : index
    %c256 = arith.constant 256 : index
    %23 = vector.load %arg8[%c0_34, %c0_35, %c256] : memref<16x16x1152xf32, #tpu.memory_space<vmem>>, vector<16x16x128xf32>
    tpu.vector_store %arg8[%c0_34, %c0_35, %c256], %22 {strides = array<i32>} : memref<16x16x1152xf32, #tpu.memory_space<vmem>>, vector<16x16x128xf32>,
    %c1_36 = arith.constant 1 : index
    %c0_37 = arith.constant 0 : index
    %c0_38 = arith.constant 0 : index
    %24 = vector.load %arg7[%c1_36, %c0_37, %c0_38] : memref<18x18x128xf32, #tpu.memory_space<vmem>>, vector<16x16x128xf32>
    %c0_39 = arith.constant 0 : index
    %c0_40 = arith.constant 0 : index
    %c384 = arith.constant 384 : index
    %25 = vector.load %arg8[%c0_39, %c0_40, %c384] : memref<16x16x1152xf32, #tpu.memory_space<vmem>>, vector<16x16x128xf32>
    tpu.vector_store %arg8[%c0_39, %c0_40, %c384], %24 {strides = array<i32>} : memref<16x16x1152xf32, #tpu.memory_space<vmem>>, vector<16x16x128xf32>,
    %c1_41 = arith.constant 1 : index
    %c1_42 = arith.constant 1 : index
    %c0_43 = arith.constant 0 : index
    %26 = vector.load %arg7[%c1_41, %c1_42, %c0_43] : memref<18x18x128xf32, #tpu.memory_space<vmem>>, vector<16x16x128xf32>
    %c0_44 = arith.constant 0 : index
    %c0_45 = arith.constant 0 : index
    %c512 = arith.constant 512 : index
    %27 = vector.load %arg8[%c0_44, %c0_45, %c512] : memref<16x16x1152xf32, #tpu.memory_space<vmem>>, vector<16x16x128xf32>
    tpu.vector_store %arg8[%c0_44, %c0_45, %c512], %26 {strides = array<i32>} : memref<16x16x1152xf32, #tpu.memory_space<vmem>>, vector<16x16x128xf32>,
    %c1_46 = arith.constant 1 : index
    %c2_47 = arith.constant 2 : index
    %c0_48 = arith.constant 0 : index
    %28 = vector.load %arg7[%c1_46, %c2_47, %c0_48] : memref<18x18x128xf32, #tpu.memory_space<vmem>>, vector<16x16x128xf32>
    %c0_49 = arith.constant 0 : index
    %c0_50 = arith.constant 0 : index
    %c640 = arith.constant 640 : index
    %29 = vector.load %arg8[%c0_49, %c0_50, %c640] : memref<16x16x1152xf32, #tpu.memory_space<vmem>>, vector<16x16x128xf32>
    tpu.vector_store %arg8[%c0_49, %c0_50, %c640], %28 {strides = array<i32>} : memref<16x16x1152xf32, #tpu.memory_space<vmem>>, vector<16x16x128xf32>,
    %c2_51 = arith.constant 2 : index
    %c0_52 = arith.constant 0 : index
    %c0_53 = arith.constant 0 : index
    %30 = vector.load %arg7[%c2_51, %c0_52, %c0_53] : memref<18x18x128xf32, #tpu.memory_space<vmem>>, vector<16x16x128xf32>
    %c0_54 = arith.constant 0 : index
    %c0_55 = arith.constant 0 : index
    %c768 = arith.constant 768 : index
    %31 = vector.load %arg8[%c0_54, %c0_55, %c768] : memref<16x16x1152xf32, #tpu.memory_space<vmem>>, vector<16x16x128xf32>
    tpu.vector_store %arg8[%c0_54, %c0_55, %c768], %30 {strides = array<i32>} : memref<16x16x1152xf32, #tpu.memory_space<vmem>>, vector<16x16x128xf32>,
    %c2_56 = arith.constant 2 : index
    %c1_57 = arith.constant 1 : index
    %c0_58 = arith.constant 0 : index
    %32 = vector.load %arg7[%c2_56, %c1_57, %c0_58] : memref<18x18x128xf32, #tpu.memory_space<vmem>>, vector<16x16x128xf32>
    %c0_59 = arith.constant 0 : index
    %c0_60 = arith.constant 0 : index
    %c896 = arith.constant 896 : index
    %33 = vector.load %arg8[%c0_59, %c0_60, %c896] : memref<16x16x1152xf32, #tpu.memory_space<vmem>>, vector<16x16x128xf32>
    tpu.vector_store %arg8[%c0_59, %c0_60, %c896], %32 {strides = array<i32>} : memref<16x16x1152xf32, #tpu.memory_space<vmem>>, vector<16x16x128xf32>,
    %c2_61 = arith.constant 2 : index
    %c2_62 = arith.constant 2 : index
    %c0_63 = arith.constant 0 : index
    %34 = vector.load %arg7[%c2_61, %c2_62, %c0_63] : memref<18x18x128xf32, #tpu.memory_space<vmem>>, vector<16x16x128xf32>
    %c0_64 = arith.constant 0 : index
    %c0_65 = arith.constant 0 : index
    %c1024 = arith.constant 1024 : index
    %35 = vector.load %arg8[%c0_64, %c0_65, %c1024] : memref<16x16x1152xf32, #tpu.memory_space<vmem>>, vector<16x16x128xf32>
    tpu.vector_store %arg8[%c0_64, %c0_65, %c1024], %34 {strides = array<i32>} : memref<16x16x1152xf32, #tpu.memory_space<vmem>>, vector<16x16x128xf32>,
    %c0_66 = arith.constant 0 : index
    %c0_67 = arith.constant 0 : index
    %c0_68 = arith.constant 0 : index
    %36 = vector.load %arg8[%c0_66, %c0_67, %c0_68] : memref<16x16x1152xf32, #tpu.memory_space<vmem>>, vector<16x16x1152xf32>
    %37 = vector.shape_cast %36 : vector<16x16x1152xf32> to vector<256x1152xf32>
    %c0_69 = arith.constant 0 : index
    %c0_70 = arith.constant 0 : index
    %38 = vector.load %arg2[%c0_69, %c0_70] : memref<1152x128xf32, #tpu.memory_space<vmem>>, vector<1152x128xf32>
    %cst_71 = arith.constant dense<0.000000e+00> : vector<256x128xf32>
    %39 = tpu.matmul %37, %38, %cst_71 {dimension_numbers = #tpu.dot_dimension_numbers<[1], [0], [0], [1], [0, 0, 1, 1], [], []>} : vector<256x1152xf32>, vector<1152x128xf32>, vector<256x128xf32> -> vector<256x128xf32>
    %c0_72 = arith.constant 0 : index
    %c0_73 = arith.constant 0 : index
    %c0_74 = arith.constant 0 : index
    %40 = vector.load %arg5[%c0_72, %c0_73, %c0_74] : memref<1x256x128xf32, #tpu.memory_space<vmem>>, vector<1x256x128xf32>
    %41 = vector.shape_cast %40 : vector<1x256x128xf32> to vector<256x128xf32>
    %42 = vector.shape_cast %39 : vector<256x128xf32> to vector<1x256x128xf32>
    tpu.vector_store %arg5[%c0_72, %c0_73, %c0_74], %42 {strides = array<i32>} : memref<1x256x128xf32, #tpu.memory_space<vmem>>, vector<1x256x128xf32>,
    %cst_75 = arith.constant 0.000000e+00 : f32
    %43 = vector.broadcast %cst_75 : f32 to vector<1x8x128xf32>
    %c0_76 = arith.constant 0 : index
    %c0_77 = arith.constant 0 : index
    %c0_78 = arith.constant 0 : index
    %44 = vector.load %arg6[%c0_76, %c0_77, %c0_78] : memref<1x8x128xf32, #tpu.memory_space<vmem>>, vector<1x8x128xf32>
    tpu.vector_store %arg6[%c0_76, %c0_77, %c0_78], %43 {strides = array<i32>} : memref<1x8x128xf32, #tpu.memory_space<vmem>>, vector<1x8x128xf32>,
    %cst_79 = arith.constant dense<0.000000e+00> : vector<128xf32>
    %45 = vector.multi_reduction <add>, %39, %cst_79 [0] : vector<256x128xf32> to vector<128xf32>
    %46 = vector.shape_cast %45 : vector<128xf32> to vector<1x128xf32>
    %47 = vector.shape_cast %46 : vector<1x128xf32> to vector<1x1x128xf32>
    %c0_80 = arith.constant 0 : index
    %c0_81 = arith.constant 0 : index
    %c0_82 = arith.constant 0 : index
    %48 = vector.load %arg6[%c0_80, %c0_81, %c0_82] : memref<1x8x128xf32, #tpu.memory_space<vmem>>, vector<1x1x128xf32>
    tpu.vector_store %arg6[%c0_80, %c0_81, %c0_82], %47 {strides = array<i32>} : memref<1x8x128xf32, #tpu.memory_space<vmem>>, vector<1x1x128xf32>,
    %49 = arith.mulf %39, %39 : vector<256x128xf32>
    %cst_83 = arith.constant dense<0.000000e+00> : vector<128xf32>
    %50 = vector.multi_reduction <add>, %49, %cst_83 [0] : vector<256x128xf32> to vector<128xf32>
    %51 = vector.shape_cast %50 : vector<128xf32> to vector<1x128xf32>
    %52 = vector.shape_cast %51 : vector<1x128xf32> to vector<1x1x128xf32>
    %c0_84 = arith.constant 0 : index
    %c1_85 = arith.constant 1 : index
    %c0_86 = arith.constant 0 : index
    %53 = vector.load %arg6[%c0_84, %c1_85, %c0_86] : memref<1x8x128xf32, #tpu.memory_space<vmem>>, vector<1x1x128xf32>
    tpu.vector_store %arg6[%c0_84, %c1_85, %c0_86], %52 {strides = array<i32>} : memref<1x8x128xf32, #tpu.memory_space<vmem>>, vector<1x1x128xf32>,
    return
  }
  func.func @transform_0(%arg0: i32) -> (i32, i32, i32) {
    %c0_i32 = arith.constant 0 : i32
    %c0_i32_0 = arith.constant 0 : i32
    %c0_i32_1 = arith.constant 0 : i32
    return %arg0, %c0_i32, %c0_i32_0 : i32, i32, i32
  }
  func.func @transform_1(%arg0: i32) -> (i32, i32) {
    %c0_i32 = arith.constant 0 : i32
    %c0_i32_0 = arith.constant 0 : i32
    %c0_i32_1 = arith.constant 0 : i32
    return %c0_i32, %c0_i32_0 : i32, i32
  }
  func.func @transform_2(%arg0: i32) -> (i32, i32) {
    %c0_i32 = arith.constant 0 : i32
    %c0_i32_0 = arith.constant 0 : i32
    %c0_i32_1 = arith.constant 0 : i32
    return %c0_i32, %c0_i32_0 : i32, i32
  }
  func.func @transform_3(%arg0: i32) -> (i32, i32) {
    %c0_i32 = arith.constant 0 : i32
    %c0_i32_0 = arith.constant 0 : i32
    %c0_i32_1 = arith.constant 0 : i32
    return %c0_i32, %c0_i32_0 : i32, i32
  }
  func.func @transform_4(%arg0: i32) -> (i32, i32, i32) {
    %c0_i32 = arith.constant 0 : i32
    %c0_i32_0 = arith.constant 0 : i32
    %c0_i32_1 = arith.constant 0 : i32
    return %arg0, %c0_i32, %c0_i32_0 : i32, i32, i32
  }
  func.func @transform_5(%arg0: i32) -> (i32, i32, i32) {
    %c0_i32 = arith.constant 0 : i32
    %c0_i32_0 = arith.constant 0 : i32
    %c0_i32_1 = arith.constant 0 : i32
    return %arg0, %c0_i32, %c0_i32_0 : i32, i32, i32
  }
}

</mosaic_0001>

<llo_original>
// kernel: double_conv.5
$region0: #{double_conv.5}
  #allocation0 [shape = 'u32[]', space=smem, size = 0x4, offset = 0x4, fixed_abs, tag = 'smem constant byte address 0x4 - core index']
  #allocation1 [shape = 'u32[72,128]{1,0:T(1,128)}', space=vmem, size = 0x9000, scoped, tag = 'internal scratch']
  %s0 = inlined_call_operand.vmem [shape: f32[2,256,128], index: 0, kind: input, shape index: {}]
  %s1 = inlined_call_operand.vmem [shape: f32[1,128], index: 1, kind: input, shape index: {}]
  %s2 = inlined_call_operand.vmem [shape: f32[1,128], index: 2, kind: input, shape index: {}]
  %s3 = inlined_call_operand.vmem [shape: f32[2,256,128], index: 3, kind: output, shape index: {}]
  %s4 = sld [smem:[#allocation0]]
  $region45: #{double_conv.5} parent=0
    _
  %s6 = ssub.s32 1, %s4
  %s7 = scalar_select 0, %s6, %s4
  loop: start=0, step=1, limit=4
  $region2: #{double_conv.5} parent=0 // loop_pre_header
    _
  $region3: #{double_conv.5} parent=0 // loop_header
    %s9 = sphi 0, %s13
    %p10 = scmp.ge.s32.totalorder %s9, 4
    %s19 = sphi 0, %s21
    %s22 = sphi 0, %s19
    %s23 = sphi 0, %s22
    %s39 = sphi 0, %s23
    %s43 = sphi 0, %s43
    %s45 = sphi 0, %s43
    %s46 = sphi 0, %s45
    %s60 = sphi 0, %s46
    %s64 = sphi 0, %s64
    %s66 = sphi 0, %s64
    %s67 = sphi 0, %s66
    %s81 = sphi 0, %s67
    %s87 = sphi 0, %s89
    %s90 = sphi 0, %s87
    %s91 = sphi 0, %s90
    %s107 = sphi 0, %s91
  $region4: #{double_conv.5} parent=0 // loop_header_branch
    %12 = sbr.rel (%p10) target = $region8
  $region5: #{double_conv.5} parent=0 // loop_body
    %s14 = ssub.s32 %s9, 1
    %s15 = ssub.s32 %s9, 2
    %s16 = sadd.s32 %s9, 1
    %s17 = ssub.s32 %s9, %s16
    %p18 = scmp.eq.s32.totalorder %s17, 0
    %s20 = sadd.s32 %s19, 1
    %s21 = scalar_select %p18, %s19, %s20
    %p24 = pneg %p18
    %p25 = scmp.eq.s32.totalorder %s9, 1
    %p26 = por %p24, %p25
    %p27 = scmp.ne.s32.totalorder %s19, %s22
    %p28 = scmp.eq.s32.totalorder %s9, 0
    %p29 = por %p27, %p28
    %p30 = scmp.ne.s32.totalorder %s19, %s22
    %p31 = scmp.eq.s32.totalorder %s14, 1
    %p32 = por %p30, %p31
    %p33 = scmp.ne.s32.totalorder %s22, %s23
    %p34 = scmp.eq.s32.totalorder %s14, 0
    %p35 = por %p33, %p34
    %p36 = scmp.ne.s32.totalorder %s22, %s23
    %p37 = scmp.eq.s32.totalorder %s15, 1
    %p38 = por %p36, %p37
    %p40 = scmp.ne.s32.totalorder %s23, %s39
    %p41 = scmp.eq.s32.totalorder %s15, 0
    %p42 = por %p40, %p41
    %s44 = sadd.s32 %s43, 1
    %p47 = scmp.eq.s32.totalorder %s9, 1
    %p48 = scmp.ne.s32.totalorder %s43, %s45
    %p49 = scmp.eq.s32.totalorder %s9, 0
    %p50 = por %p48, %p49
    %p51 = scmp.ne.s32.totalorder %s43, %s45
    %p52 = scmp.eq.s32.totalorder %s14, 1
    %p53 = por %p51, %p52
    %p54 = scmp.ne.s32.totalorder %s45, %s46
    %p55 = scmp.eq.s32.totalorder %s14, 0
    %p56 = por %p54, %p55
    %p57 = scmp.ne.s32.totalorder %s45, %s46
    %p58 = scmp.eq.s32.totalorder %s15, 1
    %p59 = por %p57, %p58
    %p61 = scmp.ne.s32.totalorder %s46, %s60
    %p62 = scmp.eq.s32.totalorder %s15, 0
    %p63 = por %p61, %p62
    %s65 = sadd.s32 %s64, 1
    %p68 = scmp.eq.s32.totalorder %s9, 1
    %p69 = scmp.ne.s32.totalorder %s64, %s66
    %p70 = scmp.eq.s32.totalorder %s9, 0
    %p71 = por %p69, %p70
    %p72 = scmp.ne.s32.totalorder %s64, %s66
    %p73 = scmp.eq.s32.totalorder %s14, 1
    %p74 = por %p72, %p73
    %p75 = scmp.ne.s32.totalorder %s66, %s67
    %p76 = scmp.eq.s32.totalorder %s14, 0
    %p77 = por %p75, %p76
    %p78 = scmp.ne.s32.totalorder %s66, %s67
    %p79 = scmp.eq.s32.totalorder %s15, 1
    %p80 = por %p78, %p79
    %p82 = scmp.ne.s32.totalorder %s67, %s81
    %p83 = scmp.eq.s32.totalorder %s15, 0
    %p84 = por %p82, %p83
    %s85 = ssub.s32 %s9, %s16
    %p86 = scmp.eq.s32.totalorder %s85, 0
    %s88 = sadd.s32 %s87, 1
    %s89 = scalar_select %p86, %s87, %s88
    %p92 = pneg %p86
    %p93 = scmp.eq.s32.totalorder %s9, 1
    %p94 = por %p92, %p93
    %p95 = scmp.ne.s32.totalorder %s87, %s90
    %p96 = scmp.eq.s32.totalorder %s9, 0
    %p97 = por %p95, %p96
    %p98 = scmp.ne.s32.totalorder %s87, %s90
    %p99 = scmp.eq.s32.totalorder %s14, 1
    %p100 = por %p98, %p99
    %p101 = scmp.ne.s32.totalorder %s90, %s91
    %p102 = scmp.eq.s32.totalorder %s14, 0
    %p103 = por %p101, %p102
    %p104 = scmp.ne.s32.totalorder %s90, %s91
    %p105 = scmp.eq.s32.totalorder %s15, 1
    %p106 = por %p104, %p105
    %p108 = scmp.ne.s32.totalorder %s91, %s107
    %p109 = scmp.eq.s32.totalorder %s15, 0
    %p110 = por %p108, %p109
    %p111 = scmp.le.s32.totalorder 1, %s9
    %p112 = scmp.lt.s32.totalorder %s9, 3
    %p113 = pnand %p111, %p112
    %p114 = pneg %p113
    // Predicated region
    $region9: #{double_conv.5} parent=5 // pred_check
      _
    $region10: #{double_conv.5} parent=5 // pred_check_branch
      %116 = sbr.rel (%p113) target = $region12
    $region11: #{double_conv.5} parent=5 // pred_region
      %s117 = ssub.s32 %s9, 1
      // Predicated region
      $region13: #{double_conv.5} parent=11 // pred_check
        %p118 = pneg %p56
      $region14: #{double_conv.5} parent=11 // pred_check_branch
        %120 = sbr.rel (%p118) target = $region16
      $region15: #{double_conv.5} parent=11 // pred_region
        _
      $region16: #{double_conv.5} parent=11 // pred_fallthru
        _
      // Predicated region
      $region17: #{double_conv.5} parent=11 // pred_check
        %p121 = pneg %p77
      $region18: #{double_conv.5} parent=11 // pred_check_branch
        %123 = sbr.rel (%p121) target = $region20
      $region19: #{double_conv.5} parent=11 // pred_region
        _
      $region20: #{double_conv.5} parent=11 // pred_fallthru
        _
    $region12: #{double_conv.5} parent=5 // pred_fallthru
      _
    %p124 = scmp.lt.s32.totalorder %s9, 2
    // Predicated region
    $region21: #{double_conv.5} parent=5 // pred_check
      %p125 = pneg %p124
    $region22: #{double_conv.5} parent=5 // pred_check_branch
      %127 = sbr.rel (%p125) target = $region24
    $region23: #{double_conv.5} parent=5 // pred_region
      // Predicated region
      $region25: #{double_conv.5} parent=23 // pred_check
        %p128 = pneg %p29
      $region26: #{double_conv.5} parent=23 // pred_check_branch
        %130 = sbr.rel (%p128) target = $region28
      $region27: #{double_conv.5} parent=23 // pred_region
        %p131 = scmp.lt.s32.totalorder %s9, 1
        %s132 = scalar_select %p131, %s9, 1
        %s133 = smul.addr %s132, 32
        %s134 = smul.addr %s133, 8
        %s135 = scalar_lea.vmem %s0, %s134
      $region28: #{double_conv.5} parent=23 // pred_fallthru
        _
    $region24: #{double_conv.5} parent=5 // pred_fallthru
      _
    %p136 = scmp.le.s32.totalorder 1, %s9
    %p137 = scmp.lt.s32.totalorder %s9, 3
    %p138 = pnand %p136, %p137
    %p139 = pneg %p138
    // Predicated region
    $region29: #{double_conv.5} parent=5 // pred_check
      _
    $region30: #{double_conv.5} parent=5 // pred_check_branch
      %141 = sbr.rel (%p138) target = $region32
    $region31: #{double_conv.5} parent=5 // pred_region
      %s142 = ssub.s32 %s9, 1
      %p143 = scmp.lt.s32.totalorder %s14, 1
      %s144 = scalar_select %p143, %s14, 1
      %s145 = smul.addr %s144, 32
      %s146 = smul.addr %s145, 8
      %s147 = scalar_lea.vmem %s0, %s146
      %p148 = pneg %p35
      %p149 = pneg %p32
      %p150 = pneg %p56
      %p151 = pneg %p53
      %p152 = pneg %p77
      %p153 = pneg %p74
      %p154 = pneg %p103
      %p155 = pneg %p100
      %p156 = scmp.lt.s32.totalorder %s14, 1
      %s157 = scalar_select %p156, %s14, 1
      %s158 = smul.addr %s157, 32
      %s159 = smul.addr %s158, 8
      %s160 = scalar_lea.vmem %s3, %s159
      %p161 = scmp.lt.s32.totalorder %s14, 1
      %s162 = scalar_select %p161, %s14, 1
      %s163 = smul.addr %s162, 32
      %s164 = smul.addr %s163, 8
      %s165 = scalar_lea.vmem %s0, %s164
      %p166 = scmp.lt.s32.totalorder %s14, 1
      %s167 = scalar_select %p166, %s14, 1
      %s168 = smul.addr %s167, 32
      %s169 = smul.addr %s168, 8
      %s170 = scalar_lea.vmem %s3, %s169
      %v171 = vld [vmem:[%s165] sm:$0xff]
      %v172 = vld [vmem:[%s165 + $0x8] sm:$0xff]
      %v173 = vld [vmem:[%s165 + $0x10] sm:$0xff]
      %v174 = vld [vmem:[%s165 + $0x18] sm:$0xff]
      %v175 = vld [vmem:[%s165 + $0x20] sm:$0xff]
      %v176 = vld [vmem:[%s165 + $0x28] sm:$0xff]
      %v177 = vld [vmem:[%s165 + $0x30] sm:$0xff]
      %v178 = vld [vmem:[%s165 + $0x38] sm:$0xff]
      %v179 = vld [vmem:[%s165 + $0x40] sm:$0xff]
      %v180 = vld [vmem:[%s165 + $0x48] sm:$0xff]
      %v181 = vld [vmem:[%s165 + $0x50] sm:$0xff]
      %v182 = vld [vmem:[%s165 + $0x58] sm:$0xff]
      %v183 = vld [vmem:[%s165 + $0x60] sm:$0xff]
      %v184 = vld [vmem:[%s165 + $0x68] sm:$0xff]
      %v185 = vld [vmem:[%s165 + $0x70] sm:$0xff]
      %v186 = vld [vmem:[%s165 + $0x78] sm:$0xff]
      %v187 = vld [vmem:[%s165 + $0x80] sm:$0xff]
      %v188 = vld [vmem:[%s165 + $0x88] sm:$0xff]
      %v189 = vld [vmem:[%s165 + $0x90] sm:$0xff]
      %v190 = vld [vmem:[%s165 + $0x98] sm:$0xff]
      %v191 = vld [vmem:[%s165 + $0xa0] sm:$0xff]
      %v192 = vld [vmem:[%s165 + $0xa8] sm:$0xff]
      %v193 = vld [vmem:[%s165 + $0xb0] sm:$0xff]
      %v194 = vld [vmem:[%s165 + $0xb8] sm:$0xff]
      %v195 = vld [vmem:[%s165 + $0xc0] sm:$0xff]
      %v196 = vld [vmem:[%s165 + $0xc8] sm:$0xff]
      %v197 = vld [vmem:[%s165 + $0xd0] sm:$0xff]
      %v198 = vld [vmem:[%s165 + $0xd8] sm:$0xff]
      %v199 = vld [vmem:[%s165 + $0xe0] sm:$0xff]
      %v200 = vld [vmem:[%s165 + $0xe8] sm:$0xff]
      %v201 = vld [vmem:[%s165 + $0xf0] sm:$0xff]
      %v202 = vld [vmem:[%s165 + $0xf8] sm:$0xff]
      %v203 = vld [vmem:[%s1] sm:$0x1]
      %v205 = vperm.slane %v203, 0
      %v207 = vmul.f32 %v171, %v205
      %v208 = vmul.f32 %v172, %v205
      %v209 = vmul.f32 %v173, %v205
      %v210 = vmul.f32 %v174, %v205
      %v211 = vmul.f32 %v175, %v205
      %v212 = vmul.f32 %v176, %v205
      %v213 = vmul.f32 %v177, %v205
      %v214 = vmul.f32 %v178, %v205
      %v215 = vmul.f32 %v179, %v205
      %v216 = vmul.f32 %v180, %v205
      %v217 = vmul.f32 %v181, %v205
      %v218 = vmul.f32 %v182, %v205
      %v219 = vmul.f32 %v183, %v205
      %v220 = vmul.f32 %v184, %v205
      %v221 = vmul.f32 %v185, %v205
      %v222 = vmul.f32 %v186, %v205
      %v223 = vmul.f32 %v187, %v205
      %v224 = vmul.f32 %v188, %v205
      %v225 = vmul.f32 %v189, %v205
      %v226 = vmul.f32 %v190, %v205
      %v227 = vmul.f32 %v191, %v205
      %v228 = vmul.f32 %v192, %v205
      %v229 = vmul.f32 %v193, %v205
      %v230 = vmul.f32 %v194, %v205
      %v231 = vmul.f32 %v195, %v205
      %v232 = vmul.f32 %v196, %v205
      %v233 = vmul.f32 %v197, %v205
      %v234 = vmul.f32 %v198, %v205
      %v235 = vmul.f32 %v199, %v205
      %v236 = vmul.f32 %v200, %v205
      %v237 = vmul.f32 %v201, %v205
      %v238 = vmul.f32 %v202, %v205
      %v239 = vld [vmem:[%s2] sm:$0x1]
      %v241 = vperm.slane %v239, 0
      %v243 = vadd.f32 %v207, %v241
      %v244 = vadd.f32 %v208, %v241
      %v245 = vadd.f32 %v209, %v241
      %v246 = vadd.f32 %v210, %v241
      %v247 = vadd.f32 %v211, %v241
      %v248 = vadd.f32 %v212, %v241
      %v249 = vadd.f32 %v213, %v241
      %v250 = vadd.f32 %v214, %v241
      %v251 = vadd.f32 %v215, %v241
      %v252 = vadd.f32 %v216, %v241
      %v253 = vadd.f32 %v217, %v241
      %v254 = vadd.f32 %v218, %v241
      %v255 = vadd.f32 %v219, %v241
      %v256 = vadd.f32 %v220, %v241
      %v257 = vadd.f32 %v221, %v241
      %v258 = vadd.f32 %v222, %v241
      %v259 = vadd.f32 %v223, %v241
      %v260 = vadd.f32 %v224, %v241
      %v261 = vadd.f32 %v225, %v241
      %v262 = vadd.f32 %v226, %v241
      %v263 = vadd.f32 %v227, %v241
      %v264 = vadd.f32 %v228, %v241
      %v265 = vadd.f32 %v229, %v241
      %v266 = vadd.f32 %v230, %v241
      %v267 = vadd.f32 %v231, %v241
      %v268 = vadd.f32 %v232, %v241
      %v269 = vadd.f32 %v233, %v241
      %v270 = vadd.f32 %v234, %v241
      %v271 = vadd.f32 %v235, %v241
      %v272 = vadd.f32 %v236, %v241
      %v273 = vadd.f32 %v237, %v241
      %v274 = vadd.f32 %v238, %v241
      %v275 = vmax.f32 %v243, 0.0
      %v276 = vmax.f32 %v244, 0.0
      %v277 = vmax.f32 %v245, 0.0
      %v278 = vmax.f32 %v246, 0.0
      %v279 = vmax.f32 %v247, 0.0
      %v280 = vmax.f32 %v248, 0.0
      %v281 = vmax.f32 %v249, 0.0
      %v282 = vmax.f32 %v250, 0.0
      %v283 = vmax.f32 %v251, 0.0
      %v284 = vmax.f32 %v252, 0.0
      %v285 = vmax.f32 %v253, 0.0
      %v286 = vmax.f32 %v254, 0.0
      %v287 = vmax.f32 %v255, 0.0
      %v288 = vmax.f32 %v256, 0.0
      %v289 = vmax.f32 %v257, 0.0
      %v290 = vmax.f32 %v258, 0.0
      %v291 = vmax.f32 %v259, 0.0
      %v292 = vmax.f32 %v260, 0.0
      %v293 = vmax.f32 %v261, 0.0
      %v294 = vmax.f32 %v262, 0.0
      %v295 = vmax.f32 %v263, 0.0
      %v296 = vmax.f32 %v264, 0.0
      %v297 = vmax.f32 %v265, 0.0
      %v298 = vmax.f32 %v266, 0.0
      %v299 = vmax.f32 %v267, 0.0
      %v300 = vmax.f32 %v268, 0.0
      %v301 = vmax.f32 %v269, 0.0
      %v302 = vmax.f32 %v270, 0.0
      %v303 = vmax.f32 %v271, 0.0
      %v304 = vmax.f32 %v272, 0.0
      %v305 = vmax.f32 %v273, 0.0
      %v306 = vmax.f32 %v274, 0.0
      %307 = vst [vmem:[%s170] sm:$0xff] %v275
      %308 = vst [vmem:[%s170 + $0x8] sm:$0xff] %v276
      %309 = vst [vmem:[%s170 + $0x10] sm:$0xff] %v277
      %310 = vst [vmem:[%s170 + $0x18] sm:$0xff] %v278
      %311 = vst [vmem:[%s170 + $0x20] sm:$0xff] %v279
      %312 = vst [vmem:[%s170 + $0x28] sm:$0xff] %v280
      %313 = vst [vmem:[%s170 + $0x30] sm:$0xff] %v281
      %314 = vst [vmem:[%s170 + $0x38] sm:$0xff] %v282
      %315 = vst [vmem:[%s170 + $0x40] sm:$0xff] %v283
      %316 = vst [vmem:[%s170 + $0x48] sm:$0xff] %v284
      %317 = vst [vmem:[%s170 + $0x50] sm:$0xff] %v285
      %318 = vst [vmem:[%s170 + $0x58] sm:$0xff] %v286
      %319 = vst [vmem:[%s170 + $0x60] sm:$0xff] %v287
      %320 = vst [vmem:[%s170 + $0x68] sm:$0xff] %v288
      %321 = vst [vmem:[%s170 + $0x70] sm:$0xff] %v289
      %322 = vst [vmem:[%s170 + $0x78] sm:$0xff] %v290
      %323 = vst [vmem:[%s170 + $0x80] sm:$0xff] %v291
      %324 = vst [vmem:[%s170 + $0x88] sm:$0xff] %v292
      %325 = vst [vmem:[%s170 + $0x90] sm:$0xff] %v293
      %326 = vst [vmem:[%s170 + $0x98] sm:$0xff] %v294
      %327 = vst [vmem:[%s170 + $0xa0] sm:$0xff] %v295
      %328 = vst [vmem:[%s170 + $0xa8] sm:$0xff] %v296
      %329 = vst [vmem:[%s170 + $0xb0] sm:$0xff] %v297
      %330 = vst [vmem:[%s170 + $0xb8] sm:$0xff] %v298
      %331 = vst [vmem:[%s170 + $0xc0] sm:$0xff] %v299
      %332 = vst [vmem:[%s170 + $0xc8] sm:$0xff] %v300
      %333 = vst [vmem:[%s170 + $0xd0] sm:$0xff] %v301
      %334 = vst [vmem:[%s170 + $0xd8] sm:$0xff] %v302
      %335 = vst [vmem:[%s170 + $0xe0] sm:$0xff] %v303
      %336 = vst [vmem:[%s170 + $0xe8] sm:$0xff] %v304
      %337 = vst [vmem:[%s170 + $0xf0] sm:$0xff] %v305
      %338 = vst [vmem:[%s170 + $0xf8] sm:$0xff] %v306
      %p339 = scmp.lt.s32.totalorder %s14, 1
      %s340 = scalar_select %p339, %s14, 1
      %s341 = smul.addr %s340, 32
      %s342 = smul.addr %s341, 8
      %s343 = scalar_lea.vmem %s3, %s342
      // Predicated region
      $region33: #{double_conv.5} parent=31 // pred_check
        %p344 = pneg %p100
      $region34: #{double_conv.5} parent=31 // pred_check_branch
        %346 = sbr.rel (%p344) target = $region36
      $region35: #{double_conv.5} parent=31 // pred_region
        _
      $region36: #{double_conv.5} parent=31 // pred_fallthru
        _
    $region32: #{double_conv.5} parent=5 // pred_fallthru
      _
    %p347 = scmp.le.s32.totalorder 2, %s9
    // Predicated region
    $region37: #{double_conv.5} parent=5 // pred_check
      %p348 = pneg %p347
    $region38: #{double_conv.5} parent=5 // pred_check_branch
      %350 = sbr.rel (%p348) target = $region40
    $region39: #{double_conv.5} parent=5 // pred_region
      %s351 = ssub.s32 %s9, 2
      // Predicated region
      $region41: #{double_conv.5} parent=39 // pred_check
        %p352 = pneg %p106
      $region42: #{double_conv.5} parent=39 // pred_check_branch
        %354 = sbr.rel (%p352) target = $region44
      $region43: #{double_conv.5} parent=39 // pred_region
        %p355 = scmp.lt.s32.totalorder %s15, 1
        %s356 = scalar_select %p355, %s15, 1
        %s357 = smul.addr %s356, 32
        %s358 = smul.addr %s357, 8
        %s359 = scalar_lea.vmem %s3, %s358
      $region44: #{double_conv.5} parent=39 // pred_fallthru
        _
    $region40: #{double_conv.5} parent=5 // pred_fallthru
      _
  $region6: #{double_conv.5} parent=0 // loop_footer
    %s13 = sadd.s32 1, %s9
  $region7: #{double_conv.5} parent=0 // loop_footer_branch
    %8 = sbr.rel target = $region3
  $region8: #{double_conv.5} parent=0 // loop_exit
    _

// kernel: double_conv.4
$region0: #{double_conv.4}
  #allocation0 [shape = 'u32[]', space=smem, size = 0x4, offset = 0x4, fixed_abs, tag = 'smem constant byte address 0x4 - core index']
  #allocation1 [shape = 'u32[72,128]{1,0:T(1,128)}', space=vmem, size = 0x9000, scoped, tag = 'internal scratch']
  #allocation2 [shape = 'f32[18,18,128]{2,1,0:T(8,128)}', space=vmem, size = 0x36000, scoped, tag = 'scratch operand']
  #allocation3 [shape = 'f32[16,16,1152]{2,1,0:T(8,128)}', space=vmem, size = 0x120000, scoped, tag = 'scratch operand']
  %s0 = inlined_call_operand.vmem [shape: f32[2,256,128], index: 0, kind: input, shape index: {}]
  %s1 = inlined_call_operand.vmem [shape: f32[1152,128], index: 1, kind: input, shape index: {}]
  %s2 = inlined_call_operand.vmem [shape: f32[1,128], index: 2, kind: input, shape index: {}]
  %s3 = inlined_call_operand.vmem [shape: f32[1,128], index: 3, kind: input, shape index: {}]
  %s4 = inlined_call_operand.vmem [shape: f32[2,256,128], index: 4, kind: output, shape index: {0}]
  %s5 = inlined_call_operand.vmem [shape: f32[2,8,128], index: 5, kind: output, shape index: {1}]
  %6 = xla_tuple %s4, %s5
  %s7 = sld [smem:[#allocation0]]
  $region57: #{double_conv.4} parent=0
    _
  %s9 = ssub.s32 1, %s7
  %s10 = scalar_select 0, %s9, %s7
  loop: start=0, step=1, limit=4
  $region2: #{double_conv.4} parent=0 // loop_pre_header
    _
  $region3: #{double_conv.4} parent=0 // loop_header
    %s12 = sphi 0, %s16
    %p13 = scmp.ge.s32.totalorder %s12, 4
    %s22 = sphi 0, %s24
    %s25 = sphi 0, %s22
    %s26 = sphi 0, %s25
    %s42 = sphi 0, %s26
    %s46 = sphi 0, %s46
    %s48 = sphi 0, %s46
    %s49 = sphi 0, %s48
    %s63 = sphi 0, %s49
    %s67 = sphi 0, %s67
    %s69 = sphi 0, %s67
    %s70 = sphi 0, %s69
    %s84 = sphi 0, %s70
    %s88 = sphi 0, %s88
    %s90 = sphi 0, %s88
    %s91 = sphi 0, %s90
    %s105 = sphi 0, %s91
    %s111 = sphi 0, %s113
    %s114 = sphi 0, %s111
    %s115 = sphi 0, %s114
    %s131 = sphi 0, %s115
    %s137 = sphi 0, %s139
    %s140 = sphi 0, %s137
    %s141 = sphi 0, %s140
    %s157 = sphi 0, %s141
  $region4: #{double_conv.4} parent=0 // loop_header_branch
    %15 = sbr.rel (%p13) target = $region8
  $region5: #{double_conv.4} parent=0 // loop_body
    %s17 = ssub.s32 %s12, 1
    %s18 = ssub.s32 %s12, 2
    %s19 = sadd.s32 %s12, 1
    %s20 = ssub.s32 %s12, %s19
    %p21 = scmp.eq.s32.totalorder %s20, 0
    %s23 = sadd.s32 %s22, 1
    %s24 = scalar_select %p21, %s22, %s23
    %p27 = pneg %p21
    %p28 = scmp.eq.s32.totalorder %s12, 1
    %p29 = por %p27, %p28
    %p30 = scmp.ne.s32.totalorder %s22, %s25
    %p31 = scmp.eq.s32.totalorder %s12, 0
    %p32 = por %p30, %p31
    %p33 = scmp.ne.s32.totalorder %s22, %s25
    %p34 = scmp.eq.s32.totalorder %s17, 1
    %p35 = por %p33, %p34
    %p36 = scmp.ne.s32.totalorder %s25, %s26
    %p37 = scmp.eq.s32.totalorder %s17, 0
    %p38 = por %p36, %p37
    %p39 = scmp.ne.s32.totalorder %s25, %s26
    %p40 = scmp.eq.s32.totalorder %s18, 1
    %p41 = por %p39, %p40
    %p43 = scmp.ne.s32.totalorder %s26, %s42
    %p44 = scmp.eq.s32.totalorder %s18, 0
    %p45 = por %p43, %p44
    %s47 = sadd.s32 %s46, 1
    %p50 = scmp.eq.s32.totalorder %s12, 1
    %p51 = scmp.ne.s32.totalorder %s46, %s48
    %p52 = scmp.eq.s32.totalorder %s12, 0
    %p53 = por %p51, %p52
    %p54 = scmp.ne.s32.totalorder %s46, %s48
    %p55 = scmp.eq.s32.totalorder %s17, 1
    %p56 = por %p54, %p55
    %p57 = scmp.ne.s32.totalorder %s48, %s49
    %p58 = scmp.eq.s32.totalorder %s17, 0
    %p59 = por %p57, %p58
    %p60 = scmp.ne.s32.totalorder %s48, %s49
    %p61 = scmp.eq.s32.totalorder %s18, 1
    %p62 = por %p60, %p61
    %p64 = scmp.ne.s32.totalorder %s49, %s63
    %p65 = scmp.eq.s32.totalorder %s18, 0
    %p66 = por %p64, %p65
    %s68 = sadd.s32 %s67, 1
    %p71 = scmp.eq.s32.totalorder %s12, 1
    %p72 = scmp.ne.s32.totalorder %s67, %s69
    %p73 = scmp.eq.s32.totalorder %s12, 0
    %p74 = por %p72, %p73
    %p75 = scmp.ne.s32.totalorder %s67, %s69
    %p76 = scmp.eq.s32.totalorder %s17, 1
    %p77 = por %p75, %p76
    %p78 = scmp.ne.s32.totalorder %s69, %s70
    %p79 = scmp.eq.s32.totalorder %s17, 0
    %p80 = por %p78, %p79
    %p81 = scmp.ne.s32.totalorder %s69, %s70
    %p82 = scmp.eq.s32.totalorder %s18, 1
    %p83 = por %p81, %p82
    %p85 = scmp.ne.s32.totalorder %s70, %s84
    %p86 = scmp.eq.s32.totalorder %s18, 0
    %p87 = por %p85, %p86
    %s89 = sadd.s32 %s88, 1
    %p92 = scmp.eq.s32.totalorder %s12, 1
    %p93 = scmp.ne.s32.totalorder %s88, %s90
    %p94 = scmp.eq.s32.totalorder %s12, 0
    %p95 = por %p93, %p94
    %p96 = scmp.ne.s32.totalorder %s88, %s90
    %p97 = scmp.eq.s32.totalorder %s17, 1
    %p98 = por %p96, %p97
    %p99 = scmp.ne.s32.totalorder %s90, %s91
    %p100 = scmp.eq.s32.totalorder %s17, 0
    %p101 = por %p99, %p100
    %p102 = scmp.ne.s32.totalorder %s90, %s91
    %p103 = scmp.eq.s32.totalorder %s18, 1
    %p104 = por %p102, %p103
    %p106 = scmp.ne.s32.totalorder %s91, %s105
    %p107 = scmp.eq.s32.totalorder %s18, 0
    %p108 = por %p106, %p107
    %s109 = ssub.s32 %s12, %s19
    %p110 = scmp.eq.s32.totalorder %s109, 0
    %s112 = sadd.s32 %s111, 1
    %s113 = scalar_select %p110, %s111, %s112
    %p116 = pneg %p110
    %p117 = scmp.eq.s32.totalorder %s12, 1
    %p118 = por %p116, %p117
    %p119 = scmp.ne.s32.totalorder %s111, %s114
    %p120 = scmp.eq.s32.totalorder %s12, 0
    %p121 = por %p119, %p120
    %p122 = scmp.ne.s32.totalorder %s111, %s114
    %p123 = scmp.eq.s32.totalorder %s17, 1
    %p124 = por %p122, %p123
    %p125 = scmp.ne.s32.totalorder %s114, %s115
    %p126 = scmp.eq.s32.totalorder %s17, 0
    %p127 = por %p125, %p126
    %p128 = scmp.ne.s32.totalorder %s114, %s115
    %p129 = scmp.eq.s32.totalorder %s18, 1
    %p130 = por %p128, %p129
    %p132 = scmp.ne.s32.totalorder %s115, %s131
    %p133 = scmp.eq.s32.totalorder %s18, 0
    %p134 = por %p132, %p133
    %s135 = ssub.s32 %s12, %s19
    %p136 = scmp.eq.s32.totalorder %s135, 0
    %s138 = sadd.s32 %s137, 1
    %s139 = scalar_select %p136, %s137, %s138
    %p142 = pneg %p136
    %p143 = scmp.eq.s32.totalorder %s12, 1
    %p144 = por %p142, %p143
    %p145 = scmp.ne.s32.totalorder %s137, %s140
    %p146 = scmp.eq.s32.totalorder %s12, 0
    %p147 = por %p145, %p146
    %p148 = scmp.ne.s32.totalorder %s137, %s140
    %p149 = scmp.eq.s32.totalorder %s17, 1
    %p150 = por %p148, %p149
    %p151 = scmp.ne.s32.totalorder %s140, %s141
    %p152 = scmp.eq.s32.totalorder %s17, 0
    %p153 = por %p151, %p152
    %p154 = scmp.ne.s32.totalorder %s140, %s141
    %p155 = scmp.eq.s32.totalorder %s18, 1
    %p156 = por %p154, %p155
    %p158 = scmp.ne.s32.totalorder %s141, %s157
    %p159 = scmp.eq.s32.totalorder %s18, 0
    %p160 = por %p158, %p159
    %p161 = scmp.le.s32.totalorder 1, %s12
    %p162 = scmp.lt.s32.totalorder %s12, 3
    %p163 = pnand %p161, %p162
    %p164 = pneg %p163
    // Predicated region
    $region9: #{double_conv.4} parent=5 // pred_check
      _
    $region10: #{double_conv.4} parent=5 // pred_check_branch
      %166 = sbr.rel (%p163) target = $region12
    $region11: #{double_conv.4} parent=5 // pred_region
      %s167 = ssub.s32 %s12, 1
      // Predicated region
      $region13: #{double_conv.4} parent=11 // pred_check
        %p168 = pneg %p59
      $region14: #{double_conv.4} parent=11 // pred_check_branch
        %170 = sbr.rel (%p168) target = $region16
      $region15: #{double_conv.4} parent=11 // pred_region
        _
      $region16: #{double_conv.4} parent=11 // pred_fallthru
        _
      // Predicated region
      $region17: #{double_conv.4} parent=11 // pred_check
        %p171 = pneg %p80
      $region18: #{double_conv.4} parent=11 // pred_check_branch
        %173 = sbr.rel (%p171) target = $region20
      $region19: #{double_conv.4} parent=11 // pred_region
        _
      $region20: #{double_conv.4} parent=11 // pred_fallthru
        _
      // Predicated region
      $region21: #{double_conv.4} parent=11 // pred_check
        %p174 = pneg %p101
      $region22: #{double_conv.4} parent=11 // pred_check_branch
        %176 = sbr.rel (%p174) target = $region24
      $region23: #{double_conv.4} parent=11 // pred_region
        _
      $region24: #{double_conv.4} parent=11 // pred_fallthru
        _
    $region12: #{double_conv.4} parent=5 // pred_fallthru
      _
    %p177 = scmp.lt.s32.totalorder %s12, 2
    // Predicated region
    $region25: #{double_conv.4} parent=5 // pred_check
      %p178 = pneg %p177
    $region26: #{double_conv.4} parent=5 // pred_check_branch
      %180 = sbr.rel (%p178) target = $region28
    $region27: #{double_conv.4} parent=5 // pred_region
      // Predicated region
      $region29: #{double_conv.4} parent=27 // pred_check
        %p181 = pneg %p32
      $region30: #{double_conv.4} parent=27 // pred_check_branch
        %183 = sbr.rel (%p181) target = $region32
      $region31: #{double_conv.4} parent=27 // pred_region
        %p184 = scmp.lt.s32.totalorder %s12, 1
        %s185 = scalar_select %p184, %s12, 1
        %s186 = smul.addr %s185, 32
        %s187 = smul.addr %s186, 8
        %s188 = scalar_lea.vmem %s0, %s187
      $region32: #{double_conv.4} parent=27 // pred_fallthru
        _
    $region28: #{double_conv.4} parent=5 // pred_fallthru
      _
    %p189 = scmp.le.s32.totalorder 1, %s12
    %p190 = scmp.lt.s32.totalorder %s12, 3
    %p191 = pnand %p189, %p190
    %p192 = pneg %p191
    // Predicated region
    $region33: #{double_conv.4} parent=5 // pred_check
      _
    $region34: #{double_conv.4} parent=5 // pred_check_branch
      %194 = sbr.rel (%p191) target = $region36
    $region35: #{double_conv.4} parent=5 // pred_region
      %s195 = ssub.s32 %s12, 1
      %p196 = scmp.lt.s32.totalorder %s17, 1
      %s197 = scalar_select %p196, %s17, 1
      %s198 = smul.addr %s197, 32
      %s199 = smul.addr %s198, 8
      %s200 = scalar_lea.vmem %s0, %s199
      %p201 = pneg %p38
      %p202 = pneg %p35
      %p203 = pneg %p59
      %p204 = pneg %p56
      %p205 = pneg %p80
      %p206 = pneg %p77
      %p207 = pneg %p101
      %p208 = pneg %p98
      %p209 = pneg %p127
      %p210 = pneg %p124
      %p211 = scmp.lt.s32.totalorder %s17, 1
      %s212 = scalar_select %p211, %s17, 1
      %s213 = smul.addr %s212, 32
      %s214 = smul.addr %s213, 8
      %s215 = scalar_lea.vmem %s4, %s214
      %p216 = pneg %p153
      %p217 = pneg %p150
      %p218 = scmp.lt.s32.totalorder %s17, 1
      %s219 = scalar_select %p218, %s17, 1
      %s220 = smul.addr %s219, 8
      %s221 = scalar_lea.vmem %s5, %s220
      %p222 = scmp.lt.s32.totalorder %s17, 1
      %s223 = scalar_select %p222, %s17, 1
      %s224 = smul.addr %s223, 32
      %s225 = smul.addr %s224, 8
      %s226 = scalar_lea.vmem %s0, %s225
      %p227 = scmp.lt.s32.totalorder %s17, 1
      %s228 = scalar_select %p227, %s17, 1
      %s229 = smul.addr %s228, 32
      %s230 = smul.addr %s229, 8
      %s231 = scalar_lea.vmem %s4, %s230
      %p232 = scmp.lt.s32.totalorder %s17, 1
      %s233 = scalar_select %p232, %s17, 1
      %s234 = smul.addr %s233, 8
      %s235 = scalar_lea.vmem %s5, %s234
      %v236 = vld [vmem:[%s226] sm:$0xff]
      %v237 = vld [vmem:[%s226 + $0x8] sm:$0xff]
      %v238 = vld [vmem:[%s226 + $0x10] sm:$0xff]
      %v239 = vld [vmem:[%s226 + $0x18] sm:$0xff]
      %v240 = vld [vmem:[%s226 + $0x20] sm:$0xff]
      %v241 = vld [vmem:[%s226 + $0x28] sm:$0xff]
      %v242 = vld [vmem:[%s226 + $0x30] sm:$0xff]
      %v243 = vld [vmem:[%s226 + $0x38] sm:$0xff]
      %v244 = vld [vmem:[%s226 + $0x40] sm:$0xff]
      %v245 = vld [vmem:[%s226 + $0x48] sm:$0xff]
      %v246 = vld [vmem:[%s226 + $0x50] sm:$0xff]
      %v247 = vld [vmem:[%s226 + $0x58] sm:$0xff]
      %v248 = vld [vmem:[%s226 + $0x60] sm:$0xff]
      %v249 = vld [vmem:[%s226 + $0x68] sm:$0xff]
      %v250 = vld [vmem:[%s226 + $0x70] sm:$0xff]
      %v251 = vld [vmem:[%s226 + $0x78] sm:$0xff]
      %v252 = vld [vmem:[%s226 + $0x80] sm:$0xff]
      %v253 = vld [vmem:[%s226 + $0x88] sm:$0xff]
      %v254 = vld [vmem:[%s226 + $0x90] sm:$0xff]
      %v255 = vld [vmem:[%s226 + $0x98] sm:$0xff]
      %v256 = vld [vmem:[%s226 + $0xa0] sm:$0xff]
      %v257 = vld [vmem:[%s226 + $0xa8] sm:$0xff]
      %v258 = vld [vmem:[%s226 + $0xb0] sm:$0xff]
      %v259 = vld [vmem:[%s226 + $0xb8] sm:$0xff]
      %v260 = vld [vmem:[%s226 + $0xc0] sm:$0xff]
      %v261 = vld [vmem:[%s226 + $0xc8] sm:$0xff]
      %v262 = vld [vmem:[%s226 + $0xd0] sm:$0xff]
      %v263 = vld [vmem:[%s226 + $0xd8] sm:$0xff]
      %v264 = vld [vmem:[%s226 + $0xe0] sm:$0xff]
      %v265 = vld [vmem:[%s226 + $0xe8] sm:$0xff]
      %v266 = vld [vmem:[%s226 + $0xf0] sm:$0xff]
      %v267 = vld [vmem:[%s226 + $0xf8] sm:$0xff]
      %v268 = vld [vmem:[%s2] sm:$0x1]
      %v270 = vperm.slane %v268, 0
      %v272 = vmul.f32 %v236, %v270
      %v273 = vmul.f32 %v237, %v270
      %v274 = vmul.f32 %v238, %v270
      %v275 = vmul.f32 %v239, %v270
      %v276 = vmul.f32 %v240, %v270
      %v277 = vmul.f32 %v241, %v270
      %v278 = vmul.f32 %v242, %v270
      %v279 = vmul.f32 %v243, %v270
      %v280 = vmul.f32 %v244, %v270
      %v281 = vmul.f32 %v245, %v270
      %v282 = vmul.f32 %v246, %v270
      %v283 = vmul.f32 %v247, %v270
      %v284 = vmul.f32 %v248, %v270
      %v285 = vmul.f32 %v249, %v270
      %v286 = vmul.f32 %v250, %v270
      %v287 = vmul.f32 %v251, %v270
      %v288 = vmul.f32 %v252, %v270
      %v289 = vmul.f32 %v253, %v270
      %v290 = vmul.f32 %v254, %v270
      %v291 = vmul.f32 %v255, %v270
      %v292 = vmul.f32 %v256, %v270
      %v293 = vmul.f32 %v257, %v270
      %v294 = vmul.f32 %v258, %v270
      %v295 = vmul.f32 %v259, %v270
      %v296 = vmul.f32 %v260, %v270
      %v297 = vmul.f32 %v261, %v270
      %v298 = vmul.f32 %v262, %v270
      %v299 = vmul.f32 %v263, %v270
      %v300 = vmul.f32 %v264, %v270
      %v301 = vmul.f32 %v265, %v270
      %v302 = vmul.f32 %v266, %v270
      %v303 = vmul.f32 %v267, %v270
      %v304 = vld [vmem:[%s3] sm:$0x1]
      %v306 = vperm.slane %v304, 0
      %v308 = vadd.f32 %v272, %v306
      %v309 = vadd.f32 %v273, %v306
      %v310 = vadd.f32 %v274, %v306
      %v311 = vadd.f32 %v275, %v306
      %v312 = vadd.f32 %v276, %v306
      %v313 = vadd.f32 %v277, %v306
      %v314 = vadd.f32 %v278, %v306
      %v315 = vadd.f32 %v279, %v306
      %v316 = vadd.f32 %v280, %v306
      %v317 = vadd.f32 %v281, %v306
      %v318 = vadd.f32 %v282, %v306
      %v319 = vadd.f32 %v283, %v306
      %v320 = vadd.f32 %v284, %v306
      %v321 = vadd.f32 %v285, %v306
      %v322 = vadd.f32 %v286, %v306
      %v323 = vadd.f32 %v287, %v306
      %v324 = vadd.f32 %v288, %v306
      %v325 = vadd.f32 %v289, %v306
      %v326 = vadd.f32 %v290, %v306
      %v327 = vadd.f32 %v291, %v306
      %v328 = vadd.f32 %v292, %v306
      %v329 = vadd.f32 %v293, %v306
      %v330 = vadd.f32 %v294, %v306
      %v331 = vadd.f32 %v295, %v306
      %v332 = vadd.f32 %v296, %v306
      %v333 = vadd.f32 %v297, %v306
      %v334 = vadd.f32 %v298, %v306
      %v335 = vadd.f32 %v299, %v306
      %v336 = vadd.f32 %v300, %v306
      %v337 = vadd.f32 %v301, %v306
      %v338 = vadd.f32 %v302, %v306
      %v339 = vadd.f32 %v303, %v306
      %v340 = vmax.f32 %v308, 0.0
      %v341 = vmax.f32 %v309, 0.0
      %v342 = vmax.f32 %v310, 0.0
      %v343 = vmax.f32 %v311, 0.0
      %v344 = vmax.f32 %v312, 0.0
      %v345 = vmax.f32 %v313, 0.0
      %v346 = vmax.f32 %v314, 0.0
      %v347 = vmax.f32 %v315, 0.0
      %v348 = vmax.f32 %v316, 0.0
      %v349 = vmax.f32 %v317, 0.0
      %v350 = vmax.f32 %v318, 0.0
      %v351 = vmax.f32 %v319, 0.0
      %v352 = vmax.f32 %v320, 0.0
      %v353 = vmax.f32 %v321, 0.0
      %v354 = vmax.f32 %v322, 0.0
      %v355 = vmax.f32 %v323, 0.0
      %v356 = vmax.f32 %v324, 0.0
      %v357 = vmax.f32 %v325, 0.0
      %v358 = vmax.f32 %v326, 0.0
      %v359 = vmax.f32 %v327, 0.0
      %v360 = vmax.f32 %v328, 0.0
      %v361 = vmax.f32 %v329, 0.0
      %v362 = vmax.f32 %v330, 0.0
      %v363 = vmax.f32 %v331, 0.0
      %v364 = vmax.f32 %v332, 0.0
      %v365 = vmax.f32 %v333, 0.0
      %v366 = vmax.f32 %v334, 0.0
      %v367 = vmax.f32 %v335, 0.0
      %v368 = vmax.f32 %v336, 0.0
      %v369 = vmax.f32 %v337, 0.0
      %v370 = vmax.f32 %v338, 0.0
      %v371 = vmax.f32 %v339, 0.0
      %372 = vst [vmem:[#allocation2] sm:$0xff] 0.0
      %373 = vst [vmem:[#allocation2 + $0x8] sm:$0xff] 0.0
      %374 = vst [vmem:[#allocation2 + $0x10] sm:$0x3] 0.0
      %s375 = scalar_lea.vmem [#allocation2], 408
      %376 = vst [vmem:[%s375] sm:$0xff] 0.0
      %377 = vst [vmem:[%s375 + $0x8] sm:$0xff] 0.0
      %378 = vst [vmem:[%s375 + $0x10] sm:$0x3] 0.0
      %379 = vst [vmem:[#allocation2] sm:$0x1] 0.0
      %380 = vst [vmem:[#allocation2 + $0x18] sm:$0x1] 0.0
      %381 = vst [vmem:[#allocation2 + $0x30] sm:$0x1] 0.0
      %382 = vst [vmem:[#allocation2 + $0x48] sm:$0x1] 0.0
      %383 = vst [vmem:[#allocation2 + $0x60] sm:$0x1] 0.0
      %384 = vst [vmem:[#allocation2 + $0x78] sm:$0x1] 0.0
      %385 = vst [vmem:[#allocation2 + $0x90] sm:$0x1] 0.0
      %386 = vst [vmem:[#allocation2 + $0xa8] sm:$0x1] 0.0
      %387 = vst [vmem:[#allocation2 + $0xc0] sm:$0x1] 0.0
      %388 = vst [vmem:[#allocation2 + $0xd8] sm:$0x1] 0.0
      %389 = vst [vmem:[#allocation2 + $0xf0] sm:$0x1] 0.0
      %390 = vst [vmem:[#allocation2 + $0x108] sm:$0x1] 0.0
      %391 = vst [vmem:[#allocation2 + $0x120] sm:$0x1] 0.0
      %392 = vst [vmem:[#allocation2 + $0x138] sm:$0x1] 0.0
      %393 = vst [vmem:[#allocation2 + $0x150] sm:$0x1] 0.0
      %394 = vst [vmem:[#allocation2 + $0x168] sm:$0x1] 0.0
      %395 = vst [vmem:[#allocation2 + $0x180] sm:$0x1] 0.0
      %396 = vst [vmem:[#allocation2 + $0x198] sm:$0x1] 0.0
      %397 = vst [vmem:[#allocation2 + $0x11] sm:$0x1] 0.0
      %398 = vst [vmem:[#allocation2 + $0x29] sm:$0x1] 0.0
      %399 = vst [vmem:[#allocation2 + $0x41] sm:$0x1] 0.0
      %400 = vst [vmem:[#allocation2 + $0x59] sm:$0x1] 0.0
      %401 = vst [vmem:[#allocation2 + $0x71] sm:$0x1] 0.0
      %402 = vst [vmem:[#allocation2 + $0x89] sm:$0x1] 0.0
      %403 = vst [vmem:[#allocation2 + $0xa1] sm:$0x1] 0.0
      %404 = vst [vmem:[#allocation2 + $0xb9] sm:$0x1] 0.0
      %405 = vst [vmem:[#allocation2 + $0xd1] sm:$0x1] 0.0
      %406 = vst [vmem:[#allocation2 + $0xe9] sm:$0x1] 0.0
      %407 = vst [vmem:[#allocation2 + $0x101] sm:$0x1] 0.0
      %408 = vst [vmem:[#allocation2 + $0x119] sm:$0x1] 0.0
      %409 = vst [vmem:[#allocation2 + $0x131] sm:$0x1] 0.0
      %410 = vst [vmem:[#allocation2 + $0x149] sm:$0x1] 0.0
      %411 = vst [vmem:[#allocation2 + $0x161] sm:$0x1] 0.0
      %412 = vst [vmem:[#allocation2 + $0x179] sm:$0x1] 0.0
      %413 = vst [vmem:[#allocation2 + $0x191] sm:$0x1] 0.0
      %414 = vst [vmem:[#allocation2 + $0x1a9] sm:$0x1] 0.0
      %s415 = scalar_lea.vmem [#allocation2], 24
      %416 = vst [vmem:[%s415 + $0x1] sm:$0xff] %v340
      %417 = vst [vmem:[%s415 + $0x9] sm:$0xff] %v341
      %418 = vst [vmem:[%s415 + $0x19] sm:$0xff] %v342
      %419 = vst [vmem:[%s415 + $0x21] sm:$0xff] %v343
      %420 = vst [vmem:[%s415 + $0x31] sm:$0xff] %v344
      %421 = vst [vmem:[%s415 + $0x39] sm:$0xff] %v345
      %422 = vst [vmem:[%s415 + $0x49] sm:$0xff] %v346
      %423 = vst [vmem:[%s415 + $0x51] sm:$0xff] %v347
      %424 = vst [vmem:[%s415 + $0x61] sm:$0xff] %v348
      %425 = vst [vmem:[%s415 + $0x69] sm:$0xff] %v349
      %426 = vst [vmem:[%s415 + $0x79] sm:$0xff] %v350
      %427 = vst [vmem:[%s415 + $0x81] sm:$0xff] %v351
      %428 = vst [vmem:[%s415 + $0x91] sm:$0xff] %v352
      %429 = vst [vmem:[%s415 + $0x99] sm:$0xff] %v353
      %430 = vst [vmem:[%s415 + $0xa9] sm:$0xff] %v354
      %431 = vst [vmem:[%s415 + $0xb1] sm:$0xff] %v355
      %432 = vst [vmem:[%s415 + $0xc1] sm:$0xff] %v356
      %433 = vst [vmem:[%s415 + $0xc9] sm:$0xff] %v357
      %434 = vst [vmem:[%s415 + $0xd9] sm:$0xff] %v358
      %435 = vst [vmem:[%s415 + $0xe1] sm:$0xff] %v359
      %436 = vst [vmem:[%s415 + $0xf1] sm:$0xff] %v360
      %437 = vst [vmem:[%s415 + $0xf9] sm:$0xff] %v361
      %438 = vst [vmem:[%s415 + $0x109] sm:$0xff] %v362
      %439 = vst [vmem:[%s415 + $0x111] sm:$0xff] %v363
      %440 = vst [vmem:[%s415 + $0x121] sm:$0xff] %v364
      %441 = vst [vmem:[%s415 + $0x129] sm:$0xff] %v365
      %442 = vst [vmem:[%s415 + $0x139] sm:$0xff] %v366
      %443 = vst [vmem:[%s415 + $0x141] sm:$0xff] %v367
      %444 = vst [vmem:[%s415 + $0x151] sm:$0xff] %v368
      %445 = vst [vmem:[%s415 + $0x159] sm:$0xff] %v369
      %446 = vst [vmem:[%s415 + $0x169] sm:$0xff] %v370
      %447 = vst [vmem:[%s415 + $0x171] sm:$0xff] %v371
      %v448 = vld [vmem:[#allocation2] sm:$0xff]
      %v449 = vld [vmem:[#allocation2 + $0x8] sm:$0xff]
      %v450 = vld [vmem:[#allocation2 + $0x18] sm:$0xff]
      %v451 = vld [vmem:[#allocation2 + $0x20] sm:$0xff]
      %v452 = vld [vmem:[#allocation2 + $0x30] sm:$0xff]
      %v453 = vld [vmem:[#allocation2 + $0x38] sm:$0xff]
      %v454 = vld [vmem:[#allocation2 + $0x48] sm:$0xff]
      %v455 = vld [vmem:[#allocation2 + $0x50] sm:$0xff]
      %v456 = vld [vmem:[#allocation2 + $0x60] sm:$0xff]
      %v457 = vld [vmem:[#allocation2 + $0x68] sm:$0xff]
      %v458 = vld [vmem:[#allocation2 + $0x78] sm:$0xff]
      %v459 = vld [vmem:[#allocation2 + $0x80] sm:$0xff]
      %v460 = vld [vmem:[#allocation2 + $0x90] sm:$0xff]
      %v461 = vld [vmem:[#allocation2 + $0x98] sm:$0xff]
      %v462 = vld [vmem:[#allocation2 + $0xa8] sm:$0xff]
      %v463 = vld [vmem:[#allocation2 + $0xb0] sm:$0xff]
      %v464 = vld [vmem:[#allocation2 + $0xc0] sm:$0xff]
      %v465 = vld [vmem:[#allocation2 + $0xc8] sm:$0xff]
      %v466 = vld [vmem:[#allocation2 + $0xd8] sm:$0xff]
      %v467 = vld [vmem:[#allocation2 + $0xe0] sm:$0xff]
      %v468 = vld [vmem:[#allocation2 + $0xf0] sm:$0xff]
      %v469 = vld [vmem:[#allocation2 + $0xf8] sm:$0xff]
      %v470 = vld [vmem:[#allocation2 + $0x108] sm:$0xff]
      %v471 = vld [vmem:[#allocation2 + $0x110] sm:$0xff]
      %v472 = vld [vmem:[#allocation2 + $0x120] sm:$0xff]
      %v473 = vld [vmem:[#allocation2 + $0x128] sm:$0xff]
      %v474 = vld [vmem:[#allocation2 + $0x138] sm:$0xff]
      %v475 = vld [vmem:[#allocation2 + $0x140] sm:$0xff]
      %v476 = vld [vmem:[#allocation2 + $0x150] sm:$0xff]
      %v477 = vld [vmem:[#allocation2 + $0x158] sm:$0xff]
      %v478 = vld [vmem:[#allocation2 + $0x168] sm:$0xff]
      %v479 = vld [vmem:[#allocation2 + $0x170] sm:$0xff]
      %480 = vst [vmem:[#allocation3] sm:$0xff] %v448
      %481 = vst [vmem:[#allocation3 + $0x48] sm:$0xff] %v449
      %482 = vst [vmem:[#allocation3 + $0x90] sm:$0xff] %v450
      %483 = vst [vmem:[#allocation3 + $0xd8] sm:$0xff] %v451
      %484 = vst [vmem:[#allocation3 + $0x120] sm:$0xff] %v452
      %485 = vst [vmem:[#allocation3 + $0x168] sm:$0xff] %v453
      %486 = vst [vmem:[#allocation3 + $0x1b0] sm:$0xff] %v454
      %487 = vst [vmem:[#allocation3 + $0x1f8] sm:$0xff] %v455
      %488 = vst [vmem:[#allocation3 + $0x240] sm:$0xff] %v456
      %489 = vst [vmem:[#allocation3 + $0x288] sm:$0xff] %v457
      %490 = vst [vmem:[#allocation3 + $0x2d0] sm:$0xff] %v458
      %491 = vst [vmem:[#allocation3 + $0x318] sm:$0xff] %v459
      %492 = vst [vmem:[#allocation3 + $0x360] sm:$0xff] %v460
      %493 = vst [vmem:[#allocation3 + $0x3a8] sm:$0xff] %v461
      %494 = vst [vmem:[#allocation3 + $0x3f0] sm:$0xff] %v462
      %495 = vst [vmem:[#allocation3 + $0x438] sm:$0xff] %v463
      %496 = vst [vmem:[#allocation3 + $0x480] sm:$0xff] %v464
      %497 = vst [vmem:[#allocation3 + $0x4c8] sm:$0xff] %v465
      %498 = vst [vmem:[#allocation3 + $0x510] sm:$0xff] %v466
      %499 = vst [vmem:[#allocation3 + $0x558] sm:$0xff] %v467
      %500 = vst [vmem:[#allocation3 + $0x5a0] sm:$0xff] %v468
      %501 = vst [vmem:[#allocation3 + $0x5e8] sm:$0xff] %v469
      %502 = vst [vmem:[#allocation3 + $0x630] sm:$0xff] %v470
      %503 = vst [vmem:[#allocation3 + $0x678] sm:$0xff] %v471
      %504 = vst [vmem:[#allocation3 + $0x6c0] sm:$0xff] %v472
      %505 = vst [vmem:[#allocation3 + $0x708] sm:$0xff] %v473
      %506 = vst [vmem:[#allocation3 + $0x750] sm:$0xff] %v474
      %507 = vst [vmem:[#allocation3 + $0x798] sm:$0xff] %v475
      %508 = vst [vmem:[#allocation3 + $0x7e0] sm:$0xff] %v476
      %509 = vst [vmem:[#allocation3 + $0x828] sm:$0xff] %v477
      %510 = vst [vmem:[#allocation3 + $0x870] sm:$0xff] %v478
      %511 = vst [vmem:[#allocation3 + $0x8b8] sm:$0xff] %v479
      %v512 = vld [vmem:[#allocation2 + $0x1] sm:$0xff]
      %v513 = vld [vmem:[#allocation2 + $0x9] sm:$0xff]
      %v514 = vld [vmem:[#allocation2 + $0x19] sm:$0xff]
      %v515 = vld [vmem:[#allocation2 + $0x21] sm:$0xff]
      %v516 = vld [vmem:[#allocation2 + $0x31] sm:$0xff]
      %v517 = vld [vmem:[#allocation2 + $0x39] sm:$0xff]
      %v518 = vld [vmem:[#allocation2 + $0x49] sm:$0xff]
      %v519 = vld [vmem:[#allocation2 + $0x51] sm:$0xff]
      %v520 = vld [vmem:[#allocation2 + $0x61] sm:$0xff]
      %v521 = vld [vmem:[#allocation2 + $0x69] sm:$0xff]
      %v522 = vld [vmem:[#allocation2 + $0x79] sm:$0xff]
      %v523 = vld [vmem:[#allocation2 + $0x81] sm:$0xff]
      %v524 = vld [vmem:[#allocation2 + $0x91] sm:$0xff]
      %v525 = vld [vmem:[#allocation2 + $0x99] sm:$0xff]
      %v526 = vld [vmem:[#allocation2 + $0xa9] sm:$0xff]
      %v527 = vld [vmem:[#allocation2 + $0xb1] sm:$0xff]
      %v528 = vld [vmem:[#allocation2 + $0xc1] sm:$0xff]
      %v529 = vld [vmem:[#allocation2 + $0xc9] sm:$0xff]
      %v530 = vld [vmem:[#allocation2 + $0xd9] sm:$0xff]
      %v531 = vld [vmem:[#allocation2 + $0xe1] sm:$0xff]
      %v532 = vld [vmem:[#allocation2 + $0xf1] sm:$0xff]
      %v533 = vld [vmem:[#allocation2 + $0xf9] sm:$0xff]
      %v534 = vld [vmem:[#allocation2 + $0x109] sm:$0xff]
      %v535 = vld [vmem:[#allocation2 + $0x111] sm:$0xff]
      %v536 = vld [vmem:[#allocation2 + $0x121] sm:$0xff]
      %v537 = vld [vmem:[#allocation2 + $0x129] sm:$0xff]
      %v538 = vld [vmem:[#allocation2 + $0x139] sm:$0xff]
      %v539 = vld [vmem:[#allocation2 + $0x141] sm:$0xff]
      %v540 = vld [vmem:[#allocation2 + $0x151] sm:$0xff]
      %v541 = vld [vmem:[#allocation2 + $0x159] sm:$0xff]
      %v542 = vld [vmem:[#allocation2 + $0x169] sm:$0xff]
      %v543 = vld [vmem:[#allocation2 + $0x171] sm:$0xff]
      %544 = vst [vmem:[#allocation3 + $0x8] sm:$0xff] %v512
      %545 = vst [vmem:[#allocation3 + $0x50] sm:$0xff] %v513
      %546 = vst [vmem:[#allocation3 + $0x98] sm:$0xff] %v514
      %547 = vst [vmem:[#allocation3 + $0xe0] sm:$0xff] %v515
      %548 = vst [vmem:[#allocation3 + $0x128] sm:$0xff] %v516
      %549 = vst [vmem:[#allocation3 + $0x170] sm:$0xff] %v517
      %550 = vst [vmem:[#allocation3 + $0x1b8] sm:$0xff] %v518
      %551 = vst [vmem:[#allocation3 + $0x200] sm:$0xff] %v519
      %552 = vst [vmem:[#allocation3 + $0x248] sm:$0xff] %v520
      %553 = vst [vmem:[#allocation3 + $0x290] sm:$0xff] %v521
      %554 = vst [vmem:[#allocation3 + $0x2d8] sm:$0xff] %v522
      %555 = vst [vmem:[#allocation3 + $0x320] sm:$0xff] %v523
      %556 = vst [vmem:[#allocation3 + $0x368] sm:$0xff] %v524
      %557 = vst [vmem:[#allocation3 + $0x3b0] sm:$0xff] %v525
      %558 = vst [vmem:[#allocation3 + $0x3f8] sm:$0xff] %v526
      %559 = vst [vmem:[#allocation3 + $0x440] sm:$0xff] %v527
      %560 = vst [vmem:[#allocation3 + $0x488] sm:$0xff] %v528
      %561 = vst [vmem:[#allocation3 + $0x4d0] sm:$0xff] %v529
      %562 = vst [vmem:[#allocation3 + $0x518] sm:$0xff] %v530
      %563 = vst [vmem:[#allocation3 + $0x560] sm:$0xff] %v531
      %564 = vst [vmem:[#allocation3 + $0x5a8] sm:$0xff] %v532
      %565 = vst [vmem:[#allocation3 + $0x5f0] sm:$0xff] %v533
      %566 = vst [vmem:[#allocation3 + $0x638] sm:$0xff] %v534
      %567 = vst [vmem:[#allocation3 + $0x680] sm:$0xff] %v535
      %568 = vst [vmem:[#allocation3 + $0x6c8] sm:$0xff] %v536
      %569 = vst [vmem:[#allocation3 + $0x710] sm:$0xff] %v537
      %570 = vst [vmem:[#allocation3 + $0x758] sm:$0xff] %v538
      %571 = vst [vmem:[#allocation3 + $0x7a0] sm:$0xff] %v539
      %572 = vst [vmem:[#allocation3 + $0x7e8] sm:$0xff] %v540
      %573 = vst [vmem:[#allocation3 + $0x830] sm:$0xff] %v541
      %574 = vst [vmem:[#allocation3 + $0x878] sm:$0xff] %v542
      %575 = vst [vmem:[#allocation3 + $0x8c0] sm:$0xff] %v543
      %v576 = vld [vmem:[#allocation2 + $0x2] sm:$0xff]
      %v577 = vld [vmem:[#allocation2 + $0xa] sm:$0xff]
      %v578 = vld [vmem:[#allocation2 + $0x1a] sm:$0xff]
      %v579 = vld [vmem:[#allocation2 + $0x22] sm:$0xff]
      %v580 = vld [vmem:[#allocation2 + $0x32] sm:$0xff]
      %v581 = vld [vmem:[#allocation2 + $0x3a] sm:$0xff]
      %v582 = vld [vmem:[#allocation2 + $0x4a] sm:$0xff]
      %v583 = vld [vmem:[#allocation2 + $0x52] sm:$0xff]
      %v584 = vld [vmem:[#allocation2 + $0x62] sm:$0xff]
      %v585 = vld [vmem:[#allocation2 + $0x6a] sm:$0xff]
      %v586 = vld [vmem:[#allocation2 + $0x7a] sm:$0xff]
      %v587 = vld [vmem:[#allocation2 + $0x82] sm:$0xff]
      %v588 = vld [vmem:[#allocation2 + $0x92] sm:$0xff]
      %v589 = vld [vmem:[#allocation2 + $0x9a] sm:$0xff]
      %v590 = vld [vmem:[#allocation2 + $0xaa] sm:$0xff]
      %v591 = vld [vmem:[#allocation2 + $0xb2] sm:$0xff]
      %v592 = vld [vmem:[#allocation2 + $0xc2] sm:$0xff]
      %v593 = vld [vmem:[#allocation2 + $0xca] sm:$0xff]
      %v594 = vld [vmem:[#allocation2 + $0xda] sm:$0xff]
      %v595 = vld [vmem:[#allocation2 + $0xe2] sm:$0xff]
      %v596 = vld [vmem:[#allocation2 + $0xf2] sm:$0xff]
      %v597 = vld [vmem:[#allocation2 + $0xfa] sm:$0xff]
      %v598 = vld [vmem:[#allocation2 + $0x10a] sm:$0xff]
      %v599 = vld [vmem:[#allocation2 + $0x112] sm:$0xff]
      %v600 = vld [vmem:[#allocation2 + $0x122] sm:$0xff]
      %v601 = vld [vmem:[#allocation2 + $0x12a] sm:$0xff]
      %v602 = vld [vmem:[#allocation2 + $0x13a] sm:$0xff]
      %v603 = vld [vmem:[#allocation2 + $0x142] sm:$0xff]
      %v604 = vld [vmem:[#allocation2 + $0x152] sm:$0xff]
      %v605 = vld [vmem:[#allocation2 + $0x15a] sm:$0xff]
      %v606 = vld [vmem:[#allocation2 + $0x16a] sm:$0xff]
      %v607 = vld [vmem:[#allocation2 + $0x172] sm:$0xff]
      %608 = vst [vmem:[#allocation3 + $0x10] sm:$0xff] %v576
      %609 = vst [vmem:[#allocation3 + $0x58] sm:$0xff] %v577
      %610 = vst [vmem:[#allocation3 + $0xa0] sm:$0xff] %v578
      %611 = vst [vmem:[#allocation3 + $0xe8] sm:$0xff] %v579
      %612 = vst [vmem:[#allocation3 + $0x130] sm:$0xff] %v580
      %613 = vst [vmem:[#allocation3 + $0x178] sm:$0xff] %v581
      %614 = vst [vmem:[#allocation3 + $0x1c0] sm:$0xff] %v582
      %615 = vst [vmem:[#allocation3 + $0x208] sm:$0xff] %v583
      %616 = vst [vmem:[#allocation3 + $0x250] sm:$0xff] %v584
      %617 = vst [vmem:[#allocation3 + $0x298] sm:$0xff] %v585
      %618 = vst [vmem:[#allocation3 + $0x2e0] sm:$0xff] %v586
      %619 = vst [vmem:[#allocation3 + $0x328] sm:$0xff] %v587
      %620 = vst [vmem:[#allocation3 + $0x370] sm:$0xff] %v588
      %621 = vst [vmem:[#allocation3 + $0x3b8] sm:$0xff] %v589
      %622 = vst [vmem:[#allocation3 + $0x400] sm:$0xff] %v590
      %623 = vst [vmem:[#allocation3 + $0x448] sm:$0xff] %v591
      %624 = vst [vmem:[#allocation3 + $0x490] sm:$0xff] %v592
      %625 = vst [vmem:[#allocation3 + $0x4d8] sm:$0xff] %v593
      %626 = vst [vmem:[#allocation3 + $0x520] sm:$0xff] %v594
      %627 = vst [vmem:[#allocation3 + $0x568] sm:$0xff] %v595
      %628 = vst [vmem:[#allocation3 + $0x5b0] sm:$0xff] %v596
      %629 = vst [vmem:[#allocation3 + $0x5f8] sm:$0xff] %v597
      %630 = vst [vmem:[#allocation3 + $0x640] sm:$0xff] %v598
      %631 = vst [vmem:[#allocation3 + $0x688] sm:$0xff] %v599
      %632 = vst [vmem:[#allocation3 + $0x6d0] sm:$0xff] %v600
      %633 = vst [vmem:[#allocation3 + $0x718] sm:$0xff] %v601
      %634 = vst [vmem:[#allocation3 + $0x760] sm:$0xff] %v602
      %635 = vst [vmem:[#allocation3 + $0x7a8] sm:$0xff] %v603
      %636 = vst [vmem:[#allocation3 + $0x7f0] sm:$0xff] %v604
      %637 = vst [vmem:[#allocation3 + $0x838] sm:$0xff] %v605
      %638 = vst [vmem:[#allocation3 + $0x880] sm:$0xff] %v606
      %639 = vst [vmem:[#allocation3 + $0x8c8] sm:$0xff] %v607
      %v640 = vld [vmem:[%s415] sm:$0xff]
      %v641 = vld [vmem:[%s415 + $0x8] sm:$0xff]
      %v642 = vld [vmem:[%s415 + $0x18] sm:$0xff]
      %v643 = vld [vmem:[%s415 + $0x20] sm:$0xff]
      %v644 = vld [vmem:[%s415 + $0x30] sm:$0xff]
      %v645 = vld [vmem:[%s415 + $0x38] sm:$0xff]
      %v646 = vld [vmem:[%s415 + $0x48] sm:$0xff]
      %v647 = vld [vmem:[%s415 + $0x50] sm:$0xff]
      %v648 = vld [vmem:[%s415 + $0x60] sm:$0xff]
      %v649 = vld [vmem:[%s415 + $0x68] sm:$0xff]
      %v650 = vld [vmem:[%s415 + $0x78] sm:$0xff]
      %v651 = vld [vmem:[%s415 + $0x80] sm:$0xff]
      %v652 = vld [vmem:[%s415 + $0x90] sm:$0xff]
      %v653 = vld [vmem:[%s415 + $0x98] sm:$0xff]
      %v654 = vld [vmem:[%s415 + $0xa8] sm:$0xff]
      %v655 = vld [vmem:[%s415 + $0xb0] sm:$0xff]
      %v656 = vld [vmem:[%s415 + $0xc0] sm:$0xff]
      %v657 = vld [vmem:[%s415 + $0xc8] sm:$0xff]
      %v658 = vld [vmem:[%s415 + $0xd8] sm:$0xff]
      %v659 = vld [vmem:[%s415 + $0xe0] sm:$0xff]
      %v660 = vld [vmem:[%s415 + $0xf0] sm:$0xff]
      %v661 = vld [vmem:[%s415 + $0xf8] sm:$0xff]
      %v662 = vld [vmem:[%s415 + $0x108] sm:$0xff]
      %v663 = vld [vmem:[%s415 + $0x110] sm:$0xff]
      %v664 = vld [vmem:[%s415 + $0x120] sm:$0xff]
      %v665 = vld [vmem:[%s415 + $0x128] sm:$0xff]
      %v666 = vld [vmem:[%s415 + $0x138] sm:$0xff]
      %v667 = vld [vmem:[%s415 + $0x140] sm:$0xff]
      %v668 = vld [vmem:[%s415 + $0x150] sm:$0xff]
      %v669 = vld [vmem:[%s415 + $0x158] sm:$0xff]
      %v670 = vld [vmem:[%s415 + $0x168] sm:$0xff]
      %v671 = vld [vmem:[%s415 + $0x170] sm:$0xff]
      %672 = vst [vmem:[#allocation3 + $0x18] sm:$0xff] %v640
      %673 = vst [vmem:[#allocation3 + $0x60] sm:$0xff] %v641
      %674 = vst [vmem:[#allocation3 + $0xa8] sm:$0xff] %v642
      %675 = vst [vmem:[#allocation3 + $0xf0] sm:$0xff] %v643
      %676 = vst [vmem:[#allocation3 + $0x138] sm:$0xff] %v644
      %677 = vst [vmem:[#allocation3 + $0x180] sm:$0xff] %v645
      %678 = vst [vmem:[#allocation3 + $0x1c8] sm:$0xff] %v646
      %679 = vst [vmem:[#allocation3 + $0x210] sm:$0xff] %v647
      %680 = vst [vmem:[#allocation3 + $0x258] sm:$0xff] %v648
      %681 = vst [vmem:[#allocation3 + $0x2a0] sm:$0xff] %v649
      %682 = vst [vmem:[#allocation3 + $0x2e8] sm:$0xff] %v650
      %683 = vst [vmem:[#allocation3 + $0x330] sm:$0xff] %v651
      %684 = vst [vmem:[#allocation3 + $0x378] sm:$0xff] %v652
      %685 = vst [vmem:[#allocation3 + $0x3c0] sm:$0xff] %v653
      %686 = vst [vmem:[#allocation3 + $0x408] sm:$0xff] %v654
      %687 = vst [vmem:[#allocation3 + $0x450] sm:$0xff] %v655
      %688 = vst [vmem:[#allocation3 + $0x498] sm:$0xff] %v656
      %689 = vst [vmem:[#allocation3 + $0x4e0] sm:$0xff] %v657
      %690 = vst [vmem:[#allocation3 + $0x528] sm:$0xff] %v658
      %691 = vst [vmem:[#allocation3 + $0x570] sm:$0xff] %v659
      %692 = vst [vmem:[#allocation3 + $0x5b8] sm:$0xff] %v660
      %693 = vst [vmem:[#allocation3 + $0x600] sm:$0xff] %v661
      %694 = vst [vmem:[#allocation3 + $0x648] sm:$0xff] %v662
      %695 = vst [vmem:[#allocation3 + $0x690] sm:$0xff] %v663
      %696 = vst [vmem:[#allocation3 + $0x6d8] sm:$0xff] %v664
      %697 = vst [vmem:[#allocation3 + $0x720] sm:$0xff] %v665
      %698 = vst [vmem:[#allocation3 + $0x768] sm:$0xff] %v666
      %699 = vst [vmem:[#allocation3 + $0x7b0] sm:$0xff] %v667
      %700 = vst [vmem:[#allocation3 + $0x7f8] sm:$0xff] %v668
      %701 = vst [vmem:[#allocation3 + $0x840] sm:$0xff] %v669
      %702 = vst [vmem:[#allocation3 + $0x888] sm:$0xff] %v670
      %703 = vst [vmem:[#allocation3 + $0x8d0] sm:$0xff] %v671
      %v704 = vld [vmem:[%s415 + $0x1] sm:$0xff]
      %v705 = vld [vmem:[%s415 + $0x9] sm:$0xff]
      %v706 = vld [vmem:[%s415 + $0x19] sm:$0xff]
      %v707 = vld [vmem:[%s415 + $0x21] sm:$0xff]
      %v708 = vld [vmem:[%s415 + $0x31] sm:$0xff]
      %v709 = vld [vmem:[%s415 + $0x39] sm:$0xff]
      %v710 = vld [vmem:[%s415 + $0x49] sm:$0xff]
      %v711 = vld [vmem:[%s415 + $0x51] sm:$0xff]
      %v712 = vld [vmem:[%s415 + $0x61] sm:$0xff]
      %v713 = vld [vmem:[%s415 + $0x69] sm:$0xff]
      %v714 = vld [vmem:[%s415 + $0x79] sm:$0xff]
      %v715 = vld [vmem:[%s415 + $0x81] sm:$0xff]
      %v716 = vld [vmem:[%s415 + $0x91] sm:$0xff]
      %v717 = vld [vmem:[%s415 + $0x99] sm:$0xff]
      %v718 = vld [vmem:[%s415 + $0xa9] sm:$0xff]
      %v719 = vld [vmem:[%s415 + $0xb1] sm:$0xff]
      %v720 = vld [vmem:[%s415 + $0xc1] sm:$0xff]
      %v721 = vld [vmem:[%s415 + $0xc9] sm:$0xff]
      %v722 = vld [vmem:[%s415 + $0xd9] sm:$0xff]
      %v723 = vld [vmem:[%s415 + $0xe1] sm:$0xff]
      %v724 = vld [vmem:[%s415 + $0xf1] sm:$0xff]
      %v725 = vld [vmem:[%s415 + $0xf9] sm:$0xff]
      %v726 = vld [vmem:[%s415 + $0x109] sm:$0xff]
      %v727 = vld [vmem:[%s415 + $0x111] sm:$0xff]
      %v728 = vld [vmem:[%s415 + $0x121] sm:$0xff]
      %v729 = vld [vmem:[%s415 + $0x129] sm:$0xff]
      %v730 = vld [vmem:[%s415 + $0x139] sm:$0xff]
      %v731 = vld [vmem:[%s415 + $0x141] sm:$0xff]
      %v732 = vld [vmem:[%s415 + $0x151] sm:$0xff]
      %v733 = vld [vmem:[%s415 + $0x159] sm:$0xff]
      %v734 = vld [vmem:[%s415 + $0x169] sm:$0xff]
      %v735 = vld [vmem:[%s415 + $0x171] sm:$0xff]
      %736 = vst [vmem:[#allocation3 + $0x20] sm:$0xff] %v704
      %737 = vst [vmem:[#allocation3 + $0x68] sm:$0xff] %v705
      %738 = vst [vmem:[#allocation3 + $0xb0] sm:$0xff] %v706
      %739 = vst [vmem:[#allocation3 + $0xf8] sm:$0xff] %v707
      %740 = vst [vmem:[#allocation3 + $0x140] sm:$0xff] %v708
      %741 = vst [vmem:[#allocation3 + $0x188] sm:$0xff] %v709
      %742 = vst [vmem:[#allocation3 + $0x1d0] sm:$0xff] %v710
      %743 = vst [vmem:[#allocation3 + $0x218] sm:$0xff] %v711
      %744 = vst [vmem:[#allocation3 + $0x260] sm:$0xff] %v712
      %745 = vst [vmem:[#allocation3 + $0x2a8] sm:$0xff] %v713
      %746 = vst [vmem:[#allocation3 + $0x2f0] sm:$0xff] %v714
      %747 = vst [vmem:[#allocation3 + $0x338] sm:$0xff] %v715
      %748 = vst [vmem:[#allocation3 + $0x380] sm:$0xff] %v716
      %749 = vst [vmem:[#allocation3 + $0x3c8] sm:$0xff] %v717
      %750 = vst [vmem:[#allocation3 + $0x410] sm:$0xff] %v718
      %751 = vst [vmem:[#allocation3 + $0x458] sm:$0xff] %v719
      %752 = vst [vmem:[#allocation3 + $0x4a0] sm:$0xff] %v720
      %753 = vst [vmem:[#allocation3 + $0x4e8] sm:$0xff] %v721
      %754 = vst [vmem:[#allocation3 + $0x530] sm:$0xff] %v722
      %755 = vst [vmem:[#allocation3 + $0x578] sm:$0xff] %v723
      %756 = vst [vmem:[#allocation3 + $0x5c0] sm:$0xff] %v724
      %757 = vst [vmem:[#allocation3 + $0x608] sm:$0xff] %v725
      %758 = vst [vmem:[#allocation3 + $0x650] sm:$0xff] %v726
      %759 = vst [vmem:[#allocation3 + $0x698] sm:$0xff] %v727
      %760 = vst [vmem:[#allocation3 + $0x6e0] sm:$0xff] %v728
      %761 = vst [vmem:[#allocation3 + $0x728] sm:$0xff] %v729
      %762 = vst [vmem:[#allocation3 + $0x770] sm:$0xff] %v730
      %763 = vst [vmem:[#allocation3 + $0x7b8] sm:$0xff] %v731
      %764 = vst [vmem:[#allocation3 + $0x800] sm:$0xff] %v732
      %765 = vst [vmem:[#allocation3 + $0x848] sm:$0xff] %v733
      %766 = vst [vmem:[#allocation3 + $0x890] sm:$0xff] %v734
      %767 = vst [vmem:[#allocation3 + $0x8d8] sm:$0xff] %v735
      %v768 = vld [vmem:[%s415 + $0x2] sm:$0xff]
      %v769 = vld [vmem:[%s415 + $0xa] sm:$0xff]
      %v770 = vld [vmem:[%s415 + $0x1a] sm:$0xff]
      %v771 = vld [vmem:[%s415 + $0x22] sm:$0xff]
      %v772 = vld [vmem:[%s415 + $0x32] sm:$0xff]
      %v773 = vld [vmem:[%s415 + $0x3a] sm:$0xff]
      %v774 = vld [vmem:[%s415 + $0x4a] sm:$0xff]
      %v775 = vld [vmem:[%s415 + $0x52] sm:$0xff]
      %v776 = vld [vmem:[%s415 + $0x62] sm:$0xff]
      %v777 = vld [vmem:[%s415 + $0x6a] sm:$0xff]
      %v778 = vld [vmem:[%s415 + $0x7a] sm:$0xff]
      %v779 = vld [vmem:[%s415 + $0x82] sm:$0xff]
      %v780 = vld [vmem:[%s415 + $0x92] sm:$0xff]
      %v781 = vld [vmem:[%s415 + $0x9a] sm:$0xff]
      %v782 = vld [vmem:[%s415 + $0xaa] sm:$0xff]
      %v783 = vld [vmem:[%s415 + $0xb2] sm:$0xff]
      %v784 = vld [vmem:[%s415 + $0xc2] sm:$0xff]
      %v785 = vld [vmem:[%s415 + $0xca] sm:$0xff]
      %v786 = vld [vmem:[%s415 + $0xda] sm:$0xff]
      %v787 = vld [vmem:[%s415 + $0xe2] sm:$0xff]
      %v788 = vld [vmem:[%s415 + $0xf2] sm:$0xff]
      %v789 = vld [vmem:[%s415 + $0xfa] sm:$0xff]
      %v790 = vld [vmem:[%s415 + $0x10a] sm:$0xff]
      %v791 = vld [vmem:[%s415 + $0x112] sm:$0xff]
      %v792 = vld [vmem:[%s415 + $0x122] sm:$0xff]
      %v793 = vld [vmem:[%s415 + $0x12a] sm:$0xff]
      %v794 = vld [vmem:[%s415 + $0x13a] sm:$0xff]
      %v795 = vld [vmem:[%s415 + $0x142] sm:$0xff]
      %v796 = vld [vmem:[%s415 + $0x152] sm:$0xff]
      %v797 = vld [vmem:[%s415 + $0x15a] sm:$0xff]
      %v798 = vld [vmem:[%s415 + $0x16a] sm:$0xff]
      %v799 = vld [vmem:[%s415 + $0x172] sm:$0xff]
      %800 = vst [vmem:[#allocation3 + $0x28] sm:$0xff] %v768
      %801 = vst [vmem:[#allocation3 + $0x70] sm:$0xff] %v769
      %802 = vst [vmem:[#allocation3 + $0xb8] sm:$0xff] %v770
      %803 = vst [vmem:[#allocation3 + $0x100] sm:$0xff] %v771
      %804 = vst [vmem:[#allocation3 + $0x148] sm:$0xff] %v772
      %805 = vst [vmem:[#allocation3 + $0x190] sm:$0xff] %v773
      %806 = vst [vmem:[#allocation3 + $0x1d8] sm:$0xff] %v774
      %807 = vst [vmem:[#allocation3 + $0x220] sm:$0xff] %v775
      %808 = vst [vmem:[#allocation3 + $0x268] sm:$0xff] %v776
      %809 = vst [vmem:[#allocation3 + $0x2b0] sm:$0xff] %v777
      %810 = vst [vmem:[#allocation3 + $0x2f8] sm:$0xff] %v778
      %811 = vst [vmem:[#allocation3 + $0x340] sm:$0xff] %v779
      %812 = vst [vmem:[#allocation3 + $0x388] sm:$0xff] %v780
      %813 = vst [vmem:[#allocation3 + $0x3d0] sm:$0xff] %v781
      %814 = vst [vmem:[#allocation3 + $0x418] sm:$0xff] %v782
      %815 = vst [vmem:[#allocation3 + $0x460] sm:$0xff] %v783
      %816 = vst [vmem:[#allocation3 + $0x4a8] sm:$0xff] %v784
      %817 = vst [vmem:[#allocation3 + $0x4f0] sm:$0xff] %v785
      %818 = vst [vmem:[#allocation3 + $0x538] sm:$0xff] %v786
      %819 = vst [vmem:[#allocation3 + $0x580] sm:$0xff] %v787
      %820 = vst [vmem:[#allocation3 + $0x5c8] sm:$0xff] %v788
      %821 = vst [vmem:[#allocation3 + $0x610] sm:$0xff] %v789
      %822 = vst [vmem:[#allocation3 + $0x658] sm:$0xff] %v790
      %823 = vst [vmem:[#allocation3 + $0x6a0] sm:$0xff] %v791
      %824 = vst [vmem:[#allocation3 + $0x6e8] sm:$0xff] %v792
      %825 = vst [vmem:[#allocation3 + $0x730] sm:$0xff] %v793
      %826 = vst [vmem:[#allocation3 + $0x778] sm:$0xff] %v794
      %827 = vst [vmem:[#allocation3 + $0x7c0] sm:$0xff] %v795
      %828 = vst [vmem:[#allocation3 + $0x808] sm:$0xff] %v796
      %829 = vst [vmem:[#allocation3 + $0x850] sm:$0xff] %v797
      %830 = vst [vmem:[#allocation3 + $0x898] sm:$0xff] %v798
      %831 = vst [vmem:[#allocation3 + $0x8e0] sm:$0xff] %v799
      %s832 = scalar_lea.vmem [#allocation2], 48
      %v833 = vld [vmem:[%s832] sm:$0xff]
      %v834 = vld [vmem:[%s832 + $0x8] sm:$0xff]
      %v835 = vld [vmem:[%s832 + $0x18] sm:$0xff]
      %v836 = vld [vmem:[%s832 + $0x20] sm:$0xff]
      %v837 = vld [vmem:[%s832 + $0x30] sm:$0xff]
      %v838 = vld [vmem:[%s832 + $0x38] sm:$0xff]
      %v839 = vld [vmem:[%s832 + $0x48] sm:$0xff]
      %v840 = vld [vmem:[%s832 + $0x50] sm:$0xff]
      %v841 = vld [vmem:[%s832 + $0x60] sm:$0xff]
      %v842 = vld [vmem:[%s832 + $0x68] sm:$0xff]
      %v843 = vld [vmem:[%s832 + $0x78] sm:$0xff]
      %v844 = vld [vmem:[%s832 + $0x80] sm:$0xff]
      %v845 = vld [vmem:[%s832 + $0x90] sm:$0xff]
      %v846 = vld [vmem:[%s832 + $0x98] sm:$0xff]
      %v847 = vld [vmem:[%s832 + $0xa8] sm:$0xff]
      %v848 = vld [vmem:[%s832 + $0xb0] sm:$0xff]
      %v849 = vld [vmem:[%s832 + $0xc0] sm:$0xff]
      %v850 = vld [vmem:[%s832 + $0xc8] sm:$0xff]
      %v851 = vld [vmem:[%s832 + $0xd8] sm:$0xff]
      %v852 = vld [vmem:[%s832 + $0xe0] sm:$0xff]
      %v853 = vld [vmem:[%s832 + $0xf0] sm:$0xff]
      %v854 = vld [vmem:[%s832 + $0xf8] sm:$0xff]
      %v855 = vld [vmem:[%s832 + $0x108] sm:$0xff]
      %v856 = vld [vmem:[%s832 + $0x110] sm:$0xff]
      %v857 = vld [vmem:[%s832 + $0x120] sm:$0xff]
      %v858 = vld [vmem:[%s832 + $0x128] sm:$0xff]
      %v859 = vld [vmem:[%s832 + $0x138] sm:$0xff]
      %v860 = vld [vmem:[%s832 + $0x140] sm:$0xff]
      %v861 = vld [vmem:[%s832 + $0x150] sm:$0xff]
      %v862 = vld [vmem:[%s832 + $0x158] sm:$0xff]
      %v863 = vld [vmem:[%s832 + $0x168] sm:$0xff]
      %v864 = vld [vmem:[%s832 + $0x170] sm:$0xff]
      %865 = vst [vmem:[#allocation3 + $0x30] sm:$0xff] %v833
      %866 = vst [vmem:[#allocation3 + $0x78] sm:$0xff] %v834
      %867 = vst [vmem:[#allocation3 + $0xc0] sm:$0xff] %v835
      %868 = vst [vmem:[#allocation3 + $0x108] sm:$0xff] %v836
      %869 = vst [vmem:[#allocation3 + $0x150] sm:$0xff] %v837
      %870 = vst [vmem:[#allocation3 + $0x198] sm:$0xff] %v838
      %871 = vst [vmem:[#allocation3 + $0x1e0] sm:$0xff] %v839
      %872 = vst [vmem:[#allocation3 + $0x228] sm:$0xff] %v840
      %873 = vst [vmem:[#allocation3 + $0x270] sm:$0xff] %v841
      %874 = vst [vmem:[#allocation3 + $0x2b8] sm:$0xff] %v842
      %875 = vst [vmem:[#allocation3 + $0x300] sm:$0xff] %v843
      %876 = vst [vmem:[#allocation3 + $0x348] sm:$0xff] %v844
      %877 = vst [vmem:[#allocation3 + $0x390] sm:$0xff] %v845
      %878 = vst [vmem:[#allocation3 + $0x3d8] sm:$0xff] %v846
      %879 = vst [vmem:[#allocation3 + $0x420] sm:$0xff] %v847
      %880 = vst [vmem:[#allocation3 + $0x468] sm:$0xff] %v848
      %881 = vst [vmem:[#allocation3 + $0x4b0] sm:$0xff] %v849
      %882 = vst [vmem:[#allocation3 + $0x4f8] sm:$0xff] %v850
      %883 = vst [vmem:[#allocation3 + $0x540] sm:$0xff] %v851
      %884 = vst [vmem:[#allocation3 + $0x588] sm:$0xff] %v852
      %885 = vst [vmem:[#allocation3 + $0x5d0] sm:$0xff] %v853
      %886 = vst [vmem:[#allocation3 + $0x618] sm:$0xff] %v854
      %887 = vst [vmem:[#allocation3 + $0x660] sm:$0xff] %v855
      %888 = vst [vmem:[#allocation3 + $0x6a8] sm:$0xff] %v856
      %889 = vst [vmem:[#allocation3 + $0x6f0] sm:$0xff] %v857
      %890 = vst [vmem:[#allocation3 + $0x738] sm:$0xff] %v858
      %891 = vst [vmem:[#allocation3 + $0x780] sm:$0xff] %v859
      %892 = vst [vmem:[#allocation3 + $0x7c8] sm:$0xff] %v860
      %893 = vst [vmem:[#allocation3 + $0x810] sm:$0xff] %v861
      %894 = vst [vmem:[#allocation3 + $0x858] sm:$0xff] %v862
      %895 = vst [vmem:[#allocation3 + $0x8a0] sm:$0xff] %v863
      %896 = vst [vmem:[#allocation3 + $0x8e8] sm:$0xff] %v864
      %v897 = vld [vmem:[%s832 + $0x1] sm:$0xff]
      %v898 = vld [vmem:[%s832 + $0x9] sm:$0xff]
      %v899 = vld [vmem:[%s832 + $0x19] sm:$0xff]
      %v900 = vld [vmem:[%s832 + $0x21] sm:$0xff]
      %v901 = vld [vmem:[%s832 + $0x31] sm:$0xff]
      %v902 = vld [vmem:[%s832 + $0x39] sm:$0xff]
      %v903 = vld [vmem:[%s832 + $0x49] sm:$0xff]
      %v904 = vld [vmem:[%s832 + $0x51] sm:$0xff]
      %v905 = vld [vmem:[%s832 + $0x61] sm:$0xff]
      %v906 = vld [vmem:[%s832 + $0x69] sm:$0xff]
      %v907 = vld [vmem:[%s832 + $0x79] sm:$0xff]
      %v908 = vld [vmem:[%s832 + $0x81] sm:$0xff]
      %v909 = vld [vmem:[%s832 + $0x91] sm:$0xff]
      %v910 = vld [vmem:[%s832 + $0x99] sm:$0xff]
      %v911 = vld [vmem:[%s832 + $0xa9] sm:$0xff]
      %v912 = vld [vmem:[%s832 + $0xb1] sm:$0xff]
      %v913 = vld [vmem:[%s832 + $0xc1] sm:$0xff]
      %v914 = vld [vmem:[%s832 + $0xc9] sm:$0xff]
      %v915 = vld [vmem:[%s832 + $0xd9] sm:$0xff]
      %v916 = vld [vmem:[%s832 + $0xe1] sm:$0xff]
      %v917 = vld [vmem:[%s832 + $0xf1] sm:$0xff]
      %v918 = vld [vmem:[%s832 + $0xf9] sm:$0xff]
      %v919 = vld [vmem:[%s832 + $0x109] sm:$0xff]
      %v920 = vld [vmem:[%s832 + $0x111] sm:$0xff]
      %v921 = vld [vmem:[%s832 + $0x121] sm:$0xff]
      %v922 = vld [vmem:[%s832 + $0x129] sm:$0xff]
      %v923 = vld [vmem:[%s832 + $0x139] sm:$0xff]
      %v924 = vld [vmem:[%s832 + $0x141] sm:$0xff]
      %v925 = vld [vmem:[%s832 + $0x151] sm:$0xff]
      %v926 = vld [vmem:[%s832 + $0x159] sm:$0xff]
      %v927 = vld [vmem:[%s832 + $0x169] sm:$0xff]
      %v928 = vld [vmem:[%s832 + $0x171] sm:$0xff]
      %929 = vst [vmem:[#allocation3 + $0x38] sm:$0xff] %v897
      %930 = vst [vmem:[#allocation3 + $0x80] sm:$0xff] %v898
      %931 = vst [vmem:[#allocation3 + $0xc8] sm:$0xff] %v899
      %932 = vst [vmem:[#allocation3 + $0x110] sm:$0xff] %v900
      %933 = vst [vmem:[#allocation3 + $0x158] sm:$0xff] %v901
      %934 = vst [vmem:[#allocation3 + $0x1a0] sm:$0xff] %v902
      %935 = vst [vmem:[#allocation3 + $0x1e8] sm:$0xff] %v903
      %936 = vst [vmem:[#allocation3 + $0x230] sm:$0xff] %v904
      %937 = vst [vmem:[#allocation3 + $0x278] sm:$0xff] %v905
      %938 = vst [vmem:[#allocation3 + $0x2c0] sm:$0xff] %v906
      %939 = vst [vmem:[#allocation3 + $0x308] sm:$0xff] %v907
      %940 = vst [vmem:[#allocation3 + $0x350] sm:$0xff] %v908
      %941 = vst [vmem:[#allocation3 + $0x398] sm:$0xff] %v909
      %942 = vst [vmem:[#allocation3 + $0x3e0] sm:$0xff] %v910
      %943 = vst [vmem:[#allocation3 + $0x428] sm:$0xff] %v911
      %944 = vst [vmem:[#allocation3 + $0x470] sm:$0xff] %v912
      %945 = vst [vmem:[#allocation3 + $0x4b8] sm:$0xff] %v913
      %946 = vst [vmem:[#allocation3 + $0x500] sm:$0xff] %v914
      %947 = vst [vmem:[#allocation3 + $0x548] sm:$0xff] %v915
      %948 = vst [vmem:[#allocation3 + $0x590] sm:$0xff] %v916
      %949 = vst [vmem:[#allocation3 + $0x5d8] sm:$0xff] %v917
      %950 = vst [vmem:[#allocation3 + $0x620] sm:$0xff] %v918
      %951 = vst [vmem:[#allocation3 + $0x668] sm:$0xff] %v919
      %952 = vst [vmem:[#allocation3 + $0x6b0] sm:$0xff] %v920
      %953 = vst [vmem:[#allocation3 + $0x6f8] sm:$0xff] %v921
      %954 = vst [vmem:[#allocation3 + $0x740] sm:$0xff] %v922
      %955 = vst [vmem:[#allocation3 + $0x788] sm:$0xff] %v923
      %956 = vst [vmem:[#allocation3 + $0x7d0] sm:$0xff] %v924
      %957 = vst [vmem:[#allocation3 + $0x818] sm:$0xff] %v925
      %958 = vst [vmem:[#allocation3 + $0x860] sm:$0xff] %v926
      %959 = vst [vmem:[#allocation3 + $0x8a8] sm:$0xff] %v927
      %960 = vst [vmem:[#allocation3 + $0x8f0] sm:$0xff] %v928
      %v961 = vld [vmem:[%s832 + $0x2] sm:$0xff]
      %v962 = vld [vmem:[%s832 + $0xa] sm:$0xff]
      %v963 = vld [vmem:[%s832 + $0x1a] sm:$0xff]
      %v964 = vld [vmem:[%s832 + $0x22] sm:$0xff]
      %v965 = vld [vmem:[%s832 + $0x32] sm:$0xff]
      %v966 = vld [vmem:[%s832 + $0x3a] sm:$0xff]
      %v967 = vld [vmem:[%s832 + $0x4a] sm:$0xff]
      %v968 = vld [vmem:[%s832 + $0x52] sm:$0xff]
      %v969 = vld [vmem:[%s832 + $0x62] sm:$0xff]
      %v970 = vld [vmem:[%s832 + $0x6a] sm:$0xff]
      %v971 = vld [vmem:[%s832 + $0x7a] sm:$0xff]
      %v972 = vld [vmem:[%s832 + $0x82] sm:$0xff]
      %v973 = vld [vmem:[%s832 + $0x92] sm:$0xff]
      %v974 = vld [vmem:[%s832 + $0x9a] sm:$0xff]
      %v975 = vld [vmem:[%s832 + $0xaa] sm:$0xff]
      %v976 = vld [vmem:[%s832 + $0xb2] sm:$0xff]
      %v977 = vld [vmem:[%s832 + $0xc2] sm:$0xff]
      %v978 = vld [vmem:[%s832 + $0xca] sm:$0xff]
      %v979 = vld [vmem:[%s832 + $0xda] sm:$0xff]
      %v980 = vld [vmem:[%s832 + $0xe2] sm:$0xff]
      %v981 = vld [vmem:[%s832 + $0xf2] sm:$0xff]
      %v982 = vld [vmem:[%s832 + $0xfa] sm:$0xff]
      %v983 = vld [vmem:[%s832 + $0x10a] sm:$0xff]
      %v984 = vld [vmem:[%s832 + $0x112] sm:$0xff]
      %v985 = vld [vmem:[%s832 + $0x122] sm:$0xff]
      %v986 = vld [vmem:[%s832 + $0x12a] sm:$0xff]
      %v987 = vld [vmem:[%s832 + $0x13a] sm:$0xff]
      %v988 = vld [vmem:[%s832 + $0x142] sm:$0xff]
      %v989 = vld [vmem:[%s832 + $0x152] sm:$0xff]
      %v990 = vld [vmem:[%s832 + $0x15a] sm:$0xff]
      %v991 = vld [vmem:[%s832 + $0x16a] sm:$0xff]
      %v992 = vld [vmem:[%s832 + $0x172] sm:$0xff]
      %993 = vst [vmem:[#allocation3 + $0x40] sm:$0xff] %v961
      %994 = vst [vmem:[#allocation3 + $0x88] sm:$0xff] %v962
      %995 = vst [vmem:[#allocation3 + $0xd0] sm:$0xff] %v963
      %996 = vst [vmem:[#allocation3 + $0x118] sm:$0xff] %v964
      %997 = vst [vmem:[#allocation3 + $0x160] sm:$0xff] %v965
      %998 = vst [vmem:[#allocation3 + $0x1a8] sm:$0xff] %v966
      %999 = vst [vmem:[#allocation3 + $0x1f0] sm:$0xff] %v967
      %1000 = vst [vmem:[#allocation3 + $0x238] sm:$0xff] %v968
      %1001 = vst [vmem:[#allocation3 + $0x280] sm:$0xff] %v969
      %1002 = vst [vmem:[#allocation3 + $0x2c8] sm:$0xff] %v970
      %1003 = vst [vmem:[#allocation3 + $0x310] sm:$0xff] %v971
      %1004 = vst [vmem:[#allocation3 + $0x358] sm:$0xff] %v972
      %1005 = vst [vmem:[#allocation3 + $0x3a0] sm:$0xff] %v973
      %1006 = vst [vmem:[#allocation3 + $0x3e8] sm:$0xff] %v974
      %1007 = vst [vmem:[#allocation3 + $0x430] sm:$0xff] %v975
      %1008 = vst [vmem:[#allocation3 + $0x478] sm:$0xff] %v976
      %1009 = vst [vmem:[#allocation3 + $0x4c0] sm:$0xff] %v977
      %1010 = vst [vmem:[#allocation3 + $0x508] sm:$0xff] %v978
      %1011 = vst [vmem:[#allocation3 + $0x550] sm:$0xff] %v979
      %1012 = vst [vmem:[#allocation3 + $0x598] sm:$0xff] %v980
      %1013 = vst [vmem:[#allocation3 + $0x5e0] sm:$0xff] %v981
      %1014 = vst [vmem:[#allocation3 + $0x628] sm:$0xff] %v982
      %1015 = vst [vmem:[#allocation3 + $0x670] sm:$0xff] %v983
      %1016 = vst [vmem:[#allocation3 + $0x6b8] sm:$0xff] %v984
      %1017 = vst [vmem:[#allocation3 + $0x700] sm:$0xff] %v985
      %1018 = vst [vmem:[#allocation3 + $0x748] sm:$0xff] %v986
      %1019 = vst [vmem:[#allocation3 + $0x790] sm:$0xff] %v987
      %1020 = vst [vmem:[#allocation3 + $0x7d8] sm:$0xff] %v988
      %1021 = vst [vmem:[#allocation3 + $0x820] sm:$0xff] %v989
      %1022 = vst [vmem:[#allocation3 + $0x868] sm:$0xff] %v990
      %1023 = vst [vmem:[#allocation3 + $0x8b0] sm:$0xff] %v991
      %1024 = vst [vmem:[#allocation3 + $0x8f8] sm:$0xff] %v992
      %v1025 = vld [vmem:[#allocation3] sm:$0xff]
      %v1026 = vld [vmem:[#allocation3 + $0x8] sm:$0xff]
      %v1027 = vld [vmem:[#allocation3 + $0x10] sm:$0xff]
      %v1028 = vld [vmem:[#allocation3 + $0x18] sm:$0xff]
      %v1029 = vld [vmem:[#allocation3 + $0x20] sm:$0xff]
      %v1030 = vld [vmem:[#allocation3 + $0x28] sm:$0xff]
      %v1031 = vld [vmem:[#allocation3 + $0x30] sm:$0xff]
      %v1032 = vld [vmem:[#allocation3 + $0x38] sm:$0xff]
      %v1033 = vld [vmem:[#allocation3 + $0x40] sm:$0xff]
      %v1034 = vld [vmem:[#allocation3 + $0x48] sm:$0xff]
      %v1035 = vld [vmem:[#allocation3 + $0x50] sm:$0xff]
      %v1036 = vld [vmem:[#allocation3 + $0x58] sm:$0xff]
      %v1037 = vld [vmem:[#allocation3 + $0x60] sm:$0xff]
      %v1038 = vld [vmem:[#allocation3 + $0x68] sm:$0xff]
      %v1039 = vld [vmem:[#allocation3 + $0x70] sm:$0xff]
      %v1040 = vld [vmem:[#allocation3 + $0x78] sm:$0xff]
      %v1041 = vld [vmem:[#allocation3 + $0x80] sm:$0xff]
      %v1042 = vld [vmem:[#allocation3 + $0x88] sm:$0xff]
      %v1043 = vld [vmem:[#allocation3 + $0x90] sm:$0xff]
      %v1044 = vld [vmem:[#allocation3 + $0x98] sm:$0xff]
      %v1045 = vld [vmem:[#allocation3 + $0xa0] sm:$0xff]
      %v1046 = vld [vmem:[#allocation3 + $0xa8] sm:$0xff]
      %v1047 = vld [vmem:[#allocation3 + $0xb0] sm:$0xff]
      %v1048 = vld [vmem:[#allocation3 + $0xb8] sm:$0xff]
      %v1049 = vld [vmem:[#allocation3 + $0xc0] sm:$0xff]
      %v1050 = vld [vmem:[#allocation3 + $0xc8] sm:$0xff]
      %v1051 = vld [vmem:[#allocation3 + $0xd0] sm:$0xff]
      %v1052 = vld [vmem:[#allocation3 + $0xd8] sm:$0xff]
      %v1053 = vld [vmem:[#allocation3 + $0xe0] sm:$0xff]
      %v1054 = vld [vmem:[#allocation3 + $0xe8] sm:$0xff]
      %v1055 = vld [vmem:[#allocation3 + $0xf0] sm:$0xff]
      %v1056 = vld [vmem:[#allocation3 + $0xf8] sm:$0xff]
      %v1057 = vld [vmem:[#allocation3 + $0x100] sm:$0xff]
      %v1058 = vld [vmem:[#allocation3 + $0x108] sm:$0xff]
      %v1059 = vld [vmem:[#allocation3 + $0x110] sm:$0xff]
      %v1060 = vld [vmem:[#allocation3 + $0x118] sm:$0xff]
      %v1061 = vld [vmem:[#allocation3 + $0x120] sm:$0xff]
      %v1062 = vld [vmem:[#allocation3 + $0x128] sm:$0xff]
      %v1063 = vld [vmem:[#allocation3 + $0x130] sm:$0xff]
      %v1064 = vld [vmem:[#allocation3 + $0x138] sm:$0xff]
      %v1065 = vld [vmem:[#allocation3 + $0x140] sm:$0xff]
      %v1066 = vld [vmem:[#allocation3 + $0x148] sm:$0xff]
      %v1067 = vld [vmem:[#allocation3 + $0x150] sm:$0xff]
      %v1068 = vld [vmem:[#allocation3 + $0x158] sm:$0xff]
      %v1069 = vld [vmem:[#allocation3 + $0x160] sm:$0xff]
      %v1070 = vld [vmem:[#allocation3 + $0x168] sm:$0xff]
      %v1071 = vld [vmem:[#allocation3 + $0x170] sm:$0xff]
      %v1072 = vld [vmem:[#allocation3 + $0x178] sm:$0xff]
      %v1073 = vld [vmem:[#allocation3 + $0x180] sm:$0xff]
      %v1074 = vld [vmem:[#allocation3 + $0x188] sm:$0xff]
      %v1075 = vld [vmem:[#allocation3 + $0x190] sm:$0xff]
      %v1076 = vld [vmem:[#allocation3 + $0x198] sm:$0xff]
      %v1077 = vld [vmem:[#allocation3 + $0x1a0] sm:$0xff]
      %v1078 = vld [vmem:[#allocation3 + $0x1a8] sm:$0xff]
      %v1079 = vld [vmem:[#allocation3 + $0x1b0] sm:$0xff]
      %v1080 = vld [vmem:[#allocation3 + $0x1b8] sm:$0xff]
      %v1081 = vld [vmem:[#allocation3 + $0x1c0] sm:$0xff]
      %v1082 = vld [vmem:[#allocation3 + $0x1c8] sm:$0xff]
      %v1083 = vld [vmem:[#allocation3 + $0x1d0] sm:$0xff]
      %v1084 = vld [vmem:[#allocation3 + $0x1d8] sm:$0xff]
      %v1085 = vld [vmem:[#allocation3 + $0x1e0] sm:$0xff]
      %v1086 = vld [vmem:[#allocation3 + $0x1e8] sm:$0xff]
      %v1087 = vld [vmem:[#allocation3 + $0x1f0] sm:$0xff]
      %v1088 = vld [vmem:[#allocation3 + $0x1f8] sm:$0xff]
      %v1089 = vld [vmem:[#allocation3 + $0x200] sm:$0xff]
      %v1090 = vld [vmem:[#allocation3 + $0x208] sm:$0xff]
      %v1091 = vld [vmem:[#allocation3 + $0x210] sm:$0xff]
      %v1092 = vld [vmem:[#allocation3 + $0x218] sm:$0xff]
      %v1093 = vld [vmem:[#allocation3 + $0x220] sm:$0xff]
      %v1094 = vld [vmem:[#allocation3 + $0x228] sm:$0xff]
      %v1095 = vld [vmem:[#allocation3 + $0x230] sm:$0xff]
      %v1096 = vld [vmem:[#allocation3 + $0x238] sm:$0xff]
      %v1097 = vld [vmem:[#allocation3 + $0x240] sm:$0xff]
      %v1098 = vld [vmem:[#allocation3 + $0x248] sm:$0xff]
      %v1099 = vld [vmem:[#allocation3 + $0x250] sm:$0xff]
      %v1100 = vld [vmem:[#allocation3 + $0x258] sm:$0xff]
      %v1101 = vld [vmem:[#allocation3 + $0x260] sm:$0xff]
      %v1102 = vld [vmem:[#allocation3 + $0x268] sm:$0xff]
      %v1103 = vld [vmem:[#allocation3 + $0x270] sm:$0xff]
      %v1104 = vld [vmem:[#allocation3 + $0x278] sm:$0xff]
      %v1105 = vld [vmem:[#allocation3 + $0x280] sm:$0xff]
      %v1106 = vld [vmem:[#allocation3 + $0x288] sm:$0xff]
      %v1107 = vld [vmem:[#allocation3 + $0x290] sm:$0xff]
      %v1108 = vld [vmem:[#allocation3 + $0x298] sm:$0xff]
      %v1109 = vld [vmem:[#allocation3 + $0x2a0] sm:$0xff]
      %v1110 = vld [vmem:[#allocation3 + $0x2a8] sm:$0xff]
      %v1111 = vld [vmem:[#allocation3 + $0x2b0] sm:$0xff]
      %v1112 = vld [vmem:[#allocation3 + $0x2b8] sm:$0xff]
      %v1113 = vld [vmem:[#allocation3 + $0x2c0] sm:$0xff]
      %v1114 = vld [vmem:[#allocation3 + $0x2c8] sm:$0xff]
      %v1115 = vld [vmem:[#allocation3 + $0x2d0] sm:$0xff]
      %v1116 = vld [vmem:[#allocation3 + $0x2d8] sm:$0xff]
      %v1117 = vld [vmem:[#allocation3 + $0x2e0] sm:$0xff]
      %v1118 = vld [vmem:[#allocation3 + $0x2e8] sm:$0xff]
      %v1119 = vld [vmem:[#allocation3 + $0x2f0] sm:$0xff]
      %v1120 = vld [vmem:[#allocation3 + $0x2f8] sm:$0xff]
      %v1121 = vld [vmem:[#allocation3 + $0x300] sm:$0xff]
      %v1122 = vld [vmem:[#allocation3 + $0x308] sm:$0xff]
      %v1123 = vld [vmem:[#allocation3 + $0x310] sm:$0xff]
      %v1124 = vld [vmem:[#allocation3 + $0x318] sm:$0xff]
      %v1125 = vld [vmem:[#allocation3 + $0x320] sm:$0xff]
      %v1126 = vld [vmem:[#allocation3 + $0x328] sm:$0xff]
      %v1127 = vld [vmem:[#allocation3 + $0x330] sm:$0xff]
      %v1128 = vld [vmem:[#allocation3 + $0x338] sm:$0xff]
      %v1129 = vld [vmem:[#allocation3 + $0x340] sm:$0xff]
      %v1130 = vld [vmem:[#allocation3 + $0x348] sm:$0xff]
      %v1131 = vld [vmem:[#allocation3 + $0x350] sm:$0xff]
      %v1132 = vld [vmem:[#allocation3 + $0x358] sm:$0xff]
      %v1133 = vld [vmem:[#allocation3 + $0x360] sm:$0xff]
      %v1134 = vld [vmem:[#allocation3 + $0x368] sm:$0xff]
      %v1135 = vld [vmem:[#allocation3 + $0x370] sm:$0xff]
      %v1136 = vld [vmem:[#allocation3 + $0x378] sm:$0xff]
      %v1137 = vld [vmem:[#allocation3 + $0x380] sm:$0xff]
      %v1138 = vld [vmem:[#allocation3 + $0x388] sm:$0xff]
      %v1139 = vld [vmem:[#allocation3 + $0x390] sm:$0xff]
      %v1140 = vld [vmem:[#allocation3 + $0x398] sm:$0xff]
      %v1141 = vld [vmem:[#allocation3 + $0x3a0] sm:$0xff]
      %v1142 = vld [vmem:[#allocation3 + $0x3a8] sm:$0xff]
      %v1143 = vld [vmem:[#allocation3 + $0x3b0] sm:$0xff]
      %v1144 = vld [vmem:[#allocation3 + $0x3b8] sm:$0xff]
      %v1145 = vld [vmem:[#allocation3 + $0x3c0] sm:$0xff]
      %v1146 = vld [vmem:[#allocation3 + $0x3c8] sm:$0xff]
      %v1147 = vld [vmem:[#allocation3 + $0x3d0] sm:$0xff]
      %v1148 = vld [vmem:[#allocation3 + $0x3d8] sm:$0xff]
      %v1149 = vld [vmem:[#allocation3 + $0x3e0] sm:$0xff]
      %v1150 = vld [vmem:[#allocation3 + $0x3e8] sm:$0xff]
      %v1151 = vld [vmem:[#allocation3 + $0x3f0] sm:$0xff]
      %v1152 = vld [vmem:[#allocation3 + $0x3f8] sm:$0xff]
      %v1153 = vld [vmem:[#allocation3 + $0x400] sm:$0xff]
      %v1154 = vld [vmem:[#allocation3 + $0x408] sm:$0xff]
      %v1155 = vld [vmem:[#allocation3 + $0x410] sm:$0xff]
      %v1156 = vld [vmem:[#allocation3 + $0x418] sm:$0xff]
      %v1157 = vld [vmem:[#allocation3 + $0x420] sm:$0xff]
      %v1158 = vld [vmem:[#allocation3 + $0x428] sm:$0xff]
      %v1159 = vld [vmem:[#allocation3 + $0x430] sm:$0xff]
      %v1160 = vld [vmem:[#allocation3 + $0x438] sm:$0xff]
      %v1161 = vld [vmem:[#allocation3 + $0x440] sm:$0xff]
      %v1162 = vld [vmem:[#allocation3 + $0x448] sm:$0xff]
      %v1163 = vld [vmem:[#allocation3 + $0x450] sm:$0xff]
      %v1164 = vld [vmem:[#allocation3 + $0x458] sm:$0xff]
      %v1165 = vld [vmem:[#allocation3 + $0x460] sm:$0xff]
      %v1166 = vld [vmem:[#allocation3 + $0x468] sm:$0xff]
      %v1167 = vld [vmem:[#allocation3 + $0x470] sm:$0xff]
      %v1168 = vld [vmem:[#allocation3 + $0x478] sm:$0xff]
      %v1169 = vld [vmem:[#allocation3 + $0x480] sm:$0xff]
      %v1170 = vld [vmem:[#allocation3 + $0x488] sm:$0xff]
      %v1171 = vld [vmem:[#allocation3 + $0x490] sm:$0xff]
      %v1172 = vld [vmem:[#allocation3 + $0x498] sm:$0xff]
      %v1173 = vld [vmem:[#allocation3 + $0x4a0] sm:$0xff]
      %v1174 = vld [vmem:[#allocation3 + $0x4a8] sm:$0xff]
      %v1175 = vld [vmem:[#allocation3 + $0x4b0] sm:$0xff]
      %v1176 = vld [vmem:[#allocation3 + $0x4b8] sm:$0xff]
      %v1177 = vld [vmem:[#allocation3 + $0x4c0] sm:$0xff]
      %v1178 = vld [vmem:[#allocation3 + $0x4c8] sm:$0xff]
      %v1179 = vld [vmem:[#allocation3 + $0x4d0] sm:$0xff]
      %v1180 = vld [vmem:[#allocation3 + $0x4d8] sm:$0xff]
      %v1181 = vld [vmem:[#allocation3 + $0x4e0] sm:$0xff]
      %v1182 = vld [vmem:[#allocation3 + $0x4e8] sm:$0xff]
      %v1183 = vld [vmem:[#allocation3 + $0x4f0] sm:$0xff]
      %v1184 = vld [vmem:[#allocation3 + $0x4f8] sm:$0xff]
      %v1185 = vld [vmem:[#allocation3 + $0x500] sm:$0xff]
      %v1186 = vld [vmem:[#allocation3 + $0x508] sm:$0xff]
      %v1187 = vld [vmem:[#allocation3 + $0x510] sm:$0xff]
      %v1188 = vld [vmem:[#allocation3 + $0x518] sm:$0xff]
      %v1189 = vld [vmem:[#allocation3 + $0x520] sm:$0xff]
      %v1190 = vld [vmem:[#allocation3 + $0x528] sm:$0xff]
      %v1191 = vld [vmem:[#allocation3 + $0x530] sm:$0xff]
      %v1192 = vld [vmem:[#allocation3 + $0x538] sm:$0xff]
      %v1193 = vld [vmem:[#allocation3 + $0x540] sm:$0xff]
      %v1194 = vld [vmem:[#allocation3 + $0x548] sm:$0xff]
      %v1195 = vld [vmem:[#allocation3 + $0x550] sm:$0xff]
      %v1196 = vld [vmem:[#allocation3 + $0x558] sm:$0xff]
      %v1197 = vld [vmem:[#allocation3 + $0x560] sm:$0xff]
      %v1198 = vld [vmem:[#allocation3 + $0x568] sm:$0xff]
      %v1199 = vld [vmem:[#allocation3 + $0x570] sm:$0xff]
      %v1200 = vld [vmem:[#allocation3 + $0x578] sm:$0xff]
      %v1201 = vld [vmem:[#allocation3 + $0x580] sm:$0xff]
      %v1202 = vld [vmem:[#allocation3 + $0x588] sm:$0xff]
      %v1203 = vld [vmem:[#allocation3 + $0x590] sm:$0xff]
      %v1204 = vld [vmem:[#allocation3 + $0x598] sm:$0xff]
      %v1205 = vld [vmem:[#allocation3 + $0x5a0] sm:$0xff]
      %v1206 = vld [vmem:[#allocation3 + $0x5a8] sm:$0xff]
      %v1207 = vld [vmem:[#allocation3 + $0x5b0] sm:$0xff]
      %v1208 = vld [vmem:[#allocation3 + $0x5b8] sm:$0xff]
      %v1209 = vld [vmem:[#allocation3 + $0x5c0] sm:$0xff]
      %v1210 = vld [vmem:[#allocation3 + $0x5c8] sm:$0xff]
      %v1211 = vld [vmem:[#allocation3 + $0x5d0] sm:$0xff]
      %v1212 = vld [vmem:[#allocation3 + $0x5d8] sm:$0xff]
      %v1213 = vld [vmem:[#allocation3 + $0x5e0] sm:$0xff]
      %v1214 = vld [vmem:[#allocation3 + $0x5e8] sm:$0xff]
      %v1215 = vld [vmem:[#allocation3 + $0x5f0] sm:$0xff]
      %v1216 = vld [vmem:[#allocation3 + $0x5f8] sm:$0xff]
      %v1217 = vld [vmem:[#allocation3 + $0x600] sm:$0xff]
      %v1218 = vld [vmem:[#allocation3 + $0x608] sm:$0xff]
      %v1219 = vld [vmem:[#allocation3 + $0x610] sm:$0xff]
      %v1220 = vld [vmem:[#allocation3 + $0x618] sm:$0xff]
      %v1221 = vld [vmem:[#allocation3 + $0x620] sm:$0xff]
      %v1222 = vld [vmem:[#allocation3 + $0x628] sm:$0xff]
      %v1223 = vld [vmem:[#allocation3 + $0x630] sm:$0xff]
      %v1224 = vld [vmem:[#allocation3 + $0x638] sm:$0xff]
      %v1225 = vld [vmem:[#allocation3 + $0x640] sm:$0xff]
      %v1226 = vld [vmem:[#allocation3 + $0x648] sm:$0xff]
      %v1227 = vld [vmem:[#allocation3 + $0x650] sm:$0xff]
      %v1228 = vld [vmem:[#allocation3 + $0x658] sm:$0xff]
      %v1229 = vld [vmem:[#allocation3 + $0x660] sm:$0xff]
      %v1230 = vld [vmem:[#allocation3 + $0x668] sm:$0xff]
      %v1231 = vld [vmem:[#allocation3 + $0x670] sm:$0xff]
      %v1232 = vld [vmem:[#allocation3 + $0x678] sm:$0xff]
      %v1233 = vld [vmem:[#allocation3 + $0x680] sm:$0xff]
      %v1234 = vld [vmem:[#allocation3 + $0x688] sm:$0xff]
      %v1235 = vld [vmem:[#allocation3 + $0x690] sm:$0xff]
      %v1236 = vld [vmem:[#allocation3 + $0x698] sm:$0xff]
      %v1237 = vld [vmem:[#allocation3 + $0x6a0] sm:$0xff]
      %v1238 = vld [vmem:[#allocation3 + $0x6a8] sm:$0xff]
      %v1239 = vld [vmem:[#allocation3 + $0x6b0] sm:$0xff]
      %v1240 = vld [vmem:[#allocation3 + $0x6b8] sm:$0xff]
      %v1241 = vld [vmem:[#allocation3 + $0x6c0] sm:$0xff]
      %v1242 = vld [vmem:[#allocation3 + $0x6c8] sm:$0xff]
      %v1243 = vld [vmem:[#allocation3 + $0x6d0] sm:$0xff]
      %v1244 = vld [vmem:[#allocation3 + $0x6d8] sm:$0xff]
      %v1245 = vld [vmem:[#allocation3 + $0x6e0] sm:$0xff]
      %v1246 = vld [vmem:[#allocation3 + $0x6e8] sm:$0xff]
      %v1247 = vld [vmem:[#allocation3 + $0x6f0] sm:$0xff]
      %v1248 = vld [vmem:[#allocation3 + $0x6f8] sm:$0xff]
      %v1249 = vld [vmem:[#allocation3 + $0x700] sm:$0xff]
      %v1250 = vld [vmem:[#allocation3 + $0x708] sm:$0xff]
      %v1251 = vld [vmem:[#allocation3 + $0x710] sm:$0xff]
      %v1252 = vld [vmem:[#allocation3 + $0x718] sm:$0xff]
      %v1253 = vld [vmem:[#allocation3 + $0x720] sm:$0xff]
      %v1254 = vld [vmem:[#allocation3 + $0x728] sm:$0xff]
      %v1255 = vld [vmem:[#allocation3 + $0x730] sm:$0xff]
      %v1256 = vld [vmem:[#allocation3 + $0x738] sm:$0xff]
      %v1257 = vld [vmem:[#allocation3 + $0x740] sm:$0xff]
      %v1258 = vld [vmem:[#allocation3 + $0x748] sm:$0xff]
      %v1259 = vld [vmem:[#allocation3 + $0x750] sm:$0xff]
      %v1260 = vld [vmem:[#allocation3 + $0x758] sm:$0xff]
      %v1261 = vld [vmem:[#allocation3 + $0x760] sm:$0xff]
      %v1262 = vld [vmem:[#allocation3 + $0x768] sm:$0xff]
      %v1263 = vld [vmem:[#allocation3 + $0x770] sm:$0xff]
      %v1264 = vld [vmem:[#allocation3 + $0x778] sm:$0xff]
      %v1265 = vld [vmem:[#allocation3 + $0x780] sm:$0xff]
      %v1266 = vld [vmem:[#allocation3 + $0x788] sm:$0xff]
      %v1267 = vld [vmem:[#allocation3 + $0x790] sm:$0xff]
      %v1268 = vld [vmem:[#allocation3 + $0x798] sm:$0xff]
      %v1269 = vld [vmem:[#allocation3 + $0x7a0] sm:$0xff]
      %v1270 = vld [vmem:[#allocation3 + $0x7a8] sm:$0xff]
      %v1271 = vld [vmem:[#allocation3 + $0x7b0] sm:$0xff]
      %v1272 = vld [vmem:[#allocation3 + $0x7b8] sm:$0xff]
      %v1273 = vld [vmem:[#allocation3 + $0x7c0] sm:$0xff]
      %v1274 = vld [vmem:[#allocation3 + $0x7c8] sm:$0xff]
      %v1275 = vld [vmem:[#allocation3 + $0x7d0] sm:$0xff]
      %v1276 = vld [vmem:[#allocation3 + $0x7d8] sm:$0xff]
      %v1277 = vld [vmem:[#allocation3 + $0x7e0] sm:$0xff]
      %v1278 = vld [vmem:[#allocation3 + $0x7e8] sm:$0xff]
      %v1279 = vld [vmem:[#allocation3 + $0x7f0] sm:$0xff]
      %v1280 = vld [vmem:[#allocation3 + $0x7f8] sm:$0xff]
      %v1281 = vld [vmem:[#allocation3 + $0x800] sm:$0xff]
      %v1282 = vld [vmem:[#allocation3 + $0x808] sm:$0xff]
      %v1283 = vld [vmem:[#allocation3 + $0x810] sm:$0xff]
      %v1284 = vld [vmem:[#allocation3 + $0x818] sm:$0xff]
      %v1285 = vld [vmem:[#allocation3 + $0x820] sm:$0xff]
      %v1286 = vld [vmem:[#allocation3 + $0x828] sm:$0xff]
      %v1287 = vld [vmem:[#allocation3 + $0x830] sm:$0xff]
      %v1288 = vld [vmem:[#allocation3 + $0x838] sm:$0xff]
      %v1289 = vld [vmem:[#allocation3 + $0x840] sm:$0xff]
      %v1290 = vld [vmem:[#allocation3 + $0x848] sm:$0xff]
      %v1291 = vld [vmem:[#allocation3 + $0x850] sm:$0xff]
      %v1292 = vld [vmem:[#allocation3 + $0x858] sm:$0xff]
      %v1293 = vld [vmem:[#allocation3 + $0x860] sm:$0xff]
      %v1294 = vld [vmem:[#allocation3 + $0x868] sm:$0xff]
      %v1295 = vld [vmem:[#allocation3 + $0x870] sm:$0xff]
      %v1296 = vld [vmem:[#allocation3 + $0x878] sm:$0xff]
      %v1297 = vld [vmem:[#allocation3 + $0x880] sm:$0xff]
      %v1298 = vld [vmem:[#allocation3 + $0x888] sm:$0xff]
      %v1299 = vld [vmem:[#allocation3 + $0x890] sm:$0xff]
      %v1300 = vld [vmem:[#allocation3 + $0x898] sm:$0xff]
      %v1301 = vld [vmem:[#allocation3 + $0x8a0] sm:$0xff]
      %v1302 = vld [vmem:[#allocation3 + $0x8a8] sm:$0xff]
      %v1303 = vld [vmem:[#allocation3 + $0x8b0] sm:$0xff]
      %v1304 = vld [vmem:[#allocation3 + $0x8b8] sm:$0xff]
      %v1305 = vld [vmem:[#allocation3 + $0x8c0] sm:$0xff]
      %v1306 = vld [vmem:[#allocation3 + $0x8c8] sm:$0xff]
      %v1307 = vld [vmem:[#allocation3 + $0x8d0] sm:$0xff]
      %v1308 = vld [vmem:[#allocation3 + $0x8d8] sm:$0xff]
      %v1309 = vld [vmem:[#allocation3 + $0x8e0] sm:$0xff]
      %v1310 = vld [vmem:[#allocation3 + $0x8e8] sm:$0xff]
      %v1311 = vld [vmem:[#allocation3 + $0x8f0] sm:$0xff]
      %v1312 = vld [vmem:[#allocation3 + $0x8f8] sm:$0xff]
      %v1313 = vld [vmem:[%s1] sm:$0xff]
      %v1314 = vld [vmem:[%s1 + $0x8] sm:$0xff]
      %v1315 = vld [vmem:[%s1 + $0x10] sm:$0xff]
      %v1316 = vld [vmem:[%s1 + $0x18] sm:$0xff]
      %v1317 = vld [vmem:[%s1 + $0x20] sm:$0xff]
      %v1318 = vld [vmem:[%s1 + $0x28] sm:$0xff]
      %v1319 = vld [vmem:[%s1 + $0x30] sm:$0xff]
      %v1320 = vld [vmem:[%s1 + $0x38] sm:$0xff]
      %v1321 = vld [vmem:[%s1 + $0x40] sm:$0xff]
      %v1322 = vld [vmem:[%s1 + $0x48] sm:$0xff]
      %v1323 = vld [vmem:[%s1 + $0x50] sm:$0xff]
      %v1324 = vld [vmem:[%s1 + $0x58] sm:$0xff]
      %v1325 = vld [vmem:[%s1 + $0x60] sm:$0xff]
      %v1326 = vld [vmem:[%s1 + $0x68] sm:$0xff]
      %v1327 = vld [vmem:[%s1 + $0x70] sm:$0xff]
      %v1328 = vld [vmem:[%s1 + $0x78] sm:$0xff]
      %v1329 = vld [vmem:[%s1 + $0x80] sm:$0xff]
      %v1330 = vld [vmem:[%s1 + $0x88] sm:$0xff]
      %v1331 = vld [vmem:[%s1 + $0x90] sm:$0xff]
      %v1332 = vld [vmem:[%s1 + $0x98] sm:$0xff]
      %v1333 = vld [vmem:[%s1 + $0xa0] sm:$0xff]
      %v1334 = vld [vmem:[%s1 + $0xa8] sm:$0xff]
      %v1335 = vld [vmem:[%s1 + $0xb0] sm:$0xff]
      %v1336 = vld [vmem:[%s1 + $0xb8] sm:$0xff]
      %v1337 = vld [vmem:[%s1 + $0xc0] sm:$0xff]
      %v1338 = vld [vmem:[%s1 + $0xc8] sm:$0xff]
      %v1339 = vld [vmem:[%s1 + $0xd0] sm:$0xff]
      %v1340 = vld [vmem:[%s1 + $0xd8] sm:$0xff]
      %v1341 = vld [vmem:[%s1 + $0xe0] sm:$0xff]
      %v1342 = vld [vmem:[%s1 + $0xe8] sm:$0xff]
      %v1343 = vld [vmem:[%s1 + $0xf0] sm:$0xff]
      %v1344 = vld [vmem:[%s1 + $0xf8] sm:$0xff]
      %v1345 = vld [vmem:[%s1 + $0x100] sm:$0xff]
      %v1346 = vld [vmem:[%s1 + $0x108] sm:$0xff]
      %v1347 = vld [vmem:[%s1 + $0x110] sm:$0xff]
      %v1348 = vld [vmem:[%s1 + $0x118] sm:$0xff]
      %v1349 = vld [vmem:[%s1 + $0x120] sm:$0xff]
      %v1350 = vld [vmem:[%s1 + $0x128] sm:$0xff]
      %v1351 = vld [vmem:[%s1 + $0x130] sm:$0xff]
      %v1352 = vld [vmem:[%s1 + $0x138] sm:$0xff]
      %v1353 = vld [vmem:[%s1 + $0x140] sm:$0xff]
      %v1354 = vld [vmem:[%s1 + $0x148] sm:$0xff]
      %v1355 = vld [vmem:[%s1 + $0x150] sm:$0xff]
      %v1356 = vld [vmem:[%s1 + $0x158] sm:$0xff]
      %v1357 = vld [vmem:[%s1 + $0x160] sm:$0xff]
      %v1358 = vld [vmem:[%s1 + $0x168] sm:$0xff]
      %v1359 = vld [vmem:[%s1 + $0x170] sm:$0xff]
      %v1360 = vld [vmem:[%s1 + $0x178] sm:$0xff]
      %v1361 = vld [vmem:[%s1 + $0x180] sm:$0xff]
      %v1362 = vld [vmem:[%s1 + $0x188] sm:$0xff]
      %v1363 = vld [vmem:[%s1 + $0x190] sm:$0xff]
      %v1364 = vld [vmem:[%s1 + $0x198] sm:$0xff]
      %v1365 = vld [vmem:[%s1 + $0x1a0] sm:$0xff]
      %v1366 = vld [vmem:[%s1 + $0x1a8] sm:$0xff]
      %v1367 = vld [vmem:[%s1 + $0x1b0] sm:$0xff]
      %v1368 = vld [vmem:[%s1 + $0x1b8] sm:$0xff]
      %v1369 = vld [vmem:[%s1 + $0x1c0] sm:$0xff]
      %v1370 = vld [vmem:[%s1 + $0x1c8] sm:$0xff]
      %v1371 = vld [vmem:[%s1 + $0x1d0] sm:$0xff]
      %v1372 = vld [vmem:[%s1 + $0x1d8] sm:$0xff]
      %v1373 = vld [vmem:[%s1 + $0x1e0] sm:$0xff]
      %v1374 = vld [vmem:[%s1 + $0x1e8] sm:$0xff]
      %v1375 = vld [vmem:[%s1 + $0x1f0] sm:$0xff]
      %v1376 = vld [vmem:[%s1 + $0x1f8] sm:$0xff]
      %v1377 = vld [vmem:[%s1 + $0x200] sm:$0xff]
      %v1378 = vld [vmem:[%s1 + $0x208] sm:$0xff]
      %v1379 = vld [vmem:[%s1 + $0x210] sm:$0xff]
      %v1380 = vld [vmem:[%s1 + $0x218] sm:$0xff]
      %v1381 = vld [vmem:[%s1 + $0x220] sm:$0xff]
      %v1382 = vld [vmem:[%s1 + $0x228] sm:$0xff]
      %v1383 = vld [vmem:[%s1 + $0x230] sm:$0xff]
      %v1384 = vld [vmem:[%s1 + $0x238] sm:$0xff]
      %v1385 = vld [vmem:[%s1 + $0x240] sm:$0xff]
      %v1386 = vld [vmem:[%s1 + $0x248] sm:$0xff]
      %v1387 = vld [vmem:[%s1 + $0x250] sm:$0xff]
      %v1388 = vld [vmem:[%s1 + $0x258] sm:$0xff]
      %v1389 = vld [vmem:[%s1 + $0x260] sm:$0xff]
      %v1390 = vld [vmem:[%s1 + $0x268] sm:$0xff]
      %v1391 = vld [vmem:[%s1 + $0x270] sm:$0xff]
      %v1392 = vld [vmem:[%s1 + $0x278] sm:$0xff]
      %v1393 = vld [vmem:[%s1 + $0x280] sm:$0xff]
      %v1394 = vld [vmem:[%s1 + $0x288] sm:$0xff]
      %v1395 = vld [vmem:[%s1 + $0x290] sm:$0xff]
      %v1396 = vld [vmem:[%s1 + $0x298] sm:$0xff]
      %v1397 = vld [vmem:[%s1 + $0x2a0] sm:$0xff]
      %v1398 = vld [vmem:[%s1 + $0x2a8] sm:$0xff]
      %v1399 = vld [vmem:[%s1 + $0x2b0] sm:$0xff]
      %v1400 = vld [vmem:[%s1 + $0x2b8] sm:$0xff]
      %v1401 = vld [vmem:[%s1 + $0x2c0] sm:$0xff]
      %v1402 = vld [vmem:[%s1 + $0x2c8] sm:$0xff]
      %v1403 = vld [vmem:[%s1 + $0x2d0] sm:$0xff]
      %v1404 = vld [vmem:[%s1 + $0x2d8] sm:$0xff]
      %v1405 = vld [vmem:[%s1 + $0x2e0] sm:$0xff]
      %v1406 = vld [vmem:[%s1 + $0x2e8] sm:$0xff]
      %v1407 = vld [vmem:[%s1 + $0x2f0] sm:$0xff]
      %v1408 = vld [vmem:[%s1 + $0x2f8] sm:$0xff]
      %v1409 = vld [vmem:[%s1 + $0x300] sm:$0xff]
      %v1410 = vld [vmem:[%s1 + $0x308] sm:$0xff]
      %v1411 = vld [vmem:[%s1 + $0x310] sm:$0xff]
      %v1412 = vld [vmem:[%s1 + $0x318] sm:$0xff]
      %v1413 = vld [vmem:[%s1 + $0x320] sm:$0xff]
      %v1414 = vld [vmem:[%s1 + $0x328] sm:$0xff]
      %v1415 = vld [vmem:[%s1 + $0x330] sm:$0xff]
      %v1416 = vld [vmem:[%s1 + $0x338] sm:$0xff]
      %v1417 = vld [vmem:[%s1 + $0x340] sm:$0xff]
      %v1418 = vld [vmem:[%s1 + $0x348] sm:$0xff]
      %v1419 = vld [vmem:[%s1 + $0x350] sm:$0xff]
      %v1420 = vld [vmem:[%s1 + $0x358] sm:$0xff]
      %v1421 = vld [vmem:[%s1 + $0x360] sm:$0xff]
      %v1422 = vld [vmem:[%s1 + $0x368] sm:$0xff]
      %v1423 = vld [vmem:[%s1 + $0x370] sm:$0xff]
      %v1424 = vld [vmem:[%s1 + $0x378] sm:$0xff]
      %v1425 = vld [vmem:[%s1 + $0x380] sm:$0xff]
      %v1426 = vld [vmem:[%s1 + $0x388] sm:$0xff]
      %v1427 = vld [vmem:[%s1 + $0x390] sm:$0xff]
      %v1428 = vld [vmem:[%s1 + $0x398] sm:$0xff]
      %v1429 = vld [vmem:[%s1 + $0x3a0] sm:$0xff]
      %v1430 = vld [vmem:[%s1 + $0x3a8] sm:$0xff]
      %v1431 = vld [vmem:[%s1 + $0x3b0] sm:$0xff]
      %v1432 = vld [vmem:[%s1 + $0x3b8] sm:$0xff]
      %v1433 = vld [vmem:[%s1 + $0x3c0] sm:$0xff]
      %v1434 = vld [vmem:[%s1 + $0x3c8] sm:$0xff]
      %v1435 = vld [vmem:[%s1 + $0x3d0] sm:$0xff]
      %v1436 = vld [vmem:[%s1 + $0x3d8] sm:$0xff]
      %v1437 = vld [vmem:[%s1 + $0x3e0] sm:$0xff]
      %v1438 = vld [vmem:[%s1 + $0x3e8] sm:$0xff]
      %v1439 = vld [vmem:[%s1 + $0x3f0] sm:$0xff]
      %v1440 = vld [vmem:[%s1 + $0x3f8] sm:$0xff]
      %v1441 = vld [vmem:[%s1 + $0x400] sm:$0xff]
      %v1442 = vld [vmem:[%s1 + $0x408] sm:$0xff]
      %v1443 = vld [vmem:[%s1 + $0x410] sm:$0xff]
      %v1444 = vld [vmem:[%s1 + $0x418] sm:$0xff]
      %v1445 = vld [vmem:[%s1 + $0x420] sm:$0xff]
      %v1446 = vld [vmem:[%s1 + $0x428] sm:$0xff]
      %v1447 = vld [vmem:[%s1 + $0x430] sm:$0xff]
      %v1448 = vld [vmem:[%s1 + $0x438] sm:$0xff]
      %v1449 = vld [vmem:[%s1 + $0x440] sm:$0xff]
      %v1450 = vld [vmem:[%s1 + $0x448] sm:$0xff]
      %v1451 = vld [vmem:[%s1 + $0x450] sm:$0xff]
      %v1452 = vld [vmem:[%s1 + $0x458] sm:$0xff]
      %v1453 = vld [vmem:[%s1 + $0x460] sm:$0xff]
      %v1454 = vld [vmem:[%s1 + $0x468] sm:$0xff]
      %v1455 = vld [vmem:[%s1 + $0x470] sm:$0xff]
      %v1456 = vld [vmem:[%s1 + $0x478] sm:$0xff]
      %1457 = vmatpush.msra.mxu0 %v1328
      %1458 = vmatpush.msra.mxu0 %v1327
      %1459 = vmatpush.msra.mxu0 %v1326
      %1460 = vmatpush.msra.mxu0 %v1325
      %1461 = vmatpush.msra.mxu0 %v1324
      %1462 = vmatpush.msra.mxu0 %v1323
      %1463 = vmatpush.msra.mxu0 %v1322
      %1464 = vmatpush.msra.mxu0 %v1321
      %1465 = vmatpush.msra.mxu0 %v1320
      %1466 = vmatpush.msra.mxu0 %v1319
      %1467 = vmatpush.msra.mxu0 %v1318
      %1468 = vmatpush.msra.mxu0 %v1317
      %1469 = vmatpush.msra.mxu0 %v1316
      %1470 = vmatpush.msra.mxu0 %v1315
      %1471 = vmatpush.msra.mxu0 %v1314
      %1472 = vmatpush.msra.mxu0 %v1313
      %1473 = vmatmul.f32.gmra.mxu0 %v1025
      %v1474 = vpop.f32.mrf.mxu0
      %v1475 = vadd.f32 0.0, %v1474
      %1476 = vmatmul.f32.gmra.mxu0 %v1034
      %v1477 = vpop.f32.mrf.mxu0
      %v1478 = vadd.f32 0.0, %v1477
      %1479 = vmatmul.f32.gmra.mxu0 %v1043
      %v1480 = vpop.f32.mrf.mxu0
      %v1481 = vadd.f32 0.0, %v1480
      %1482 = vmatmul.f32.gmra.mxu0 %v1052
      %v1483 = vpop.f32.mrf.mxu0
      %v1484 = vadd.f32 0.0, %v1483
      %1485 = vmatmul.f32.gmra.mxu0 %v1061
      %v1486 = vpop.f32.mrf.mxu0
      %v1487 = vadd.f32 0.0, %v1486
      %1488 = vmatmul.f32.gmra.mxu0 %v1070
      %v1489 = vpop.f32.mrf.mxu0
      %v1490 = vadd.f32 0.0, %v1489
      %1491 = vmatmul.f32.gmra.mxu0 %v1079
      %v1492 = vpop.f32.mrf.mxu0
      %v1493 = vadd.f32 0.0, %v1492
      %1494 = vmatmul.f32.gmra.mxu0 %v1088
      %v1495 = vpop.f32.mrf.mxu0
      %v1496 = vadd.f32 0.0, %v1495
      %1497 = vmatmul.f32.gmra.mxu0 %v1097
      %v1498 = vpop.f32.mrf.mxu0
      %v1499 = vadd.f32 0.0, %v1498
      %1500 = vmatmul.f32.gmra.mxu0 %v1106
      %v1501 = vpop.f32.mrf.mxu0
      %v1502 = vadd.f32 0.0, %v1501
      %1503 = vmatmul.f32.gmra.mxu0 %v1115
      %v1504 = vpop.f32.mrf.mxu0
      %v1505 = vadd.f32 0.0, %v1504
      %1506 = vmatmul.f32.gmra.mxu0 %v1124
      %v1507 = vpop.f32.mrf.mxu0
      %v1508 = vadd.f32 0.0, %v1507
      %1509 = vmatmul.f32.gmra.mxu0 %v1133
      %v1510 = vpop.f32.mrf.mxu0
      %v1511 = vadd.f32 0.0, %v1510
      %1512 = vmatmul.f32.gmra.mxu0 %v1142
      %v1513 = vpop.f32.mrf.mxu0
      %v1514 = vadd.f32 0.0, %v1513
      %1515 = vmatmul.f32.gmra.mxu0 %v1151
      %v1516 = vpop.f32.mrf.mxu0
      %v1517 = vadd.f32 0.0, %v1516
      %1518 = vmatmul.f32.gmra.mxu0 %v1160
      %v1519 = vpop.f32.mrf.mxu0
      %v1520 = vadd.f32 0.0, %v1519
      %1521 = vmatmul.f32.gmra.mxu0 %v1169
      %v1522 = vpop.f32.mrf.mxu0
      %v1523 = vadd.f32 0.0, %v1522
      %1524 = vmatmul.f32.gmra.mxu0 %v1178
      %v1525 = vpop.f32.mrf.mxu0
      %v1526 = vadd.f32 0.0, %v1525
      %1527 = vmatmul.f32.gmra.mxu0 %v1187
      %v1528 = vpop.f32.mrf.mxu0
      %v1529 = vadd.f32 0.0, %v1528
      %1530 = vmatmul.f32.gmra.mxu0 %v1196
      %v1531 = vpop.f32.mrf.mxu0
      %v1532 = vadd.f32 0.0, %v1531
      %1533 = vmatmul.f32.gmra.mxu0 %v1205
      %v1534 = vpop.f32.mrf.mxu0
      %v1535 = vadd.f32 0.0, %v1534
      %1536 = vmatmul.f32.gmra.mxu0 %v1214
      %v1537 = vpop.f32.mrf.mxu0
      %v1538 = vadd.f32 0.0, %v1537
      %1539 = vmatmul.f32.gmra.mxu0 %v1223
      %v1540 = vpop.f32.mrf.mxu0
      %v1541 = vadd.f32 0.0, %v1540
      %1542 = vmatmul.f32.gmra.mxu0 %v1232
      %v1543 = vpop.f32.mrf.mxu0
      %v1544 = vadd.f32 0.0, %v1543
      %1545 = vmatmul.f32.gmra.mxu0 %v1241
      %v1546 = vpop.f32.mrf.mxu0
      %v1547 = vadd.f32 0.0, %v1546
      %1548 = vmatmul.f32.gmra.mxu0 %v1250
      %v1549 = vpop.f32.mrf.mxu0
      %v1550 = vadd.f32 0.0, %v1549
      %1551 = vmatmul.f32.gmra.mxu0 %v1259
      %v1552 = vpop.f32.mrf.mxu0
      %v1553 = vadd.f32 0.0, %v1552
      %1554 = vmatmul.f32.gmra.mxu0 %v1268
      %v1555 = vpop.f32.mrf.mxu0
      %v1556 = vadd.f32 0.0, %v1555
      %1557 = vmatmul.f32.gmra.mxu0 %v1277
      %v1558 = vpop.f32.mrf.mxu0
      %v1559 = vadd.f32 0.0, %v1558
      %1560 = vmatmul.f32.gmra.mxu0 %v1286
      %v1561 = vpop.f32.mrf.mxu0
      %v1562 = vadd.f32 0.0, %v1561
      %1563 = vmatmul.f32.gmra.mxu0 %v1295
      %v1564 = vpop.f32.mrf.mxu0
      %v1565 = vadd.f32 0.0, %v1564
      %1566 = vmatmul.f32.gmra.mxu0 %v1304
      %v1567 = vpop.f32.mrf.mxu0
      %v1568 = vadd.f32 0.0, %v1567
      %1569 = vdwg.mxu0
      %1570 = vmatpush.msra.mxu0 %v1344
      %1571 = vmatpush.msra.mxu0 %v1343
      %1572 = vmatpush.msra.mxu0 %v1342
      %1573 = vmatpush.msra.mxu0 %v1341
      %1574 = vmatpush.msra.mxu0 %v1340
      %1575 = vmatpush.msra.mxu0 %v1339
      %1576 = vmatpush.msra.mxu0 %v1338
      %1577 = vmatpush.msra.mxu0 %v1337
      %1578 = vmatpush.msra.mxu0 %v1336
      %1579 = vmatpush.msra.mxu0 %v1335
      %1580 = vmatpush.msra.mxu0 %v1334
      %1581 = vmatpush.msra.mxu0 %v1333
      %1582 = vmatpush.msra.mxu0 %v1332
      %1583 = vmatpush.msra.mxu0 %v1331
      %1584 = vmatpush.msra.mxu0 %v1330
      %1585 = vmatpush.msra.mxu0 %v1329
      %1586 = vmatmul.f32.gmra.mxu0 %v1026
      %v1587 = vpop.f32.mrf.mxu0
      %v1588 = vadd.f32 %v1475, %v1587
      %1589 = vmatmul.f32.gmra.mxu0 %v1035
      %v1590 = vpop.f32.mrf.mxu0
      %v1591 = vadd.f32 %v1478, %v1590
      %1592 = vmatmul.f32.gmra.mxu0 %v1044
      %v1593 = vpop.f32.mrf.mxu0
      %v1594 = vadd.f32 %v1481, %v1593
      %1595 = vmatmul.f32.gmra.mxu0 %v1053
      %v1596 = vpop.f32.mrf.mxu0
      %v1597 = vadd.f32 %v1484, %v1596
      %1598 = vmatmul.f32.gmra.mxu0 %v1062
      %v1599 = vpop.f32.mrf.mxu0
      %v1600 = vadd.f32 %v1487, %v1599
      %1601 = vmatmul.f32.gmra.mxu0 %v1071
      %v1602 = vpop.f32.mrf.mxu0
      %v1603 = vadd.f32 %v1490, %v1602
      %1604 = vmatmul.f32.gmra.mxu0 %v1080
      %v1605 = vpop.f32.mrf.mxu0
      %v1606 = vadd.f32 %v1493, %v1605
      %1607 = vmatmul.f32.gmra.mxu0 %v1089
      %v1608 = vpop.f32.mrf.mxu0
      %v1609 = vadd.f32 %v1496, %v1608
      %1610 = vmatmul.f32.gmra.mxu0 %v1098
      %v1611 = vpop.f32.mrf.mxu0
      %v1612 = vadd.f32 %v1499, %v1611
      %1613 = vmatmul.f32.gmra.mxu0 %v1107
      %v1614 = vpop.f32.mrf.mxu0
      %v1615 = vadd.f32 %v1502, %v1614
      %1616 = vmatmul.f32.gmra.mxu0 %v1116
      %v1617 = vpop.f32.mrf.mxu0
      %v1618 = vadd.f32 %v1505, %v1617
      %1619 = vmatmul.f32.gmra.mxu0 %v1125
      %v1620 = vpop.f32.mrf.mxu0
      %v1621 = vadd.f32 %v1508, %v1620
      %1622 = vmatmul.f32.gmra.mxu0 %v1134
      %v1623 = vpop.f32.mrf.mxu0
      %v1624 = vadd.f32 %v1511, %v1623
      %1625 = vmatmul.f32.gmra.mxu0 %v1143
      %v1626 = vpop.f32.mrf.mxu0
      %v1627 = vadd.f32 %v1514, %v1626
      %1628 = vmatmul.f32.gmra.mxu0 %v1152
      %v1629 = vpop.f32.mrf.mxu0
      %v1630 = vadd.f32 %v1517, %v1629
      %1631 = vmatmul.f32.gmra.mxu0 %v1161
      %v1632 = vpop.f32.mrf.mxu0
      %v1633 = vadd.f32 %v1520, %v1632
      %1634 = vmatmul.f32.gmra.mxu0 %v1170
      %v1635 = vpop.f32.mrf.mxu0
      %v1636 = vadd.f32 %v1523, %v1635
      %1637 = vmatmul.f32.gmra.mxu0 %v1179
      %v1638 = vpop.f32.mrf.mxu0
      %v1639 = vadd.f32 %v1526, %v1638
      %1640 = vmatmul.f32.gmra.mxu0 %v1188
      %v1641 = vpop.f32.mrf.mxu0
      %v1642 = vadd.f32 %v1529, %v1641
      %1643 = vmatmul.f32.gmra.mxu0 %v1197
      %v1644 = vpop.f32.mrf.mxu0
      %v1645 = vadd.f32 %v1532, %v1644
      %1646 = vmatmul.f32.gmra.mxu0 %v1206
      %v1647 = vpop.f32.mrf.mxu0
      %v1648 = vadd.f32 %v1535, %v1647
      %1649 = vmatmul.f32.gmra.mxu0 %v1215
      %v1650 = vpop.f32.mrf.mxu0
      %v1651 = vadd.f32 %v1538, %v1650
      %1652 = vmatmul.f32.gmra.mxu0 %v1224
      %v1653 = vpop.f32.mrf.mxu0
      %v1654 = vadd.f32 %v1541, %v1653
      %1655 = vmatmul.f32.gmra.mxu0 %v1233
      %v1656 = vpop.f32.mrf.mxu0
      %v1657 = vadd.f32 %v1544, %v1656
      %1658 = vmatmul.f32.gmra.mxu0 %v1242
      %v1659 = vpop.f32.mrf.mxu0
      %v1660 = vadd.f32 %v1547, %v1659
      %1661 = vmatmul.f32.gmra.mxu0 %v1251
      %v1662 = vpop.f32.mrf.mxu0
      %v1663 = vadd.f32 %v1550, %v1662
      %1664 = vmatmul.f32.gmra.mxu0 %v1260
      %v1665 = vpop.f32.mrf.mxu0
      %v1666 = vadd.f32 %v1553, %v1665
      %1667 = vmatmul.f32.gmra.mxu0 %v1269
      %v1668 = vpop.f32.mrf.mxu0
      %v1669 = vadd.f32 %v1556, %v1668
      %1670 = vmatmul.f32.gmra.mxu0 %v1278
      %v1671 = vpop.f32.mrf.mxu0
      %v1672 = vadd.f32 %v1559, %v1671
      %1673 = vmatmul.f32.gmra.mxu0 %v1287
      %v1674 = vpop.f32.mrf.mxu0
      %v1675 = vadd.f32 %v1562, %v1674
      %1676 = vmatmul.f32.gmra.mxu0 %v1296
      %v1677 = vpop.f32.mrf.mxu0
      %v1678 = vadd.f32 %v1565, %v1677
      %1679 = vmatmul.f32.gmra.mxu0 %v1305
      %v1680 = vpop.f32.mrf.mxu0
      %v1681 = vadd.f32 %v1568, %v1680
      %1682 = vdwg.mxu0
      %1683 = vmatpush.msra.mxu0 %v1360
      %1684 = vmatpush.msra.mxu0 %v1359
      %1685 = vmatpush.msra.mxu0 %v1358
      %1686 = vmatpush.msra.mxu0 %v1357
      %1687 = vmatpush.msra.mxu0 %v1356
      %1688 = vmatpush.msra.mxu0 %v1355
      %1689 = vmatpush.msra.mxu0 %v1354
      %1690 = vmatpush.msra.mxu0 %v1353
      %1691 = vmatpush.msra.mxu0 %v1352
      %1692 = vmatpush.msra.mxu0 %v1351
      %1693 = vmatpush.msra.mxu0 %v1350
      %1694 = vmatpush.msra.mxu0 %v1349
      %1695 = vmatpush.msra.mxu0 %v1348
      %1696 = vmatpush.msra.mxu0 %v1347
      %1697 = vmatpush.msra.mxu0 %v1346
      %1698 = vmatpush.msra.mxu0 %v1345
      %1699 = vmatmul.f32.gmra.mxu0 %v1027
      %v1700 = vpop.f32.mrf.mxu0
      %v1701 = vadd.f32 %v1588, %v1700
      %1702 = vmatmul.f32.gmra.mxu0 %v1036
      %v1703 = vpop.f32.mrf.mxu0
      %v1704 = vadd.f32 %v1591, %v1703
      %1705 = vmatmul.f32.gmra.mxu0 %v1045
      %v1706 = vpop.f32.mrf.mxu0
      %v1707 = vadd.f32 %v1594, %v1706
      %1708 = vmatmul.f32.gmra.mxu0 %v1054
      %v1709 = vpop.f32.mrf.mxu0
      %v1710 = vadd.f32 %v1597, %v1709
      %1711 = vmatmul.f32.gmra.mxu0 %v1063
      %v1712 = vpop.f32.mrf.mxu0
      %v1713 = vadd.f32 %v1600, %v1712
      %1714 = vmatmul.f32.gmra.mxu0 %v1072
      %v1715 = vpop.f32.mrf.mxu0
      %v1716 = vadd.f32 %v1603, %v1715
      %1717 = vmatmul.f32.gmra.mxu0 %v1081
      %v1718 = vpop.f32.mrf.mxu0
      %v1719 = vadd.f32 %v1606, %v1718
      %1720 = vmatmul.f32.gmra.mxu0 %v1090
      %v1721 = vpop.f32.mrf.mxu0
      %v1722 = vadd.f32 %v1609, %v1721
      %1723 = vmatmul.f32.gmra.mxu0 %v1099
      %v1724 = vpop.f32.mrf.mxu0
      %v1725 = vadd.f32 %v1612, %v1724
      %1726 = vmatmul.f32.gmra.mxu0 %v1108
      %v1727 = vpop.f32.mrf.mxu0
      %v1728 = vadd.f32 %v1615, %v1727
      %1729 = vmatmul.f32.gmra.mxu0 %v1117
      %v1730 = vpop.f32.mrf.mxu0
      %v1731 = vadd.f32 %v1618, %v1730
      %1732 = vmatmul.f32.gmra.mxu0 %v1126
      %v1733 = vpop.f32.mrf.mxu0
      %v1734 = vadd.f32 %v1621, %v1733
      %1735 = vmatmul.f32.gmra.mxu0 %v1135
      %v1736 = vpop.f32.mrf.mxu0
      %v1737 = vadd.f32 %v1624, %v1736
      %1738 = vmatmul.f32.gmra.mxu0 %v1144
      %v1739 = vpop.f32.mrf.mxu0
      %v1740 = vadd.f32 %v1627, %v1739
      %1741 = vmatmul.f32.gmra.mxu0 %v1153
      %v1742 = vpop.f32.mrf.mxu0
      %v1743 = vadd.f32 %v1630, %v1742
      %1744 = vmatmul.f32.gmra.mxu0 %v1162
      %v1745 = vpop.f32.mrf.mxu0
      %v1746 = vadd.f32 %v1633, %v1745
      %1747 = vmatmul.f32.gmra.mxu0 %v1171
      %v1748 = vpop.f32.mrf.mxu0
      %v1749 = vadd.f32 %v1636, %v1748
      %1750 = vmatmul.f32.gmra.mxu0 %v1180
      %v1751 = vpop.f32.mrf.mxu0
      %v1752 = vadd.f32 %v1639, %v1751
      %1753 = vmatmul.f32.gmra.mxu0 %v1189
      %v1754 = vpop.f32.mrf.mxu0
      %v1755 = vadd.f32 %v1642, %v1754
      %1756 = vmatmul.f32.gmra.mxu0 %v1198
      %v1757 = vpop.f32.mrf.mxu0
      %v1758 = vadd.f32 %v1645, %v1757
      %1759 = vmatmul.f32.gmra.mxu0 %v1207
      %v1760 = vpop.f32.mrf.mxu0
      %v1761 = vadd.f32 %v1648, %v1760
      %1762 = vmatmul.f32.gmra.mxu0 %v1216
      %v1763 = vpop.f32.mrf.mxu0
      %v1764 = vadd.f32 %v1651, %v1763
      %1765 = vmatmul.f32.gmra.mxu0 %v1225
      %v1766 = vpop.f32.mrf.mxu0
      %v1767 = vadd.f32 %v1654, %v1766
      %1768 = vmatmul.f32.gmra.mxu0 %v1234
      %v1769 = vpop.f32.mrf.mxu0
      %v1770 = vadd.f32 %v1657, %v1769
      %1771 = vmatmul.f32.gmra.mxu0 %v1243
      %v1772 = vpop.f32.mrf.mxu0
      %v1773 = vadd.f32 %v1660, %v1772
      %1774 = vmatmul.f32.gmra.mxu0 %v1252
      %v1775 = vpop.f32.mrf.mxu0
      %v1776 = vadd.f32 %v1663, %v1775
      %1777 = vmatmul.f32.gmra.mxu0 %v1261
      %v1778 = vpop.f32.mrf.mxu0
      %v1779 = vadd.f32 %v1666, %v1778
      %1780 = vmatmul.f32.gmra.mxu0 %v1270
      %v1781 = vpop.f32.mrf.mxu0
      %v1782 = vadd.f32 %v1669, %v1781
      %1783 = vmatmul.f32.gmra.mxu0 %v1279
      %v1784 = vpop.f32.mrf.mxu0
      %v1785 = vadd.f32 %v1672, %v1784
      %1786 = vmatmul.f32.gmra.mxu0 %v1288
      %v1787 = vpop.f32.mrf.mxu0
      %v1788 = vadd.f32 %v1675, %v1787
      %1789 = vmatmul.f32.gmra.mxu0 %v1297
      %v1790 = vpop.f32.mrf.mxu0
      %v1791 = vadd.f32 %v1678, %v1790
      %1792 = vmatmul.f32.gmra.mxu0 %v1306
      %v1793 = vpop.f32.mrf.mxu0
      %v1794 = vadd.f32 %v1681, %v1793
      %1795 = vdwg.mxu0
      %1796 = vmatpush.msra.mxu0 %v1376
      %1797 = vmatpush.msra.mxu0 %v1375
      %1798 = vmatpush.msra.mxu0 %v1374
      %1799 = vmatpush.msra.mxu0 %v1373
      %1800 = vmatpush.msra.mxu0 %v1372
      %1801 = vmatpush.msra.mxu0 %v1371
      %1802 = vmatpush.msra.mxu0 %v1370
      %1803 = vmatpush.msra.mxu0 %v1369
      %1804 = vmatpush.msra.mxu0 %v1368
      %1805 = vmatpush.msra.mxu0 %v1367
      %1806 = vmatpush.msra.mxu0 %v1366
      %1807 = vmatpush.msra.mxu0 %v1365
      %1808 = vmatpush.msra.mxu0 %v1364
      %1809 = vmatpush.msra.mxu0 %v1363
      %1810 = vmatpush.msra.mxu0 %v1362
      %1811 = vmatpush.msra.mxu0 %v1361
      %1812 = vmatmul.f32.gmra.mxu0 %v1028
      %v1813 = vpop.f32.mrf.mxu0
      %v1814 = vadd.f32 %v1701, %v1813
      %1815 = vmatmul.f32.gmra.mxu0 %v1037
      %v1816 = vpop.f32.mrf.mxu0
      %v1817 = vadd.f32 %v1704, %v1816
      %1818 = vmatmul.f32.gmra.mxu0 %v1046
      %v1819 = vpop.f32.mrf.mxu0
      %v1820 = vadd.f32 %v1707, %v1819
      %1821 = vmatmul.f32.gmra.mxu0 %v1055
      %v1822 = vpop.f32.mrf.mxu0
      %v1823 = vadd.f32 %v1710, %v1822
      %1824 = vmatmul.f32.gmra.mxu0 %v1064
      %v1825 = vpop.f32.mrf.mxu0
      %v1826 = vadd.f32 %v1713, %v1825
      %1827 = vmatmul.f32.gmra.mxu0 %v1073
      %v1828 = vpop.f32.mrf.mxu0
      %v1829 = vadd.f32 %v1716, %v1828
      %1830 = vmatmul.f32.gmra.mxu0 %v1082
      %v1831 = vpop.f32.mrf.mxu0
      %v1832 = vadd.f32 %v1719, %v1831
      %1833 = vmatmul.f32.gmra.mxu0 %v1091
      %v1834 = vpop.f32.mrf.mxu0
      %v1835 = vadd.f32 %v1722, %v1834
      %1836 = vmatmul.f32.gmra.mxu0 %v1100
      %v1837 = vpop.f32.mrf.mxu0
      %v1838 = vadd.f32 %v1725, %v1837
      %1839 = vmatmul.f32.gmra.mxu0 %v1109
      %v1840 = vpop.f32.mrf.mxu0
      %v1841 = vadd.f32 %v1728, %v1840
      %1842 = vmatmul.f32.gmra.mxu0 %v1118
      %v1843 = vpop.f32.mrf.mxu0
      %v1844 = vadd.f32 %v1731, %v1843
      %1845 = vmatmul.f32.gmra.mxu0 %v1127
      %v1846 = vpop.f32.mrf.mxu0
      %v1847 = vadd.f32 %v1734, %v1846
      %1848 = vmatmul.f32.gmra.mxu0 %v1136
      %v1849 = vpop.f32.mrf.mxu0
      %v1850 = vadd.f32 %v1737, %v1849
      %1851 = vmatmul.f32.gmra.mxu0 %v1145
      %v1852 = vpop.f32.mrf.mxu0
      %v1853 = vadd.f32 %v1740, %v1852
      %1854 = vmatmul.f32.gmra.mxu0 %v1154
      %v1855 = vpop.f32.mrf.mxu0
      %v1856 = vadd.f32 %v1743, %v1855
      %1857 = vmatmul.f32.gmra.mxu0 %v1163
      %v1858 = vpop.f32.mrf.mxu0
      %v1859 = vadd.f32 %v1746, %v1858
      %1860 = vmatmul.f32.gmra.mxu0 %v1172
      %v1861 = vpop.f32.mrf.mxu0
      %v1862 = vadd.f32 %v1749, %v1861
      %1863 = vmatmul.f32.gmra.mxu0 %v1181
      %v1864 = vpop.f32.mrf.mxu0
      %v1865 = vadd.f32 %v1752, %v1864
      %1866 = vmatmul.f32.gmra.mxu0 %v1190
      %v1867 = vpop.f32.mrf.mxu0
      %v1868 = vadd.f32 %v1755, %v1867
      %1869 = vmatmul.f32.gmra.mxu0 %v1199
      %v1870 = vpop.f32.mrf.mxu0
      %v1871 = vadd.f32 %v1758, %v1870
      %1872 = vmatmul.f32.gmra.mxu0 %v1208
      %v1873 = vpop.f32.mrf.mxu0
      %v1874 = vadd.f32 %v1761, %v1873
      %1875 = vmatmul.f32.gmra.mxu0 %v1217
      %v1876 = vpop.f32.mrf.mxu0
      %v1877 = vadd.f32 %v1764, %v1876
      %1878 = vmatmul.f32.gmra.mxu0 %v1226
      %v1879 = vpop.f32.mrf.mxu0
      %v1880 = vadd.f32 %v1767, %v1879
      %1881 = vmatmul.f32.gmra.mxu0 %v1235
      %v1882 = vpop.f32.mrf.mxu0
      %v1883 = vadd.f32 %v1770, %v1882
      %1884 = vmatmul.f32.gmra.mxu0 %v1244
      %v1885 = vpop.f32.mrf.mxu0
      %v1886 = vadd.f32 %v1773, %v1885
      %1887 = vmatmul.f32.gmra.mxu0 %v1253
      %v1888 = vpop.f32.mrf.mxu0
      %v1889 = vadd.f32 %v1776, %v1888
      %1890 = vmatmul.f32.gmra.mxu0 %v1262
      %v1891 = vpop.f32.mrf.mxu0
      %v1892 = vadd.f32 %v1779, %v1891
      %1893 = vmatmul.f32.gmra.mxu0 %v1271
      %v1894 = vpop.f32.mrf.mxu0
      %v1895 = vadd.f32 %v1782, %v1894
      %1896 = vmatmul.f32.gmra.mxu0 %v1280
      %v1897 = vpop.f32.mrf.mxu0
      %v1898 = vadd.f32 %v1785, %v1897
      %1899 = vmatmul.f32.gmra.mxu0 %v1289
      %v1900 = vpop.f32.mrf.mxu0
      %v1901 = vadd.f32 %v1788, %v1900
      %1902 = vmatmul.f32.gmra.mxu0 %v1298
      %v1903 = vpop.f32.mrf.mxu0
      %v1904 = vadd.f32 %v1791, %v1903
      %1905 = vmatmul.f32.gmra.mxu0 %v1307
      %v1906 = vpop.f32.mrf.mxu0
      %v1907 = vadd.f32 %v1794, %v1906
      %1908 = vdwg.mxu0
      %1909 = vmatpush.msra.mxu0 %v1392
      %1910 = vmatpush.msra.mxu0 %v1391
      %1911 = vmatpush.msra.mxu0 %v1390
      %1912 = vmatpush.msra.mxu0 %v1389
      %1913 = vmatpush.msra.mxu0 %v1388
      %1914 = vmatpush.msra.mxu0 %v1387
      %1915 = vmatpush.msra.mxu0 %v1386
      %1916 = vmatpush.msra.mxu0 %v1385
      %1917 = vmatpush.msra.mxu0 %v1384
      %1918 = vmatpush.msra.mxu0 %v1383
      %1919 = vmatpush.msra.mxu0 %v1382
      %1920 = vmatpush.msra.mxu0 %v1381
      %1921 = vmatpush.msra.mxu0 %v1380
      %1922 = vmatpush.msra.mxu0 %v1379
      %1923 = vmatpush.msra.mxu0 %v1378
      %1924 = vmatpush.msra.mxu0 %v1377
      %1925 = vmatmul.f32.gmra.mxu0 %v1029
      %v1926 = vpop.f32.mrf.mxu0
      %v1927 = vadd.f32 %v1814, %v1926
      %1928 = vmatmul.f32.gmra.mxu0 %v1038
      %v1929 = vpop.f32.mrf.mxu0
      %v1930 = vadd.f32 %v1817, %v1929
      %1931 = vmatmul.f32.gmra.mxu0 %v1047
      %v1932 = vpop.f32.mrf.mxu0
      %v1933 = vadd.f32 %v1820, %v1932
      %1934 = vmatmul.f32.gmra.mxu0 %v1056
      %v1935 = vpop.f32.mrf.mxu0
      %v1936 = vadd.f32 %v1823, %v1935
      %1937 = vmatmul.f32.gmra.mxu0 %v1065
      %v1938 = vpop.f32.mrf.mxu0
      %v1939 = vadd.f32 %v1826, %v1938
      %1940 = vmatmul.f32.gmra.mxu0 %v1074
      %v1941 = vpop.f32.mrf.mxu0
      %v1942 = vadd.f32 %v1829, %v1941
      %1943 = vmatmul.f32.gmra.mxu0 %v1083
      %v1944 = vpop.f32.mrf.mxu0
      %v1945 = vadd.f32 %v1832, %v1944
      %1946 = vmatmul.f32.gmra.mxu0 %v1092
      %v1947 = vpop.f32.mrf.mxu0
      %v1948 = vadd.f32 %v1835, %v1947
      %1949 = vmatmul.f32.gmra.mxu0 %v1101
      %v1950 = vpop.f32.mrf.mxu0
      %v1951 = vadd.f32 %v1838, %v1950
      %1952 = vmatmul.f32.gmra.mxu0 %v1110
      %v1953 = vpop.f32.mrf.mxu0
      %v1954 = vadd.f32 %v1841, %v1953
      %1955 = vmatmul.f32.gmra.mxu0 %v1119
      %v1956 = vpop.f32.mrf.mxu0
      %v1957 = vadd.f32 %v1844, %v1956
      %1958 = vmatmul.f32.gmra.mxu0 %v1128
      %v1959 = vpop.f32.mrf.mxu0
      %v1960 = vadd.f32 %v1847, %v1959
      %1961 = vmatmul.f32.gmra.mxu0 %v1137
      %v1962 = vpop.f32.mrf.mxu0
      %v1963 = vadd.f32 %v1850, %v1962
      %1964 = vmatmul.f32.gmra.mxu0 %v1146
      %v1965 = vpop.f32.mrf.mxu0
      %v1966 = vadd.f32 %v1853, %v1965
      %1967 = vmatmul.f32.gmra.mxu0 %v1155
      %v1968 = vpop.f32.mrf.mxu0
      %v1969 = vadd.f32 %v1856, %v1968
      %1970 = vmatmul.f32.gmra.mxu0 %v1164
      %v1971 = vpop.f32.mrf.mxu0
      %v1972 = vadd.f32 %v1859, %v1971
      %1973 = vmatmul.f32.gmra.mxu0 %v1173
      %v1974 = vpop.f32.mrf.mxu0
      %v1975 = vadd.f32 %v1862, %v1974
      %1976 = vmatmul.f32.gmra.mxu0 %v1182
      %v1977 = vpop.f32.mrf.mxu0
      %v1978 = vadd.f32 %v1865, %v1977
      %1979 = vmatmul.f32.gmra.mxu0 %v1191
      %v1980 = vpop.f32.mrf.mxu0
      %v1981 = vadd.f32 %v1868, %v1980
      %1982 = vmatmul.f32.gmra.mxu0 %v1200
      %v1983 = vpop.f32.mrf.mxu0
      %v1984 = vadd.f32 %v1871, %v1983
      %1985 = vmatmul.f32.gmra.mxu0 %v1209
      %v1986 = vpop.f32.mrf.mxu0
      %v1987 = vadd.f32 %v1874, %v1986
      %1988 = vmatmul.f32.gmra.mxu0 %v1218
      %v1989 = vpop.f32.mrf.mxu0
      %v1990 = vadd.f32 %v1877, %v1989
      %1991 = vmatmul.f32.gmra.mxu0 %v1227
      %v1992 = vpop.f32.mrf.mxu0
      %v1993 = vadd.f32 %v1880, %v1992
      %1994 = vmatmul.f32.gmra.mxu0 %v1236
      %v1995 = vpop.f32.mrf.mxu0
      %v1996 = vadd.f32 %v1883, %v1995
      %1997 = vmatmul.f32.gmra.mxu0 %v1245
      %v1998 = vpop.f32.mrf.mxu0
      %v1999 = vadd.f32 %v1886, %v1998
      %2000 = vmatmul.f32.gmra.mxu0 %v1254
      %v2001 = vpop.f32.mrf.mxu0
      %v2002 = vadd.f32 %v1889, %v2001
      %2003 = vmatmul.f32.gmra.mxu0 %v1263
      %v2004 = vpop.f32.mrf.mxu0
      %v2005 = vadd.f32 %v1892, %v2004
      %2006 = vmatmul.f32.gmra.mxu0 %v1272
      %v2007 = vpop.f32.mrf.mxu0
      %v2008 = vadd.f32 %v1895, %v2007
      %2009 = vmatmul.f32.gmra.mxu0 %v1281
      %v2010 = vpop.f32.mrf.mxu0
      %v2011 = vadd.f32 %v1898, %v2010
      %2012 = vmatmul.f32.gmra.mxu0 %v1290
      %v2013 = vpop.f32.mrf.mxu0
      %v2014 = vadd.f32 %v1901, %v2013
      %2015 = vmatmul.f32.gmra.mxu0 %v1299
      %v2016 = vpop.f32.mrf.mxu0
      %v2017 = vadd.f32 %v1904, %v2016
      %2018 = vmatmul.f32.gmra.mxu0 %v1308
      %v2019 = vpop.f32.mrf.mxu0
      %v2020 = vadd.f32 %v1907, %v2019
      %2021 = vdwg.mxu0
      %2022 = vmatpush.msra.mxu0 %v1408
      %2023 = vmatpush.msra.mxu0 %v1407
      %2024 = vmatpush.msra.mxu0 %v1406
      %2025 = vmatpush.msra.mxu0 %v1405
      %2026 = vmatpush.msra.mxu0 %v1404
      %2027 = vmatpush.msra.mxu0 %v1403
      %2028 = vmatpush.msra.mxu0 %v1402
      %2029 = vmatpush.msra.mxu0 %v1401
      %2030 = vmatpush.msra.mxu0 %v1400
      %2031 = vmatpush.msra.mxu0 %v1399
      %2032 = vmatpush.msra.mxu0 %v1398
      %2033 = vmatpush.msra.mxu0 %v1397
      %2034 = vmatpush.msra.mxu0 %v1396
      %2035 = vmatpush.msra.mxu0 %v1395
      %2036 = vmatpush.msra.mxu0 %v1394
      %2037 = vmatpush.msra.mxu0 %v1393
      %2038 = vmatmul.f32.gmra.mxu0 %v1030
      %v2039 = vpop.f32.mrf.mxu0
      %v2040 = vadd.f32 %v1927, %v2039
      %2041 = vmatmul.f32.gmra.mxu0 %v1039
      %v2042 = vpop.f32.mrf.mxu0
      %v2043 = vadd.f32 %v1930, %v2042
      %2044 = vmatmul.f32.gmra.mxu0 %v1048
      %v2045 = vpop.f32.mrf.mxu0
      %v2046 = vadd.f32 %v1933, %v2045
      %2047 = vmatmul.f32.gmra.mxu0 %v1057
      %v2048 = vpop.f32.mrf.mxu0
      %v2049 = vadd.f32 %v1936, %v2048
      %2050 = vmatmul.f32.gmra.mxu0 %v1066
      %v2051 = vpop.f32.mrf.mxu0
      %v2052 = vadd.f32 %v1939, %v2051
      %2053 = vmatmul.f32.gmra.mxu0 %v1075
      %v2054 = vpop.f32.mrf.mxu0
      %v2055 = vadd.f32 %v1942, %v2054
      %2056 = vmatmul.f32.gmra.mxu0 %v1084
      %v2057 = vpop.f32.mrf.mxu0
      %v2058 = vadd.f32 %v1945, %v2057
      %2059 = vmatmul.f32.gmra.mxu0 %v1093
      %v2060 = vpop.f32.mrf.mxu0
      %v2061 = vadd.f32 %v1948, %v2060
      %2062 = vmatmul.f32.gmra.mxu0 %v1102
      %v2063 = vpop.f32.mrf.mxu0
      %v2064 = vadd.f32 %v1951, %v2063
      %2065 = vmatmul.f32.gmra.mxu0 %v1111
      %v2066 = vpop.f32.mrf.mxu0
      %v2067 = vadd.f32 %v1954, %v2066
      %2068 = vmatmul.f32.gmra.mxu0 %v1120
      %v2069 = vpop.f32.mrf.mxu0
      %v2070 = vadd.f32 %v1957, %v2069
      %2071 = vmatmul.f32.gmra.mxu0 %v1129
      %v2072 = vpop.f32.mrf.mxu0
      %v2073 = vadd.f32 %v1960, %v2072
      %2074 = vmatmul.f32.gmra.mxu0 %v1138
      %v2075 = vpop.f32.mrf.mxu0
      %v2076 = vadd.f32 %v1963, %v2075
      %2077 = vmatmul.f32.gmra.mxu0 %v1147
      %v2078 = vpop.f32.mrf.mxu0
      %v2079 = vadd.f32 %v1966, %v2078
      %2080 = vmatmul.f32.gmra.mxu0 %v1156
      %v2081 = vpop.f32.mrf.mxu0
      %v2082 = vadd.f32 %v1969, %v2081
      %2083 = vmatmul.f32.gmra.mxu0 %v1165
      %v2084 = vpop.f32.mrf.mxu0
      %v2085 = vadd.f32 %v1972, %v2084
      %2086 = vmatmul.f32.gmra.mxu0 %v1174
      %v2087 = vpop.f32.mrf.mxu0
      %v2088 = vadd.f32 %v1975, %v2087
      %2089 = vmatmul.f32.gmra.mxu0 %v1183
      %v2090 = vpop.f32.mrf.mxu0
      %v2091 = vadd.f32 %v1978, %v2090
      %2092 = vmatmul.f32.gmra.mxu0 %v1192
      %v2093 = vpop.f32.mrf.mxu0
      %v2094 = vadd.f32 %v1981, %v2093
      %2095 = vmatmul.f32.gmra.mxu0 %v1201
      %v2096 = vpop.f32.mrf.mxu0
      %v2097 = vadd.f32 %v1984, %v2096
      %2098 = vmatmul.f32.gmra.mxu0 %v1210
      %v2099 = vpop.f32.mrf.mxu0
      %v2100 = vadd.f32 %v1987, %v2099
      %2101 = vmatmul.f32.gmra.mxu0 %v1219
      %v2102 = vpop.f32.mrf.mxu0
      %v2103 = vadd.f32 %v1990, %v2102
      %2104 = vmatmul.f32.gmra.mxu0 %v1228
      %v2105 = vpop.f32.mrf.mxu0
      %v2106 = vadd.f32 %v1993, %v2105
      %2107 = vmatmul.f32.gmra.mxu0 %v1237
      %v2108 = vpop.f32.mrf.mxu0
      %v2109 = vadd.f32 %v1996, %v2108
      %2110 = vmatmul.f32.gmra.mxu0 %v1246
      %v2111 = vpop.f32.mrf.mxu0
      %v2112 = vadd.f32 %v1999, %v2111
      %2113 = vmatmul.f32.gmra.mxu0 %v1255
      %v2114 = vpop.f32.mrf.mxu0
      %v2115 = vadd.f32 %v2002, %v2114
      %2116 = vmatmul.f32.gmra.mxu0 %v1264
      %v2117 = vpop.f32.mrf.mxu0
      %v2118 = vadd.f32 %v2005, %v2117
      %2119 = vmatmul.f32.gmra.mxu0 %v1273
      %v2120 = vpop.f32.mrf.mxu0
      %v2121 = vadd.f32 %v2008, %v2120
      %2122 = vmatmul.f32.gmra.mxu0 %v1282
      %v2123 = vpop.f32.mrf.mxu0
      %v2124 = vadd.f32 %v2011, %v2123
      %2125 = vmatmul.f32.gmra.mxu0 %v1291
      %v2126 = vpop.f32.mrf.mxu0
      %v2127 = vadd.f32 %v2014, %v2126
      %2128 = vmatmul.f32.gmra.mxu0 %v1300
      %v2129 = vpop.f32.mrf.mxu0
      %v2130 = vadd.f32 %v2017, %v2129
      %2131 = vmatmul.f32.gmra.mxu0 %v1309
      %v2132 = vpop.f32.mrf.mxu0
      %v2133 = vadd.f32 %v2020, %v2132
      %2134 = vdwg.mxu0
      %2135 = vmatpush.msra.mxu0 %v1424
      %2136 = vmatpush.msra.mxu0 %v1423
      %2137 = vmatpush.msra.mxu0 %v1422
      %2138 = vmatpush.msra.mxu0 %v1421
      %2139 = vmatpush.msra.mxu0 %v1420
      %2140 = vmatpush.msra.mxu0 %v1419
      %2141 = vmatpush.msra.mxu0 %v1418
      %2142 = vmatpush.msra.mxu0 %v1417
      %2143 = vmatpush.msra.mxu0 %v1416
      %2144 = vmatpush.msra.mxu0 %v1415
      %2145 = vmatpush.msra.mxu0 %v1414
      %2146 = vmatpush.msra.mxu0 %v1413
      %2147 = vmatpush.msra.mxu0 %v1412
      %2148 = vmatpush.msra.mxu0 %v1411
      %2149 = vmatpush.msra.mxu0 %v1410
      %2150 = vmatpush.msra.mxu0 %v1409
      %2151 = vmatmul.f32.gmra.mxu0 %v1031
      %v2152 = vpop.f32.mrf.mxu0
      %v2153 = vadd.f32 %v2040, %v2152
      %2154 = vmatmul.f32.gmra.mxu0 %v1040
      %v2155 = vpop.f32.mrf.mxu0
      %v2156 = vadd.f32 %v2043, %v2155
      %2157 = vmatmul.f32.gmra.mxu0 %v1049
      %v2158 = vpop.f32.mrf.mxu0
      %v2159 = vadd.f32 %v2046, %v2158
      %2160 = vmatmul.f32.gmra.mxu0 %v1058
      %v2161 = vpop.f32.mrf.mxu0
      %v2162 = vadd.f32 %v2049, %v2161
      %2163 = vmatmul.f32.gmra.mxu0 %v1067
      %v2164 = vpop.f32.mrf.mxu0
      %v2165 = vadd.f32 %v2052, %v2164
      %2166 = vmatmul.f32.gmra.mxu0 %v1076
      %v2167 = vpop.f32.mrf.mxu0
      %v2168 = vadd.f32 %v2055, %v2167
      %2169 = vmatmul.f32.gmra.mxu0 %v1085
      %v2170 = vpop.f32.mrf.mxu0
      %v2171 = vadd.f32 %v2058, %v2170
      %2172 = vmatmul.f32.gmra.mxu0 %v1094
      %v2173 = vpop.f32.mrf.mxu0
      %v2174 = vadd.f32 %v2061, %v2173
      %2175 = vmatmul.f32.gmra.mxu0 %v1103
      %v2176 = vpop.f32.mrf.mxu0
      %v2177 = vadd.f32 %v2064, %v2176
      %2178 = vmatmul.f32.gmra.mxu0 %v1112
      %v2179 = vpop.f32.mrf.mxu0
      %v2180 = vadd.f32 %v2067, %v2179
      %2181 = vmatmul.f32.gmra.mxu0 %v1121
      %v2182 = vpop.f32.mrf.mxu0
      %v2183 = vadd.f32 %v2070, %v2182
      %2184 = vmatmul.f32.gmra.mxu0 %v1130
      %v2185 = vpop.f32.mrf.mxu0
      %v2186 = vadd.f32 %v2073, %v2185
      %2187 = vmatmul.f32.gmra.mxu0 %v1139
      %v2188 = vpop.f32.mrf.mxu0
      %v2189 = vadd.f32 %v2076, %v2188
      %2190 = vmatmul.f32.gmra.mxu0 %v1148
      %v2191 = vpop.f32.mrf.mxu0
      %v2192 = vadd.f32 %v2079, %v2191
      %2193 = vmatmul.f32.gmra.mxu0 %v1157
      %v2194 = vpop.f32.mrf.mxu0
      %v2195 = vadd.f32 %v2082, %v2194
      %2196 = vmatmul.f32.gmra.mxu0 %v1166
      %v2197 = vpop.f32.mrf.mxu0
      %v2198 = vadd.f32 %v2085, %v2197
      %2199 = vmatmul.f32.gmra.mxu0 %v1175
      %v2200 = vpop.f32.mrf.mxu0
      %v2201 = vadd.f32 %v2088, %v2200
      %2202 = vmatmul.f32.gmra.mxu0 %v1184
      %v2203 = vpop.f32.mrf.mxu0
      %v2204 = vadd.f32 %v2091, %v2203
      %2205 = vmatmul.f32.gmra.mxu0 %v1193
      %v2206 = vpop.f32.mrf.mxu0
      %v2207 = vadd.f32 %v2094, %v2206
      %2208 = vmatmul.f32.gmra.mxu0 %v1202
      %v2209 = vpop.f32.mrf.mxu0
      %v2210 = vadd.f32 %v2097, %v2209
      %2211 = vmatmul.f32.gmra.mxu0 %v1211
      %v2212 = vpop.f32.mrf.mxu0
      %v2213 = vadd.f32 %v2100, %v2212
      %2214 = vmatmul.f32.gmra.mxu0 %v1220
      %v2215 = vpop.f32.mrf.mxu0
      %v2216 = vadd.f32 %v2103, %v2215
      %2217 = vmatmul.f32.gmra.mxu0 %v1229
      %v2218 = vpop.f32.mrf.mxu0
      %v2219 = vadd.f32 %v2106, %v2218
      %2220 = vmatmul.f32.gmra.mxu0 %v1238
      %v2221 = vpop.f32.mrf.mxu0
      %v2222 = vadd.f32 %v2109, %v2221
      %2223 = vmatmul.f32.gmra.mxu0 %v1247
      %v2224 = vpop.f32.mrf.mxu0
      %v2225 = vadd.f32 %v2112, %v2224
      %2226 = vmatmul.f32.gmra.mxu0 %v1256
      %v2227 = vpop.f32.mrf.mxu0
      %v2228 = vadd.f32 %v2115, %v2227
      %2229 = vmatmul.f32.gmra.mxu0 %v1265
      %v2230 = vpop.f32.mrf.mxu0
      %v2231 = vadd.f32 %v2118, %v2230
      %2232 = vmatmul.f32.gmra.mxu0 %v1274
      %v2233 = vpop.f32.mrf.mxu0
      %v2234 = vadd.f32 %v2121, %v2233
      %2235 = vmatmul.f32.gmra.mxu0 %v1283
      %v2236 = vpop.f32.mrf.mxu0
      %v2237 = vadd.f32 %v2124, %v2236
      %2238 = vmatmul.f32.gmra.mxu0 %v1292
      %v2239 = vpop.f32.mrf.mxu0
      %v2240 = vadd.f32 %v2127, %v2239
      %2241 = vmatmul.f32.gmra.mxu0 %v1301
      %v2242 = vpop.f32.mrf.mxu0
      %v2243 = vadd.f32 %v2130, %v2242
      %2244 = vmatmul.f32.gmra.mxu0 %v1310
      %v2245 = vpop.f32.mrf.mxu0
      %v2246 = vadd.f32 %v2133, %v2245
      %2247 = vdwg.mxu0
      %2248 = vmatpush.msra.mxu0 %v1440
      %2249 = vmatpush.msra.mxu0 %v1439
      %2250 = vmatpush.msra.mxu0 %v1438
      %2251 = vmatpush.msra.mxu0 %v1437
      %2252 = vmatpush.msra.mxu0 %v1436
      %2253 = vmatpush.msra.mxu0 %v1435
      %2254 = vmatpush.msra.mxu0 %v1434
      %2255 = vmatpush.msra.mxu0 %v1433
      %2256 = vmatpush.msra.mxu0 %v1432
      %2257 = vmatpush.msra.mxu0 %v1431
      %2258 = vmatpush.msra.mxu0 %v1430
      %2259 = vmatpush.msra.mxu0 %v1429
      %2260 = vmatpush.msra.mxu0 %v1428
      %2261 = vmatpush.msra.mxu0 %v1427
      %2262 = vmatpush.msra.mxu0 %v1426
      %2263 = vmatpush.msra.mxu0 %v1425
      %2264 = vmatmul.f32.gmra.mxu0 %v1032
      %v2265 = vpop.f32.mrf.mxu0
      %v2266 = vadd.f32 %v2153, %v2265
      %2267 = vmatmul.f32.gmra.mxu0 %v1041
      %v2268 = vpop.f32.mrf.mxu0
      %v2269 = vadd.f32 %v2156, %v2268
      %2270 = vmatmul.f32.gmra.mxu0 %v1050
      %v2271 = vpop.f32.mrf.mxu0
      %v2272 = vadd.f32 %v2159, %v2271
      %2273 = vmatmul.f32.gmra.mxu0 %v1059
      %v2274 = vpop.f32.mrf.mxu0
      %v2275 = vadd.f32 %v2162, %v2274
      %2276 = vmatmul.f32.gmra.mxu0 %v1068
      %v2277 = vpop.f32.mrf.mxu0
      %v2278 = vadd.f32 %v2165, %v2277
      %2279 = vmatmul.f32.gmra.mxu0 %v1077
      %v2280 = vpop.f32.mrf.mxu0
      %v2281 = vadd.f32 %v2168, %v2280
      %2282 = vmatmul.f32.gmra.mxu0 %v1086
      %v2283 = vpop.f32.mrf.mxu0
      %v2284 = vadd.f32 %v2171, %v2283
      %2285 = vmatmul.f32.gmra.mxu0 %v1095
      %v2286 = vpop.f32.mrf.mxu0
      %v2287 = vadd.f32 %v2174, %v2286
      %2288 = vmatmul.f32.gmra.mxu0 %v1104
      %v2289 = vpop.f32.mrf.mxu0
      %v2290 = vadd.f32 %v2177, %v2289
      %2291 = vmatmul.f32.gmra.mxu0 %v1113
      %v2292 = vpop.f32.mrf.mxu0
      %v2293 = vadd.f32 %v2180, %v2292
      %2294 = vmatmul.f32.gmra.mxu0 %v1122
      %v2295 = vpop.f32.mrf.mxu0
      %v2296 = vadd.f32 %v2183, %v2295
      %2297 = vmatmul.f32.gmra.mxu0 %v1131
      %v2298 = vpop.f32.mrf.mxu0
      %v2299 = vadd.f32 %v2186, %v2298
      %2300 = vmatmul.f32.gmra.mxu0 %v1140
      %v2301 = vpop.f32.mrf.mxu0
      %v2302 = vadd.f32 %v2189, %v2301
      %2303 = vmatmul.f32.gmra.mxu0 %v1149
      %v2304 = vpop.f32.mrf.mxu0
      %v2305 = vadd.f32 %v2192, %v2304
      %2306 = vmatmul.f32.gmra.mxu0 %v1158
      %v2307 = vpop.f32.mrf.mxu0
      %v2308 = vadd.f32 %v2195, %v2307
      %2309 = vmatmul.f32.gmra.mxu0 %v1167
      %v2310 = vpop.f32.mrf.mxu0
      %v2311 = vadd.f32 %v2198, %v2310
      %2312 = vmatmul.f32.gmra.mxu0 %v1176
      %v2313 = vpop.f32.mrf.mxu0
      %v2314 = vadd.f32 %v2201, %v2313
      %2315 = vmatmul.f32.gmra.mxu0 %v1185
      %v2316 = vpop.f32.mrf.mxu0
      %v2317 = vadd.f32 %v2204, %v2316
      %2318 = vmatmul.f32.gmra.mxu0 %v1194
      %v2319 = vpop.f32.mrf.mxu0
      %v2320 = vadd.f32 %v2207, %v2319
      %2321 = vmatmul.f32.gmra.mxu0 %v1203
      %v2322 = vpop.f32.mrf.mxu0
      %v2323 = vadd.f32 %v2210, %v2322
      %2324 = vmatmul.f32.gmra.mxu0 %v1212
      %v2325 = vpop.f32.mrf.mxu0
      %v2326 = vadd.f32 %v2213, %v2325
      %2327 = vmatmul.f32.gmra.mxu0 %v1221
      %v2328 = vpop.f32.mrf.mxu0
      %v2329 = vadd.f32 %v2216, %v2328
      %2330 = vmatmul.f32.gmra.mxu0 %v1230
      %v2331 = vpop.f32.mrf.mxu0
      %v2332 = vadd.f32 %v2219, %v2331
      %2333 = vmatmul.f32.gmra.mxu0 %v1239
      %v2334 = vpop.f32.mrf.mxu0
      %v2335 = vadd.f32 %v2222, %v2334
      %2336 = vmatmul.f32.gmra.mxu0 %v1248
      %v2337 = vpop.f32.mrf.mxu0
      %v2338 = vadd.f32 %v2225, %v2337
      %2339 = vmatmul.f32.gmra.mxu0 %v1257
      %v2340 = vpop.f32.mrf.mxu0
      %v2341 = vadd.f32 %v2228, %v2340
      %2342 = vmatmul.f32.gmra.mxu0 %v1266
      %v2343 = vpop.f32.mrf.mxu0
      %v2344 = vadd.f32 %v2231, %v2343
      %2345 = vmatmul.f32.gmra.mxu0 %v1275
      %v2346 = vpop.f32.mrf.mxu0
      %v2347 = vadd.f32 %v2234, %v2346
      %2348 = vmatmul.f32.gmra.mxu0 %v1284
      %v2349 = vpop.f32.mrf.mxu0
      %v2350 = vadd.f32 %v2237, %v2349
      %2351 = vmatmul.f32.gmra.mxu0 %v1293
      %v2352 = vpop.f32.mrf.mxu0
      %v2353 = vadd.f32 %v2240, %v2352
      %2354 = vmatmul.f32.gmra.mxu0 %v1302
      %v2355 = vpop.f32.mrf.mxu0
      %v2356 = vadd.f32 %v2243, %v2355
      %2357 = vmatmul.f32.gmra.mxu0 %v1311
      %v2358 = vpop.f32.mrf.mxu0
      %v2359 = vadd.f32 %v2246, %v2358
      %2360 = vdwg.mxu0
      %2361 = vmatpush.msra.mxu0 %v1456
      %2362 = vmatpush.msra.mxu0 %v1455
      %2363 = vmatpush.msra.mxu0 %v1454
      %2364 = vmatpush.msra.mxu0 %v1453
      %2365 = vmatpush.msra.mxu0 %v1452
      %2366 = vmatpush.msra.mxu0 %v1451
      %2367 = vmatpush.msra.mxu0 %v1450
      %2368 = vmatpush.msra.mxu0 %v1449
      %2369 = vmatpush.msra.mxu0 %v1448
      %2370 = vmatpush.msra.mxu0 %v1447
      %2371 = vmatpush.msra.mxu0 %v1446
      %2372 = vmatpush.msra.mxu0 %v1445
      %2373 = vmatpush.msra.mxu0 %v1444
      %2374 = vmatpush.msra.mxu0 %v1443
      %2375 = vmatpush.msra.mxu0 %v1442
      %2376 = vmatpush.msra.mxu0 %v1441
      %2377 = vmatmul.f32.gmra.mxu0 %v1033
      %v2378 = vpop.f32.mrf.mxu0
      %v2379 = vadd.f32 %v2266, %v2378
      %2380 = vmatmul.f32.gmra.mxu0 %v1042
      %v2381 = vpop.f32.mrf.mxu0
      %v2382 = vadd.f32 %v2269, %v2381
      %2383 = vmatmul.f32.gmra.mxu0 %v1051
      %v2384 = vpop.f32.mrf.mxu0
      %v2385 = vadd.f32 %v2272, %v2384
      %2386 = vmatmul.f32.gmra.mxu0 %v1060
      %v2387 = vpop.f32.mrf.mxu0
      %v2388 = vadd.f32 %v2275, %v2387
      %2389 = vmatmul.f32.gmra.mxu0 %v1069
      %v2390 = vpop.f32.mrf.mxu0
      %v2391 = vadd.f32 %v2278, %v2390
      %2392 = vmatmul.f32.gmra.mxu0 %v1078
      %v2393 = vpop.f32.mrf.mxu0
      %v2394 = vadd.f32 %v2281, %v2393
      %2395 = vmatmul.f32.gmra.mxu0 %v1087
      %v2396 = vpop.f32.mrf.mxu0
      %v2397 = vadd.f32 %v2284, %v2396
      %2398 = vmatmul.f32.gmra.mxu0 %v1096
      %v2399 = vpop.f32.mrf.mxu0
      %v2400 = vadd.f32 %v2287, %v2399
      %2401 = vmatmul.f32.gmra.mxu0 %v1105
      %v2402 = vpop.f32.mrf.mxu0
      %v2403 = vadd.f32 %v2290, %v2402
      %2404 = vmatmul.f32.gmra.mxu0 %v1114
      %v2405 = vpop.f32.mrf.mxu0
      %v2406 = vadd.f32 %v2293, %v2405
      %2407 = vmatmul.f32.gmra.mxu0 %v1123
      %v2408 = vpop.f32.mrf.mxu0
      %v2409 = vadd.f32 %v2296, %v2408
      %2410 = vmatmul.f32.gmra.mxu0 %v1132
      %v2411 = vpop.f32.mrf.mxu0
      %v2412 = vadd.f32 %v2299, %v2411
      %2413 = vmatmul.f32.gmra.mxu0 %v1141
      %v2414 = vpop.f32.mrf.mxu0
      %v2415 = vadd.f32 %v2302, %v2414
      %2416 = vmatmul.f32.gmra.mxu0 %v1150
      %v2417 = vpop.f32.mrf.mxu0
      %v2418 = vadd.f32 %v2305, %v2417
      %2419 = vmatmul.f32.gmra.mxu0 %v1159
      %v2420 = vpop.f32.mrf.mxu0
      %v2421 = vadd.f32 %v2308, %v2420
      %2422 = vmatmul.f32.gmra.mxu0 %v1168
      %v2423 = vpop.f32.mrf.mxu0
      %v2424 = vadd.f32 %v2311, %v2423
      %2425 = vmatmul.f32.gmra.mxu0 %v1177
      %v2426 = vpop.f32.mrf.mxu0
      %v2427 = vadd.f32 %v2314, %v2426
      %2428 = vmatmul.f32.gmra.mxu0 %v1186
      %v2429 = vpop.f32.mrf.mxu0
      %v2430 = vadd.f32 %v2317, %v2429
      %2431 = vmatmul.f32.gmra.mxu0 %v1195
      %v2432 = vpop.f32.mrf.mxu0
      %v2433 = vadd.f32 %v2320, %v2432
      %2434 = vmatmul.f32.gmra.mxu0 %v1204
      %v2435 = vpop.f32.mrf.mxu0
      %v2436 = vadd.f32 %v2323, %v2435
      %2437 = vmatmul.f32.gmra.mxu0 %v1213
      %v2438 = vpop.f32.mrf.mxu0
      %v2439 = vadd.f32 %v2326, %v2438
      %2440 = vmatmul.f32.gmra.mxu0 %v1222
      %v2441 = vpop.f32.mrf.mxu0
      %v2442 = vadd.f32 %v2329, %v2441
      %2443 = vmatmul.f32.gmra.mxu0 %v1231
      %v2444 = vpop.f32.mrf.mxu0
      %v2445 = vadd.f32 %v2332, %v2444
      %2446 = vmatmul.f32.gmra.mxu0 %v1240
      %v2447 = vpop.f32.mrf.mxu0
      %v2448 = vadd.f32 %v2335, %v2447
      %2449 = vmatmul.f32.gmra.mxu0 %v1249
      %v2450 = vpop.f32.mrf.mxu0
      %v2451 = vadd.f32 %v2338, %v2450
      %2452 = vmatmul.f32.gmra.mxu0 %v1258
      %v2453 = vpop.f32.mrf.mxu0
      %v2454 = vadd.f32 %v2341, %v2453
      %2455 = vmatmul.f32.gmra.mxu0 %v1267
      %v2456 = vpop.f32.mrf.mxu0
      %v2457 = vadd.f32 %v2344, %v2456
      %2458 = vmatmul.f32.gmra.mxu0 %v1276
      %v2459 = vpop.f32.mrf.mxu0
      %v2460 = vadd.f32 %v2347, %v2459
      %2461 = vmatmul.f32.gmra.mxu0 %v1285
      %v2462 = vpop.f32.mrf.mxu0
      %v2463 = vadd.f32 %v2350, %v2462
      %2464 = vmatmul.f32.gmra.mxu0 %v1294
      %v2465 = vpop.f32.mrf.mxu0
      %v2466 = vadd.f32 %v2353, %v2465
      %2467 = vmatmul.f32.gmra.mxu0 %v1303
      %v2468 = vpop.f32.mrf.mxu0
      %v2469 = vadd.f32 %v2356, %v2468
      %2470 = vmatmul.f32.gmra.mxu0 %v1312
      %v2471 = vpop.f32.mrf.mxu0
      %v2472 = vadd.f32 %v2359, %v2471
      %2473 = vdwg.mxu0
      %2474 = vst [vmem:[%s231] sm:$0xff] %v2379
      %2475 = vst [vmem:[%s231 + $0x8] sm:$0xff] %v2382
      %2476 = vst [vmem:[%s231 + $0x10] sm:$0xff] %v2385
      %2477 = vst [vmem:[%s231 + $0x18] sm:$0xff] %v2388
      %2478 = vst [vmem:[%s231 + $0x20] sm:$0xff] %v2391
      %2479 = vst [vmem:[%s231 + $0x28] sm:$0xff] %v2394
      %2480 = vst [vmem:[%s231 + $0x30] sm:$0xff] %v2397
      %2481 = vst [vmem:[%s231 + $0x38] sm:$0xff] %v2400
      %2482 = vst [vmem:[%s231 + $0x40] sm:$0xff] %v2403
      %2483 = vst [vmem:[%s231 + $0x48] sm:$0xff] %v2406
      %2484 = vst [vmem:[%s231 + $0x50] sm:$0xff] %v2409
      %2485 = vst [vmem:[%s231 + $0x58] sm:$0xff] %v2412
      %2486 = vst [vmem:[%s231 + $0x60] sm:$0xff] %v2415
      %2487 = vst [vmem:[%s231 + $0x68] sm:$0xff] %v2418
      %2488 = vst [vmem:[%s231 + $0x70] sm:$0xff] %v2421
      %2489 = vst [vmem:[%s231 + $0x78] sm:$0xff] %v2424
      %2490 = vst [vmem:[%s231 + $0x80] sm:$0xff] %v2427
      %2491 = vst [vmem:[%s231 + $0x88] sm:$0xff] %v2430
      %2492 = vst [vmem:[%s231 + $0x90] sm:$0xff] %v2433
      %2493 = vst [vmem:[%s231 + $0x98] sm:$0xff] %v2436
      %2494 = vst [vmem:[%s231 + $0xa0] sm:$0xff] %v2439
      %2495 = vst [vmem:[%s231 + $0xa8] sm:$0xff] %v2442
      %2496 = vst [vmem:[%s231 + $0xb0] sm:$0xff] %v2445
      %2497 = vst [vmem:[%s231 + $0xb8] sm:$0xff] %v2448
      %2498 = vst [vmem:[%s231 + $0xc0] sm:$0xff] %v2451
      %2499 = vst [vmem:[%s231 + $0xc8] sm:$0xff] %v2454
      %2500 = vst [vmem:[%s231 + $0xd0] sm:$0xff] %v2457
      %2501 = vst [vmem:[%s231 + $0xd8] sm:$0xff] %v2460
      %2502 = vst [vmem:[%s231 + $0xe0] sm:$0xff] %v2463
      %2503 = vst [vmem:[%s231 + $0xe8] sm:$0xff] %v2466
      %2504 = vst [vmem:[%s231 + $0xf0] sm:$0xff] %v2469
      %2505 = vst [vmem:[%s231 + $0xf8] sm:$0xff] %v2472
      %2506 = vst [vmem:[%s235] sm:$0xff] 0.0
      %v2507 = vadd.f32 %v2379, %v2382
      %v2508 = vadd.f32 %v2507, %v2385
      %v2509 = vadd.f32 %v2508, %v2388
      %v2510 = vadd.f32 %v2509, %v2391
      %v2511 = vadd.f32 %v2510, %v2394
      %v2512 = vadd.f32 %v2511, %v2397
      %v2513 = vadd.f32 %v2512, %v2400
      %v2514 = vadd.f32 %v2513, %v2403
      %v2515 = vadd.f32 %v2514, %v2406
      %v2516 = vadd.f32 %v2515, %v2409
      %v2517 = vadd.f32 %v2516, %v2412
      %v2518 = vadd.f32 %v2517, %v2415
      %v2519 = vadd.f32 %v2518, %v2418
      %v2520 = vadd.f32 %v2519, %v2421
      %v2521 = vadd.f32 %v2520, %v2424
      %v2522 = vadd.f32 %v2521, %v2427
      %v2523 = vadd.f32 %v2522, %v2430
      %v2524 = vadd.f32 %v2523, %v2433
      %v2525 = vadd.f32 %v2524, %v2436
      %v2526 = vadd.f32 %v2525, %v2439
      %v2527 = vadd.f32 %v2526, %v2442
      %v2528 = vadd.f32 %v2527, %v2445
      %v2529 = vadd.f32 %v2528, %v2448
      %v2530 = vadd.f32 %v2529, %v2451
      %v2531 = vadd.f32 %v2530, %v2454
      %v2532 = vadd.f32 %v2531, %v2457
      %v2533 = vadd.f32 %v2532, %v2460
      %v2534 = vadd.f32 %v2533, %v2463
      %v2535 = vadd.f32 %v2534, %v2466
      %v2536 = vadd.f32 %v2535, %v2469
      %v2537 = vadd.f32 %v2536, %v2472
      %v2538 = vrot.slane %v2537, 4
      %v2539 = vadd.f32 %v2537, %v2538
      %v2540 = vrot.slane %v2539, 2
      %v2541 = vadd.f32 %v2539, %v2540
      %v2542 = vrot.slane %v2541, 1
      %v2543 = vadd.f32 %v2541, %v2542
      %2544 = vst [vmem:[%s235] sm:$0x1] %v2543
      %v2545 = vmul.f32 %v2379, %v2379
      %v2546 = vmul.f32 %v2382, %v2382
      %v2547 = vmul.f32 %v2385, %v2385
      %v2548 = vmul.f32 %v2388, %v2388
      %v2549 = vmul.f32 %v2391, %v2391
      %v2550 = vmul.f32 %v2394, %v2394
      %v2551 = vmul.f32 %v2397, %v2397
      %v2552 = vmul.f32 %v2400, %v2400
      %v2553 = vmul.f32 %v2403, %v2403
      %v2554 = vmul.f32 %v2406, %v2406
      %v2555 = vmul.f32 %v2409, %v2409
      %v2556 = vmul.f32 %v2412, %v2412
      %v2557 = vmul.f32 %v2415, %v2415
      %v2558 = vmul.f32 %v2418, %v2418
      %v2559 = vmul.f32 %v2421, %v2421
      %v2560 = vmul.f32 %v2424, %v2424
      %v2561 = vmul.f32 %v2427, %v2427
      %v2562 = vmul.f32 %v2430, %v2430
      %v2563 = vmul.f32 %v2433, %v2433
      %v2564 = vmul.f32 %v2436, %v2436
      %v2565 = vmul.f32 %v2439, %v2439
      %v2566 = vmul.f32 %v2442, %v2442
      %v2567 = vmul.f32 %v2445, %v2445
      %v2568 = vmul.f32 %v2448, %v2448
      %v2569 = vmul.f32 %v2451, %v2451
      %v2570 = vmul.f32 %v2454, %v2454
      %v2571 = vmul.f32 %v2457, %v2457
      %v2572 = vmul.f32 %v2460, %v2460
      %v2573 = vmul.f32 %v2463, %v2463
      %v2574 = vmul.f32 %v2466, %v2466
      %v2575 = vmul.f32 %v2469, %v2469
      %v2576 = vmul.f32 %v2472, %v2472
      %v2577 = vadd.f32 %v2545, %v2546
      %v2578 = vadd.f32 %v2577, %v2547
      %v2579 = vadd.f32 %v2578, %v2548
      %v2580 = vadd.f32 %v2579, %v2549
      %v2581 = vadd.f32 %v2580, %v2550
      %v2582 = vadd.f32 %v2581, %v2551
      %v2583 = vadd.f32 %v2582, %v2552
      %v2584 = vadd.f32 %v2583, %v2553
      %v2585 = vadd.f32 %v2584, %v2554
      %v2586 = vadd.f32 %v2585, %v2555
      %v2587 = vadd.f32 %v2586, %v2556
      %v2588 = vadd.f32 %v2587, %v2557
      %v2589 = vadd.f32 %v2588, %v2558
      %v2590 = vadd.f32 %v2589, %v2559
      %v2591 = vadd.f32 %v2590, %v2560
      %v2592 = vadd.f32 %v2591, %v2561
      %v2593 = vadd.f32 %v2592, %v2562
      %v2594 = vadd.f32 %v2593, %v2563
      %v2595 = vadd.f32 %v2594, %v2564
      %v2596 = vadd.f32 %v2595, %v2565
      %v2597 = vadd.f32 %v2596, %v2566
      %v2598 = vadd.f32 %v2597, %v2567
      %v2599 = vadd.f32 %v2598, %v2568
      %v2600 = vadd.f32 %v2599, %v2569
      %v2601 = vadd.f32 %v2600, %v2570
      %v2602 = vadd.f32 %v2601, %v2571
      %v2603 = vadd.f32 %v2602, %v2572
      %v2604 = vadd.f32 %v2603, %v2573
      %v2605 = vadd.f32 %v2604, %v2574
      %v2606 = vadd.f32 %v2605, %v2575
      %v2607 = vadd.f32 %v2606, %v2576
      %v2608 = vrot.slane %v2607, 4
      %v2609 = vadd.f32 %v2607, %v2608
      %v2610 = vrot.slane %v2609, 2
      %v2611 = vadd.f32 %v2609, %v2610
      %v2612 = vrot.slane %v2611, 1
      %v2613 = vadd.f32 %v2611, %v2612
      %2614 = vst [vmem:[%s235 + $0x1] sm:$0x1] %v2613
      %p2615 = scmp.lt.s32.totalorder %s17, 1
      %s2616 = scalar_select %p2615, %s17, 1
      %s2617 = smul.addr %s2616, 32
      %s2618 = smul.addr %s2617, 8
      %s2619 = scalar_lea.vmem %s4, %s2618
      %p2620 = scmp.lt.s32.totalorder %s17, 1
      %s2621 = scalar_select %p2620, %s17, 1
      %s2622 = smul.addr %s2621, 8
      %s2623 = scalar_lea.vmem %s5, %s2622
      // Predicated region
      $region37: #{double_conv.4} parent=35 // pred_check
        %p2624 = pneg %p124
      $region38: #{double_conv.4} parent=35 // pred_check_branch
        %2626 = sbr.rel (%p2624) target = $region40
      $region39: #{double_conv.4} parent=35 // pred_region
        _
      $region40: #{double_conv.4} parent=35 // pred_fallthru
        _
      // Predicated region
      $region41: #{double_conv.4} parent=35 // pred_check
        %p2627 = pneg %p150
      $region42: #{double_conv.4} parent=35 // pred_check_branch
        %2629 = sbr.rel (%p2627) target = $region44
      $region43: #{double_conv.4} parent=35 // pred_region
        _
      $region44: #{double_conv.4} parent=35 // pred_fallthru
        _
    $region36: #{double_conv.4} parent=5 // pred_fallthru
      _
    %p2630 = scmp.le.s32.totalorder 2, %s12
    // Predicated region
    $region45: #{double_conv.4} parent=5 // pred_check
      %p2631 = pneg %p2630
    $region46: #{double_conv.4} parent=5 // pred_check_branch
      %2633 = sbr.rel (%p2631) target = $region48
    $region47: #{double_conv.4} parent=5 // pred_region
      %s2634 = ssub.s32 %s12, 2
      // Predicated region
      $region49: #{double_conv.4} parent=47 // pred_check
        %p2635 = pneg %p130
      $region50: #{double_conv.4} parent=47 // pred_check_branch
        %2637 = sbr.rel (%p2635) target = $region52
      $region51: #{double_conv.4} parent=47 // pred_region
        %p2638 = scmp.lt.s32.totalorder %s18, 1
        %s2639 = scalar_select %p2638, %s18, 1
        %s2640 = smul.addr %s2639, 32
        %s2641 = smul.addr %s2640, 8
        %s2642 = scalar_lea.vmem %s4, %s2641
      $region52: #{double_conv.4} parent=47 // pred_fallthru
        _
      // Predicated region
      $region53: #{double_conv.4} parent=47 // pred_check
        %p2643 = pneg %p156
      $region54: #{double_conv.4} parent=47 // pred_check_branch
        %2645 = sbr.rel (%p2643) target = $region56
      $region55: #{double_conv.4} parent=47 // pred_region
        %p2646 = scmp.lt.s32.totalorder %s18, 1
        %s2647 = scalar_select %p2646, %s18, 1
        %s2648 = smul.addr %s2647, 8
        %s2649 = scalar_lea.vmem %s5, %s2648
      $region56: #{double_conv.4} parent=47 // pred_fallthru
        _
    $region48: #{double_conv.4} parent=5 // pred_fallthru
      _
  $region6: #{double_conv.4} parent=0 // loop_footer
    %s16 = sadd.s32 1, %s12
  $region7: #{double_conv.4} parent=0 // loop_footer_branch
    %11 = sbr.rel target = $region3
  $region8: #{double_conv.4} parent=0 // loop_exit
    _

// kernel: double_conv.3
$region0: #{double_conv.3}
  #allocation0 [shape = 'u32[]', space=smem, size = 0x4, offset = 0x4, fixed_abs, tag = 'smem constant byte address 0x4 - core index']
  #allocation1 [shape = 'u32[72,128]{1,0:T(1,128)}', space=vmem, size = 0x9000, scoped, tag = 'internal scratch']
  #allocation2 [shape = 'f32[18,18,128]{2,1,0:T(8,128)}', space=vmem, size = 0x36000, scoped, tag = 'scratch operand']
  #allocation3 [shape = 'f32[16,16,1152]{2,1,0:T(8,128)}', space=vmem, size = 0x120000, scoped, tag = 'scratch operand']
  %s0 = inlined_call_operand.vmem [shape: f32[2,256,128], index: 0, kind: input, shape index: {}]
  %s1 = inlined_call_operand.vmem [shape: f32[1152,128], index: 1, kind: input, shape index: {}]
  %s2 = inlined_call_operand.vmem [shape: f32[1,128], index: 2, kind: input, shape index: {}]
  %s3 = inlined_call_operand.vmem [shape: f32[1,128], index: 3, kind: input, shape index: {}]
  %s4 = inlined_call_operand.vmem [shape: f32[2,256,128], index: 4, kind: output, shape index: {0}]
  %s5 = inlined_call_operand.vmem [shape: f32[2,8,128], index: 5, kind: output, shape index: {1}]
  %6 = xla_tuple %s4, %s5
  %s7 = sld [smem:[#allocation0]]
  $region57: #{double_conv.3} parent=0
    _
  %s9 = ssub.s32 1, %s7
  %s10 = scalar_select 0, %s9, %s7
  loop: start=0, step=1, limit=4
  $region2: #{double_conv.3} parent=0 // loop_pre_header
    _
  $region3: #{double_conv.3} parent=0 // loop_header
    %s12 = sphi 0, %s16
    %p13 = scmp.ge.s32.totalorder %s12, 4
    %s22 = sphi 0, %s24
    %s25 = sphi 0, %s22
    %s26 = sphi 0, %s25
    %s42 = sphi 0, %s26
    %s46 = sphi 0, %s46
    %s48 = sphi 0, %s46
    %s49 = sphi 0, %s48
    %s63 = sphi 0, %s49
    %s67 = sphi 0, %s67
    %s69 = sphi 0, %s67
    %s70 = sphi 0, %s69
    %s84 = sphi 0, %s70
    %s88 = sphi 0, %s88
    %s90 = sphi 0, %s88
    %s91 = sphi 0, %s90
    %s105 = sphi 0, %s91
    %s111 = sphi 0, %s113
    %s114 = sphi 0, %s111
    %s115 = sphi 0, %s114
    %s131 = sphi 0, %s115
    %s137 = sphi 0, %s139
    %s140 = sphi 0, %s137
    %s141 = sphi 0, %s140
    %s157 = sphi 0, %s141
  $region4: #{double_conv.3} parent=0 // loop_header_branch
    %15 = sbr.rel (%p13) target = $region8
  $region5: #{double_conv.3} parent=0 // loop_body
    %s17 = ssub.s32 %s12, 1
    %s18 = ssub.s32 %s12, 2
    %s19 = sadd.s32 %s12, 1
    %s20 = ssub.s32 %s12, %s19
    %p21 = scmp.eq.s32.totalorder %s20, 0
    %s23 = sadd.s32 %s22, 1
    %s24 = scalar_select %p21, %s22, %s23
    %p27 = pneg %p21
    %p28 = scmp.eq.s32.totalorder %s12, 1
    %p29 = por %p27, %p28
    %p30 = scmp.ne.s32.totalorder %s22, %s25
    %p31 = scmp.eq.s32.totalorder %s12, 0
    %p32 = por %p30, %p31
    %p33 = scmp.ne.s32.totalorder %s22, %s25
    %p34 = scmp.eq.s32.totalorder %s17, 1
    %p35 = por %p33, %p34
    %p36 = scmp.ne.s32.totalorder %s25, %s26
    %p37 = scmp.eq.s32.totalorder %s17, 0
    %p38 = por %p36, %p37
    %p39 = scmp.ne.s32.totalorder %s25, %s26
    %p40 = scmp.eq.s32.totalorder %s18, 1
    %p41 = por %p39, %p40
    %p43 = scmp.ne.s32.totalorder %s26, %s42
    %p44 = scmp.eq.s32.totalorder %s18, 0
    %p45 = por %p43, %p44
    %s47 = sadd.s32 %s46, 1
    %p50 = scmp.eq.s32.totalorder %s12, 1
    %p51 = scmp.ne.s32.totalorder %s46, %s48
    %p52 = scmp.eq.s32.totalorder %s12, 0
    %p53 = por %p51, %p52
    %p54 = scmp.ne.s32.totalorder %s46, %s48
    %p55 = scmp.eq.s32.totalorder %s17, 1
    %p56 = por %p54, %p55
    %p57 = scmp.ne.s32.totalorder %s48, %s49
    %p58 = scmp.eq.s32.totalorder %s17, 0
    %p59 = por %p57, %p58
    %p60 = scmp.ne.s32.totalorder %s48, %s49
    %p61 = scmp.eq.s32.totalorder %s18, 1
    %p62 = por %p60, %p61
    %p64 = scmp.ne.s32.totalorder %s49, %s63
    %p65 = scmp.eq.s32.totalorder %s18, 0
    %p66 = por %p64, %p65
    %s68 = sadd.s32 %s67, 1
    %p71 = scmp.eq.s32.totalorder %s12, 1
    %p72 = scmp.ne.s32.totalorder %s67, %s69
    %p73 = scmp.eq.s32.totalorder %s12, 0
    %p74 = por %p72, %p73
    %p75 = scmp.ne.s32.totalorder %s67, %s69
    %p76 = scmp.eq.s32.totalorder %s17, 1
    %p77 = por %p75, %p76
    %p78 = scmp.ne.s32.totalorder %s69, %s70
    %p79 = scmp.eq.s32.totalorder %s17, 0
    %p80 = por %p78, %p79
    %p81 = scmp.ne.s32.totalorder %s69, %s70
    %p82 = scmp.eq.s32.totalorder %s18, 1
    %p83 = por %p81, %p82
    %p85 = scmp.ne.s32.totalorder %s70, %s84
    %p86 = scmp.eq.s32.totalorder %s18, 0
    %p87 = por %p85, %p86
    %s89 = sadd.s32 %s88, 1
    %p92 = scmp.eq.s32.totalorder %s12, 1
    %p93 = scmp.ne.s32.totalorder %s88, %s90
    %p94 = scmp.eq.s32.totalorder %s12, 0
    %p95 = por %p93, %p94
    %p96 = scmp.ne.s32.totalorder %s88, %s90
    %p97 = scmp.eq.s32.totalorder %s17, 1
    %p98 = por %p96, %p97
    %p99 = scmp.ne.s32.totalorder %s90, %s91
    %p100 = scmp.eq.s32.totalorder %s17, 0
    %p101 = por %p99, %p100
    %p102 = scmp.ne.s32.totalorder %s90, %s91
    %p103 = scmp.eq.s32.totalorder %s18, 1
    %p104 = por %p102, %p103
    %p106 = scmp.ne.s32.totalorder %s91, %s105
    %p107 = scmp.eq.s32.totalorder %s18, 0
    %p108 = por %p106, %p107
    %s109 = ssub.s32 %s12, %s19
    %p110 = scmp.eq.s32.totalorder %s109, 0
    %s112 = sadd.s32 %s111, 1
    %s113 = scalar_select %p110, %s111, %s112
    %p116 = pneg %p110
    %p117 = scmp.eq.s32.totalorder %s12, 1
    %p118 = por %p116, %p117
    %p119 = scmp.ne.s32.totalorder %s111, %s114
    %p120 = scmp.eq.s32.totalorder %s12, 0
    %p121 = por %p119, %p120
    %p122 = scmp.ne.s32.totalorder %s111, %s114
    %p123 = scmp.eq.s32.totalorder %s17, 1
    %p124 = por %p122, %p123
    %p125 = scmp.ne.s32.totalorder %s114, %s115
    %p126 = scmp.eq.s32.totalorder %s17, 0
    %p127 = por %p125, %p126
    %p128 = scmp.ne.s32.totalorder %s114, %s115
    %p129 = scmp.eq.s32.totalorder %s18, 1
    %p130 = por %p128, %p129
    %p132 = scmp.ne.s32.totalorder %s115, %s131
    %p133 = scmp.eq.s32.totalorder %s18, 0
    %p134 = por %p132, %p133
    %s135 = ssub.s32 %s12, %s19
    %p136 = scmp.eq.s32.totalorder %s135, 0
    %s138 = sadd.s32 %s137, 1
    %s139 = scalar_select %p136, %s137, %s138
    %p142 = pneg %p136
    %p143 = scmp.eq.s32.totalorder %s12, 1
    %p144 = por %p142, %p143
    %p145 = scmp.ne.s32.totalorder %s137, %s140
    %p146 = scmp.eq.s32.totalorder %s12, 0
    %p147 = por %p145, %p146
    %p148 = scmp.ne.s32.totalorder %s137, %s140
    %p149 = scmp.eq.s32.totalorder %s17, 1
    %p150 = por %p148, %p149
    %p151 = scmp.ne.s32.totalorder %s140, %s141
    %p152 = scmp.eq.s32.totalorder %s17, 0
    %p153 = por %p151, %p152
    %p154 = scmp.ne.s32.totalorder %s140, %s141
    %p155 = scmp.eq.s32.totalorder %s18, 1
    %p156 = por %p154, %p155
    %p158 = scmp.ne.s32.totalorder %s141, %s157
    %p159 = scmp.eq.s32.totalorder %s18, 0
    %p160 = por %p158, %p159
    %p161 = scmp.le.s32.totalorder 1, %s12
    %p162 = scmp.lt.s32.totalorder %s12, 3
    %p163 = pnand %p161, %p162
    %p164 = pneg %p163
    // Predicated region
    $region9: #{double_conv.3} parent=5 // pred_check
      _
    $region10: #{double_conv.3} parent=5 // pred_check_branch
      %166 = sbr.rel (%p163) target = $region12
    $region11: #{double_conv.3} parent=5 // pred_region
      %s167 = ssub.s32 %s12, 1
      // Predicated region
      $region13: #{double_conv.3} parent=11 // pred_check
        %p168 = pneg %p59
      $region14: #{double_conv.3} parent=11 // pred_check_branch
        %170 = sbr.rel (%p168) target = $region16
      $region15: #{double_conv.3} parent=11 // pred_region
        _
      $region16: #{double_conv.3} parent=11 // pred_fallthru
        _
      // Predicated region
      $region17: #{double_conv.3} parent=11 // pred_check
        %p171 = pneg %p80
      $region18: #{double_conv.3} parent=11 // pred_check_branch
        %173 = sbr.rel (%p171) target = $region20
      $region19: #{double_conv.3} parent=11 // pred_region
        _
      $region20: #{double_conv.3} parent=11 // pred_fallthru
        _
      // Predicated region
      $region21: #{double_conv.3} parent=11 // pred_check
        %p174 = pneg %p101
      $region22: #{double_conv.3} parent=11 // pred_check_branch
        %176 = sbr.rel (%p174) target = $region24
      $region23: #{double_conv.3} parent=11 // pred_region
        _
      $region24: #{double_conv.3} parent=11 // pred_fallthru
        _
    $region12: #{double_conv.3} parent=5 // pred_fallthru
      _
    %p177 = scmp.lt.s32.totalorder %s12, 2
    // Predicated region
    $region25: #{double_conv.3} parent=5 // pred_check
      %p178 = pneg %p177
    $region26: #{double_conv.3} parent=5 // pred_check_branch
      %180 = sbr.rel (%p178) target = $region28
    $region27: #{double_conv.3} parent=5 // pred_region
      // Predicated region
      $region29: #{double_conv.3} parent=27 // pred_check
        %p181 = pneg %p32
      $region30: #{double_conv.3} parent=27 // pred_check_branch
        %183 = sbr.rel (%p181) target = $region32
      $region31: #{double_conv.3} parent=27 // pred_region
        %p184 = scmp.lt.s32.totalorder %s12, 1
        %s185 = scalar_select %p184, %s12, 1
        %s186 = smul.addr %s185, 32
        %s187 = smul.addr %s186, 8
        %s188 = scalar_lea.vmem %s0, %s187
      $region32: #{double_conv.3} parent=27 // pred_fallthru
        _
    $region28: #{double_conv.3} parent=5 // pred_fallthru
      _
    %p189 = scmp.le.s32.totalorder 1, %s12
    %p190 = scmp.lt.s32.totalorder %s12, 3
    %p191 = pnand %p189, %p190
    %p192 = pneg %p191
    // Predicated region
    $region33: #{double_conv.3} parent=5 // pred_check
      _
    $region34: #{double_conv.3} parent=5 // pred_check_branch
      %194 = sbr.rel (%p191) target = $region36
    $region35: #{double_conv.3} parent=5 // pred_region
      %s195 = ssub.s32 %s12, 1
      %p196 = scmp.lt.s32.totalorder %s17, 1
      %s197 = scalar_select %p196, %s17, 1
      %s198 = smul.addr %s197, 32
      %s199 = smul.addr %s198, 8
      %s200 = scalar_lea.vmem %s0, %s199
      %p201 = pneg %p38
      %p202 = pneg %p35
      %p203 = pneg %p59
      %p204 = pneg %p56
      %p205 = pneg %p80
      %p206 = pneg %p77
      %p207 = pneg %p101
      %p208 = pneg %p98
      %p209 = pneg %p127
      %p210 = pneg %p124
      %p211 = scmp.lt.s32.totalorder %s17, 1
      %s212 = scalar_select %p211, %s17, 1
      %s213 = smul.addr %s212, 32
      %s214 = smul.addr %s213, 8
      %s215 = scalar_lea.vmem %s4, %s214
      %p216 = pneg %p153
      %p217 = pneg %p150
      %p218 = scmp.lt.s32.totalorder %s17, 1
      %s219 = scalar_select %p218, %s17, 1
      %s220 = smul.addr %s219, 8
      %s221 = scalar_lea.vmem %s5, %s220
      %p222 = scmp.lt.s32.totalorder %s17, 1
      %s223 = scalar_select %p222, %s17, 1
      %s224 = smul.addr %s223, 32
      %s225 = smul.addr %s224, 8
      %s226 = scalar_lea.vmem %s0, %s225
      %p227 = scmp.lt.s32.totalorder %s17, 1
      %s228 = scalar_select %p227, %s17, 1
      %s229 = smul.addr %s228, 32
      %s230 = smul.addr %s229, 8
      %s231 = scalar_lea.vmem %s4, %s230
      %p232 = scmp.lt.s32.totalorder %s17, 1
      %s233 = scalar_select %p232, %s17, 1
      %s234 = smul.addr %s233, 8
      %s235 = scalar_lea.vmem %s5, %s234
      %v236 = vld [vmem:[%s226] sm:$0xff]
      %v237 = vld [vmem:[%s226 + $0x8] sm:$0xff]
      %v238 = vld [vmem:[%s226 + $0x10] sm:$0xff]
      %v239 = vld [vmem:[%s226 + $0x18] sm:$0xff]
      %v240 = vld [vmem:[%s226 + $0x20] sm:$0xff]
      %v241 = vld [vmem:[%s226 + $0x28] sm:$0xff]
      %v242 = vld [vmem:[%s226 + $0x30] sm:$0xff]
      %v243 = vld [vmem:[%s226 + $0x38] sm:$0xff]
      %v244 = vld [vmem:[%s226 + $0x40] sm:$0xff]
      %v245 = vld [vmem:[%s226 + $0x48] sm:$0xff]
      %v246 = vld [vmem:[%s226 + $0x50] sm:$0xff]
      %v247 = vld [vmem:[%s226 + $0x58] sm:$0xff]
      %v248 = vld [vmem:[%s226 + $0x60] sm:$0xff]
      %v249 = vld [vmem:[%s226 + $0x68] sm:$0xff]
      %v250 = vld [vmem:[%s226 + $0x70] sm:$0xff]
      %v251 = vld [vmem:[%s226 + $0x78] sm:$0xff]
      %v252 = vld [vmem:[%s226 + $0x80] sm:$0xff]
      %v253 = vld [vmem:[%s226 + $0x88] sm:$0xff]
      %v254 = vld [vmem:[%s226 + $0x90] sm:$0xff]
      %v255 = vld [vmem:[%s226 + $0x98] sm:$0xff]
      %v256 = vld [vmem:[%s226 + $0xa0] sm:$0xff]
      %v257 = vld [vmem:[%s226 + $0xa8] sm:$0xff]
      %v258 = vld [vmem:[%s226 + $0xb0] sm:$0xff]
      %v259 = vld [vmem:[%s226 + $0xb8] sm:$0xff]
      %v260 = vld [vmem:[%s226 + $0xc0] sm:$0xff]
      %v261 = vld [vmem:[%s226 + $0xc8] sm:$0xff]
      %v262 = vld [vmem:[%s226 + $0xd0] sm:$0xff]
      %v263 = vld [vmem:[%s226 + $0xd8] sm:$0xff]
      %v264 = vld [vmem:[%s226 + $0xe0] sm:$0xff]
      %v265 = vld [vmem:[%s226 + $0xe8] sm:$0xff]
      %v266 = vld [vmem:[%s226 + $0xf0] sm:$0xff]
      %v267 = vld [vmem:[%s226 + $0xf8] sm:$0xff]
      %268 = vst [vmem:[#allocation2] sm:$0xff] 0.0
      %269 = vst [vmem:[#allocation2 + $0x8] sm:$0xff] 0.0
      %270 = vst [vmem:[#allocation2 + $0x10] sm:$0x3] 0.0
      %s271 = scalar_lea.vmem [#allocation2], 408
      %272 = vst [vmem:[%s271] sm:$0xff] 0.0
      %273 = vst [vmem:[%s271 + $0x8] sm:$0xff] 0.0
      %274 = vst [vmem:[%s271 + $0x10] sm:$0x3] 0.0
      %275 = vst [vmem:[#allocation2] sm:$0x1] 0.0
      %276 = vst [vmem:[#allocation2 + $0x18] sm:$0x1] 0.0
      %277 = vst [vmem:[#allocation2 + $0x30] sm:$0x1] 0.0
      %278 = vst [vmem:[#allocation2 + $0x48] sm:$0x1] 0.0
      %279 = vst [vmem:[#allocation2 + $0x60] sm:$0x1] 0.0
      %280 = vst [vmem:[#allocation2 + $0x78] sm:$0x1] 0.0
      %281 = vst [vmem:[#allocation2 + $0x90] sm:$0x1] 0.0
      %282 = vst [vmem:[#allocation2 + $0xa8] sm:$0x1] 0.0
      %283 = vst [vmem:[#allocation2 + $0xc0] sm:$0x1] 0.0
      %284 = vst [vmem:[#allocation2 + $0xd8] sm:$0x1] 0.0
      %285 = vst [vmem:[#allocation2 + $0xf0] sm:$0x1] 0.0
      %286 = vst [vmem:[#allocation2 + $0x108] sm:$0x1] 0.0
      %287 = vst [vmem:[#allocation2 + $0x120] sm:$0x1] 0.0
      %288 = vst [vmem:[#allocation2 + $0x138] sm:$0x1] 0.0
      %289 = vst [vmem:[#allocation2 + $0x150] sm:$0x1] 0.0
      %290 = vst [vmem:[#allocation2 + $0x168] sm:$0x1] 0.0
      %291 = vst [vmem:[#allocation2 + $0x180] sm:$0x1] 0.0
      %292 = vst [vmem:[#allocation2 + $0x198] sm:$0x1] 0.0
      %293 = vst [vmem:[#allocation2 + $0x11] sm:$0x1] 0.0
      %294 = vst [vmem:[#allocation2 + $0x29] sm:$0x1] 0.0
      %295 = vst [vmem:[#allocation2 + $0x41] sm:$0x1] 0.0
      %296 = vst [vmem:[#allocation2 + $0x59] sm:$0x1] 0.0
      %297 = vst [vmem:[#allocation2 + $0x71] sm:$0x1] 0.0
      %298 = vst [vmem:[#allocation2 + $0x89] sm:$0x1] 0.0
      %299 = vst [vmem:[#allocation2 + $0xa1] sm:$0x1] 0.0
      %300 = vst [vmem:[#allocation2 + $0xb9] sm:$0x1] 0.0
      %301 = vst [vmem:[#allocation2 + $0xd1] sm:$0x1] 0.0
      %302 = vst [vmem:[#allocation2 + $0xe9] sm:$0x1] 0.0
      %303 = vst [vmem:[#allocation2 + $0x101] sm:$0x1] 0.0
      %304 = vst [vmem:[#allocation2 + $0x119] sm:$0x1] 0.0
      %305 = vst [vmem:[#allocation2 + $0x131] sm:$0x1] 0.0
      %306 = vst [vmem:[#allocation2 + $0x149] sm:$0x1] 0.0
      %307 = vst [vmem:[#allocation2 + $0x161] sm:$0x1] 0.0
      %308 = vst [vmem:[#allocation2 + $0x179] sm:$0x1] 0.0
      %309 = vst [vmem:[#allocation2 + $0x191] sm:$0x1] 0.0
      %310 = vst [vmem:[#allocation2 + $0x1a9] sm:$0x1] 0.0
      %s311 = scalar_lea.vmem [#allocation2], 24
      %312 = vst [vmem:[%s311 + $0x1] sm:$0xff] %v236
      %313 = vst [vmem:[%s311 + $0x9] sm:$0xff] %v237
      %314 = vst [vmem:[%s311 + $0x19] sm:$0xff] %v238
      %315 = vst [vmem:[%s311 + $0x21] sm:$0xff] %v239
      %316 = vst [vmem:[%s311 + $0x31] sm:$0xff] %v240
      %317 = vst [vmem:[%s311 + $0x39] sm:$0xff] %v241
      %318 = vst [vmem:[%s311 + $0x49] sm:$0xff] %v242
      %319 = vst [vmem:[%s311 + $0x51] sm:$0xff] %v243
      %320 = vst [vmem:[%s311 + $0x61] sm:$0xff] %v244
      %321 = vst [vmem:[%s311 + $0x69] sm:$0xff] %v245
      %322 = vst [vmem:[%s311 + $0x79] sm:$0xff] %v246
      %323 = vst [vmem:[%s311 + $0x81] sm:$0xff] %v247
      %324 = vst [vmem:[%s311 + $0x91] sm:$0xff] %v248
      %325 = vst [vmem:[%s311 + $0x99] sm:$0xff] %v249
      %326 = vst [vmem:[%s311 + $0xa9] sm:$0xff] %v250
      %327 = vst [vmem:[%s311 + $0xb1] sm:$0xff] %v251
      %328 = vst [vmem:[%s311 + $0xc1] sm:$0xff] %v252
      %329 = vst [vmem:[%s311 + $0xc9] sm:$0xff] %v253
      %330 = vst [vmem:[%s311 + $0xd9] sm:$0xff] %v254
      %331 = vst [vmem:[%s311 + $0xe1] sm:$0xff] %v255
      %332 = vst [vmem:[%s311 + $0xf1] sm:$0xff] %v256
      %333 = vst [vmem:[%s311 + $0xf9] sm:$0xff] %v257
      %334 = vst [vmem:[%s311 + $0x109] sm:$0xff] %v258
      %335 = vst [vmem:[%s311 + $0x111] sm:$0xff] %v259
      %336 = vst [vmem:[%s311 + $0x121] sm:$0xff] %v260
      %337 = vst [vmem:[%s311 + $0x129] sm:$0xff] %v261
      %338 = vst [vmem:[%s311 + $0x139] sm:$0xff] %v262
      %339 = vst [vmem:[%s311 + $0x141] sm:$0xff] %v263
      %340 = vst [vmem:[%s311 + $0x151] sm:$0xff] %v264
      %341 = vst [vmem:[%s311 + $0x159] sm:$0xff] %v265
      %342 = vst [vmem:[%s311 + $0x169] sm:$0xff] %v266
      %343 = vst [vmem:[%s311 + $0x171] sm:$0xff] %v267
      %v344 = vld [vmem:[#allocation2] sm:$0xff]
      %v345 = vld [vmem:[#allocation2 + $0x8] sm:$0xff]
      %v346 = vld [vmem:[#allocation2 + $0x18] sm:$0xff]
      %v347 = vld [vmem:[#allocation2 + $0x20] sm:$0xff]
      %v348 = vld [vmem:[#allocation2 + $0x30] sm:$0xff]
      %v349 = vld [vmem:[#allocation2 + $0x38] sm:$0xff]
      %v350 = vld [vmem:[#allocation2 + $0x48] sm:$0xff]
      %v351 = vld [vmem:[#allocation2 + $0x50] sm:$0xff]
      %v352 = vld [vmem:[#allocation2 + $0x60] sm:$0xff]
      %v353 = vld [vmem:[#allocation2 + $0x68] sm:$0xff]
      %v354 = vld [vmem:[#allocation2 + $0x78] sm:$0xff]
      %v355 = vld [vmem:[#allocation2 + $0x80] sm:$0xff]
      %v356 = vld [vmem:[#allocation2 + $0x90] sm:$0xff]
      %v357 = vld [vmem:[#allocation2 + $0x98] sm:$0xff]
      %v358 = vld [vmem:[#allocation2 + $0xa8] sm:$0xff]
      %v359 = vld [vmem:[#allocation2 + $0xb0] sm:$0xff]
      %v360 = vld [vmem:[#allocation2 + $0xc0] sm:$0xff]
      %v361 = vld [vmem:[#allocation2 + $0xc8] sm:$0xff]
      %v362 = vld [vmem:[#allocation2 + $0xd8] sm:$0xff]
      %v363 = vld [vmem:[#allocation2 + $0xe0] sm:$0xff]
      %v364 = vld [vmem:[#allocation2 + $0xf0] sm:$0xff]
      %v365 = vld [vmem:[#allocation2 + $0xf8] sm:$0xff]
      %v366 = vld [vmem:[#allocation2 + $0x108] sm:$0xff]
      %v367 = vld [vmem:[#allocation2 + $0x110] sm:$0xff]
      %v368 = vld [vmem:[#allocation2 + $0x120] sm:$0xff]
      %v369 = vld [vmem:[#allocation2 + $0x128] sm:$0xff]
      %v370 = vld [vmem:[#allocation2 + $0x138] sm:$0xff]
      %v371 = vld [vmem:[#allocation2 + $0x140] sm:$0xff]
      %v372 = vld [vmem:[#allocation2 + $0x150] sm:$0xff]
      %v373 = vld [vmem:[#allocation2 + $0x158] sm:$0xff]
      %v374 = vld [vmem:[#allocation2 + $0x168] sm:$0xff]
      %v375 = vld [vmem:[#allocation2 + $0x170] sm:$0xff]
      %376 = vst [vmem:[#allocation3] sm:$0xff] %v344
      %377 = vst [vmem:[#allocation3 + $0x48] sm:$0xff] %v345
      %378 = vst [vmem:[#allocation3 + $0x90] sm:$0xff] %v346
      %379 = vst [vmem:[#allocation3 + $0xd8] sm:$0xff] %v347
      %380 = vst [vmem:[#allocation3 + $0x120] sm:$0xff] %v348
      %381 = vst [vmem:[#allocation3 + $0x168] sm:$0xff] %v349
      %382 = vst [vmem:[#allocation3 + $0x1b0] sm:$0xff] %v350
      %383 = vst [vmem:[#allocation3 + $0x1f8] sm:$0xff] %v351
      %384 = vst [vmem:[#allocation3 + $0x240] sm:$0xff] %v352
      %385 = vst [vmem:[#allocation3 + $0x288] sm:$0xff] %v353
      %386 = vst [vmem:[#allocation3 + $0x2d0] sm:$0xff] %v354
      %387 = vst [vmem:[#allocation3 + $0x318] sm:$0xff] %v355
      %388 = vst [vmem:[#allocation3 + $0x360] sm:$0xff] %v356
      %389 = vst [vmem:[#allocation3 + $0x3a8] sm:$0xff] %v357
      %390 = vst [vmem:[#allocation3 + $0x3f0] sm:$0xff] %v358
      %391 = vst [vmem:[#allocation3 + $0x438] sm:$0xff] %v359
      %392 = vst [vmem:[#allocation3 + $0x480] sm:$0xff] %v360
      %393 = vst [vmem:[#allocation3 + $0x4c8] sm:$0xff] %v361
      %394 = vst [vmem:[#allocation3 + $0x510] sm:$0xff] %v362
      %395 = vst [vmem:[#allocation3 + $0x558] sm:$0xff] %v363
      %396 = vst [vmem:[#allocation3 + $0x5a0] sm:$0xff] %v364
      %397 = vst [vmem:[#allocation3 + $0x5e8] sm:$0xff] %v365
      %398 = vst [vmem:[#allocation3 + $0x630] sm:$0xff] %v366
      %399 = vst [vmem:[#allocation3 + $0x678] sm:$0xff] %v367
      %400 = vst [vmem:[#allocation3 + $0x6c0] sm:$0xff] %v368
      %401 = vst [vmem:[#allocation3 + $0x708] sm:$0xff] %v369
      %402 = vst [vmem:[#allocation3 + $0x750] sm:$0xff] %v370
      %403 = vst [vmem:[#allocation3 + $0x798] sm:$0xff] %v371
      %404 = vst [vmem:[#allocation3 + $0x7e0] sm:$0xff] %v372
      %405 = vst [vmem:[#allocation3 + $0x828] sm:$0xff] %v373
      %406 = vst [vmem:[#allocation3 + $0x870] sm:$0xff] %v374
      %407 = vst [vmem:[#allocation3 + $0x8b8] sm:$0xff] %v375
      %v408 = vld [vmem:[#allocation2 + $0x1] sm:$0xff]
      %v409 = vld [vmem:[#allocation2 + $0x9] sm:$0xff]
      %v410 = vld [vmem:[#allocation2 + $0x19] sm:$0xff]
      %v411 = vld [vmem:[#allocation2 + $0x21] sm:$0xff]
      %v412 = vld [vmem:[#allocation2 + $0x31] sm:$0xff]
      %v413 = vld [vmem:[#allocation2 + $0x39] sm:$0xff]
      %v414 = vld [vmem:[#allocation2 + $0x49] sm:$0xff]
      %v415 = vld [vmem:[#allocation2 + $0x51] sm:$0xff]
      %v416 = vld [vmem:[#allocation2 + $0x61] sm:$0xff]
      %v417 = vld [vmem:[#allocation2 + $0x69] sm:$0xff]
      %v418 = vld [vmem:[#allocation2 + $0x79] sm:$0xff]
      %v419 = vld [vmem:[#allocation2 + $0x81] sm:$0xff]
      %v420 = vld [vmem:[#allocation2 + $0x91] sm:$0xff]
      %v421 = vld [vmem:[#allocation2 + $0x99] sm:$0xff]
      %v422 = vld [vmem:[#allocation2 + $0xa9] sm:$0xff]
      %v423 = vld [vmem:[#allocation2 + $0xb1] sm:$0xff]
      %v424 = vld [vmem:[#allocation2 + $0xc1] sm:$0xff]
      %v425 = vld [vmem:[#allocation2 + $0xc9] sm:$0xff]
      %v426 = vld [vmem:[#allocation2 + $0xd9] sm:$0xff]
      %v427 = vld [vmem:[#allocation2 + $0xe1] sm:$0xff]
      %v428 = vld [vmem:[#allocation2 + $0xf1] sm:$0xff]
      %v429 = vld [vmem:[#allocation2 + $0xf9] sm:$0xff]
      %v430 = vld [vmem:[#allocation2 + $0x109] sm:$0xff]
      %v431 = vld [vmem:[#allocation2 + $0x111] sm:$0xff]
      %v432 = vld [vmem:[#allocation2 + $0x121] sm:$0xff]
      %v433 = vld [vmem:[#allocation2 + $0x129] sm:$0xff]
      %v434 = vld [vmem:[#allocation2 + $0x139] sm:$0xff]
      %v435 = vld [vmem:[#allocation2 + $0x141] sm:$0xff]
      %v436 = vld [vmem:[#allocation2 + $0x151] sm:$0xff]
      %v437 = vld [vmem:[#allocation2 + $0x159] sm:$0xff]
      %v438 = vld [vmem:[#allocation2 + $0x169] sm:$0xff]
      %v439 = vld [vmem:[#allocation2 + $0x171] sm:$0xff]
      %440 = vst [vmem:[#allocation3 + $0x8] sm:$0xff] %v408
      %441 = vst [vmem:[#allocation3 + $0x50] sm:$0xff] %v409
      %442 = vst [vmem:[#allocation3 + $0x98] sm:$0xff] %v410
      %443 = vst [vmem:[#allocation3 + $0xe0] sm:$0xff] %v411
      %444 = vst [vmem:[#allocation3 + $0x128] sm:$0xff] %v412
      %445 = vst [vmem:[#allocation3 + $0x170] sm:$0xff] %v413
      %446 = vst [vmem:[#allocation3 + $0x1b8] sm:$0xff] %v414
      %447 = vst [vmem:[#allocation3 + $0x200] sm:$0xff] %v415
      %448 = vst [vmem:[#allocation3 + $0x248] sm:$0xff] %v416
      %449 = vst [vmem:[#allocation3 + $0x290] sm:$0xff] %v417
      %450 = vst [vmem:[#allocation3 + $0x2d8] sm:$0xff] %v418
      %451 = vst [vmem:[#allocation3 + $0x320] sm:$0xff] %v419
      %452 = vst [vmem:[#allocation3 + $0x368] sm:$0xff] %v420
      %453 = vst [vmem:[#allocation3 + $0x3b0] sm:$0xff] %v421
      %454 = vst [vmem:[#allocation3 + $0x3f8] sm:$0xff] %v422
      %455 = vst [vmem:[#allocation3 + $0x440] sm:$0xff] %v423
      %456 = vst [vmem:[#allocation3 + $0x488] sm:$0xff] %v424
      %457 = vst [vmem:[#allocation3 + $0x4d0] sm:$0xff] %v425
      %458 = vst [vmem:[#allocation3 + $0x518] sm:$0xff] %v426
      %459 = vst [vmem:[#allocation3 + $0x560] sm:$0xff] %v427
      %460 = vst [vmem:[#allocation3 + $0x5a8] sm:$0xff] %v428
      %461 = vst [vmem:[#allocation3 + $0x5f0] sm:$0xff] %v429
      %462 = vst [vmem:[#allocation3 + $0x638] sm:$0xff] %v430
      %463 = vst [vmem:[#allocation3 + $0x680] sm:$0xff] %v431
      %464 = vst [vmem:[#allocation3 + $0x6c8] sm:$0xff] %v432
      %465 = vst [vmem:[#allocation3 + $0x710] sm:$0xff] %v433
      %466 = vst [vmem:[#allocation3 + $0x758] sm:$0xff] %v434
      %467 = vst [vmem:[#allocation3 + $0x7a0] sm:$0xff] %v435
      %468 = vst [vmem:[#allocation3 + $0x7e8] sm:$0xff] %v436
      %469 = vst [vmem:[#allocation3 + $0x830] sm:$0xff] %v437
      %470 = vst [vmem:[#allocation3 + $0x878] sm:$0xff] %v438
      %471 = vst [vmem:[#allocation3 + $0x8c0] sm:$0xff] %v439
      %v472 = vld [vmem:[#allocation2 + $0x2] sm:$0xff]
      %v473 = vld [vmem:[#allocation2 + $0xa] sm:$0xff]
      %v474 = vld [vmem:[#allocation2 + $0x1a] sm:$0xff]
      %v475 = vld [vmem:[#allocation2 + $0x22] sm:$0xff]
      %v476 = vld [vmem:[#allocation2 + $0x32] sm:$0xff]
      %v477 = vld [vmem:[#allocation2 + $0x3a] sm:$0xff]
      %v478 = vld [vmem:[#allocation2 + $0x4a] sm:$0xff]
      %v479 = vld [vmem:[#allocation2 + $0x52] sm:$0xff]
      %v480 = vld [vmem:[#allocation2 + $0x62] sm:$0xff]
      %v481 = vld [vmem:[#allocation2 + $0x6a] sm:$0xff]
      %v482 = vld [vmem:[#allocation2 + $0x7a] sm:$0xff]
      %v483 = vld [vmem:[#allocation2 + $0x82] sm:$0xff]
      %v484 = vld [vmem:[#allocation2 + $0x92] sm:$0xff]
      %v485 = vld [vmem:[#allocation2 + $0x9a] sm:$0xff]
      %v486 = vld [vmem:[#allocation2 + $0xaa] sm:$0xff]
      %v487 = vld [vmem:[#allocation2 + $0xb2] sm:$0xff]
      %v488 = vld [vmem:[#allocation2 + $0xc2] sm:$0xff]
      %v489 = vld [vmem:[#allocation2 + $0xca] sm:$0xff]
      %v490 = vld [vmem:[#allocation2 + $0xda] sm:$0xff]
      %v491 = vld [vmem:[#allocation2 + $0xe2] sm:$0xff]
      %v492 = vld [vmem:[#allocation2 + $0xf2] sm:$0xff]
      %v493 = vld [vmem:[#allocation2 + $0xfa] sm:$0xff]
      %v494 = vld [vmem:[#allocation2 + $0x10a] sm:$0xff]
      %v495 = vld [vmem:[#allocation2 + $0x112] sm:$0xff]
      %v496 = vld [vmem:[#allocation2 + $0x122] sm:$0xff]
      %v497 = vld [vmem:[#allocation2 + $0x12a] sm:$0xff]
      %v498 = vld [vmem:[#allocation2 + $0x13a] sm:$0xff]
      %v499 = vld [vmem:[#allocation2 + $0x142] sm:$0xff]
      %v500 = vld [vmem:[#allocation2 + $0x152] sm:$0xff]
      %v501 = vld [vmem:[#allocation2 + $0x15a] sm:$0xff]
      %v502 = vld [vmem:[#allocation2 + $0x16a] sm:$0xff]
      %v503 = vld [vmem:[#allocation2 + $0x172] sm:$0xff]
      %504 = vst [vmem:[#allocation3 + $0x10] sm:$0xff] %v472
      %505 = vst [vmem:[#allocation3 + $0x58] sm:$0xff] %v473
      %506 = vst [vmem:[#allocation3 + $0xa0] sm:$0xff] %v474
      %507 = vst [vmem:[#allocation3 + $0xe8] sm:$0xff] %v475
      %508 = vst [vmem:[#allocation3 + $0x130] sm:$0xff] %v476
      %509 = vst [vmem:[#allocation3 + $0x178] sm:$0xff] %v477
      %510 = vst [vmem:[#allocation3 + $0x1c0] sm:$0xff] %v478
      %511 = vst [vmem:[#allocation3 + $0x208] sm:$0xff] %v479
      %512 = vst [vmem:[#allocation3 + $0x250] sm:$0xff] %v480
      %513 = vst [vmem:[#allocation3 + $0x298] sm:$0xff] %v481
      %514 = vst [vmem:[#allocation3 + $0x2e0] sm:$0xff] %v482
      %515 = vst [vmem:[#allocation3 + $0x328] sm:$0xff] %v483
      %516 = vst [vmem:[#allocation3 + $0x370] sm:$0xff] %v484
      %517 = vst [vmem:[#allocation3 + $0x3b8] sm:$0xff] %v485
      %518 = vst [vmem:[#allocation3 + $0x400] sm:$0xff] %v486
      %519 = vst [vmem:[#allocation3 + $0x448] sm:$0xff] %v487
      %520 = vst [vmem:[#allocation3 + $0x490] sm:$0xff] %v488
      %521 = vst [vmem:[#allocation3 + $0x4d8] sm:$0xff] %v489
      %522 = vst [vmem:[#allocation3 + $0x520] sm:$0xff] %v490
      %523 = vst [vmem:[#allocation3 + $0x568] sm:$0xff] %v491
      %524 = vst [vmem:[#allocation3 + $0x5b0] sm:$0xff] %v492
      %525 = vst [vmem:[#allocation3 + $0x5f8] sm:$0xff] %v493
      %526 = vst [vmem:[#allocation3 + $0x640] sm:$0xff] %v494
      %527 = vst [vmem:[#allocation3 + $0x688] sm:$0xff] %v495
      %528 = vst [vmem:[#allocation3 + $0x6d0] sm:$0xff] %v496
      %529 = vst [vmem:[#allocation3 + $0x718] sm:$0xff] %v497
      %530 = vst [vmem:[#allocation3 + $0x760] sm:$0xff] %v498
      %531 = vst [vmem:[#allocation3 + $0x7a8] sm:$0xff] %v499
      %532 = vst [vmem:[#allocation3 + $0x7f0] sm:$0xff] %v500
      %533 = vst [vmem:[#allocation3 + $0x838] sm:$0xff] %v501
      %534 = vst [vmem:[#allocation3 + $0x880] sm:$0xff] %v502
      %535 = vst [vmem:[#allocation3 + $0x8c8] sm:$0xff] %v503
      %v536 = vld [vmem:[%s311] sm:$0xff]
      %v537 = vld [vmem:[%s311 + $0x8] sm:$0xff]
      %v538 = vld [vmem:[%s311 + $0x18] sm:$0xff]
      %v539 = vld [vmem:[%s311 + $0x20] sm:$0xff]
      %v540 = vld [vmem:[%s311 + $0x30] sm:$0xff]
      %v541 = vld [vmem:[%s311 + $0x38] sm:$0xff]
      %v542 = vld [vmem:[%s311 + $0x48] sm:$0xff]
      %v543 = vld [vmem:[%s311 + $0x50] sm:$0xff]
      %v544 = vld [vmem:[%s311 + $0x60] sm:$0xff]
      %v545 = vld [vmem:[%s311 + $0x68] sm:$0xff]
      %v546 = vld [vmem:[%s311 + $0x78] sm:$0xff]
      %v547 = vld [vmem:[%s311 + $0x80] sm:$0xff]
      %v548 = vld [vmem:[%s311 + $0x90] sm:$0xff]
      %v549 = vld [vmem:[%s311 + $0x98] sm:$0xff]
      %v550 = vld [vmem:[%s311 + $0xa8] sm:$0xff]
      %v551 = vld [vmem:[%s311 + $0xb0] sm:$0xff]
      %v552 = vld [vmem:[%s311 + $0xc0] sm:$0xff]
      %v553 = vld [vmem:[%s311 + $0xc8] sm:$0xff]
      %v554 = vld [vmem:[%s311 + $0xd8] sm:$0xff]
      %v555 = vld [vmem:[%s311 + $0xe0] sm:$0xff]
      %v556 = vld [vmem:[%s311 + $0xf0] sm:$0xff]
      %v557 = vld [vmem:[%s311 + $0xf8] sm:$0xff]
      %v558 = vld [vmem:[%s311 + $0x108] sm:$0xff]
      %v559 = vld [vmem:[%s311 + $0x110] sm:$0xff]
      %v560 = vld [vmem:[%s311 + $0x120] sm:$0xff]
      %v561 = vld [vmem:[%s311 + $0x128] sm:$0xff]
      %v562 = vld [vmem:[%s311 + $0x138] sm:$0xff]
      %v563 = vld [vmem:[%s311 + $0x140] sm:$0xff]
      %v564 = vld [vmem:[%s311 + $0x150] sm:$0xff]
      %v565 = vld [vmem:[%s311 + $0x158] sm:$0xff]
      %v566 = vld [vmem:[%s311 + $0x168] sm:$0xff]
      %v567 = vld [vmem:[%s311 + $0x170] sm:$0xff]
      %568 = vst [vmem:[#allocation3 + $0x18] sm:$0xff] %v536
      %569 = vst [vmem:[#allocation3 + $0x60] sm:$0xff] %v537
      %570 = vst [vmem:[#allocation3 + $0xa8] sm:$0xff] %v538
      %571 = vst [vmem:[#allocation3 + $0xf0] sm:$0xff] %v539
      %572 = vst [vmem:[#allocation3 + $0x138] sm:$0xff] %v540
      %573 = vst [vmem:[#allocation3 + $0x180] sm:$0xff] %v541
      %574 = vst [vmem:[#allocation3 + $0x1c8] sm:$0xff] %v542
      %575 = vst [vmem:[#allocation3 + $0x210] sm:$0xff] %v543
      %576 = vst [vmem:[#allocation3 + $0x258] sm:$0xff] %v544
      %577 = vst [vmem:[#allocation3 + $0x2a0] sm:$0xff] %v545
      %578 = vst [vmem:[#allocation3 + $0x2e8] sm:$0xff] %v546
      %579 = vst [vmem:[#allocation3 + $0x330] sm:$0xff] %v547
      %580 = vst [vmem:[#allocation3 + $0x378] sm:$0xff] %v548
      %581 = vst [vmem:[#allocation3 + $0x3c0] sm:$0xff] %v549
      %582 = vst [vmem:[#allocation3 + $0x408] sm:$0xff] %v550
      %583 = vst [vmem:[#allocation3 + $0x450] sm:$0xff] %v551
      %584 = vst [vmem:[#allocation3 + $0x498] sm:$0xff] %v552
      %585 = vst [vmem:[#allocation3 + $0x4e0] sm:$0xff] %v553
      %586 = vst [vmem:[#allocation3 + $0x528] sm:$0xff] %v554
      %587 = vst [vmem:[#allocation3 + $0x570] sm:$0xff] %v555
      %588 = vst [vmem:[#allocation3 + $0x5b8] sm:$0xff] %v556
      %589 = vst [vmem:[#allocation3 + $0x600] sm:$0xff] %v557
      %590 = vst [vmem:[#allocation3 + $0x648] sm:$0xff] %v558
      %591 = vst [vmem:[#allocation3 + $0x690] sm:$0xff] %v559
      %592 = vst [vmem:[#allocation3 + $0x6d8] sm:$0xff] %v560
      %593 = vst [vmem:[#allocation3 + $0x720] sm:$0xff] %v561
      %594 = vst [vmem:[#allocation3 + $0x768] sm:$0xff] %v562
      %595 = vst [vmem:[#allocation3 + $0x7b0] sm:$0xff] %v563
      %596 = vst [vmem:[#allocation3 + $0x7f8] sm:$0xff] %v564
      %597 = vst [vmem:[#allocation3 + $0x840] sm:$0xff] %v565
      %598 = vst [vmem:[#allocation3 + $0x888] sm:$0xff] %v566
      %599 = vst [vmem:[#allocation3 + $0x8d0] sm:$0xff] %v567
      %v600 = vld [vmem:[%s311 + $0x1] sm:$0xff]
      %v601 = vld [vmem:[%s311 + $0x9] sm:$0xff]
      %v602 = vld [vmem:[%s311 + $0x19] sm:$0xff]
      %v603 = vld [vmem:[%s311 + $0x21] sm:$0xff]
      %v604 = vld [vmem:[%s311 + $0x31] sm:$0xff]
      %v605 = vld [vmem:[%s311 + $0x39] sm:$0xff]
      %v606 = vld [vmem:[%s311 + $0x49] sm:$0xff]
      %v607 = vld [vmem:[%s311 + $0x51] sm:$0xff]
      %v608 = vld [vmem:[%s311 + $0x61] sm:$0xff]
      %v609 = vld [vmem:[%s311 + $0x69] sm:$0xff]
      %v610 = vld [vmem:[%s311 + $0x79] sm:$0xff]
      %v611 = vld [vmem:[%s311 + $0x81] sm:$0xff]
      %v612 = vld [vmem:[%s311 + $0x91] sm:$0xff]
      %v613 = vld [vmem:[%s311 + $0x99] sm:$0xff]
      %v614 = vld [vmem:[%s311 + $0xa9] sm:$0xff]
      %v615 = vld [vmem:[%s311 + $0xb1] sm:$0xff]
      %v616 = vld [vmem:[%s311 + $0xc1] sm:$0xff]
      %v617 = vld [vmem:[%s311 + $0xc9] sm:$0xff]
      %v618 = vld [vmem:[%s311 + $0xd9] sm:$0xff]
      %v619 = vld [vmem:[%s311 + $0xe1] sm:$0xff]
      %v620 = vld [vmem:[%s311 + $0xf1] sm:$0xff]
      %v621 = vld [vmem:[%s311 + $0xf9] sm:$0xff]
      %v622 = vld [vmem:[%s311 + $0x109] sm:$0xff]
      %v623 = vld [vmem:[%s311 + $0x111] sm:$0xff]
      %v624 = vld [vmem:[%s311 + $0x121] sm:$0xff]
      %v625 = vld [vmem:[%s311 + $0x129] sm:$0xff]
      %v626 = vld [vmem:[%s311 + $0x139] sm:$0xff]
      %v627 = vld [vmem:[%s311 + $0x141] sm:$0xff]
      %v628 = vld [vmem:[%s311 + $0x151] sm:$0xff]
      %v629 = vld [vmem:[%s311 + $0x159] sm:$0xff]
      %v630 = vld [vmem:[%s311 + $0x169] sm:$0xff]
      %v631 = vld [vmem:[%s311 + $0x171] sm:$0xff]
      %632 = vst [vmem:[#allocation3 + $0x20] sm:$0xff] %v600
      %633 = vst [vmem:[#allocation3 + $0x68] sm:$0xff] %v601
      %634 = vst [vmem:[#allocation3 + $0xb0] sm:$0xff] %v602
      %635 = vst [vmem:[#allocation3 + $0xf8] sm:$0xff] %v603
      %636 = vst [vmem:[#allocation3 + $0x140] sm:$0xff] %v604
      %637 = vst [vmem:[#allocation3 + $0x188] sm:$0xff] %v605
      %638 = vst [vmem:[#allocation3 + $0x1d0] sm:$0xff] %v606
      %639 = vst [vmem:[#allocation3 + $0x218] sm:$0xff] %v607
      %640 = vst [vmem:[#allocation3 + $0x260] sm:$0xff] %v608
      %641 = vst [vmem:[#allocation3 + $0x2a8] sm:$0xff] %v609
      %642 = vst [vmem:[#allocation3 + $0x2f0] sm:$0xff] %v610
      %643 = vst [vmem:[#allocation3 + $0x338] sm:$0xff] %v611
      %644 = vst [vmem:[#allocation3 + $0x380] sm:$0xff] %v612
      %645 = vst [vmem:[#allocation3 + $0x3c8] sm:$0xff] %v613
      %646 = vst [vmem:[#allocation3 + $0x410] sm:$0xff] %v614
      %647 = vst [vmem:[#allocation3 + $0x458] sm:$0xff] %v615
      %648 = vst [vmem:[#allocation3 + $0x4a0] sm:$0xff] %v616
      %649 = vst [vmem:[#allocation3 + $0x4e8] sm:$0xff] %v617
      %650 = vst [vmem:[#allocation3 + $0x530] sm:$0xff] %v618
      %651 = vst [vmem:[#allocation3 + $0x578] sm:$0xff] %v619
      %652 = vst [vmem:[#allocation3 + $0x5c0] sm:$0xff] %v620
      %653 = vst [vmem:[#allocation3 + $0x608] sm:$0xff] %v621
      %654 = vst [vmem:[#allocation3 + $0x650] sm:$0xff] %v622
      %655 = vst [vmem:[#allocation3 + $0x698] sm:$0xff] %v623
      %656 = vst [vmem:[#allocation3 + $0x6e0] sm:$0xff] %v624
      %657 = vst [vmem:[#allocation3 + $0x728] sm:$0xff] %v625
      %658 = vst [vmem:[#allocation3 + $0x770] sm:$0xff] %v626
      %659 = vst [vmem:[#allocation3 + $0x7b8] sm:$0xff] %v627
      %660 = vst [vmem:[#allocation3 + $0x800] sm:$0xff] %v628
      %661 = vst [vmem:[#allocation3 + $0x848] sm:$0xff] %v629
      %662 = vst [vmem:[#allocation3 + $0x890] sm:$0xff] %v630
      %663 = vst [vmem:[#allocation3 + $0x8d8] sm:$0xff] %v631
      %v664 = vld [vmem:[%s311 + $0x2] sm:$0xff]
      %v665 = vld [vmem:[%s311 + $0xa] sm:$0xff]
      %v666 = vld [vmem:[%s311 + $0x1a] sm:$0xff]
      %v667 = vld [vmem:[%s311 + $0x22] sm:$0xff]
      %v668 = vld [vmem:[%s311 + $0x32] sm:$0xff]
      %v669 = vld [vmem:[%s311 + $0x3a] sm:$0xff]
      %v670 = vld [vmem:[%s311 + $0x4a] sm:$0xff]
      %v671 = vld [vmem:[%s311 + $0x52] sm:$0xff]
      %v672 = vld [vmem:[%s311 + $0x62] sm:$0xff]
      %v673 = vld [vmem:[%s311 + $0x6a] sm:$0xff]
      %v674 = vld [vmem:[%s311 + $0x7a] sm:$0xff]
      %v675 = vld [vmem:[%s311 + $0x82] sm:$0xff]
      %v676 = vld [vmem:[%s311 + $0x92] sm:$0xff]
      %v677 = vld [vmem:[%s311 + $0x9a] sm:$0xff]
      %v678 = vld [vmem:[%s311 + $0xaa] sm:$0xff]
      %v679 = vld [vmem:[%s311 + $0xb2] sm:$0xff]
      %v680 = vld [vmem:[%s311 + $0xc2] sm:$0xff]
      %v681 = vld [vmem:[%s311 + $0xca] sm:$0xff]
      %v682 = vld [vmem:[%s311 + $0xda] sm:$0xff]
      %v683 = vld [vmem:[%s311 + $0xe2] sm:$0xff]
      %v684 = vld [vmem:[%s311 + $0xf2] sm:$0xff]
      %v685 = vld [vmem:[%s311 + $0xfa] sm:$0xff]
      %v686 = vld [vmem:[%s311 + $0x10a] sm:$0xff]
      %v687 = vld [vmem:[%s311 + $0x112] sm:$0xff]
      %v688 = vld [vmem:[%s311 + $0x122] sm:$0xff]
      %v689 = vld [vmem:[%s311 + $0x12a] sm:$0xff]
      %v690 = vld [vmem:[%s311 + $0x13a] sm:$0xff]
      %v691 = vld [vmem:[%s311 + $0x142] sm:$0xff]
      %v692 = vld [vmem:[%s311 + $0x152] sm:$0xff]
      %v693 = vld [vmem:[%s311 + $0x15a] sm:$0xff]
      %v694 = vld [vmem:[%s311 + $0x16a] sm:$0xff]
      %v695 = vld [vmem:[%s311 + $0x172] sm:$0xff]
      %696 = vst [vmem:[#allocation3 + $0x28] sm:$0xff] %v664
      %697 = vst [vmem:[#allocation3 + $0x70] sm:$0xff] %v665
      %698 = vst [vmem:[#allocation3 + $0xb8] sm:$0xff] %v666
      %699 = vst [vmem:[#allocation3 + $0x100] sm:$0xff] %v667
      %700 = vst [vmem:[#allocation3 + $0x148] sm:$0xff] %v668
      %701 = vst [vmem:[#allocation3 + $0x190] sm:$0xff] %v669
      %702 = vst [vmem:[#allocation3 + $0x1d8] sm:$0xff] %v670
      %703 = vst [vmem:[#allocation3 + $0x220] sm:$0xff] %v671
      %704 = vst [vmem:[#allocation3 + $0x268] sm:$0xff] %v672
      %705 = vst [vmem:[#allocation3 + $0x2b0] sm:$0xff] %v673
      %706 = vst [vmem:[#allocation3 + $0x2f8] sm:$0xff] %v674
      %707 = vst [vmem:[#allocation3 + $0x340] sm:$0xff] %v675
      %708 = vst [vmem:[#allocation3 + $0x388] sm:$0xff] %v676
      %709 = vst [vmem:[#allocation3 + $0x3d0] sm:$0xff] %v677
      %710 = vst [vmem:[#allocation3 + $0x418] sm:$0xff] %v678
      %711 = vst [vmem:[#allocation3 + $0x460] sm:$0xff] %v679
      %712 = vst [vmem:[#allocation3 + $0x4a8] sm:$0xff] %v680
      %713 = vst [vmem:[#allocation3 + $0x4f0] sm:$0xff] %v681
      %714 = vst [vmem:[#allocation3 + $0x538] sm:$0xff] %v682
      %715 = vst [vmem:[#allocation3 + $0x580] sm:$0xff] %v683
      %716 = vst [vmem:[#allocation3 + $0x5c8] sm:$0xff] %v684
      %717 = vst [vmem:[#allocation3 + $0x610] sm:$0xff] %v685
      %718 = vst [vmem:[#allocation3 + $0x658] sm:$0xff] %v686
      %719 = vst [vmem:[#allocation3 + $0x6a0] sm:$0xff] %v687
      %720 = vst [vmem:[#allocation3 + $0x6e8] sm:$0xff] %v688
      %721 = vst [vmem:[#allocation3 + $0x730] sm:$0xff] %v689
      %722 = vst [vmem:[#allocation3 + $0x778] sm:$0xff] %v690
      %723 = vst [vmem:[#allocation3 + $0x7c0] sm:$0xff] %v691
      %724 = vst [vmem:[#allocation3 + $0x808] sm:$0xff] %v692
      %725 = vst [vmem:[#allocation3 + $0x850] sm:$0xff] %v693
      %726 = vst [vmem:[#allocation3 + $0x898] sm:$0xff] %v694
      %727 = vst [vmem:[#allocation3 + $0x8e0] sm:$0xff] %v695
      %s728 = scalar_lea.vmem [#allocation2], 48
      %v729 = vld [vmem:[%s728] sm:$0xff]
      %v730 = vld [vmem:[%s728 + $0x8] sm:$0xff]
      %v731 = vld [vmem:[%s728 + $0x18] sm:$0xff]
      %v732 = vld [vmem:[%s728 + $0x20] sm:$0xff]
      %v733 = vld [vmem:[%s728 + $0x30] sm:$0xff]
      %v734 = vld [vmem:[%s728 + $0x38] sm:$0xff]
      %v735 = vld [vmem:[%s728 + $0x48] sm:$0xff]
      %v736 = vld [vmem:[%s728 + $0x50] sm:$0xff]
      %v737 = vld [vmem:[%s728 + $0x60] sm:$0xff]
      %v738 = vld [vmem:[%s728 + $0x68] sm:$0xff]
      %v739 = vld [vmem:[%s728 + $0x78] sm:$0xff]
      %v740 = vld [vmem:[%s728 + $0x80] sm:$0xff]
      %v741 = vld [vmem:[%s728 + $0x90] sm:$0xff]
      %v742 = vld [vmem:[%s728 + $0x98] sm:$0xff]
      %v743 = vld [vmem:[%s728 + $0xa8] sm:$0xff]
      %v744 = vld [vmem:[%s728 + $0xb0] sm:$0xff]
      %v745 = vld [vmem:[%s728 + $0xc0] sm:$0xff]
      %v746 = vld [vmem:[%s728 + $0xc8] sm:$0xff]
      %v747 = vld [vmem:[%s728 + $0xd8] sm:$0xff]
      %v748 = vld [vmem:[%s728 + $0xe0] sm:$0xff]
      %v749 = vld [vmem:[%s728 + $0xf0] sm:$0xff]
      %v750 = vld [vmem:[%s728 + $0xf8] sm:$0xff]
      %v751 = vld [vmem:[%s728 + $0x108] sm:$0xff]
      %v752 = vld [vmem:[%s728 + $0x110] sm:$0xff]
      %v753 = vld [vmem:[%s728 + $0x120] sm:$0xff]
      %v754 = vld [vmem:[%s728 + $0x128] sm:$0xff]
      %v755 = vld [vmem:[%s728 + $0x138] sm:$0xff]
      %v756 = vld [vmem:[%s728 + $0x140] sm:$0xff]
      %v757 = vld [vmem:[%s728 + $0x150] sm:$0xff]
      %v758 = vld [vmem:[%s728 + $0x158] sm:$0xff]
      %v759 = vld [vmem:[%s728 + $0x168] sm:$0xff]
      %v760 = vld [vmem:[%s728 + $0x170] sm:$0xff]
      %761 = vst [vmem:[#allocation3 + $0x30] sm:$0xff] %v729
      %762 = vst [vmem:[#allocation3 + $0x78] sm:$0xff] %v730
      %763 = vst [vmem:[#allocation3 + $0xc0] sm:$0xff] %v731
      %764 = vst [vmem:[#allocation3 + $0x108] sm:$0xff] %v732
      %765 = vst [vmem:[#allocation3 + $0x150] sm:$0xff] %v733
      %766 = vst [vmem:[#allocation3 + $0x198] sm:$0xff] %v734
      %767 = vst [vmem:[#allocation3 + $0x1e0] sm:$0xff] %v735
      %768 = vst [vmem:[#allocation3 + $0x228] sm:$0xff] %v736
      %769 = vst [vmem:[#allocation3 + $0x270] sm:$0xff] %v737
      %770 = vst [vmem:[#allocation3 + $0x2b8] sm:$0xff] %v738
      %771 = vst [vmem:[#allocation3 + $0x300] sm:$0xff] %v739
      %772 = vst [vmem:[#allocation3 + $0x348] sm:$0xff] %v740
      %773 = vst [vmem:[#allocation3 + $0x390] sm:$0xff] %v741
      %774 = vst [vmem:[#allocation3 + $0x3d8] sm:$0xff] %v742
      %775 = vst [vmem:[#allocation3 + $0x420] sm:$0xff] %v743
      %776 = vst [vmem:[#allocation3 + $0x468] sm:$0xff] %v744
      %777 = vst [vmem:[#allocation3 + $0x4b0] sm:$0xff] %v745
      %778 = vst [vmem:[#allocation3 + $0x4f8] sm:$0xff] %v746
      %779 = vst [vmem:[#allocation3 + $0x540] sm:$0xff] %v747
      %780 = vst [vmem:[#allocation3 + $0x588] sm:$0xff] %v748
      %781 = vst [vmem:[#allocation3 + $0x5d0] sm:$0xff] %v749
      %782 = vst [vmem:[#allocation3 + $0x618] sm:$0xff] %v750
      %783 = vst [vmem:[#allocation3 + $0x660] sm:$0xff] %v751
      %784 = vst [vmem:[#allocation3 + $0x6a8] sm:$0xff] %v752
      %785 = vst [vmem:[#allocation3 + $0x6f0] sm:$0xff] %v753
      %786 = vst [vmem:[#allocation3 + $0x738] sm:$0xff] %v754
      %787 = vst [vmem:[#allocation3 + $0x780] sm:$0xff] %v755
      %788 = vst [vmem:[#allocation3 + $0x7c8] sm:$0xff] %v756
      %789 = vst [vmem:[#allocation3 + $0x810] sm:$0xff] %v757
      %790 = vst [vmem:[#allocation3 + $0x858] sm:$0xff] %v758
      %791 = vst [vmem:[#allocation3 + $0x8a0] sm:$0xff] %v759
      %792 = vst [vmem:[#allocation3 + $0x8e8] sm:$0xff] %v760
      %v793 = vld [vmem:[%s728 + $0x1] sm:$0xff]
      %v794 = vld [vmem:[%s728 + $0x9] sm:$0xff]
      %v795 = vld [vmem:[%s728 + $0x19] sm:$0xff]
      %v796 = vld [vmem:[%s728 + $0x21] sm:$0xff]
      %v797 = vld [vmem:[%s728 + $0x31] sm:$0xff]
      %v798 = vld [vmem:[%s728 + $0x39] sm:$0xff]
      %v799 = vld [vmem:[%s728 + $0x49] sm:$0xff]
      %v800 = vld [vmem:[%s728 + $0x51] sm:$0xff]
      %v801 = vld [vmem:[%s728 + $0x61] sm:$0xff]
      %v802 = vld [vmem:[%s728 + $0x69] sm:$0xff]
      %v803 = vld [vmem:[%s728 + $0x79] sm:$0xff]
      %v804 = vld [vmem:[%s728 + $0x81] sm:$0xff]
      %v805 = vld [vmem:[%s728 + $0x91] sm:$0xff]
      %v806 = vld [vmem:[%s728 + $0x99] sm:$0xff]
      %v807 = vld [vmem:[%s728 + $0xa9] sm:$0xff]
      %v808 = vld [vmem:[%s728 + $0xb1] sm:$0xff]
      %v809 = vld [vmem:[%s728 + $0xc1] sm:$0xff]
      %v810 = vld [vmem:[%s728 + $0xc9] sm:$0xff]
      %v811 = vld [vmem:[%s728 + $0xd9] sm:$0xff]
      %v812 = vld [vmem:[%s728 + $0xe1] sm:$0xff]
      %v813 = vld [vmem:[%s728 + $0xf1] sm:$0xff]
      %v814 = vld [vmem:[%s728 + $0xf9] sm:$0xff]
      %v815 = vld [vmem:[%s728 + $0x109] sm:$0xff]
      %v816 = vld [vmem:[%s728 + $0x111] sm:$0xff]
      %v817 = vld [vmem:[%s728 + $0x121] sm:$0xff]
      %v818 = vld [vmem:[%s728 + $0x129] sm:$0xff]
      %v819 = vld [vmem:[%s728 + $0x139] sm:$0xff]
      %v820 = vld [vmem:[%s728 + $0x141] sm:$0xff]
      %v821 = vld [vmem:[%s728 + $0x151] sm:$0xff]
      %v822 = vld [vmem:[%s728 + $0x159] sm:$0xff]
      %v823 = vld [vmem:[%s728 + $0x169] sm:$0xff]
      %v824 = vld [vmem:[%s728 + $0x171] sm:$0xff]
      %825 = vst [vmem:[#allocation3 + $0x38] sm:$0xff] %v793
      %826 = vst [vmem:[#allocation3 + $0x80] sm:$0xff] %v794
      %827 = vst [vmem:[#allocation3 + $0xc8] sm:$0xff] %v795
      %828 = vst [vmem:[#allocation3 + $0x110] sm:$0xff] %v796
      %829 = vst [vmem:[#allocation3 + $0x158] sm:$0xff] %v797
      %830 = vst [vmem:[#allocation3 + $0x1a0] sm:$0xff] %v798
      %831 = vst [vmem:[#allocation3 + $0x1e8] sm:$0xff] %v799
      %832 = vst [vmem:[#allocation3 + $0x230] sm:$0xff] %v800
      %833 = vst [vmem:[#allocation3 + $0x278] sm:$0xff] %v801
      %834 = vst [vmem:[#allocation3 + $0x2c0] sm:$0xff] %v802
      %835 = vst [vmem:[#allocation3 + $0x308] sm:$0xff] %v803
      %836 = vst [vmem:[#allocation3 + $0x350] sm:$0xff] %v804
      %837 = vst [vmem:[#allocation3 + $0x398] sm:$0xff] %v805
      %838 = vst [vmem:[#allocation3 + $0x3e0] sm:$0xff] %v806
      %839 = vst [vmem:[#allocation3 + $0x428] sm:$0xff] %v807
      %840 = vst [vmem:[#allocation3 + $0x470] sm:$0xff] %v808
      %841 = vst [vmem:[#allocation3 + $0x4b8] sm:$0xff] %v809
      %842 = vst [vmem:[#allocation3 + $0x500] sm:$0xff] %v810
      %843 = vst [vmem:[#allocation3 + $0x548] sm:$0xff] %v811
      %844 = vst [vmem:[#allocation3 + $0x590] sm:$0xff] %v812
      %845 = vst [vmem:[#allocation3 + $0x5d8] sm:$0xff] %v813
      %846 = vst [vmem:[#allocation3 + $0x620] sm:$0xff] %v814
      %847 = vst [vmem:[#allocation3 + $0x668] sm:$0xff] %v815
      %848 = vst [vmem:[#allocation3 + $0x6b0] sm:$0xff] %v816
      %849 = vst [vmem:[#allocation3 + $0x6f8] sm:$0xff] %v817
      %850 = vst [vmem:[#allocation3 + $0x740] sm:$0xff] %v818
      %851 = vst [vmem:[#allocation3 + $0x788] sm:$0xff] %v819
      %852 = vst [vmem:[#allocation3 + $0x7d0] sm:$0xff] %v820
      %853 = vst [vmem:[#allocation3 + $0x818] sm:$0xff] %v821
      %854 = vst [vmem:[#allocation3 + $0x860] sm:$0xff] %v822
      %855 = vst [vmem:[#allocation3 + $0x8a8] sm:$0xff] %v823
      %856 = vst [vmem:[#allocation3 + $0x8f0] sm:$0xff] %v824
      %v857 = vld [vmem:[%s728 + $0x2] sm:$0xff]
      %v858 = vld [vmem:[%s728 + $0xa] sm:$0xff]
      %v859 = vld [vmem:[%s728 + $0x1a] sm:$0xff]
      %v860 = vld [vmem:[%s728 + $0x22] sm:$0xff]
      %v861 = vld [vmem:[%s728 + $0x32] sm:$0xff]
      %v862 = vld [vmem:[%s728 + $0x3a] sm:$0xff]
      %v863 = vld [vmem:[%s728 + $0x4a] sm:$0xff]
      %v864 = vld [vmem:[%s728 + $0x52] sm:$0xff]
      %v865 = vld [vmem:[%s728 + $0x62] sm:$0xff]
      %v866 = vld [vmem:[%s728 + $0x6a] sm:$0xff]
      %v867 = vld [vmem:[%s728 + $0x7a] sm:$0xff]
      %v868 = vld [vmem:[%s728 + $0x82] sm:$0xff]
      %v869 = vld [vmem:[%s728 + $0x92] sm:$0xff]
      %v870 = vld [vmem:[%s728 + $0x9a] sm:$0xff]
      %v871 = vld [vmem:[%s728 + $0xaa] sm:$0xff]
      %v872 = vld [vmem:[%s728 + $0xb2] sm:$0xff]
      %v873 = vld [vmem:[%s728 + $0xc2] sm:$0xff]
      %v874 = vld [vmem:[%s728 + $0xca] sm:$0xff]
      %v875 = vld [vmem:[%s728 + $0xda] sm:$0xff]
      %v876 = vld [vmem:[%s728 + $0xe2] sm:$0xff]
      %v877 = vld [vmem:[%s728 + $0xf2] sm:$0xff]
      %v878 = vld [vmem:[%s728 + $0xfa] sm:$0xff]
      %v879 = vld [vmem:[%s728 + $0x10a] sm:$0xff]
      %v880 = vld [vmem:[%s728 + $0x112] sm:$0xff]
      %v881 = vld [vmem:[%s728 + $0x122] sm:$0xff]
      %v882 = vld [vmem:[%s728 + $0x12a] sm:$0xff]
      %v883 = vld [vmem:[%s728 + $0x13a] sm:$0xff]
      %v884 = vld [vmem:[%s728 + $0x142] sm:$0xff]
      %v885 = vld [vmem:[%s728 + $0x152] sm:$0xff]
      %v886 = vld [vmem:[%s728 + $0x15a] sm:$0xff]
      %v887 = vld [vmem:[%s728 + $0x16a] sm:$0xff]
      %v888 = vld [vmem:[%s728 + $0x172] sm:$0xff]
      %889 = vst [vmem:[#allocation3 + $0x40] sm:$0xff] %v857
      %890 = vst [vmem:[#allocation3 + $0x88] sm:$0xff] %v858
      %891 = vst [vmem:[#allocation3 + $0xd0] sm:$0xff] %v859
      %892 = vst [vmem:[#allocation3 + $0x118] sm:$0xff] %v860
      %893 = vst [vmem:[#allocation3 + $0x160] sm:$0xff] %v861
      %894 = vst [vmem:[#allocation3 + $0x1a8] sm:$0xff] %v862
      %895 = vst [vmem:[#allocation3 + $0x1f0] sm:$0xff] %v863
      %896 = vst [vmem:[#allocation3 + $0x238] sm:$0xff] %v864
      %897 = vst [vmem:[#allocation3 + $0x280] sm:$0xff] %v865
      %898 = vst [vmem:[#allocation3 + $0x2c8] sm:$0xff] %v866
      %899 = vst [vmem:[#allocation3 + $0x310] sm:$0xff] %v867
      %900 = vst [vmem:[#allocation3 + $0x358] sm:$0xff] %v868
      %901 = vst [vmem:[#allocation3 + $0x3a0] sm:$0xff] %v869
      %902 = vst [vmem:[#allocation3 + $0x3e8] sm:$0xff] %v870
      %903 = vst [vmem:[#allocation3 + $0x430] sm:$0xff] %v871
      %904 = vst [vmem:[#allocation3 + $0x478] sm:$0xff] %v872
      %905 = vst [vmem:[#allocation3 + $0x4c0] sm:$0xff] %v873
      %906 = vst [vmem:[#allocation3 + $0x508] sm:$0xff] %v874
      %907 = vst [vmem:[#allocation3 + $0x550] sm:$0xff] %v875
      %908 = vst [vmem:[#allocation3 + $0x598] sm:$0xff] %v876
      %909 = vst [vmem:[#allocation3 + $0x5e0] sm:$0xff] %v877
      %910 = vst [vmem:[#allocation3 + $0x628] sm:$0xff] %v878
      %911 = vst [vmem:[#allocation3 + $0x670] sm:$0xff] %v879
      %912 = vst [vmem:[#allocation3 + $0x6b8] sm:$0xff] %v880
      %913 = vst [vmem:[#allocation3 + $0x700] sm:$0xff] %v881
      %914 = vst [vmem:[#allocation3 + $0x748] sm:$0xff] %v882
      %915 = vst [vmem:[#allocation3 + $0x790] sm:$0xff] %v883
      %916 = vst [vmem:[#allocation3 + $0x7d8] sm:$0xff] %v884
      %917 = vst [vmem:[#allocation3 + $0x820] sm:$0xff] %v885
      %918 = vst [vmem:[#allocation3 + $0x868] sm:$0xff] %v886
      %919 = vst [vmem:[#allocation3 + $0x8b0] sm:$0xff] %v887
      %920 = vst [vmem:[#allocation3 + $0x8f8] sm:$0xff] %v888
      %v921 = vld [vmem:[#allocation3] sm:$0xff]
      %v922 = vld [vmem:[#allocation3 + $0x8] sm:$0xff]
      %v923 = vld [vmem:[#allocation3 + $0x10] sm:$0xff]
      %v924 = vld [vmem:[#allocation3 + $0x18] sm:$0xff]
      %v925 = vld [vmem:[#allocation3 + $0x20] sm:$0xff]
      %v926 = vld [vmem:[#allocation3 + $0x28] sm:$0xff]
      %v927 = vld [vmem:[#allocation3 + $0x30] sm:$0xff]
      %v928 = vld [vmem:[#allocation3 + $0x38] sm:$0xff]
      %v929 = vld [vmem:[#allocation3 + $0x40] sm:$0xff]
      %v930 = vld [vmem:[#allocation3 + $0x48] sm:$0xff]
      %v931 = vld [vmem:[#allocation3 + $0x50] sm:$0xff]
      %v932 = vld [vmem:[#allocation3 + $0x58] sm:$0xff]
      %v933 = vld [vmem:[#allocation3 + $0x60] sm:$0xff]
      %v934 = vld [vmem:[#allocation3 + $0x68] sm:$0xff]
      %v935 = vld [vmem:[#allocation3 + $0x70] sm:$0xff]
      %v936 = vld [vmem:[#allocation3 + $0x78] sm:$0xff]
      %v937 = vld [vmem:[#allocation3 + $0x80] sm:$0xff]
      %v938 = vld [vmem:[#allocation3 + $0x88] sm:$0xff]
      %v939 = vld [vmem:[#allocation3 + $0x90] sm:$0xff]
      %v940 = vld [vmem:[#allocation3 + $0x98] sm:$0xff]
      %v941 = vld [vmem:[#allocation3 + $0xa0] sm:$0xff]
      %v942 = vld [vmem:[#allocation3 + $0xa8] sm:$0xff]
      %v943 = vld [vmem:[#allocation3 + $0xb0] sm:$0xff]
      %v944 = vld [vmem:[#allocation3 + $0xb8] sm:$0xff]
      %v945 = vld [vmem:[#allocation3 + $0xc0] sm:$0xff]
      %v946 = vld [vmem:[#allocation3 + $0xc8] sm:$0xff]
      %v947 = vld [vmem:[#allocation3 + $0xd0] sm:$0xff]
      %v948 = vld [vmem:[#allocation3 + $0xd8] sm:$0xff]
      %v949 = vld [vmem:[#allocation3 + $0xe0] sm:$0xff]
      %v950 = vld [vmem:[#allocation3 + $0xe8] sm:$0xff]
      %v951 = vld [vmem:[#allocation3 + $0xf0] sm:$0xff]
      %v952 = vld [vmem:[#allocation3 + $0xf8] sm:$0xff]
      %v953 = vld [vmem:[#allocation3 + $0x100] sm:$0xff]
      %v954 = vld [vmem:[#allocation3 + $0x108] sm:$0xff]
      %v955 = vld [vmem:[#allocation3 + $0x110] sm:$0xff]
      %v956 = vld [vmem:[#allocation3 + $0x118] sm:$0xff]
      %v957 = vld [vmem:[#allocation3 + $0x120] sm:$0xff]
      %v958 = vld [vmem:[#allocation3 + $0x128] sm:$0xff]
      %v959 = vld [vmem:[#allocation3 + $0x130] sm:$0xff]
      %v960 = vld [vmem:[#allocation3 + $0x138] sm:$0xff]
      %v961 = vld [vmem:[#allocation3 + $0x140] sm:$0xff]
      %v962 = vld [vmem:[#allocation3 + $0x148] sm:$0xff]
      %v963 = vld [vmem:[#allocation3 + $0x150] sm:$0xff]
      %v964 = vld [vmem:[#allocation3 + $0x158] sm:$0xff]
      %v965 = vld [vmem:[#allocation3 + $0x160] sm:$0xff]
      %v966 = vld [vmem:[#allocation3 + $0x168] sm:$0xff]
      %v967 = vld [vmem:[#allocation3 + $0x170] sm:$0xff]
      %v968 = vld [vmem:[#allocation3 + $0x178] sm:$0xff]
      %v969 = vld [vmem:[#allocation3 + $0x180] sm:$0xff]
      %v970 = vld [vmem:[#allocation3 + $0x188] sm:$0xff]
      %v971 = vld [vmem:[#allocation3 + $0x190] sm:$0xff]
      %v972 = vld [vmem:[#allocation3 + $0x198] sm:$0xff]
      %v973 = vld [vmem:[#allocation3 + $0x1a0] sm:$0xff]
      %v974 = vld [vmem:[#allocation3 + $0x1a8] sm:$0xff]
      %v975 = vld [vmem:[#allocation3 + $0x1b0] sm:$0xff]
      %v976 = vld [vmem:[#allocation3 + $0x1b8] sm:$0xff]
      %v977 = vld [vmem:[#allocation3 + $0x1c0] sm:$0xff]
      %v978 = vld [vmem:[#allocation3 + $0x1c8] sm:$0xff]
      %v979 = vld [vmem:[#allocation3 + $0x1d0] sm:$0xff]
      %v980 = vld [vmem:[#allocation3 + $0x1d8] sm:$0xff]
      %v981 = vld [vmem:[#allocation3 + $0x1e0] sm:$0xff]
      %v982 = vld [vmem:[#allocation3 + $0x1e8] sm:$0xff]
      %v983 = vld [vmem:[#allocation3 + $0x1f0] sm:$0xff]
      %v984 = vld [vmem:[#allocation3 + $0x1f8] sm:$0xff]
      %v985 = vld [vmem:[#allocation3 + $0x200] sm:$0xff]
      %v986 = vld [vmem:[#allocation3 + $0x208] sm:$0xff]
      %v987 = vld [vmem:[#allocation3 + $0x210] sm:$0xff]
      %v988 = vld [vmem:[#allocation3 + $0x218] sm:$0xff]
      %v989 = vld [vmem:[#allocation3 + $0x220] sm:$0xff]
      %v990 = vld [vmem:[#allocation3 + $0x228] sm:$0xff]
      %v991 = vld [vmem:[#allocation3 + $0x230] sm:$0xff]
      %v992 = vld [vmem:[#allocation3 + $0x238] sm:$0xff]
      %v993 = vld [vmem:[#allocation3 + $0x240] sm:$0xff]
      %v994 = vld [vmem:[#allocation3 + $0x248] sm:$0xff]
      %v995 = vld [vmem:[#allocation3 + $0x250] sm:$0xff]
      %v996 = vld [vmem:[#allocation3 + $0x258] sm:$0xff]
      %v997 = vld [vmem:[#allocation3 + $0x260] sm:$0xff]
      %v998 = vld [vmem:[#allocation3 + $0x268] sm:$0xff]
      %v999 = vld [vmem:[#allocation3 + $0x270] sm:$0xff]
      %v1000 = vld [vmem:[#allocation3 + $0x278] sm:$0xff]
      %v1001 = vld [vmem:[#allocation3 + $0x280] sm:$0xff]
      %v1002 = vld [vmem:[#allocation3 + $0x288] sm:$0xff]
      %v1003 = vld [vmem:[#allocation3 + $0x290] sm:$0xff]
      %v1004 = vld [vmem:[#allocation3 + $0x298] sm:$0xff]
      %v1005 = vld [vmem:[#allocation3 + $0x2a0] sm:$0xff]
      %v1006 = vld [vmem:[#allocation3 + $0x2a8] sm:$0xff]
      %v1007 = vld [vmem:[#allocation3 + $0x2b0] sm:$0xff]
      %v1008 = vld [vmem:[#allocation3 + $0x2b8] sm:$0xff]
      %v1009 = vld [vmem:[#allocation3 + $0x2c0] sm:$0xff]
      %v1010 = vld [vmem:[#allocation3 + $0x2c8] sm:$0xff]
      %v1011 = vld [vmem:[#allocation3 + $0x2d0] sm:$0xff]
      %v1012 = vld [vmem:[#allocation3 + $0x2d8] sm:$0xff]
      %v1013 = vld [vmem:[#allocation3 + $0x2e0] sm:$0xff]
      %v1014 = vld [vmem:[#allocation3 + $0x2e8] sm:$0xff]
      %v1015 = vld [vmem:[#allocation3 + $0x2f0] sm:$0xff]
      %v1016 = vld [vmem:[#allocation3 + $0x2f8] sm:$0xff]
      %v1017 = vld [vmem:[#allocation3 + $0x300] sm:$0xff]
      %v1018 = vld [vmem:[#allocation3 + $0x308] sm:$0xff]
      %v1019 = vld [vmem:[#allocation3 + $0x310] sm:$0xff]
      %v1020 = vld [vmem:[#allocation3 + $0x318] sm:$0xff]
      %v1021 = vld [vmem:[#allocation3 + $0x320] sm:$0xff]
      %v1022 = vld [vmem:[#allocation3 + $0x328] sm:$0xff]
      %v1023 = vld [vmem:[#allocation3 + $0x330] sm:$0xff]
      %v1024 = vld [vmem:[#allocation3 + $0x338] sm:$0xff]
      %v1025 = vld [vmem:[#allocation3 + $0x340] sm:$0xff]
      %v1026 = vld [vmem:[#allocation3 + $0x348] sm:$0xff]
      %v1027 = vld [vmem:[#allocation3 + $0x350] sm:$0xff]
      %v1028 = vld [vmem:[#allocation3 + $0x358] sm:$0xff]
      %v1029 = vld [vmem:[#allocation3 + $0x360] sm:$0xff]
      %v1030 = vld [vmem:[#allocation3 + $0x368] sm:$0xff]
      %v1031 = vld [vmem:[#allocation3 + $0x370] sm:$0xff]
      %v1032 = vld [vmem:[#allocation3 + $0x378] sm:$0xff]
      %v1033 = vld [vmem:[#allocation3 + $0x380] sm:$0xff]
      %v1034 = vld [vmem:[#allocation3 + $0x388] sm:$0xff]
      %v1035 = vld [vmem:[#allocation3 + $0x390] sm:$0xff]
      %v1036 = vld [vmem:[#allocation3 + $0x398] sm:$0xff]
      %v1037 = vld [vmem:[#allocation3 + $0x3a0] sm:$0xff]
      %v1038 = vld [vmem:[#allocation3 + $0x3a8] sm:$0xff]
      %v1039 = vld [vmem:[#allocation3 + $0x3b0] sm:$0xff]
      %v1040 = vld [vmem:[#allocation3 + $0x3b8] sm:$0xff]
      %v1041 = vld [vmem:[#allocation3 + $0x3c0] sm:$0xff]
      %v1042 = vld [vmem:[#allocation3 + $0x3c8] sm:$0xff]
      %v1043 = vld [vmem:[#allocation3 + $0x3d0] sm:$0xff]
      %v1044 = vld [vmem:[#allocation3 + $0x3d8] sm:$0xff]
      %v1045 = vld [vmem:[#allocation3 + $0x3e0] sm:$0xff]
      %v1046 = vld [vmem:[#allocation3 + $0x3e8] sm:$0xff]
      %v1047 = vld [vmem:[#allocation3 + $0x3f0] sm:$0xff]
      %v1048 = vld [vmem:[#allocation3 + $0x3f8] sm:$0xff]
      %v1049 = vld [vmem:[#allocation3 + $0x400] sm:$0xff]
      %v1050 = vld [vmem:[#allocation3 + $0x408] sm:$0xff]
      %v1051 = vld [vmem:[#allocation3 + $0x410] sm:$0xff]
      %v1052 = vld [vmem:[#allocation3 + $0x418] sm:$0xff]
      %v1053 = vld [vmem:[#allocation3 + $0x420] sm:$0xff]
      %v1054 = vld [vmem:[#allocation3 + $0x428] sm:$0xff]
      %v1055 = vld [vmem:[#allocation3 + $0x430] sm:$0xff]
      %v1056 = vld [vmem:[#allocation3 + $0x438] sm:$0xff]
      %v1057 = vld [vmem:[#allocation3 + $0x440] sm:$0xff]
      %v1058 = vld [vmem:[#allocation3 + $0x448] sm:$0xff]
      %v1059 = vld [vmem:[#allocation3 + $0x450] sm:$0xff]
      %v1060 = vld [vmem:[#allocation3 + $0x458] sm:$0xff]
      %v1061 = vld [vmem:[#allocation3 + $0x460] sm:$0xff]
      %v1062 = vld [vmem:[#allocation3 + $0x468] sm:$0xff]
      %v1063 = vld [vmem:[#allocation3 + $0x470] sm:$0xff]
      %v1064 = vld [vmem:[#allocation3 + $0x478] sm:$0xff]
      %v1065 = vld [vmem:[#allocation3 + $0x480] sm:$0xff]
      %v1066 = vld [vmem:[#allocation3 + $0x488] sm:$0xff]
      %v1067 = vld [vmem:[#allocation3 + $0x490] sm:$0xff]
      %v1068 = vld [vmem:[#allocation3 + $0x498] sm:$0xff]
      %v1069 = vld [vmem:[#allocation3 + $0x4a0] sm:$0xff]
      %v1070 = vld [vmem:[#allocation3 + $0x4a8] sm:$0xff]
      %v1071 = vld [vmem:[#allocation3 + $0x4b0] sm:$0xff]
      %v1072 = vld [vmem:[#allocation3 + $0x4b8] sm:$0xff]
      %v1073 = vld [vmem:[#allocation3 + $0x4c0] sm:$0xff]
      %v1074 = vld [vmem:[#allocation3 + $0x4c8] sm:$0xff]
      %v1075 = vld [vmem:[#allocation3 + $0x4d0] sm:$0xff]
      %v1076 = vld [vmem:[#allocation3 + $0x4d8] sm:$0xff]
      %v1077 = vld [vmem:[#allocation3 + $0x4e0] sm:$0xff]
      %v1078 = vld [vmem:[#allocation3 + $0x4e8] sm:$0xff]
      %v1079 = vld [vmem:[#allocation3 + $0x4f0] sm:$0xff]
      %v1080 = vld [vmem:[#allocation3 + $0x4f8] sm:$0xff]
      %v1081 = vld [vmem:[#allocation3 + $0x500] sm:$0xff]
      %v1082 = vld [vmem:[#allocation3 + $0x508] sm:$0xff]
      %v1083 = vld [vmem:[#allocation3 + $0x510] sm:$0xff]
      %v1084 = vld [vmem:[#allocation3 + $0x518] sm:$0xff]
      %v1085 = vld [vmem:[#allocation3 + $0x520] sm:$0xff]
      %v1086 = vld [vmem:[#allocation3 + $0x528] sm:$0xff]
      %v1087 = vld [vmem:[#allocation3 + $0x530] sm:$0xff]
      %v1088 = vld [vmem:[#allocation3 + $0x538] sm:$0xff]
      %v1089 = vld [vmem:[#allocation3 + $0x540] sm:$0xff]
      %v1090 = vld [vmem:[#allocation3 + $0x548] sm:$0xff]
      %v1091 = vld [vmem:[#allocation3 + $0x550] sm:$0xff]
      %v1092 = vld [vmem:[#allocation3 + $0x558] sm:$0xff]
      %v1093 = vld [vmem:[#allocation3 + $0x560] sm:$0xff]
      %v1094 = vld [vmem:[#allocation3 + $0x568] sm:$0xff]
      %v1095 = vld [vmem:[#allocation3 + $0x570] sm:$0xff]
      %v1096 = vld [vmem:[#allocation3 + $0x578] sm:$0xff]
      %v1097 = vld [vmem:[#allocation3 + $0x580] sm:$0xff]
      %v1098 = vld [vmem:[#allocation3 + $0x588] sm:$0xff]
      %v1099 = vld [vmem:[#allocation3 + $0x590] sm:$0xff]
      %v1100 = vld [vmem:[#allocation3 + $0x598] sm:$0xff]
      %v1101 = vld [vmem:[#allocation3 + $0x5a0] sm:$0xff]
      %v1102 = vld [vmem:[#allocation3 + $0x5a8] sm:$0xff]
      %v1103 = vld [vmem:[#allocation3 + $0x5b0] sm:$0xff]
      %v1104 = vld [vmem:[#allocation3 + $0x5b8] sm:$0xff]
      %v1105 = vld [vmem:[#allocation3 + $0x5c0] sm:$0xff]
      %v1106 = vld [vmem:[#allocation3 + $0x5c8] sm:$0xff]
      %v1107 = vld [vmem:[#allocation3 + $0x5d0] sm:$0xff]
      %v1108 = vld [vmem:[#allocation3 + $0x5d8] sm:$0xff]
      %v1109 = vld [vmem:[#allocation3 + $0x5e0] sm:$0xff]
      %v1110 = vld [vmem:[#allocation3 + $0x5e8] sm:$0xff]
      %v1111 = vld [vmem:[#allocation3 + $0x5f0] sm:$0xff]
      %v1112 = vld [vmem:[#allocation3 + $0x5f8] sm:$0xff]
      %v1113 = vld [vmem:[#allocation3 + $0x600] sm:$0xff]
      %v1114 = vld [vmem:[#allocation3 + $0x608] sm:$0xff]
      %v1115 = vld [vmem:[#allocation3 + $0x610] sm:$0xff]
      %v1116 = vld [vmem:[#allocation3 + $0x618] sm:$0xff]
      %v1117 = vld [vmem:[#allocation3 + $0x620] sm:$0xff]
      %v1118 = vld [vmem:[#allocation3 + $0x628] sm:$0xff]
      %v1119 = vld [vmem:[#allocation3 + $0x630] sm:$0xff]
      %v1120 = vld [vmem:[#allocation3 + $0x638] sm:$0xff]
      %v1121 = vld [vmem:[#allocation3 + $0x640] sm:$0xff]
      %v1122 = vld [vmem:[#allocation3 + $0x648] sm:$0xff]
      %v1123 = vld [vmem:[#allocation3 + $0x650] sm:$0xff]
      %v1124 = vld [vmem:[#allocation3 + $0x658] sm:$0xff]
      %v1125 = vld [vmem:[#allocation3 + $0x660] sm:$0xff]
      %v1126 = vld [vmem:[#allocation3 + $0x668] sm:$0xff]
      %v1127 = vld [vmem:[#allocation3 + $0x670] sm:$0xff]
      %v1128 = vld [vmem:[#allocation3 + $0x678] sm:$0xff]
      %v1129 = vld [vmem:[#allocation3 + $0x680] sm:$0xff]
      %v1130 = vld [vmem:[#allocation3 + $0x688] sm:$0xff]
      %v1131 = vld [vmem:[#allocation3 + $0x690] sm:$0xff]
      %v1132 = vld [vmem:[#allocation3 + $0x698] sm:$0xff]
      %v1133 = vld [vmem:[#allocation3 + $0x6a0] sm:$0xff]
      %v1134 = vld [vmem:[#allocation3 + $0x6a8] sm:$0xff]
      %v1135 = vld [vmem:[#allocation3 + $0x6b0] sm:$0xff]
      %v1136 = vld [vmem:[#allocation3 + $0x6b8] sm:$0xff]
      %v1137 = vld [vmem:[#allocation3 + $0x6c0] sm:$0xff]
      %v1138 = vld [vmem:[#allocation3 + $0x6c8] sm:$0xff]
      %v1139 = vld [vmem:[#allocation3 + $0x6d0] sm:$0xff]
      %v1140 = vld [vmem:[#allocation3 + $0x6d8] sm:$0xff]
      %v1141 = vld [vmem:[#allocation3 + $0x6e0] sm:$0xff]
      %v1142 = vld [vmem:[#allocation3 + $0x6e8] sm:$0xff]
      %v1143 = vld [vmem:[#allocation3 + $0x6f0] sm:$0xff]
      %v1144 = vld [vmem:[#allocation3 + $0x6f8] sm:$0xff]
      %v1145 = vld [vmem:[#allocation3 + $0x700] sm:$0xff]
      %v1146 = vld [vmem:[#allocation3 + $0x708] sm:$0xff]
      %v1147 = vld [vmem:[#allocation3 + $0x710] sm:$0xff]
      %v1148 = vld [vmem:[#allocation3 + $0x718] sm:$0xff]
      %v1149 = vld [vmem:[#allocation3 + $0x720] sm:$0xff]
      %v1150 = vld [vmem:[#allocation3 + $0x728] sm:$0xff]
      %v1151 = vld [vmem:[#allocation3 + $0x730] sm:$0xff]
      %v1152 = vld [vmem:[#allocation3 + $0x738] sm:$0xff]
      %v1153 = vld [vmem:[#allocation3 + $0x740] sm:$0xff]
      %v1154 = vld [vmem:[#allocation3 + $0x748] sm:$0xff]
      %v1155 = vld [vmem:[#allocation3 + $0x750] sm:$0xff]
      %v1156 = vld [vmem:[#allocation3 + $0x758] sm:$0xff]
      %v1157 = vld [vmem:[#allocation3 + $0x760] sm:$0xff]
      %v1158 = vld [vmem:[#allocation3 + $0x768] sm:$0xff]
      %v1159 = vld [vmem:[#allocation3 + $0x770] sm:$0xff]
      %v1160 = vld [vmem:[#allocation3 + $0x778] sm:$0xff]
      %v1161 = vld [vmem:[#allocation3 + $0x780] sm:$0xff]
      %v1162 = vld [vmem:[#allocation3 + $0x788] sm:$0xff]
      %v1163 = vld [vmem:[#allocation3 + $0x790] sm:$0xff]
      %v1164 = vld [vmem:[#allocation3 + $0x798] sm:$0xff]
      %v1165 = vld [vmem:[#allocation3 + $0x7a0] sm:$0xff]
      %v1166 = vld [vmem:[#allocation3 + $0x7a8] sm:$0xff]
      %v1167 = vld [vmem:[#allocation3 + $0x7b0] sm:$0xff]
      %v1168 = vld [vmem:[#allocation3 + $0x7b8] sm:$0xff]
      %v1169 = vld [vmem:[#allocation3 + $0x7c0] sm:$0xff]
      %v1170 = vld [vmem:[#allocation3 + $0x7c8] sm:$0xff]
      %v1171 = vld [vmem:[#allocation3 + $0x7d0] sm:$0xff]
      %v1172 = vld [vmem:[#allocation3 + $0x7d8] sm:$0xff]
      %v1173 = vld [vmem:[#allocation3 + $0x7e0] sm:$0xff]
      %v1174 = vld [vmem:[#allocation3 + $0x7e8] sm:$0xff]
      %v1175 = vld [vmem:[#allocation3 + $0x7f0] sm:$0xff]
      %v1176 = vld [vmem:[#allocation3 + $0x7f8] sm:$0xff]
      %v1177 = vld [vmem:[#allocation3 + $0x800] sm:$0xff]
      %v1178 = vld [vmem:[#allocation3 + $0x808] sm:$0xff]
      %v1179 = vld [vmem:[#allocation3 + $0x810] sm:$0xff]
      %v1180 = vld [vmem:[#allocation3 + $0x818] sm:$0xff]
      %v1181 = vld [vmem:[#allocation3 + $0x820] sm:$0xff]
      %v1182 = vld [vmem:[#allocation3 + $0x828] sm:$0xff]
      %v1183 = vld [vmem:[#allocation3 + $0x830] sm:$0xff]
      %v1184 = vld [vmem:[#allocation3 + $0x838] sm:$0xff]
      %v1185 = vld [vmem:[#allocation3 + $0x840] sm:$0xff]
      %v1186 = vld [vmem:[#allocation3 + $0x848] sm:$0xff]
      %v1187 = vld [vmem:[#allocation3 + $0x850] sm:$0xff]
      %v1188 = vld [vmem:[#allocation3 + $0x858] sm:$0xff]
      %v1189 = vld [vmem:[#allocation3 + $0x860] sm:$0xff]
      %v1190 = vld [vmem:[#allocation3 + $0x868] sm:$0xff]
      %v1191 = vld [vmem:[#allocation3 + $0x870] sm:$0xff]
      %v1192 = vld [vmem:[#allocation3 + $0x878] sm:$0xff]
      %v1193 = vld [vmem:[#allocation3 + $0x880] sm:$0xff]
      %v1194 = vld [vmem:[#allocation3 + $0x888] sm:$0xff]
      %v1195 = vld [vmem:[#allocation3 + $0x890] sm:$0xff]
      %v1196 = vld [vmem:[#allocation3 + $0x898] sm:$0xff]
      %v1197 = vld [vmem:[#allocation3 + $0x8a0] sm:$0xff]
      %v1198 = vld [vmem:[#allocation3 + $0x8a8] sm:$0xff]
      %v1199 = vld [vmem:[#allocation3 + $0x8b0] sm:$0xff]
      %v1200 = vld [vmem:[#allocation3 + $0x8b8] sm:$0xff]
      %v1201 = vld [vmem:[#allocation3 + $0x8c0] sm:$0xff]
      %v1202 = vld [vmem:[#allocation3 + $0x8c8] sm:$0xff]
      %v1203 = vld [vmem:[#allocation3 + $0x8d0] sm:$0xff]
      %v1204 = vld [vmem:[#allocation3 + $0x8d8] sm:$0xff]
      %v1205 = vld [vmem:[#allocation3 + $0x8e0] sm:$0xff]
      %v1206 = vld [vmem:[#allocation3 + $0x8e8] sm:$0xff]
      %v1207 = vld [vmem:[#allocation3 + $0x8f0] sm:$0xff]
      %v1208 = vld [vmem:[#allocation3 + $0x8f8] sm:$0xff]
      %v1209 = vld [vmem:[%s1] sm:$0xff]
      %v1210 = vld [vmem:[%s1 + $0x8] sm:$0xff]
      %v1211 = vld [vmem:[%s1 + $0x10] sm:$0xff]
      %v1212 = vld [vmem:[%s1 + $0x18] sm:$0xff]
      %v1213 = vld [vmem:[%s1 + $0x20] sm:$0xff]
      %v1214 = vld [vmem:[%s1 + $0x28] sm:$0xff]
      %v1215 = vld [vmem:[%s1 + $0x30] sm:$0xff]
      %v1216 = vld [vmem:[%s1 + $0x38] sm:$0xff]
      %v1217 = vld [vmem:[%s1 + $0x40] sm:$0xff]
      %v1218 = vld [vmem:[%s1 + $0x48] sm:$0xff]
      %v1219 = vld [vmem:[%s1 + $0x50] sm:$0xff]
      %v1220 = vld [vmem:[%s1 + $0x58] sm:$0xff]
      %v1221 = vld [vmem:[%s1 + $0x60] sm:$0xff]
      %v1222 = vld [vmem:[%s1 + $0x68] sm:$0xff]
      %v1223 = vld [vmem:[%s1 + $0x70] sm:$0xff]
      %v1224 = vld [vmem:[%s1 + $0x78] sm:$0xff]
      %v1225 = vld [vmem:[%s1 + $0x80] sm:$0xff]
      %v1226 = vld [vmem:[%s1 + $0x88] sm:$0xff]
      %v1227 = vld [vmem:[%s1 + $0x90] sm:$0xff]
      %v1228 = vld [vmem:[%s1 + $0x98] sm:$0xff]
      %v1229 = vld [vmem:[%s1 + $0xa0] sm:$0xff]
      %v1230 = vld [vmem:[%s1 + $0xa8] sm:$0xff]
      %v1231 = vld [vmem:[%s1 + $0xb0] sm:$0xff]
      %v1232 = vld [vmem:[%s1 + $0xb8] sm:$0xff]
      %v1233 = vld [vmem:[%s1 + $0xc0] sm:$0xff]
      %v1234 = vld [vmem:[%s1 + $0xc8] sm:$0xff]
      %v1235 = vld [vmem:[%s1 + $0xd0] sm:$0xff]
      %v1236 = vld [vmem:[%s1 + $0xd8] sm:$0xff]
      %v1237 = vld [vmem:[%s1 + $0xe0] sm:$0xff]
      %v1238 = vld [vmem:[%s1 + $0xe8] sm:$0xff]
      %v1239 = vld [vmem:[%s1 + $0xf0] sm:$0xff]
      %v1240 = vld [vmem:[%s1 + $0xf8] sm:$0xff]
      %v1241 = vld [vmem:[%s1 + $0x100] sm:$0xff]
      %v1242 = vld [vmem:[%s1 + $0x108] sm:$0xff]
      %v1243 = vld [vmem:[%s1 + $0x110] sm:$0xff]
      %v1244 = vld [vmem:[%s1 + $0x118] sm:$0xff]
      %v1245 = vld [vmem:[%s1 + $0x120] sm:$0xff]
      %v1246 = vld [vmem:[%s1 + $0x128] sm:$0xff]
      %v1247 = vld [vmem:[%s1 + $0x130] sm:$0xff]
      %v1248 = vld [vmem:[%s1 + $0x138] sm:$0xff]
      %v1249 = vld [vmem:[%s1 + $0x140] sm:$0xff]
      %v1250 = vld [vmem:[%s1 + $0x148] sm:$0xff]
      %v1251 = vld [vmem:[%s1 + $0x150] sm:$0xff]
      %v1252 = vld [vmem:[%s1 + $0x158] sm:$0xff]
      %v1253 = vld [vmem:[%s1 + $0x160] sm:$0xff]
      %v1254 = vld [vmem:[%s1 + $0x168] sm:$0xff]
      %v1255 = vld [vmem:[%s1 + $0x170] sm:$0xff]
      %v1256 = vld [vmem:[%s1 + $0x178] sm:$0xff]
      %v1257 = vld [vmem:[%s1 + $0x180] sm:$0xff]
      %v1258 = vld [vmem:[%s1 + $0x188] sm:$0xff]
      %v1259 = vld [vmem:[%s1 + $0x190] sm:$0xff]
      %v1260 = vld [vmem:[%s1 + $0x198] sm:$0xff]
      %v1261 = vld [vmem:[%s1 + $0x1a0] sm:$0xff]
      %v1262 = vld [vmem:[%s1 + $0x1a8] sm:$0xff]
      %v1263 = vld [vmem:[%s1 + $0x1b0] sm:$0xff]
      %v1264 = vld [vmem:[%s1 + $0x1b8] sm:$0xff]
      %v1265 = vld [vmem:[%s1 + $0x1c0] sm:$0xff]
      %v1266 = vld [vmem:[%s1 + $0x1c8] sm:$0xff]
      %v1267 = vld [vmem:[%s1 + $0x1d0] sm:$0xff]
      %v1268 = vld [vmem:[%s1 + $0x1d8] sm:$0xff]
      %v1269 = vld [vmem:[%s1 + $0x1e0] sm:$0xff]
      %v1270 = vld [vmem:[%s1 + $0x1e8] sm:$0xff]
      %v1271 = vld [vmem:[%s1 + $0x1f0] sm:$0xff]
      %v1272 = vld [vmem:[%s1 + $0x1f8] sm:$0xff]
      %v1273 = vld [vmem:[%s1 + $0x200] sm:$0xff]
      %v1274 = vld [vmem:[%s1 + $0x208] sm:$0xff]
      %v1275 = vld [vmem:[%s1 + $0x210] sm:$0xff]
      %v1276 = vld [vmem:[%s1 + $0x218] sm:$0xff]
      %v1277 = vld [vmem:[%s1 + $0x220] sm:$0xff]
      %v1278 = vld [vmem:[%s1 + $0x228] sm:$0xff]
      %v1279 = vld [vmem:[%s1 + $0x230] sm:$0xff]
      %v1280 = vld [vmem:[%s1 + $0x238] sm:$0xff]
      %v1281 = vld [vmem:[%s1 + $0x240] sm:$0xff]
      %v1282 = vld [vmem:[%s1 + $0x248] sm:$0xff]
      %v1283 = vld [vmem:[%s1 + $0x250] sm:$0xff]
      %v1284 = vld [vmem:[%s1 + $0x258] sm:$0xff]
      %v1285 = vld [vmem:[%s1 + $0x260] sm:$0xff]
      %v1286 = vld [vmem:[%s1 + $0x268] sm:$0xff]
      %v1287 = vld [vmem:[%s1 + $0x270] sm:$0xff]
      %v1288 = vld [vmem:[%s1 + $0x278] sm:$0xff]
      %v1289 = vld [vmem:[%s1 + $0x280] sm:$0xff]
      %v1290 = vld [vmem:[%s1 + $0x288] sm:$0xff]
      %v1291 = vld [vmem:[%s1 + $0x290] sm:$0xff]
      %v1292 = vld [vmem:[%s1 + $0x298] sm:$0xff]
      %v1293 = vld [vmem:[%s1 + $0x2a0] sm:$0xff]
      %v1294 = vld [vmem:[%s1 + $0x2a8] sm:$0xff]
      %v1295 = vld [vmem:[%s1 + $0x2b0] sm:$0xff]
      %v1296 = vld [vmem:[%s1 + $0x2b8] sm:$0xff]
      %v1297 = vld [vmem:[%s1 + $0x2c0] sm:$0xff]
      %v1298 = vld [vmem:[%s1 + $0x2c8] sm:$0xff]
      %v1299 = vld [vmem:[%s1 + $0x2d0] sm:$0xff]
      %v1300 = vld [vmem:[%s1 + $0x2d8] sm:$0xff]
      %v1301 = vld [vmem:[%s1 + $0x2e0] sm:$0xff]
      %v1302 = vld [vmem:[%s1 + $0x2e8] sm:$0xff]
      %v1303 = vld [vmem:[%s1 + $0x2f0] sm:$0xff]
      %v1304 = vld [vmem:[%s1 + $0x2f8] sm:$0xff]
      %v1305 = vld [vmem:[%s1 + $0x300] sm:$0xff]
      %v1306 = vld [vmem:[%s1 + $0x308] sm:$0xff]
      %v1307 = vld [vmem:[%s1 + $0x310] sm:$0xff]
      %v1308 = vld [vmem:[%s1 + $0x318] sm:$0xff]
      %v1309 = vld [vmem:[%s1 + $0x320] sm:$0xff]
      %v1310 = vld [vmem:[%s1 + $0x328] sm:$0xff]
      %v1311 = vld [vmem:[%s1 + $0x330] sm:$0xff]
      %v1312 = vld [vmem:[%s1 + $0x338] sm:$0xff]
      %v1313 = vld [vmem:[%s1 + $0x340] sm:$0xff]
      %v1314 = vld [vmem:[%s1 + $0x348] sm:$0xff]
      %v1315 = vld [vmem:[%s1 + $0x350] sm:$0xff]
      %v1316 = vld [vmem:[%s1 + $0x358] sm:$0xff]
      %v1317 = vld [vmem:[%s1 + $0x360] sm:$0xff]
      %v1318 = vld [vmem:[%s1 + $0x368] sm:$0xff]
      %v1319 = vld [vmem:[%s1 + $0x370] sm:$0xff]
      %v1320 = vld [vmem:[%s1 + $0x378] sm:$0xff]
      %v1321 = vld [vmem:[%s1 + $0x380] sm:$0xff]
      %v1322 = vld [vmem:[%s1 + $0x388] sm:$0xff]
      %v1323 = vld [vmem:[%s1 + $0x390] sm:$0xff]
      %v1324 = vld [vmem:[%s1 + $0x398] sm:$0xff]
      %v1325 = vld [vmem:[%s1 + $0x3a0] sm:$0xff]
      %v1326 = vld [vmem:[%s1 + $0x3a8] sm:$0xff]
      %v1327 = vld [vmem:[%s1 + $0x3b0] sm:$0xff]
      %v1328 = vld [vmem:[%s1 + $0x3b8] sm:$0xff]
      %v1329 = vld [vmem:[%s1 + $0x3c0] sm:$0xff]
      %v1330 = vld [vmem:[%s1 + $0x3c8] sm:$0xff]
      %v1331 = vld [vmem:[%s1 + $0x3d0] sm:$0xff]
      %v1332 = vld [vmem:[%s1 + $0x3d8] sm:$0xff]
      %v1333 = vld [vmem:[%s1 + $0x3e0] sm:$0xff]
      %v1334 = vld [vmem:[%s1 + $0x3e8] sm:$0xff]
      %v1335 = vld [vmem:[%s1 + $0x3f0] sm:$0xff]
      %v1336 = vld [vmem:[%s1 + $0x3f8] sm:$0xff]
      %v1337 = vld [vmem:[%s1 + $0x400] sm:$0xff]
      %v1338 = vld [vmem:[%s1 + $0x408] sm:$0xff]
      %v1339 = vld [vmem:[%s1 + $0x410] sm:$0xff]
      %v1340 = vld [vmem:[%s1 + $0x418] sm:$0xff]
      %v1341 = vld [vmem:[%s1 + $0x420] sm:$0xff]
      %v1342 = vld [vmem:[%s1 + $0x428] sm:$0xff]
      %v1343 = vld [vmem:[%s1 + $0x430] sm:$0xff]
      %v1344 = vld [vmem:[%s1 + $0x438] sm:$0xff]
      %v1345 = vld [vmem:[%s1 + $0x440] sm:$0xff]
      %v1346 = vld [vmem:[%s1 + $0x448] sm:$0xff]
      %v1347 = vld [vmem:[%s1 + $0x450] sm:$0xff]
      %v1348 = vld [vmem:[%s1 + $0x458] sm:$0xff]
      %v1349 = vld [vmem:[%s1 + $0x460] sm:$0xff]
      %v1350 = vld [vmem:[%s1 + $0x468] sm:$0xff]
      %v1351 = vld [vmem:[%s1 + $0x470] sm:$0xff]
      %v1352 = vld [vmem:[%s1 + $0x478] sm:$0xff]
      %1353 = vmatpush.msra.mxu0 %v1224
      %1354 = vmatpush.msra.mxu0 %v1223
      %1355 = vmatpush.msra.mxu0 %v1222
      %1356 = vmatpush.msra.mxu0 %v1221
      %1357 = vmatpush.msra.mxu0 %v1220
      %1358 = vmatpush.msra.mxu0 %v1219
      %1359 = vmatpush.msra.mxu0 %v1218
      %1360 = vmatpush.msra.mxu0 %v1217
      %1361 = vmatpush.msra.mxu0 %v1216
      %1362 = vmatpush.msra.mxu0 %v1215
      %1363 = vmatpush.msra.mxu0 %v1214
      %1364 = vmatpush.msra.mxu0 %v1213
      %1365 = vmatpush.msra.mxu0 %v1212
      %1366 = vmatpush.msra.mxu0 %v1211
      %1367 = vmatpush.msra.mxu0 %v1210
      %1368 = vmatpush.msra.mxu0 %v1209
      %1369 = vmatmul.f32.gmra.mxu0 %v921
      %v1370 = vpop.f32.mrf.mxu0
      %v1371 = vadd.f32 0.0, %v1370
      %1372 = vmatmul.f32.gmra.mxu0 %v930
      %v1373 = vpop.f32.mrf.mxu0
      %v1374 = vadd.f32 0.0, %v1373
      %1375 = vmatmul.f32.gmra.mxu0 %v939
      %v1376 = vpop.f32.mrf.mxu0
      %v1377 = vadd.f32 0.0, %v1376
      %1378 = vmatmul.f32.gmra.mxu0 %v948
      %v1379 = vpop.f32.mrf.mxu0
      %v1380 = vadd.f32 0.0, %v1379
      %1381 = vmatmul.f32.gmra.mxu0 %v957
      %v1382 = vpop.f32.mrf.mxu0
      %v1383 = vadd.f32 0.0, %v1382
      %1384 = vmatmul.f32.gmra.mxu0 %v966
      %v1385 = vpop.f32.mrf.mxu0
      %v1386 = vadd.f32 0.0, %v1385
      %1387 = vmatmul.f32.gmra.mxu0 %v975
      %v1388 = vpop.f32.mrf.mxu0
      %v1389 = vadd.f32 0.0, %v1388
      %1390 = vmatmul.f32.gmra.mxu0 %v984
      %v1391 = vpop.f32.mrf.mxu0
      %v1392 = vadd.f32 0.0, %v1391
      %1393 = vmatmul.f32.gmra.mxu0 %v993
      %v1394 = vpop.f32.mrf.mxu0
      %v1395 = vadd.f32 0.0, %v1394
      %1396 = vmatmul.f32.gmra.mxu0 %v1002
      %v1397 = vpop.f32.mrf.mxu0
      %v1398 = vadd.f32 0.0, %v1397
      %1399 = vmatmul.f32.gmra.mxu0 %v1011
      %v1400 = vpop.f32.mrf.mxu0
      %v1401 = vadd.f32 0.0, %v1400
      %1402 = vmatmul.f32.gmra.mxu0 %v1020
      %v1403 = vpop.f32.mrf.mxu0
      %v1404 = vadd.f32 0.0, %v1403
      %1405 = vmatmul.f32.gmra.mxu0 %v1029
      %v1406 = vpop.f32.mrf.mxu0
      %v1407 = vadd.f32 0.0, %v1406
      %1408 = vmatmul.f32.gmra.mxu0 %v1038
      %v1409 = vpop.f32.mrf.mxu0
      %v1410 = vadd.f32 0.0, %v1409
      %1411 = vmatmul.f32.gmra.mxu0 %v1047
      %v1412 = vpop.f32.mrf.mxu0
      %v1413 = vadd.f32 0.0, %v1412
      %1414 = vmatmul.f32.gmra.mxu0 %v1056
      %v1415 = vpop.f32.mrf.mxu0
      %v1416 = vadd.f32 0.0, %v1415
      %1417 = vmatmul.f32.gmra.mxu0 %v1065
      %v1418 = vpop.f32.mrf.mxu0
      %v1419 = vadd.f32 0.0, %v1418
      %1420 = vmatmul.f32.gmra.mxu0 %v1074
      %v1421 = vpop.f32.mrf.mxu0
      %v1422 = vadd.f32 0.0, %v1421
      %1423 = vmatmul.f32.gmra.mxu0 %v1083
      %v1424 = vpop.f32.mrf.mxu0
      %v1425 = vadd.f32 0.0, %v1424
      %1426 = vmatmul.f32.gmra.mxu0 %v1092
      %v1427 = vpop.f32.mrf.mxu0
      %v1428 = vadd.f32 0.0, %v1427
      %1429 = vmatmul.f32.gmra.mxu0 %v1101
      %v1430 = vpop.f32.mrf.mxu0
      %v1431 = vadd.f32 0.0, %v1430
      %1432 = vmatmul.f32.gmra.mxu0 %v1110
      %v1433 = vpop.f32.mrf.mxu0
      %v1434 = vadd.f32 0.0, %v1433
      %1435 = vmatmul.f32.gmra.mxu0 %v1119
      %v1436 = vpop.f32.mrf.mxu0
      %v1437 = vadd.f32 0.0, %v1436
      %1438 = vmatmul.f32.gmra.mxu0 %v1128
      %v1439 = vpop.f32.mrf.mxu0
      %v1440 = vadd.f32 0.0, %v1439
      %1441 = vmatmul.f32.gmra.mxu0 %v1137
      %v1442 = vpop.f32.mrf.mxu0
      %v1443 = vadd.f32 0.0, %v1442
      %1444 = vmatmul.f32.gmra.mxu0 %v1146
      %v1445 = vpop.f32.mrf.mxu0
      %v1446 = vadd.f32 0.0, %v1445
      %1447 = vmatmul.f32.gmra.mxu0 %v1155
      %v1448 = vpop.f32.mrf.mxu0
      %v1449 = vadd.f32 0.0, %v1448
      %1450 = vmatmul.f32.gmra.mxu0 %v1164
      %v1451 = vpop.f32.mrf.mxu0
      %v1452 = vadd.f32 0.0, %v1451
      %1453 = vmatmul.f32.gmra.mxu0 %v1173
      %v1454 = vpop.f32.mrf.mxu0
      %v1455 = vadd.f32 0.0, %v1454
      %1456 = vmatmul.f32.gmra.mxu0 %v1182
      %v1457 = vpop.f32.mrf.mxu0
      %v1458 = vadd.f32 0.0, %v1457
      %1459 = vmatmul.f32.gmra.mxu0 %v1191
      %v1460 = vpop.f32.mrf.mxu0
      %v1461 = vadd.f32 0.0, %v1460
      %1462 = vmatmul.f32.gmra.mxu0 %v1200
      %v1463 = vpop.f32.mrf.mxu0
      %v1464 = vadd.f32 0.0, %v1463
      %1465 = vdwg.mxu0
      %1466 = vmatpush.msra.mxu0 %v1240
      %1467 = vmatpush.msra.mxu0 %v1239
      %1468 = vmatpush.msra.mxu0 %v1238
      %1469 = vmatpush.msra.mxu0 %v1237
      %1470 = vmatpush.msra.mxu0 %v1236
      %1471 = vmatpush.msra.mxu0 %v1235
      %1472 = vmatpush.msra.mxu0 %v1234
      %1473 = vmatpush.msra.mxu0 %v1233
      %1474 = vmatpush.msra.mxu0 %v1232
      %1475 = vmatpush.msra.mxu0 %v1231
      %1476 = vmatpush.msra.mxu0 %v1230
      %1477 = vmatpush.msra.mxu0 %v1229
      %1478 = vmatpush.msra.mxu0 %v1228
      %1479 = vmatpush.msra.mxu0 %v1227
      %1480 = vmatpush.msra.mxu0 %v1226
      %1481 = vmatpush.msra.mxu0 %v1225
      %1482 = vmatmul.f32.gmra.mxu0 %v922
      %v1483 = vpop.f32.mrf.mxu0
      %v1484 = vadd.f32 %v1371, %v1483
      %1485 = vmatmul.f32.gmra.mxu0 %v931
      %v1486 = vpop.f32.mrf.mxu0
      %v1487 = vadd.f32 %v1374, %v1486
      %1488 = vmatmul.f32.gmra.mxu0 %v940
      %v1489 = vpop.f32.mrf.mxu0
      %v1490 = vadd.f32 %v1377, %v1489
      %1491 = vmatmul.f32.gmra.mxu0 %v949
      %v1492 = vpop.f32.mrf.mxu0
      %v1493 = vadd.f32 %v1380, %v1492
      %1494 = vmatmul.f32.gmra.mxu0 %v958
      %v1495 = vpop.f32.mrf.mxu0
      %v1496 = vadd.f32 %v1383, %v1495
      %1497 = vmatmul.f32.gmra.mxu0 %v967
      %v1498 = vpop.f32.mrf.mxu0
      %v1499 = vadd.f32 %v1386, %v1498
      %1500 = vmatmul.f32.gmra.mxu0 %v976
      %v1501 = vpop.f32.mrf.mxu0
      %v1502 = vadd.f32 %v1389, %v1501
      %1503 = vmatmul.f32.gmra.mxu0 %v985
      %v1504 = vpop.f32.mrf.mxu0
      %v1505 = vadd.f32 %v1392, %v1504
      %1506 = vmatmul.f32.gmra.mxu0 %v994
      %v1507 = vpop.f32.mrf.mxu0
      %v1508 = vadd.f32 %v1395, %v1507
      %1509 = vmatmul.f32.gmra.mxu0 %v1003
      %v1510 = vpop.f32.mrf.mxu0
      %v1511 = vadd.f32 %v1398, %v1510
      %1512 = vmatmul.f32.gmra.mxu0 %v1012
      %v1513 = vpop.f32.mrf.mxu0
      %v1514 = vadd.f32 %v1401, %v1513
      %1515 = vmatmul.f32.gmra.mxu0 %v1021
      %v1516 = vpop.f32.mrf.mxu0
      %v1517 = vadd.f32 %v1404, %v1516
      %1518 = vmatmul.f32.gmra.mxu0 %v1030
      %v1519 = vpop.f32.mrf.mxu0
      %v1520 = vadd.f32 %v1407, %v1519
      %1521 = vmatmul.f32.gmra.mxu0 %v1039
      %v1522 = vpop.f32.mrf.mxu0
      %v1523 = vadd.f32 %v1410, %v1522
      %1524 = vmatmul.f32.gmra.mxu0 %v1048
      %v1525 = vpop.f32.mrf.mxu0
      %v1526 = vadd.f32 %v1413, %v1525
      %1527 = vmatmul.f32.gmra.mxu0 %v1057
      %v1528 = vpop.f32.mrf.mxu0
      %v1529 = vadd.f32 %v1416, %v1528
      %1530 = vmatmul.f32.gmra.mxu0 %v1066
      %v1531 = vpop.f32.mrf.mxu0
      %v1532 = vadd.f32 %v1419, %v1531
      %1533 = vmatmul.f32.gmra.mxu0 %v1075
      %v1534 = vpop.f32.mrf.mxu0
      %v1535 = vadd.f32 %v1422, %v1534
      %1536 = vmatmul.f32.gmra.mxu0 %v1084
      %v1537 = vpop.f32.mrf.mxu0
      %v1538 = vadd.f32 %v1425, %v1537
      %1539 = vmatmul.f32.gmra.mxu0 %v1093
      %v1540 = vpop.f32.mrf.mxu0
      %v1541 = vadd.f32 %v1428, %v1540
      %1542 = vmatmul.f32.gmra.mxu0 %v1102
      %v1543 = vpop.f32.mrf.mxu0
      %v1544 = vadd.f32 %v1431, %v1543
      %1545 = vmatmul.f32.gmra.mxu0 %v1111
      %v1546 = vpop.f32.mrf.mxu0
      %v1547 = vadd.f32 %v1434, %v1546
      %1548 = vmatmul.f32.gmra.mxu0 %v1120
      %v1549 = vpop.f32.mrf.mxu0
      %v1550 = vadd.f32 %v1437, %v1549
      %1551 = vmatmul.f32.gmra.mxu0 %v1129
      %v1552 = vpop.f32.mrf.mxu0
      %v1553 = vadd.f32 %v1440, %v1552
      %1554 = vmatmul.f32.gmra.mxu0 %v1138
      %v1555 = vpop.f32.mrf.mxu0
      %v1556 = vadd.f32 %v1443, %v1555
      %1557 = vmatmul.f32.gmra.mxu0 %v1147
      %v1558 = vpop.f32.mrf.mxu0
      %v1559 = vadd.f32 %v1446, %v1558
      %1560 = vmatmul.f32.gmra.mxu0 %v1156
      %v1561 = vpop.f32.mrf.mxu0
      %v1562 = vadd.f32 %v1449, %v1561
      %1563 = vmatmul.f32.gmra.mxu0 %v1165
      %v1564 = vpop.f32.mrf.mxu0
      %v1565 = vadd.f32 %v1452, %v1564
      %1566 = vmatmul.f32.gmra.mxu0 %v1174
      %v1567 = vpop.f32.mrf.mxu0
      %v1568 = vadd.f32 %v1455, %v1567
      %1569 = vmatmul.f32.gmra.mxu0 %v1183
      %v1570 = vpop.f32.mrf.mxu0
      %v1571 = vadd.f32 %v1458, %v1570
      %1572 = vmatmul.f32.gmra.mxu0 %v1192
      %v1573 = vpop.f32.mrf.mxu0
      %v1574 = vadd.f32 %v1461, %v1573
      %1575 = vmatmul.f32.gmra.mxu0 %v1201
      %v1576 = vpop.f32.mrf.mxu0
      %v1577 = vadd.f32 %v1464, %v1576
      %1578 = vdwg.mxu0
      %1579 = vmatpush.msra.mxu0 %v1256
      %1580 = vmatpush.msra.mxu0 %v1255
      %1581 = vmatpush.msra.mxu0 %v1254
      %1582 = vmatpush.msra.mxu0 %v1253
      %1583 = vmatpush.msra.mxu0 %v1252
      %1584 = vmatpush.msra.mxu0 %v1251
      %1585 = vmatpush.msra.mxu0 %v1250
      %1586 = vmatpush.msra.mxu0 %v1249
      %1587 = vmatpush.msra.mxu0 %v1248
      %1588 = vmatpush.msra.mxu0 %v1247
      %1589 = vmatpush.msra.mxu0 %v1246
      %1590 = vmatpush.msra.mxu0 %v1245
      %1591 = vmatpush.msra.mxu0 %v1244
      %1592 = vmatpush.msra.mxu0 %v1243
      %1593 = vmatpush.msra.mxu0 %v1242
      %1594 = vmatpush.msra.mxu0 %v1241
      %1595 = vmatmul.f32.gmra.mxu0 %v923
      %v1596 = vpop.f32.mrf.mxu0
      %v1597 = vadd.f32 %v1484, %v1596
      %1598 = vmatmul.f32.gmra.mxu0 %v932
      %v1599 = vpop.f32.mrf.mxu0
      %v1600 = vadd.f32 %v1487, %v1599
      %1601 = vmatmul.f32.gmra.mxu0 %v941
      %v1602 = vpop.f32.mrf.mxu0
      %v1603 = vadd.f32 %v1490, %v1602
      %1604 = vmatmul.f32.gmra.mxu0 %v950
      %v1605 = vpop.f32.mrf.mxu0
      %v1606 = vadd.f32 %v1493, %v1605
      %1607 = vmatmul.f32.gmra.mxu0 %v959
      %v1608 = vpop.f32.mrf.mxu0
      %v1609 = vadd.f32 %v1496, %v1608
      %1610 = vmatmul.f32.gmra.mxu0 %v968
      %v1611 = vpop.f32.mrf.mxu0
      %v1612 = vadd.f32 %v1499, %v1611
      %1613 = vmatmul.f32.gmra.mxu0 %v977
      %v1614 = vpop.f32.mrf.mxu0
      %v1615 = vadd.f32 %v1502, %v1614
      %1616 = vmatmul.f32.gmra.mxu0 %v986
      %v1617 = vpop.f32.mrf.mxu0
      %v1618 = vadd.f32 %v1505, %v1617
      %1619 = vmatmul.f32.gmra.mxu0 %v995
      %v1620 = vpop.f32.mrf.mxu0
      %v1621 = vadd.f32 %v1508, %v1620
      %1622 = vmatmul.f32.gmra.mxu0 %v1004
      %v1623 = vpop.f32.mrf.mxu0
      %v1624 = vadd.f32 %v1511, %v1623
      %1625 = vmatmul.f32.gmra.mxu0 %v1013
      %v1626 = vpop.f32.mrf.mxu0
      %v1627 = vadd.f32 %v1514, %v1626
      %1628 = vmatmul.f32.gmra.mxu0 %v1022
      %v1629 = vpop.f32.mrf.mxu0
      %v1630 = vadd.f32 %v1517, %v1629
      %1631 = vmatmul.f32.gmra.mxu0 %v1031
      %v1632 = vpop.f32.mrf.mxu0
      %v1633 = vadd.f32 %v1520, %v1632
      %1634 = vmatmul.f32.gmra.mxu0 %v1040
      %v1635 = vpop.f32.mrf.mxu0
      %v1636 = vadd.f32 %v1523, %v1635
      %1637 = vmatmul.f32.gmra.mxu0 %v1049
      %v1638 = vpop.f32.mrf.mxu0
      %v1639 = vadd.f32 %v1526, %v1638
      %1640 = vmatmul.f32.gmra.mxu0 %v1058
      %v1641 = vpop.f32.mrf.mxu0
      %v1642 = vadd.f32 %v1529, %v1641
      %1643 = vmatmul.f32.gmra.mxu0 %v1067
      %v1644 = vpop.f32.mrf.mxu0
      %v1645 = vadd.f32 %v1532, %v1644
      %1646 = vmatmul.f32.gmra.mxu0 %v1076
      %v1647 = vpop.f32.mrf.mxu0
      %v1648 = vadd.f32 %v1535, %v1647
      %1649 = vmatmul.f32.gmra.mxu0 %v1085
      %v1650 = vpop.f32.mrf.mxu0
      %v1651 = vadd.f32 %v1538, %v1650
      %1652 = vmatmul.f32.gmra.mxu0 %v1094
      %v1653 = vpop.f32.mrf.mxu0
      %v1654 = vadd.f32 %v1541, %v1653
      %1655 = vmatmul.f32.gmra.mxu0 %v1103
      %v1656 = vpop.f32.mrf.mxu0
      %v1657 = vadd.f32 %v1544, %v1656
      %1658 = vmatmul.f32.gmra.mxu0 %v1112
      %v1659 = vpop.f32.mrf.mxu0
      %v1660 = vadd.f32 %v1547, %v1659
      %1661 = vmatmul.f32.gmra.mxu0 %v1121
      %v1662 = vpop.f32.mrf.mxu0
      %v1663 = vadd.f32 %v1550, %v1662
      %1664 = vmatmul.f32.gmra.mxu0 %v1130
      %v1665 = vpop.f32.mrf.mxu0
      %v1666 = vadd.f32 %v1553, %v1665
      %1667 = vmatmul.f32.gmra.mxu0 %v1139
      %v1668 = vpop.f32.mrf.mxu0
      %v1669 = vadd.f32 %v1556, %v1668
      %1670 = vmatmul.f32.gmra.mxu0 %v1148
      %v1671 = vpop.f32.mrf.mxu0
      %v1672 = vadd.f32 %v1559, %v1671
      %1673 = vmatmul.f32.gmra.mxu0 %v1157
      %v1674 = vpop.f32.mrf.mxu0
      %v1675 = vadd.f32 %v1562, %v1674
      %1676 = vmatmul.f32.gmra.mxu0 %v1166
      %v1677 = vpop.f32.mrf.mxu0
      %v1678 = vadd.f32 %v1565, %v1677
      %1679 = vmatmul.f32.gmra.mxu0 %v1175
      %v1680 = vpop.f32.mrf.mxu0
      %v1681 = vadd.f32 %v1568, %v1680
      %1682 = vmatmul.f32.gmra.mxu0 %v1184
      %v1683 = vpop.f32.mrf.mxu0
      %v1684 = vadd.f32 %v1571, %v1683
      %1685 = vmatmul.f32.gmra.mxu0 %v1193
      %v1686 = vpop.f32.mrf.mxu0
      %v1687 = vadd.f32 %v1574, %v1686
      %1688 = vmatmul.f32.gmra.mxu0 %v1202
      %v1689 = vpop.f32.mrf.mxu0
      %v1690 = vadd.f32 %v1577, %v1689
      %1691 = vdwg.mxu0
      %1692 = vmatpush.msra.mxu0 %v1272
      %1693 = vmatpush.msra.mxu0 %v1271
      %1694 = vmatpush.msra.mxu0 %v1270
      %1695 = vmatpush.msra.mxu0 %v1269
      %1696 = vmatpush.msra.mxu0 %v1268
      %1697 = vmatpush.msra.mxu0 %v1267
      %1698 = vmatpush.msra.mxu0 %v1266
      %1699 = vmatpush.msra.mxu0 %v1265
      %1700 = vmatpush.msra.mxu0 %v1264
      %1701 = vmatpush.msra.mxu0 %v1263
      %1702 = vmatpush.msra.mxu0 %v1262
      %1703 = vmatpush.msra.mxu0 %v1261
      %1704 = vmatpush.msra.mxu0 %v1260
      %1705 = vmatpush.msra.mxu0 %v1259
      %1706 = vmatpush.msra.mxu0 %v1258
      %1707 = vmatpush.msra.mxu0 %v1257
      %1708 = vmatmul.f32.gmra.mxu0 %v924
      %v1709 = vpop.f32.mrf.mxu0
      %v1710 = vadd.f32 %v1597, %v1709
      %1711 = vmatmul.f32.gmra.mxu0 %v933
      %v1712 = vpop.f32.mrf.mxu0
      %v1713 = vadd.f32 %v1600, %v1712
      %1714 = vmatmul.f32.gmra.mxu0 %v942
      %v1715 = vpop.f32.mrf.mxu0
      %v1716 = vadd.f32 %v1603, %v1715
      %1717 = vmatmul.f32.gmra.mxu0 %v951
      %v1718 = vpop.f32.mrf.mxu0
      %v1719 = vadd.f32 %v1606, %v1718
      %1720 = vmatmul.f32.gmra.mxu0 %v960
      %v1721 = vpop.f32.mrf.mxu0
      %v1722 = vadd.f32 %v1609, %v1721
      %1723 = vmatmul.f32.gmra.mxu0 %v969
      %v1724 = vpop.f32.mrf.mxu0
      %v1725 = vadd.f32 %v1612, %v1724
      %1726 = vmatmul.f32.gmra.mxu0 %v978
      %v1727 = vpop.f32.mrf.mxu0
      %v1728 = vadd.f32 %v1615, %v1727
      %1729 = vmatmul.f32.gmra.mxu0 %v987
      %v1730 = vpop.f32.mrf.mxu0
      %v1731 = vadd.f32 %v1618, %v1730
      %1732 = vmatmul.f32.gmra.mxu0 %v996
      %v1733 = vpop.f32.mrf.mxu0
      %v1734 = vadd.f32 %v1621, %v1733
      %1735 = vmatmul.f32.gmra.mxu0 %v1005
      %v1736 = vpop.f32.mrf.mxu0
      %v1737 = vadd.f32 %v1624, %v1736
      %1738 = vmatmul.f32.gmra.mxu0 %v1014
      %v1739 = vpop.f32.mrf.mxu0
      %v1740 = vadd.f32 %v1627, %v1739
      %1741 = vmatmul.f32.gmra.mxu0 %v1023
      %v1742 = vpop.f32.mrf.mxu0
      %v1743 = vadd.f32 %v1630, %v1742
      %1744 = vmatmul.f32.gmra.mxu0 %v1032
      %v1745 = vpop.f32.mrf.mxu0
      %v1746 = vadd.f32 %v1633, %v1745
      %1747 = vmatmul.f32.gmra.mxu0 %v1041
      %v1748 = vpop.f32.mrf.mxu0
      %v1749 = vadd.f32 %v1636, %v1748
      %1750 = vmatmul.f32.gmra.mxu0 %v1050
      %v1751 = vpop.f32.mrf.mxu0
      %v1752 = vadd.f32 %v1639, %v1751
      %1753 = vmatmul.f32.gmra.mxu0 %v1059
      %v1754 = vpop.f32.mrf.mxu0
      %v1755 = vadd.f32 %v1642, %v1754
      %1756 = vmatmul.f32.gmra.mxu0 %v1068
      %v1757 = vpop.f32.mrf.mxu0
      %v1758 = vadd.f32 %v1645, %v1757
      %1759 = vmatmul.f32.gmra.mxu0 %v1077
      %v1760 = vpop.f32.mrf.mxu0
      %v1761 = vadd.f32 %v1648, %v1760
      %1762 = vmatmul.f32.gmra.mxu0 %v1086
      %v1763 = vpop.f32.mrf.mxu0
      %v1764 = vadd.f32 %v1651, %v1763
      %1765 = vmatmul.f32.gmra.mxu0 %v1095
      %v1766 = vpop.f32.mrf.mxu0
      %v1767 = vadd.f32 %v1654, %v1766
      %1768 = vmatmul.f32.gmra.mxu0 %v1104
      %v1769 = vpop.f32.mrf.mxu0
      %v1770 = vadd.f32 %v1657, %v1769
      %1771 = vmatmul.f32.gmra.mxu0 %v1113
      %v1772 = vpop.f32.mrf.mxu0
      %v1773 = vadd.f32 %v1660, %v1772
      %1774 = vmatmul.f32.gmra.mxu0 %v1122
      %v1775 = vpop.f32.mrf.mxu0
      %v1776 = vadd.f32 %v1663, %v1775
      %1777 = vmatmul.f32.gmra.mxu0 %v1131
      %v1778 = vpop.f32.mrf.mxu0
      %v1779 = vadd.f32 %v1666, %v1778
      %1780 = vmatmul.f32.gmra.mxu0 %v1140
      %v1781 = vpop.f32.mrf.mxu0
      %v1782 = vadd.f32 %v1669, %v1781
      %1783 = vmatmul.f32.gmra.mxu0 %v1149
      %v1784 = vpop.f32.mrf.mxu0
      %v1785 = vadd.f32 %v1672, %v1784
      %1786 = vmatmul.f32.gmra.mxu0 %v1158
      %v1787 = vpop.f32.mrf.mxu0
      %v1788 = vadd.f32 %v1675, %v1787
      %1789 = vmatmul.f32.gmra.mxu0 %v1167
      %v1790 = vpop.f32.mrf.mxu0
      %v1791 = vadd.f32 %v1678, %v1790
      %1792 = vmatmul.f32.gmra.mxu0 %v1176
      %v1793 = vpop.f32.mrf.mxu0
      %v1794 = vadd.f32 %v1681, %v1793
      %1795 = vmatmul.f32.gmra.mxu0 %v1185
      %v1796 = vpop.f32.mrf.mxu0
      %v1797 = vadd.f32 %v1684, %v1796
      %1798 = vmatmul.f32.gmra.mxu0 %v1194
      %v1799 = vpop.f32.mrf.mxu0
      %v1800 = vadd.f32 %v1687, %v1799
      %1801 = vmatmul.f32.gmra.mxu0 %v1203
      %v1802 = vpop.f32.mrf.mxu0
      %v1803 = vadd.f32 %v1690, %v1802
      %1804 = vdwg.mxu0
      %1805 = vmatpush.msra.mxu0 %v1288
      %1806 = vmatpush.msra.mxu0 %v1287
      %1807 = vmatpush.msra.mxu0 %v1286
      %1808 = vmatpush.msra.mxu0 %v1285
      %1809 = vmatpush.msra.mxu0 %v1284
      %1810 = vmatpush.msra.mxu0 %v1283
      %1811 = vmatpush.msra.mxu0 %v1282
      %1812 = vmatpush.msra.mxu0 %v1281
      %1813 = vmatpush.msra.mxu0 %v1280
      %1814 = vmatpush.msra.mxu0 %v1279
      %1815 = vmatpush.msra.mxu0 %v1278
      %1816 = vmatpush.msra.mxu0 %v1277
      %1817 = vmatpush.msra.mxu0 %v1276
      %1818 = vmatpush.msra.mxu0 %v1275
      %1819 = vmatpush.msra.mxu0 %v1274
      %1820 = vmatpush.msra.mxu0 %v1273
      %1821 = vmatmul.f32.gmra.mxu0 %v925
      %v1822 = vpop.f32.mrf.mxu0
      %v1823 = vadd.f32 %v1710, %v1822
      %1824 = vmatmul.f32.gmra.mxu0 %v934
      %v1825 = vpop.f32.mrf.mxu0
      %v1826 = vadd.f32 %v1713, %v1825
      %1827 = vmatmul.f32.gmra.mxu0 %v943
      %v1828 = vpop.f32.mrf.mxu0
      %v1829 = vadd.f32 %v1716, %v1828
      %1830 = vmatmul.f32.gmra.mxu0 %v952
      %v1831 = vpop.f32.mrf.mxu0
      %v1832 = vadd.f32 %v1719, %v1831
      %1833 = vmatmul.f32.gmra.mxu0 %v961
      %v1834 = vpop.f32.mrf.mxu0
      %v1835 = vadd.f32 %v1722, %v1834
      %1836 = vmatmul.f32.gmra.mxu0 %v970
      %v1837 = vpop.f32.mrf.mxu0
      %v1838 = vadd.f32 %v1725, %v1837
      %1839 = vmatmul.f32.gmra.mxu0 %v979
      %v1840 = vpop.f32.mrf.mxu0
      %v1841 = vadd.f32 %v1728, %v1840
      %1842 = vmatmul.f32.gmra.mxu0 %v988
      %v1843 = vpop.f32.mrf.mxu0
      %v1844 = vadd.f32 %v1731, %v1843
      %1845 = vmatmul.f32.gmra.mxu0 %v997
      %v1846 = vpop.f32.mrf.mxu0
      %v1847 = vadd.f32 %v1734, %v1846
      %1848 = vmatmul.f32.gmra.mxu0 %v1006
      %v1849 = vpop.f32.mrf.mxu0
      %v1850 = vadd.f32 %v1737, %v1849
      %1851 = vmatmul.f32.gmra.mxu0 %v1015
      %v1852 = vpop.f32.mrf.mxu0
      %v1853 = vadd.f32 %v1740, %v1852
      %1854 = vmatmul.f32.gmra.mxu0 %v1024
      %v1855 = vpop.f32.mrf.mxu0
      %v1856 = vadd.f32 %v1743, %v1855
      %1857 = vmatmul.f32.gmra.mxu0 %v1033
      %v1858 = vpop.f32.mrf.mxu0
      %v1859 = vadd.f32 %v1746, %v1858
      %1860 = vmatmul.f32.gmra.mxu0 %v1042
      %v1861 = vpop.f32.mrf.mxu0
      %v1862 = vadd.f32 %v1749, %v1861
      %1863 = vmatmul.f32.gmra.mxu0 %v1051
      %v1864 = vpop.f32.mrf.mxu0
      %v1865 = vadd.f32 %v1752, %v1864
      %1866 = vmatmul.f32.gmra.mxu0 %v1060
      %v1867 = vpop.f32.mrf.mxu0
      %v1868 = vadd.f32 %v1755, %v1867
      %1869 = vmatmul.f32.gmra.mxu0 %v1069
      %v1870 = vpop.f32.mrf.mxu0
      %v1871 = vadd.f32 %v1758, %v1870
      %1872 = vmatmul.f32.gmra.mxu0 %v1078
      %v1873 = vpop.f32.mrf.mxu0
      %v1874 = vadd.f32 %v1761, %v1873
      %1875 = vmatmul.f32.gmra.mxu0 %v1087
      %v1876 = vpop.f32.mrf.mxu0
      %v1877 = vadd.f32 %v1764, %v1876
      %1878 = vmatmul.f32.gmra.mxu0 %v1096
      %v1879 = vpop.f32.mrf.mxu0
      %v1880 = vadd.f32 %v1767, %v1879
      %1881 = vmatmul.f32.gmra.mxu0 %v1105
      %v1882 = vpop.f32.mrf.mxu0
      %v1883 = vadd.f32 %v1770, %v1882
      %1884 = vmatmul.f32.gmra.mxu0 %v1114
      %v1885 = vpop.f32.mrf.mxu0
      %v1886 = vadd.f32 %v1773, %v1885
      %1887 = vmatmul.f32.gmra.mxu0 %v1123
      %v1888 = vpop.f32.mrf.mxu0
      %v1889 = vadd.f32 %v1776, %v1888
      %1890 = vmatmul.f32.gmra.mxu0 %v1132
      %v1891 = vpop.f32.mrf.mxu0
      %v1892 = vadd.f32 %v1779, %v1891
      %1893 = vmatmul.f32.gmra.mxu0 %v1141
      %v1894 = vpop.f32.mrf.mxu0
      %v1895 = vadd.f32 %v1782, %v1894
      %1896 = vmatmul.f32.gmra.mxu0 %v1150
      %v1897 = vpop.f32.mrf.mxu0
      %v1898 = vadd.f32 %v1785, %v1897
      %1899 = vmatmul.f32.gmra.mxu0 %v1159
      %v1900 = vpop.f32.mrf.mxu0
      %v1901 = vadd.f32 %v1788, %v1900
      %1902 = vmatmul.f32.gmra.mxu0 %v1168
      %v1903 = vpop.f32.mrf.mxu0
      %v1904 = vadd.f32 %v1791, %v1903
      %1905 = vmatmul.f32.gmra.mxu0 %v1177
      %v1906 = vpop.f32.mrf.mxu0
      %v1907 = vadd.f32 %v1794, %v1906
      %1908 = vmatmul.f32.gmra.mxu0 %v1186
      %v1909 = vpop.f32.mrf.mxu0
      %v1910 = vadd.f32 %v1797, %v1909
      %1911 = vmatmul.f32.gmra.mxu0 %v1195
      %v1912 = vpop.f32.mrf.mxu0
      %v1913 = vadd.f32 %v1800, %v1912
      %1914 = vmatmul.f32.gmra.mxu0 %v1204
      %v1915 = vpop.f32.mrf.mxu0
      %v1916 = vadd.f32 %v1803, %v1915
      %1917 = vdwg.mxu0
      %1918 = vmatpush.msra.mxu0 %v1304
      %1919 = vmatpush.msra.mxu0 %v1303
      %1920 = vmatpush.msra.mxu0 %v1302
      %1921 = vmatpush.msra.mxu0 %v1301
      %1922 = vmatpush.msra.mxu0 %v1300
      %1923 = vmatpush.msra.mxu0 %v1299
      %1924 = vmatpush.msra.mxu0 %v1298
      %1925 = vmatpush.msra.mxu0 %v1297
      %1926 = vmatpush.msra.mxu0 %v1296
      %1927 = vmatpush.msra.mxu0 %v1295
      %1928 = vmatpush.msra.mxu0 %v1294
      %1929 = vmatpush.msra.mxu0 %v1293
      %1930 = vmatpush.msra.mxu0 %v1292
      %1931 = vmatpush.msra.mxu0 %v1291
      %1932 = vmatpush.msra.mxu0 %v1290
      %1933 = vmatpush.msra.mxu0 %v1289
      %1934 = vmatmul.f32.gmra.mxu0 %v926
      %v1935 = vpop.f32.mrf.mxu0
      %v1936 = vadd.f32 %v1823, %v1935
      %1937 = vmatmul.f32.gmra.mxu0 %v935
      %v1938 = vpop.f32.mrf.mxu0
      %v1939 = vadd.f32 %v1826, %v1938
      %1940 = vmatmul.f32.gmra.mxu0 %v944
      %v1941 = vpop.f32.mrf.mxu0
      %v1942 = vadd.f32 %v1829, %v1941
      %1943 = vmatmul.f32.gmra.mxu0 %v953
      %v1944 = vpop.f32.mrf.mxu0
      %v1945 = vadd.f32 %v1832, %v1944
      %1946 = vmatmul.f32.gmra.mxu0 %v962
      %v1947 = vpop.f32.mrf.mxu0
      %v1948 = vadd.f32 %v1835, %v1947
      %1949 = vmatmul.f32.gmra.mxu0 %v971
      %v1950 = vpop.f32.mrf.mxu0
      %v1951 = vadd.f32 %v1838, %v1950
      %1952 = vmatmul.f32.gmra.mxu0 %v980
      %v1953 = vpop.f32.mrf.mxu0
      %v1954 = vadd.f32 %v1841, %v1953
      %1955 = vmatmul.f32.gmra.mxu0 %v989
      %v1956 = vpop.f32.mrf.mxu0
      %v1957 = vadd.f32 %v1844, %v1956
      %1958 = vmatmul.f32.gmra.mxu0 %v998
      %v1959 = vpop.f32.mrf.mxu0
      %v1960 = vadd.f32 %v1847, %v1959
      %1961 = vmatmul.f32.gmra.mxu0 %v1007
      %v1962 = vpop.f32.mrf.mxu0
      %v1963 = vadd.f32 %v1850, %v1962
      %1964 = vmatmul.f32.gmra.mxu0 %v1016
      %v1965 = vpop.f32.mrf.mxu0
      %v1966 = vadd.f32 %v1853, %v1965
      %1967 = vmatmul.f32.gmra.mxu0 %v1025
      %v1968 = vpop.f32.mrf.mxu0
      %v1969 = vadd.f32 %v1856, %v1968
      %1970 = vmatmul.f32.gmra.mxu0 %v1034
      %v1971 = vpop.f32.mrf.mxu0
      %v1972 = vadd.f32 %v1859, %v1971
      %1973 = vmatmul.f32.gmra.mxu0 %v1043
      %v1974 = vpop.f32.mrf.mxu0
      %v1975 = vadd.f32 %v1862, %v1974
      %1976 = vmatmul.f32.gmra.mxu0 %v1052
      %v1977 = vpop.f32.mrf.mxu0
      %v1978 = vadd.f32 %v1865, %v1977
      %1979 = vmatmul.f32.gmra.mxu0 %v1061
      %v1980 = vpop.f32.mrf.mxu0
      %v1981 = vadd.f32 %v1868, %v1980
      %1982 = vmatmul.f32.gmra.mxu0 %v1070
      %v1983 = vpop.f32.mrf.mxu0
      %v1984 = vadd.f32 %v1871, %v1983
      %1985 = vmatmul.f32.gmra.mxu0 %v1079
      %v1986 = vpop.f32.mrf.mxu0
      %v1987 = vadd.f32 %v1874, %v1986
      %1988 = vmatmul.f32.gmra.mxu0 %v1088
      %v1989 = vpop.f32.mrf.mxu0
      %v1990 = vadd.f32 %v1877, %v1989
      %1991 = vmatmul.f32.gmra.mxu0 %v1097
      %v1992 = vpop.f32.mrf.mxu0
      %v1993 = vadd.f32 %v1880, %v1992
      %1994 = vmatmul.f32.gmra.mxu0 %v1106
      %v1995 = vpop.f32.mrf.mxu0
      %v1996 = vadd.f32 %v1883, %v1995
      %1997 = vmatmul.f32.gmra.mxu0 %v1115
      %v1998 = vpop.f32.mrf.mxu0
      %v1999 = vadd.f32 %v1886, %v1998
      %2000 = vmatmul.f32.gmra.mxu0 %v1124
      %v2001 = vpop.f32.mrf.mxu0
      %v2002 = vadd.f32 %v1889, %v2001
      %2003 = vmatmul.f32.gmra.mxu0 %v1133
      %v2004 = vpop.f32.mrf.mxu0
      %v2005 = vadd.f32 %v1892, %v2004
      %2006 = vmatmul.f32.gmra.mxu0 %v1142
      %v2007 = vpop.f32.mrf.mxu0
      %v2008 = vadd.f32 %v1895, %v2007
      %2009 = vmatmul.f32.gmra.mxu0 %v1151
      %v2010 = vpop.f32.mrf.mxu0
      %v2011 = vadd.f32 %v1898, %v2010
      %2012 = vmatmul.f32.gmra.mxu0 %v1160
      %v2013 = vpop.f32.mrf.mxu0
      %v2014 = vadd.f32 %v1901, %v2013
      %2015 = vmatmul.f32.gmra.mxu0 %v1169
      %v2016 = vpop.f32.mrf.mxu0
      %v2017 = vadd.f32 %v1904, %v2016
      %2018 = vmatmul.f32.gmra.mxu0 %v1178
      %v2019 = vpop.f32.mrf.mxu0
      %v2020 = vadd.f32 %v1907, %v2019
      %2021 = vmatmul.f32.gmra.mxu0 %v1187
      %v2022 = vpop.f32.mrf.mxu0
      %v2023 = vadd.f32 %v1910, %v2022
      %2024 = vmatmul.f32.gmra.mxu0 %v1196
      %v2025 = vpop.f32.mrf.mxu0
      %v2026 = vadd.f32 %v1913, %v2025
      %2027 = vmatmul.f32.gmra.mxu0 %v1205
      %v2028 = vpop.f32.mrf.mxu0
      %v2029 = vadd.f32 %v1916, %v2028
      %2030 = vdwg.mxu0
      %2031 = vmatpush.msra.mxu0 %v1320
      %2032 = vmatpush.msra.mxu0 %v1319
      %2033 = vmatpush.msra.mxu0 %v1318
      %2034 = vmatpush.msra.mxu0 %v1317
      %2035 = vmatpush.msra.mxu0 %v1316
      %2036 = vmatpush.msra.mxu0 %v1315
      %2037 = vmatpush.msra.mxu0 %v1314
      %2038 = vmatpush.msra.mxu0 %v1313
      %2039 = vmatpush.msra.mxu0 %v1312
      %2040 = vmatpush.msra.mxu0 %v1311
      %2041 = vmatpush.msra.mxu0 %v1310
      %2042 = vmatpush.msra.mxu0 %v1309
      %2043 = vmatpush.msra.mxu0 %v1308
      %2044 = vmatpush.msra.mxu0 %v1307
      %2045 = vmatpush.msra.mxu0 %v1306
      %2046 = vmatpush.msra.mxu0 %v1305
      %2047 = vmatmul.f32.gmra.mxu0 %v927
      %v2048 = vpop.f32.mrf.mxu0
      %v2049 = vadd.f32 %v1936, %v2048
      %2050 = vmatmul.f32.gmra.mxu0 %v936
      %v2051 = vpop.f32.mrf.mxu0
      %v2052 = vadd.f32 %v1939, %v2051
      %2053 = vmatmul.f32.gmra.mxu0 %v945
      %v2054 = vpop.f32.mrf.mxu0
      %v2055 = vadd.f32 %v1942, %v2054
      %2056 = vmatmul.f32.gmra.mxu0 %v954
      %v2057 = vpop.f32.mrf.mxu0
      %v2058 = vadd.f32 %v1945, %v2057
      %2059 = vmatmul.f32.gmra.mxu0 %v963
      %v2060 = vpop.f32.mrf.mxu0
      %v2061 = vadd.f32 %v1948, %v2060
      %2062 = vmatmul.f32.gmra.mxu0 %v972
      %v2063 = vpop.f32.mrf.mxu0
      %v2064 = vadd.f32 %v1951, %v2063
      %2065 = vmatmul.f32.gmra.mxu0 %v981
      %v2066 = vpop.f32.mrf.mxu0
      %v2067 = vadd.f32 %v1954, %v2066
      %2068 = vmatmul.f32.gmra.mxu0 %v990
      %v2069 = vpop.f32.mrf.mxu0
      %v2070 = vadd.f32 %v1957, %v2069
      %2071 = vmatmul.f32.gmra.mxu0 %v999
      %v2072 = vpop.f32.mrf.mxu0
      %v2073 = vadd.f32 %v1960, %v2072
      %2074 = vmatmul.f32.gmra.mxu0 %v1008
      %v2075 = vpop.f32.mrf.mxu0
      %v2076 = vadd.f32 %v1963, %v2075
      %2077 = vmatmul.f32.gmra.mxu0 %v1017
      %v2078 = vpop.f32.mrf.mxu0
      %v2079 = vadd.f32 %v1966, %v2078
      %2080 = vmatmul.f32.gmra.mxu0 %v1026
      %v2081 = vpop.f32.mrf.mxu0
      %v2082 = vadd.f32 %v1969, %v2081
      %2083 = vmatmul.f32.gmra.mxu0 %v1035
      %v2084 = vpop.f32.mrf.mxu0
      %v2085 = vadd.f32 %v1972, %v2084
      %2086 = vmatmul.f32.gmra.mxu0 %v1044
      %v2087 = vpop.f32.mrf.mxu0
      %v2088 = vadd.f32 %v1975, %v2087
      %2089 = vmatmul.f32.gmra.mxu0 %v1053
      %v2090 = vpop.f32.mrf.mxu0
      %v2091 = vadd.f32 %v1978, %v2090
      %2092 = vmatmul.f32.gmra.mxu0 %v1062
      %v2093 = vpop.f32.mrf.mxu0
      %v2094 = vadd.f32 %v1981, %v2093
      %2095 = vmatmul.f32.gmra.mxu0 %v1071
      %v2096 = vpop.f32.mrf.mxu0
      %v2097 = vadd.f32 %v1984, %v2096
      %2098 = vmatmul.f32.gmra.mxu0 %v1080
      %v2099 = vpop.f32.mrf.mxu0
      %v2100 = vadd.f32 %v1987, %v2099
      %2101 = vmatmul.f32.gmra.mxu0 %v1089
      %v2102 = vpop.f32.mrf.mxu0
      %v2103 = vadd.f32 %v1990, %v2102
      %2104 = vmatmul.f32.gmra.mxu0 %v1098
      %v2105 = vpop.f32.mrf.mxu0
      %v2106 = vadd.f32 %v1993, %v2105
      %2107 = vmatmul.f32.gmra.mxu0 %v1107
      %v2108 = vpop.f32.mrf.mxu0
      %v2109 = vadd.f32 %v1996, %v2108
      %2110 = vmatmul.f32.gmra.mxu0 %v1116
      %v2111 = vpop.f32.mrf.mxu0
      %v2112 = vadd.f32 %v1999, %v2111
      %2113 = vmatmul.f32.gmra.mxu0 %v1125
      %v2114 = vpop.f32.mrf.mxu0
      %v2115 = vadd.f32 %v2002, %v2114
      %2116 = vmatmul.f32.gmra.mxu0 %v1134
      %v2117 = vpop.f32.mrf.mxu0
      %v2118 = vadd.f32 %v2005, %v2117
      %2119 = vmatmul.f32.gmra.mxu0 %v1143
      %v2120 = vpop.f32.mrf.mxu0
      %v2121 = vadd.f32 %v2008, %v2120
      %2122 = vmatmul.f32.gmra.mxu0 %v1152
      %v2123 = vpop.f32.mrf.mxu0
      %v2124 = vadd.f32 %v2011, %v2123
      %2125 = vmatmul.f32.gmra.mxu0 %v1161
      %v2126 = vpop.f32.mrf.mxu0
      %v2127 = vadd.f32 %v2014, %v2126
      %2128 = vmatmul.f32.gmra.mxu0 %v1170
      %v2129 = vpop.f32.mrf.mxu0
      %v2130 = vadd.f32 %v2017, %v2129
      %2131 = vmatmul.f32.gmra.mxu0 %v1179
      %v2132 = vpop.f32.mrf.mxu0
      %v2133 = vadd.f32 %v2020, %v2132
      %2134 = vmatmul.f32.gmra.mxu0 %v1188
      %v2135 = vpop.f32.mrf.mxu0
      %v2136 = vadd.f32 %v2023, %v2135
      %2137 = vmatmul.f32.gmra.mxu0 %v1197
      %v2138 = vpop.f32.mrf.mxu0
      %v2139 = vadd.f32 %v2026, %v2138
      %2140 = vmatmul.f32.gmra.mxu0 %v1206
      %v2141 = vpop.f32.mrf.mxu0
      %v2142 = vadd.f32 %v2029, %v2141
      %2143 = vdwg.mxu0
      %2144 = vmatpush.msra.mxu0 %v1336
      %2145 = vmatpush.msra.mxu0 %v1335
      %2146 = vmatpush.msra.mxu0 %v1334
      %2147 = vmatpush.msra.mxu0 %v1333
      %2148 = vmatpush.msra.mxu0 %v1332
      %2149 = vmatpush.msra.mxu0 %v1331
      %2150 = vmatpush.msra.mxu0 %v1330
      %2151 = vmatpush.msra.mxu0 %v1329
      %2152 = vmatpush.msra.mxu0 %v1328
      %2153 = vmatpush.msra.mxu0 %v1327
      %2154 = vmatpush.msra.mxu0 %v1326
      %2155 = vmatpush.msra.mxu0 %v1325
      %2156 = vmatpush.msra.mxu0 %v1324
      %2157 = vmatpush.msra.mxu0 %v1323
      %2158 = vmatpush.msra.mxu0 %v1322
      %2159 = vmatpush.msra.mxu0 %v1321
      %2160 = vmatmul.f32.gmra.mxu0 %v928
      %v2161 = vpop.f32.mrf.mxu0
      %v2162 = vadd.f32 %v2049, %v2161
      %2163 = vmatmul.f32.gmra.mxu0 %v937
      %v2164 = vpop.f32.mrf.mxu0
      %v2165 = vadd.f32 %v2052, %v2164
      %2166 = vmatmul.f32.gmra.mxu0 %v946
      %v2167 = vpop.f32.mrf.mxu0
      %v2168 = vadd.f32 %v2055, %v2167
      %2169 = vmatmul.f32.gmra.mxu0 %v955
      %v2170 = vpop.f32.mrf.mxu0
      %v2171 = vadd.f32 %v2058, %v2170
      %2172 = vmatmul.f32.gmra.mxu0 %v964
      %v2173 = vpop.f32.mrf.mxu0
      %v2174 = vadd.f32 %v2061, %v2173
      %2175 = vmatmul.f32.gmra.mxu0 %v973
      %v2176 = vpop.f32.mrf.mxu0
      %v2177 = vadd.f32 %v2064, %v2176
      %2178 = vmatmul.f32.gmra.mxu0 %v982
      %v2179 = vpop.f32.mrf.mxu0
      %v2180 = vadd.f32 %v2067, %v2179
      %2181 = vmatmul.f32.gmra.mxu0 %v991
      %v2182 = vpop.f32.mrf.mxu0
      %v2183 = vadd.f32 %v2070, %v2182
      %2184 = vmatmul.f32.gmra.mxu0 %v1000
      %v2185 = vpop.f32.mrf.mxu0
      %v2186 = vadd.f32 %v2073, %v2185
      %2187 = vmatmul.f32.gmra.mxu0 %v1009
      %v2188 = vpop.f32.mrf.mxu0
      %v2189 = vadd.f32 %v2076, %v2188
      %2190 = vmatmul.f32.gmra.mxu0 %v1018
      %v2191 = vpop.f32.mrf.mxu0
      %v2192 = vadd.f32 %v2079, %v2191
      %2193 = vmatmul.f32.gmra.mxu0 %v1027
      %v2194 = vpop.f32.mrf.mxu0
      %v2195 = vadd.f32 %v2082, %v2194
      %2196 = vmatmul.f32.gmra.mxu0 %v1036
      %v2197 = vpop.f32.mrf.mxu0
      %v2198 = vadd.f32 %v2085, %v2197
      %2199 = vmatmul.f32.gmra.mxu0 %v1045
      %v2200 = vpop.f32.mrf.mxu0
      %v2201 = vadd.f32 %v2088, %v2200
      %2202 = vmatmul.f32.gmra.mxu0 %v1054
      %v2203 = vpop.f32.mrf.mxu0
      %v2204 = vadd.f32 %v2091, %v2203
      %2205 = vmatmul.f32.gmra.mxu0 %v1063
      %v2206 = vpop.f32.mrf.mxu0
      %v2207 = vadd.f32 %v2094, %v2206
      %2208 = vmatmul.f32.gmra.mxu0 %v1072
      %v2209 = vpop.f32.mrf.mxu0
      %v2210 = vadd.f32 %v2097, %v2209
      %2211 = vmatmul.f32.gmra.mxu0 %v1081
      %v2212 = vpop.f32.mrf.mxu0
      %v2213 = vadd.f32 %v2100, %v2212
      %2214 = vmatmul.f32.gmra.mxu0 %v1090
      %v2215 = vpop.f32.mrf.mxu0
      %v2216 = vadd.f32 %v2103, %v2215
      %2217 = vmatmul.f32.gmra.mxu0 %v1099
      %v2218 = vpop.f32.mrf.mxu0
      %v2219 = vadd.f32 %v2106, %v2218
      %2220 = vmatmul.f32.gmra.mxu0 %v1108
      %v2221 = vpop.f32.mrf.mxu0
      %v2222 = vadd.f32 %v2109, %v2221
      %2223 = vmatmul.f32.gmra.mxu0 %v1117
      %v2224 = vpop.f32.mrf.mxu0
      %v2225 = vadd.f32 %v2112, %v2224
      %2226 = vmatmul.f32.gmra.mxu0 %v1126
      %v2227 = vpop.f32.mrf.mxu0
      %v2228 = vadd.f32 %v2115, %v2227
      %2229 = vmatmul.f32.gmra.mxu0 %v1135
      %v2230 = vpop.f32.mrf.mxu0
      %v2231 = vadd.f32 %v2118, %v2230
      %2232 = vmatmul.f32.gmra.mxu0 %v1144
      %v2233 = vpop.f32.mrf.mxu0
      %v2234 = vadd.f32 %v2121, %v2233
      %2235 = vmatmul.f32.gmra.mxu0 %v1153
      %v2236 = vpop.f32.mrf.mxu0
      %v2237 = vadd.f32 %v2124, %v2236
      %2238 = vmatmul.f32.gmra.mxu0 %v1162
      %v2239 = vpop.f32.mrf.mxu0
      %v2240 = vadd.f32 %v2127, %v2239
      %2241 = vmatmul.f32.gmra.mxu0 %v1171
      %v2242 = vpop.f32.mrf.mxu0
      %v2243 = vadd.f32 %v2130, %v2242
      %2244 = vmatmul.f32.gmra.mxu0 %v1180
      %v2245 = vpop.f32.mrf.mxu0
      %v2246 = vadd.f32 %v2133, %v2245
      %2247 = vmatmul.f32.gmra.mxu0 %v1189
      %v2248 = vpop.f32.mrf.mxu0
      %v2249 = vadd.f32 %v2136, %v2248
      %2250 = vmatmul.f32.gmra.mxu0 %v1198
      %v2251 = vpop.f32.mrf.mxu0
      %v2252 = vadd.f32 %v2139, %v2251
      %2253 = vmatmul.f32.gmra.mxu0 %v1207
      %v2254 = vpop.f32.mrf.mxu0
      %v2255 = vadd.f32 %v2142, %v2254
      %2256 = vdwg.mxu0
      %2257 = vmatpush.msra.mxu0 %v1352
      %2258 = vmatpush.msra.mxu0 %v1351
      %2259 = vmatpush.msra.mxu0 %v1350
      %2260 = vmatpush.msra.mxu0 %v1349
      %2261 = vmatpush.msra.mxu0 %v1348
      %2262 = vmatpush.msra.mxu0 %v1347
      %2263 = vmatpush.msra.mxu0 %v1346
      %2264 = vmatpush.msra.mxu0 %v1345
      %2265 = vmatpush.msra.mxu0 %v1344
      %2266 = vmatpush.msra.mxu0 %v1343
      %2267 = vmatpush.msra.mxu0 %v1342
      %2268 = vmatpush.msra.mxu0 %v1341
      %2269 = vmatpush.msra.mxu0 %v1340
      %2270 = vmatpush.msra.mxu0 %v1339
      %2271 = vmatpush.msra.mxu0 %v1338
      %2272 = vmatpush.msra.mxu0 %v1337
      %2273 = vmatmul.f32.gmra.mxu0 %v929
      %v2274 = vpop.f32.mrf.mxu0
      %v2275 = vadd.f32 %v2162, %v2274
      %2276 = vmatmul.f32.gmra.mxu0 %v938
      %v2277 = vpop.f32.mrf.mxu0
      %v2278 = vadd.f32 %v2165, %v2277
      %2279 = vmatmul.f32.gmra.mxu0 %v947
      %v2280 = vpop.f32.mrf.mxu0
      %v2281 = vadd.f32 %v2168, %v2280
      %2282 = vmatmul.f32.gmra.mxu0 %v956
      %v2283 = vpop.f32.mrf.mxu0
      %v2284 = vadd.f32 %v2171, %v2283
      %2285 = vmatmul.f32.gmra.mxu0 %v965
      %v2286 = vpop.f32.mrf.mxu0
      %v2287 = vadd.f32 %v2174, %v2286
      %2288 = vmatmul.f32.gmra.mxu0 %v974
      %v2289 = vpop.f32.mrf.mxu0
      %v2290 = vadd.f32 %v2177, %v2289
      %2291 = vmatmul.f32.gmra.mxu0 %v983
      %v2292 = vpop.f32.mrf.mxu0
      %v2293 = vadd.f32 %v2180, %v2292
      %2294 = vmatmul.f32.gmra.mxu0 %v992
      %v2295 = vpop.f32.mrf.mxu0
      %v2296 = vadd.f32 %v2183, %v2295
      %2297 = vmatmul.f32.gmra.mxu0 %v1001
      %v2298 = vpop.f32.mrf.mxu0
      %v2299 = vadd.f32 %v2186, %v2298
      %2300 = vmatmul.f32.gmra.mxu0 %v1010
      %v2301 = vpop.f32.mrf.mxu0
      %v2302 = vadd.f32 %v2189, %v2301
      %2303 = vmatmul.f32.gmra.mxu0 %v1019
      %v2304 = vpop.f32.mrf.mxu0
      %v2305 = vadd.f32 %v2192, %v2304
      %2306 = vmatmul.f32.gmra.mxu0 %v1028
      %v2307 = vpop.f32.mrf.mxu0
      %v2308 = vadd.f32 %v2195, %v2307
      %2309 = vmatmul.f32.gmra.mxu0 %v1037
      %v2310 = vpop.f32.mrf.mxu0
      %v2311 = vadd.f32 %v2198, %v2310
      %2312 = vmatmul.f32.gmra.mxu0 %v1046
      %v2313 = vpop.f32.mrf.mxu0
      %v2314 = vadd.f32 %v2201, %v2313
      %2315 = vmatmul.f32.gmra.mxu0 %v1055
      %v2316 = vpop.f32.mrf.mxu0
      %v2317 = vadd.f32 %v2204, %v2316
      %2318 = vmatmul.f32.gmra.mxu0 %v1064
      %v2319 = vpop.f32.mrf.mxu0
      %v2320 = vadd.f32 %v2207, %v2319
      %2321 = vmatmul.f32.gmra.mxu0 %v1073
      %v2322 = vpop.f32.mrf.mxu0
      %v2323 = vadd.f32 %v2210, %v2322
      %2324 = vmatmul.f32.gmra.mxu0 %v1082
      %v2325 = vpop.f32.mrf.mxu0
      %v2326 = vadd.f32 %v2213, %v2325
      %2327 = vmatmul.f32.gmra.mxu0 %v1091
      %v2328 = vpop.f32.mrf.mxu0
      %v2329 = vadd.f32 %v2216, %v2328
      %2330 = vmatmul.f32.gmra.mxu0 %v1100
      %v2331 = vpop.f32.mrf.mxu0
      %v2332 = vadd.f32 %v2219, %v2331
      %2333 = vmatmul.f32.gmra.mxu0 %v1109
      %v2334 = vpop.f32.mrf.mxu0
      %v2335 = vadd.f32 %v2222, %v2334
      %2336 = vmatmul.f32.gmra.mxu0 %v1118
      %v2337 = vpop.f32.mrf.mxu0
      %v2338 = vadd.f32 %v2225, %v2337
      %2339 = vmatmul.f32.gmra.mxu0 %v1127
      %v2340 = vpop.f32.mrf.mxu0
      %v2341 = vadd.f32 %v2228, %v2340
      %2342 = vmatmul.f32.gmra.mxu0 %v1136
      %v2343 = vpop.f32.mrf.mxu0
      %v2344 = vadd.f32 %v2231, %v2343
      %2345 = vmatmul.f32.gmra.mxu0 %v1145
      %v2346 = vpop.f32.mrf.mxu0
      %v2347 = vadd.f32 %v2234, %v2346
      %2348 = vmatmul.f32.gmra.mxu0 %v1154
      %v2349 = vpop.f32.mrf.mxu0
      %v2350 = vadd.f32 %v2237, %v2349
      %2351 = vmatmul.f32.gmra.mxu0 %v1163
      %v2352 = vpop.f32.mrf.mxu0
      %v2353 = vadd.f32 %v2240, %v2352
      %2354 = vmatmul.f32.gmra.mxu0 %v1172
      %v2355 = vpop.f32.mrf.mxu0
      %v2356 = vadd.f32 %v2243, %v2355
      %2357 = vmatmul.f32.gmra.mxu0 %v1181
      %v2358 = vpop.f32.mrf.mxu0
      %v2359 = vadd.f32 %v2246, %v2358
      %2360 = vmatmul.f32.gmra.mxu0 %v1190
      %v2361 = vpop.f32.mrf.mxu0
      %v2362 = vadd.f32 %v2249, %v2361
      %2363 = vmatmul.f32.gmra.mxu0 %v1199
      %v2364 = vpop.f32.mrf.mxu0
      %v2365 = vadd.f32 %v2252, %v2364
      %2366 = vmatmul.f32.gmra.mxu0 %v1208
      %v2367 = vpop.f32.mrf.mxu0
      %v2368 = vadd.f32 %v2255, %v2367
      %2369 = vdwg.mxu0
      %2370 = vst [vmem:[%s231] sm:$0xff] %v2275
      %2371 = vst [vmem:[%s231 + $0x8] sm:$0xff] %v2278
      %2372 = vst [vmem:[%s231 + $0x10] sm:$0xff] %v2281
      %2373 = vst [vmem:[%s231 + $0x18] sm:$0xff] %v2284
      %2374 = vst [vmem:[%s231 + $0x20] sm:$0xff] %v2287
      %2375 = vst [vmem:[%s231 + $0x28] sm:$0xff] %v2290
      %2376 = vst [vmem:[%s231 + $0x30] sm:$0xff] %v2293
      %2377 = vst [vmem:[%s231 + $0x38] sm:$0xff] %v2296
      %2378 = vst [vmem:[%s231 + $0x40] sm:$0xff] %v2299
      %2379 = vst [vmem:[%s231 + $0x48] sm:$0xff] %v2302
      %2380 = vst [vmem:[%s231 + $0x50] sm:$0xff] %v2305
      %2381 = vst [vmem:[%s231 + $0x58] sm:$0xff] %v2308
      %2382 = vst [vmem:[%s231 + $0x60] sm:$0xff] %v2311
      %2383 = vst [vmem:[%s231 + $0x68] sm:$0xff] %v2314
      %2384 = vst [vmem:[%s231 + $0x70] sm:$0xff] %v2317
      %2385 = vst [vmem:[%s231 + $0x78] sm:$0xff] %v2320
      %2386 = vst [vmem:[%s231 + $0x80] sm:$0xff] %v2323
      %2387 = vst [vmem:[%s231 + $0x88] sm:$0xff] %v2326
      %2388 = vst [vmem:[%s231 + $0x90] sm:$0xff] %v2329
      %2389 = vst [vmem:[%s231 + $0x98] sm:$0xff] %v2332
      %2390 = vst [vmem:[%s231 + $0xa0] sm:$0xff] %v2335
      %2391 = vst [vmem:[%s231 + $0xa8] sm:$0xff] %v2338
      %2392 = vst [vmem:[%s231 + $0xb0] sm:$0xff] %v2341
      %2393 = vst [vmem:[%s231 + $0xb8] sm:$0xff] %v2344
      %2394 = vst [vmem:[%s231 + $0xc0] sm:$0xff] %v2347
      %2395 = vst [vmem:[%s231 + $0xc8] sm:$0xff] %v2350
      %2396 = vst [vmem:[%s231 + $0xd0] sm:$0xff] %v2353
      %2397 = vst [vmem:[%s231 + $0xd8] sm:$0xff] %v2356
      %2398 = vst [vmem:[%s231 + $0xe0] sm:$0xff] %v2359
      %2399 = vst [vmem:[%s231 + $0xe8] sm:$0xff] %v2362
      %2400 = vst [vmem:[%s231 + $0xf0] sm:$0xff] %v2365
      %2401 = vst [vmem:[%s231 + $0xf8] sm:$0xff] %v2368
      %2402 = vst [vmem:[%s235] sm:$0xff] 0.0
      %v2403 = vadd.f32 %v2275, %v2278
      %v2404 = vadd.f32 %v2403, %v2281
      %v2405 = vadd.f32 %v2404, %v2284
      %v2406 = vadd.f32 %v2405, %v2287
      %v2407 = vadd.f32 %v2406, %v2290
      %v2408 = vadd.f32 %v2407, %v2293
      %v2409 = vadd.f32 %v2408, %v2296
      %v2410 = vadd.f32 %v2409, %v2299
      %v2411 = vadd.f32 %v2410, %v2302
      %v2412 = vadd.f32 %v2411, %v2305
      %v2413 = vadd.f32 %v2412, %v2308
      %v2414 = vadd.f32 %v2413, %v2311
      %v2415 = vadd.f32 %v2414, %v2314
      %v2416 = vadd.f32 %v2415, %v2317
      %v2417 = vadd.f32 %v2416, %v2320
      %v2418 = vadd.f32 %v2417, %v2323
      %v2419 = vadd.f32 %v2418, %v2326
      %v2420 = vadd.f32 %v2419, %v2329
      %v2421 = vadd.f32 %v2420, %v2332
      %v2422 = vadd.f32 %v2421, %v2335
      %v2423 = vadd.f32 %v2422, %v2338
      %v2424 = vadd.f32 %v2423, %v2341
      %v2425 = vadd.f32 %v2424, %v2344
      %v2426 = vadd.f32 %v2425, %v2347
      %v2427 = vadd.f32 %v2426, %v2350
      %v2428 = vadd.f32 %v2427, %v2353
      %v2429 = vadd.f32 %v2428, %v2356
      %v2430 = vadd.f32 %v2429, %v2359
      %v2431 = vadd.f32 %v2430, %v2362
      %v2432 = vadd.f32 %v2431, %v2365
      %v2433 = vadd.f32 %v2432, %v2368
      %v2434 = vrot.slane %v2433, 4
      %v2435 = vadd.f32 %v2433, %v2434
      %v2436 = vrot.slane %v2435, 2
      %v2437 = vadd.f32 %v2435, %v2436
      %v2438 = vrot.slane %v2437, 1
      %v2439 = vadd.f32 %v2437, %v2438
      %2440 = vst [vmem:[%s235] sm:$0x1] %v2439
      %v2441 = vmul.f32 %v2275, %v2275
      %v2442 = vmul.f32 %v2278, %v2278
      %v2443 = vmul.f32 %v2281, %v2281
      %v2444 = vmul.f32 %v2284, %v2284
      %v2445 = vmul.f32 %v2287, %v2287
      %v2446 = vmul.f32 %v2290, %v2290
      %v2447 = vmul.f32 %v2293, %v2293
      %v2448 = vmul.f32 %v2296, %v2296
      %v2449 = vmul.f32 %v2299, %v2299
      %v2450 = vmul.f32 %v2302, %v2302
      %v2451 = vmul.f32 %v2305, %v2305
      %v2452 = vmul.f32 %v2308, %v2308
      %v2453 = vmul.f32 %v2311, %v2311
      %v2454 = vmul.f32 %v2314, %v2314
      %v2455 = vmul.f32 %v2317, %v2317
      %v2456 = vmul.f32 %v2320, %v2320
      %v2457 = vmul.f32 %v2323, %v2323
      %v2458 = vmul.f32 %v2326, %v2326
      %v2459 = vmul.f32 %v2329, %v2329
      %v2460 = vmul.f32 %v2332, %v2332
      %v2461 = vmul.f32 %v2335, %v2335
      %v2462 = vmul.f32 %v2338, %v2338
      %v2463 = vmul.f32 %v2341, %v2341
      %v2464 = vmul.f32 %v2344, %v2344
      %v2465 = vmul.f32 %v2347, %v2347
      %v2466 = vmul.f32 %v2350, %v2350
      %v2467 = vmul.f32 %v2353, %v2353
      %v2468 = vmul.f32 %v2356, %v2356
      %v2469 = vmul.f32 %v2359, %v2359
      %v2470 = vmul.f32 %v2362, %v2362
      %v2471 = vmul.f32 %v2365, %v2365
      %v2472 = vmul.f32 %v2368, %v2368
      %v2473 = vadd.f32 %v2441, %v2442
      %v2474 = vadd.f32 %v2473, %v2443
      %v2475 = vadd.f32 %v2474, %v2444
      %v2476 = vadd.f32 %v2475, %v2445
      %v2477 = vadd.f32 %v2476, %v2446
      %v2478 = vadd.f32 %v2477, %v2447
      %v2479 = vadd.f32 %v2478, %v2448
      %v2480 = vadd.f32 %v2479, %v2449
      %v2481 = vadd.f32 %v2480, %v2450
      %v2482 = vadd.f32 %v2481, %v2451
      %v2483 = vadd.f32 %v2482, %v2452
      %v2484 = vadd.f32 %v2483, %v2453
      %v2485 = vadd.f32 %v2484, %v2454
      %v2486 = vadd.f32 %v2485, %v2455
      %v2487 = vadd.f32 %v2486, %v2456
      %v2488 = vadd.f32 %v2487, %v2457
      %v2489 = vadd.f32 %v2488, %v2458
      %v2490 = vadd.f32 %v2489, %v2459
      %v2491 = vadd.f32 %v2490, %v2460
      %v2492 = vadd.f32 %v2491, %v2461
      %v2493 = vadd.f32 %v2492, %v2462
      %v2494 = vadd.f32 %v2493, %v2463
      %v2495 = vadd.f32 %v2494, %v2464
      %v2496 = vadd.f32 %v2495, %v2465
      %v2497 = vadd.f32 %v2496, %v2466
      %v2498 = vadd.f32 %v2497, %v2467
      %v2499 = vadd.f32 %v2498, %v2468
      %v2500 = vadd.f32 %v2499, %v2469
      %v2501 = vadd.f32 %v2500, %v2470
      %v2502 = vadd.f32 %v2501, %v2471
      %v2503 = vadd.f32 %v2502, %v2472
      %v2504 = vrot.slane %v2503, 4
      %v2505 = vadd.f32 %v2503, %v2504
      %v2506 = vrot.slane %v2505, 2
      %v2507 = vadd.f32 %v2505, %v2506
      %v2508 = vrot.slane %v2507, 1
      %v2509 = vadd.f32 %v2507, %v2508
      %2510 = vst [vmem:[%s235 + $0x1] sm:$0x1] %v2509
      %p2511 = scmp.lt.s32.totalorder %s17, 1
      %s2512 = scalar_select %p2511, %s17, 1
      %s2513 = smul.addr %s2512, 32
      %s2514 = smul.addr %s2513, 8
      %s2515 = scalar_lea.vmem %s4, %s2514
      %p2516 = scmp.lt.s32.totalorder %s17, 1
      %s2517 = scalar_select %p2516, %s17, 1
      %s2518 = smul.addr %s2517, 8
      %s2519 = scalar_lea.vmem %s5, %s2518
      // Predicated region
      $region37: #{double_conv.3} parent=35 // pred_check
        %p2520 = pneg %p124
      $region38: #{double_conv.3} parent=35 // pred_check_branch
        %2522 = sbr.rel (%p2520) target = $region40
      $region39: #{double_conv.3} parent=35 // pred_region
        _
      $region40: #{double_conv.3} parent=35 // pred_fallthru
        _
      // Predicated region
      $region41: #{double_conv.3} parent=35 // pred_check
        %p2523 = pneg %p150
      $region42: #{double_conv.3} parent=35 // pred_check_branch
        %2525 = sbr.rel (%p2523) target = $region44
      $region43: #{double_conv.3} parent=35 // pred_region
        _
      $region44: #{double_conv.3} parent=35 // pred_fallthru
        _
    $region36: #{double_conv.3} parent=5 // pred_fallthru
      _
    %p2526 = scmp.le.s32.totalorder 2, %s12
    // Predicated region
    $region45: #{double_conv.3} parent=5 // pred_check
      %p2527 = pneg %p2526
    $region46: #{double_conv.3} parent=5 // pred_check_branch
      %2529 = sbr.rel (%p2527) target = $region48
    $region47: #{double_conv.3} parent=5 // pred_region
      %s2530 = ssub.s32 %s12, 2
      // Predicated region
      $region49: #{double_conv.3} parent=47 // pred_check
        %p2531 = pneg %p130
      $region50: #{double_conv.3} parent=47 // pred_check_branch
        %2533 = sbr.rel (%p2531) target = $region52
      $region51: #{double_conv.3} parent=47 // pred_region
        %p2534 = scmp.lt.s32.totalorder %s18, 1
        %s2535 = scalar_select %p2534, %s18, 1
        %s2536 = smul.addr %s2535, 32
        %s2537 = smul.addr %s2536, 8
        %s2538 = scalar_lea.vmem %s4, %s2537
      $region52: #{double_conv.3} parent=47 // pred_fallthru
        _
      // Predicated region
      $region53: #{double_conv.3} parent=47 // pred_check
        %p2539 = pneg %p156
      $region54: #{double_conv.3} parent=47 // pred_check_branch
        %2541 = sbr.rel (%p2539) target = $region56
      $region55: #{double_conv.3} parent=47 // pred_region
        %p2542 = scmp.lt.s32.totalorder %s18, 1
        %s2543 = scalar_select %p2542, %s18, 1
        %s2544 = smul.addr %s2543, 8
        %s2545 = scalar_lea.vmem %s5, %s2544
      $region56: #{double_conv.3} parent=47 // pred_fallthru
        _
    $region48: #{double_conv.3} parent=5 // pred_fallthru
      _
  $region6: #{double_conv.3} parent=0 // loop_footer
    %s16 = sadd.s32 1, %s12
  $region7: #{double_conv.3} parent=0 // loop_footer_branch
    %11 = sbr.rel target = $region3
  $region8: #{double_conv.3} parent=0 // loop_exit
    _

</llo_original>
